<compile_context>
chip_gen: v6e
topology: v6e:2x2x1
jax: 0.10.0
libtpu: 0.0.40
codegen_flags: <defaults>
</compile_context>

<pallas_src>
import math

import jax
import jax.numpy as jnp
from jax import lax
from jax.experimental import pallas as pl
from jax.experimental.pallas import tpu as pltpu

# ---- hyperparameters (small, consistent with the module signature) ----
INPUT_LEN = 16    # Input_len  (history length)
OUT_LEN   = 8     # out_len    (future length)
NUM_ID    = 4     # num_id     (number of variables)
NUM_HI    = 8     # num_hi     (per-head hidden)
MUTI_HEAD = 2     # muti_head
NUM_LAYER = 2     # num_layer  (MRI_block_1 / laynorm_1 are SHARED across layers)
REVIN_EPS = 1e-5
LN_EPS    = 1e-5
HD        = NUM_HI * MUTI_HEAD          # 16
QKV_ROWS  = 6 * HD                      # 96  (q,k,v) x 2 resolutions
CTX_ROWS  = 2 * HD                      # 32  heads x 2 resolutions
LANE      = 128

assert NUM_HI & (NUM_HI - 1) == 0, "sublane butterfly all-reduce needs power-of-2 head dim"


# --------------------------------------------------------------------------
# Pallas kernel: one block = TB samples, laid out as (rows, NUM_ID*TB) slabs.
# --------------------------------------------------------------------------
def _make_kernel(tb):
    ntb = NUM_ID * tb
    n_rep = tb // LANE
    inv_nl = 1.0 / float(NUM_ID * INPUT_LEN)

    def _sum_tokens(row):                 # (1, NTB) -> (1, TB): per-sample sum over tokens
        acc = row[:, 0:tb]
        for n in range(1, NUM_ID):
            acc = acc + row[:, n * tb:(n + 1) * tb]
        return acc

    def _tile_tokens(row):                # (1, TB) -> (1, NTB)
        return jnp.concatenate([row] * NUM_ID, axis=1)

    def _expand_lane_param(p):            # (R, NUM_ID*128) -> (R, NUM_ID*TB)
        if n_rep == 1:
            return p
        blocks = []
        for n in range(NUM_ID):
            blk = p[:, n * LANE:(n + 1) * LANE]
            blocks.extend([blk] * n_rep)
        return jnp.concatenate(blocks, axis=1)

    def _splat_tokens(smem_ref):          # (NUM_ID,) SMEM scalars -> (1, NUM_ID*TB)
        return jnp.concatenate(
            [jnp.full((1, tb), smem_ref[n], dtype=jnp.float32) for n in range(NUM_ID)],
            axis=1)

    def _sublane_allreduce(p):            # (NUM_HI, TB): every sublane := sum over sublanes
        shift = NUM_HI // 2
        while shift >= 1:
            p = p + pltpu.roll(p, shift, axis=0)
            shift //= 2
        return p

    def kernel(x_ref, wqkv_ref, bqkv_ref, wout_ref, bout_ref,
               lnw_ref, lnb_ref, revw_ref, revb_ref, revinv_ref,
               convw_ref, convb_ref, o_ref, ctx_ref):
        x     = x_ref[...]                # (L, NTB)  f32, column = n*TB + b
        wqkv  = wqkv_ref[...]             # (96, L)   bf16, pool + 1/sqrt(d) folded in
        bqkv  = bqkv_ref[...]             # (96, 1)   f32
        wout  = wout_ref[...]             # (L, 32)   bf16
        bout  = bout_ref[...]             # (L, 1)    f32
        convw = convw_ref[...]            # (O, L)    f32
        convb = convb_ref[...]            # (O, 1)    f32

        # Hoisted, per grid step: expand compact params to the (·, NTB) layout.
        lnw = _expand_lane_param(lnw_ref[...])        # (L, NTB)
        lnb = _expand_lane_param(lnb_ref[...])        # (L, NTB)
        revw_row   = _splat_tokens(revw_ref)          # (1, NTB)
        revb_row   = _splat_tokens(revb_ref)          # (1, NTB)
        revinv_row = _splat_tokens(revinv_ref)        # (1, NTB)  1/(rev_w + eps^2)

        # --- RevIN 'norm': stats over time, per (variable, sample) column ---
        mean = jnp.mean(x, axis=0, keepdims=True)                    # (1, NTB)
        var  = jnp.mean((x - mean) ** 2, axis=0, keepdims=True)      # (1, NTB)
        inv_std = lax.rsqrt(var + REVIN_EPS)
        std = (var + REVIN_EPS) * inv_std                            # == sqrt(var+eps)
        xs = (x - mean) * (inv_std * revw_row) + revb_row            # (L, NTB)

        # --- num_layer x [ x = x + MRI_block(x) ; LayerNorm([num_id, Input_len]) ] ---
        for _layer in range(NUM_LAYER):                              # shared weights
            # single stacked projection matmul on the MXU (bf16 operands, f32 acc)
            qkv = jnp.dot(wqkv, xs.astype(jnp.bfloat16),
                          preferred_element_type=jnp.float32) + bqkv  # (96, NTB)

            for r in range(2):                                       # two resolutions
                base = r * 3 * HD
                for h in range(MUTI_HEAD):
                    q = qkv[base + h * NUM_HI: base + (h + 1) * NUM_HI, :]
                    k = qkv[base + HD + h * NUM_HI: base + HD + (h + 1) * NUM_HI, :]
                    v = qkv[base + 2 * HD + h * NUM_HI: base + 2 * HD + (h + 1) * NUM_HI, :]
                    row0 = r * HD + h * NUM_HI
                    for nq in range(NUM_ID):                         # query token
                        qn = q[:, nq * tb:(nq + 1) * tb]             # (D, TB)
                        # scores vs the NUM_ID key tokens, replicated over sublanes
                        # via a roll butterfly -> no separate broadcast downstream
                        s = [_sublane_allreduce(qn * k[:, m * tb:(m + 1) * tb])
                             for m in range(NUM_ID)]                 # NUM_ID x (D, TB)
                        smax = s[0]
                        for m in range(1, NUM_ID):
                            smax = jnp.maximum(smax, s[m])
                        e = [jnp.exp(sm - smax) for sm in s]
                        den = e[0]
                        for m in range(1, NUM_ID):
                            den = den + e[m]
                        ctx = e[0] * v[:, 0:tb]
                        for m in range(1, NUM_ID):
                            ctx = ctx + e[m] * v[:, m * tb:(m + 1) * tb]
                        ctx = ctx * pl.reciprocal(den, approx=True)  # (D, TB)
                        # slice-store into VMEM scratch (no in-kernel concatenates)
                        ctx_ref[row0:row0 + NUM_HI, nq * tb:(nq + 1) * tb] = ctx

            # single stacked output projection (both resolutions / heads)
            blk = jnp.dot(wout, ctx_ref[...].astype(jnp.bfloat16),
                          preferred_element_type=jnp.float32) + bout   # (L, NTB)
            xs = xs + blk

            # LayerNorm over the whole (num_id, Input_len) slab of each sample
            mu = _tile_tokens(_sum_tokens(
                jnp.sum(xs, axis=0, keepdims=True)) * inv_nl)          # (1, NTB)
            xc = xs - mu
            varln = _sum_tokens(
                jnp.sum(xc * xc, axis=0, keepdims=True)) * inv_nl      # (1, TB)
            inv_ln = _tile_tokens(lax.rsqrt(varln + LN_EPS))           # (1, NTB)
            xs = xc * inv_ln * lnw + lnb

        # --- Conv1d(Input_len -> out_len, k=1) over time + RevIN 'denorm' ---
        y = jnp.dot(convw, xs, preferred_element_type=jnp.float32) + convb   # (O, NTB)
        y = (y - revb_row) * revinv_row
        o_ref[...] = y * std + mean

    return kernel


# --------------------------------------------------------------------------
# Host-side layout plumbing + parameter folding
# --------------------------------------------------------------------------
def _pick_tb(batch, max_tb=1024):
    """Lane-aligned batch tile; large batches keep >=2 grid steps (v7x megacore)."""
    if batch <= LANE:
        return LANE
    half = -(-batch // 2)
    tbv = -(-half // LANE) * LANE
    return max(LANE, min(tbv, max_tb))


def _prep_inputs(history_data, tb):
    b = history_data.shape[0]
    g = -(-b // tb)
    b_pad = g * tb
    x = history_data[:, :, :, 0].astype(jnp.float32)             # (B, L, N)
    x = jnp.pad(x, ((0, b_pad - b), (0, 0), (0, 0)))
    x = x.reshape(g, tb, INPUT_LEN, NUM_ID)
    x = jnp.transpose(x, (2, 0, 3, 1))                           # (L, G, N, TB)
    x = x.reshape(INPUT_LEN, g * NUM_ID * tb)                    # col = g*N*TB + n*TB + b
    return x, g, b_pad


def _prep_params(params):
    rev_w, rev_b, w_in, b_in, w_out, b_out, ln_w, ln_b, conv_w, conv_b = params
    scale = 1.0 / math.sqrt(NUM_HI)
    idx = jnp.arange(INPUT_LEN)
    # avg-pool(2)+nearest-upsample(2) fused into one (L, L) matrix (symmetric)
    pool = (idx[:, None] // 2 == idx[None, :] // 2).astype(jnp.float32) * 0.5
    w_lo = [pool @ w_in[3 + i] for i in range(3)]                # fold pool into low-res weights
    w_stack = jnp.concatenate(
        [w_in[0] * scale, w_in[1], w_in[2],
         w_lo[0] * scale, w_lo[1], w_lo[2]], axis=1)             # (L, 96)
    b_stack = jnp.concatenate(
        [b_in[0] * scale, b_in[1], b_in[2],
         b_in[3] * scale, b_in[4], b_in[5]], axis=0)             # (96,)
    wqkv = w_stack.T.astype(jnp.bfloat16)                        # (96, L)  bf16 MXU operand
    bqkv = b_stack.reshape(QKV_ROWS, 1).astype(jnp.float32)
    wout = jnp.concatenate([w_out[0], w_out[1]], axis=0).T.astype(jnp.bfloat16)  # (L, 32)
    bout = (b_out[0] + b_out[1]).reshape(INPUT_LEN, 1).astype(jnp.float32)
    # compact, TB-independent per-token params
    lnw128 = jnp.repeat(ln_w.T, LANE, axis=1).astype(jnp.float32)    # (L, NUM_ID*128)
    lnb128 = jnp.repeat(ln_b.T, LANE, axis=1).astype(jnp.float32)
    revw = rev_w.astype(jnp.float32)                                 # (NUM_ID,) -> SMEM
    revb = rev_b.astype(jnp.float32)
    revinv = (1.0 / (rev_w + REVIN_EPS ** 2)).astype(jnp.float32)
    convw = conv_w.astype(jnp.float32)
    convb = conv_b.reshape(OUT_LEN, 1).astype(jnp.float32)
    return (wqkv, bqkv, wout, bout, lnw128, lnb128, revw, revb, revinv, convw, convb)


def mriformer_forward(history_data, params, tb=None):
    b = history_data.shape[0]
    if tb is None:
        tb = _pick_tb(b)
    assert tb % LANE == 0, "batch tile must be a multiple of 128 lanes"
    ntb = NUM_ID * tb
    x2d, g, b_pad = _prep_inputs(history_data, tb)
    kparams = _prep_params(params)
    (wqkv, bqkv, wout, bout, lnw128, lnb128, revw, revb, revinv, convw, convb) = kparams

    def vmem_full(a):
        nd = a.ndim
        return pl.BlockSpec(a.shape, lambda i, _nd=nd: (0,) * _nd)

    smem_spec = pl.BlockSpec(memory_space=pltpu.MemorySpace.SMEM)

    in_specs = ([pl.BlockSpec((INPUT_LEN, ntb), lambda i: (0, i))]
                + [vmem_full(p) for p in (wqkv, bqkv, wout, bout, lnw128, lnb128)]
                + [smem_spec, smem_spec, smem_spec]
                + [vmem_full(p) for p in (convw, convb)])
    out_spec = pl.BlockSpec((OUT_LEN, ntb), lambda i: (0, i))

    y2d = pl.pallas_call(
        _make_kernel(tb),
        out_shape=jax.ShapeDtypeStruct((OUT_LEN, g * ntb), jnp.float32),
        grid_spec=pltpu.PrefetchScalarGridSpec(
            num_scalar_prefetch=0,
            grid=(g,),
            in_specs=in_specs,
            out_specs=out_spec,
            scratch_shapes=[pltpu.VMEM((CTX_ROWS, ntb), jnp.float32)],
        ),
        compiler_params=pltpu.CompilerParams(dimension_semantics=("parallel",)),
    )(x2d, *kparams)

    y = y2d.reshape(OUT_LEN, g, NUM_ID, tb)
    y = jnp.transpose(y, (1, 3, 0, 2)).reshape(b_pad, OUT_LEN, NUM_ID)
    return y[:b, :, :, None]                                     # unsqueeze(-1)


# --------------------------------------------------------------------------
# Pure-JAX reference (per-sample, un-folded f32 weights) for validation
# --------------------------------------------------------------------------
def _forward_ref(x, params):
    rev_w, rev_b, w_in, b_in, w_out, b_out, ln_w, ln_b, conv_w, conv_b = params
    mean = jnp.mean(x, axis=0, keepdims=True)
    var = jnp.mean((x - mean) ** 2, axis=0, keepdims=True)
    std = jnp.sqrt(var + REVIN_EPS)
    xn = (x - mean) / std * rev_w + rev_b
    xt = xn.T                                                    # (N, L)
    idx = jnp.arange(INPUT_LEN)
    pool = (idx[:, None] // 2 == idx[None, :] // 2).astype(jnp.float32) * 0.5
    for _ in range(NUM_LAYER):
        z = xt
        z_low = z @ pool
        out = jnp.zeros_like(z)
        for r, zr in enumerate((z, z_low)):
            q = zr @ w_in[3 * r + 0] + b_in[3 * r + 0]
            k = zr @ w_in[3 * r + 1] + b_in[3 * r + 1]
            v = zr @ w_in[3 * r + 2] + b_in[3 * r + 2]
            heads = []
            for h in range(MUTI_HEAD):
                sl = slice(h * NUM_HI, (h + 1) * NUM_HI)
                sc = (q[:, sl] @ k[:, sl].T) * (1.0 / math.sqrt(NUM_HI))
                a = jax.nn.softmax(sc, axis=-1)
                heads.append(a @ v[:, sl])
            ctx = jnp.concatenate(heads, axis=-1)
            out = out + ctx @ w_out[r] + b_out[r]
        xt = xt + out
        mu = jnp.mean(xt)
        vv = jnp.mean((xt - mu) ** 2)
        xt = (xt - mu) / jnp.sqrt(vv + LN_EPS) * ln_w + ln_b
    y = conv_w @ xt.T + conv_b[:, None]                          # (O, N)
    y = (y - rev_b) / (rev_w + REVIN_EPS ** 2)
    y = y * std + mean
    return y


def init_params(key):
    ks = jax.random.split(key, 10)
    s = 0.02
    rev_w = 1.0 + 0.1 * jax.random.normal(ks[0], (NUM_ID,), jnp.float32)
    rev_b = 0.1 * jax.random.normal(ks[1], (NUM_ID,), jnp.float32)
    w_in = s * jax.random.normal(ks[2], (6, INPUT_LEN, HD), jnp.float32)   # Q/K/V x 2 res
    b_in = s * jax.random.normal(ks[3], (6, HD), jnp.float32)
    w_out = s * jax.random.normal(ks[4], (2, HD, INPUT_LEN), jnp.float32)  # out proj x 2 res
    b_out = s * jax.random.normal(ks[5], (2, INPUT_LEN), jnp.float32)
    ln_w = 1.0 + 0.1 * jax.random.normal(ks[6], (NUM_ID, INPUT_LEN), jnp.float32)
    ln_b = 0.1 * jax.random.normal(ks[7], (NUM_ID, INPUT_LEN), jnp.float32)
    conv_w = s * jax.random.normal(ks[8], (OUT_LEN, INPUT_LEN), jnp.float32)   # Conv1d k=1
    conv_b = s * jax.random.normal(ks[9], (OUT_LEN,), jnp.float32)
    return (rev_w, rev_b, w_in, b_in, w_out, b_out, ln_w, ln_b, conv_w, conv_b)


if __name__ == "__main__":
    key = jax.random.PRNGKey(0)
    k_x, k_p = jax.random.split(key)
    history_data = jax.random.normal(k_x, (2, INPUT_LEN, NUM_ID, 1), dtype=jnp.float32)
    params = init_params(k_p)

    out = jax.block_until_ready(mriformer_forward(history_data, params))
    assert out.shape == (2, OUT_LEN, NUM_ID, 1), out.shape

    ref = jax.vmap(lambda x2d: _forward_ref(x2d, params))(history_data[:, :, :, 0])[..., None]
    max_err = float(jnp.max(jnp.abs(out - ref)))
    # tolerance accounts for bf16 MXU operands + approx reciprocal in the softmax
    assert jnp.allclose(out, ref, atol=5e-3, rtol=5e-3), f"mismatch vs reference: {max_err}"
    print("KERNEL_OK")
</pallas_src>

<mosaic_0001>
module attributes {stable_mosaic.version = 11 : i64} {
  func.func @kernel(%arg0: i32, %arg1: memref<16x512xf32, #tpu.memory_space<vmem>>, %arg2: memref<96x16xbf16, #tpu.memory_space<vmem>>, %arg3: memref<96x1xf32, #tpu.memory_space<vmem>>, %arg4: memref<16x32xbf16, #tpu.memory_space<vmem>>, %arg5: memref<16x1xf32, #tpu.memory_space<vmem>>, %arg6: memref<16x512xf32, #tpu.memory_space<vmem>>, %arg7: memref<16x512xf32, #tpu.memory_space<vmem>>, %arg8: memref<4xf32, #tpu.memory_space<smem>>, %arg9: memref<4xf32, #tpu.memory_space<smem>>, %arg10: memref<4xf32, #tpu.memory_space<smem>>, %arg11: memref<8x16xf32, #tpu.memory_space<vmem>>, %arg12: memref<8x1xf32, #tpu.memory_space<vmem>>, %arg13: memref<8x512xf32, #tpu.memory_space<vmem>>, %arg14: memref<32x512xf32, #tpu.memory_space<vmem>>) attributes {dimension_semantics = [#tpu.dimension_semantics<parallel>], iteration_bounds = array<i64: 1>, scalar_prefetch = 0 : i64, scratch_operands = 1 : i64, tpu.core_type = #tpu.core_type<tc>, window_params = [{transform_indices = @transform_0, window_bounds = array<i64: 16, 512>}, {pipeline_mode = #tpu.pipeline_mode<synchronous>, transform_indices = @transform_1, window_bounds = array<i64: 96, 16>}, {pipeline_mode = #tpu.pipeline_mode<synchronous>, transform_indices = @transform_2, window_bounds = array<i64: 96, 1>}, {pipeline_mode = #tpu.pipeline_mode<synchronous>, transform_indices = @transform_3, window_bounds = array<i64: 16, 32>}, {pipeline_mode = #tpu.pipeline_mode<synchronous>, transform_indices = @transform_4, window_bounds = array<i64: 16, 1>}, {pipeline_mode = #tpu.pipeline_mode<synchronous>, transform_indices = @transform_5, window_bounds = array<i64: 16, 512>}, {pipeline_mode = #tpu.pipeline_mode<synchronous>, transform_indices = @transform_6, window_bounds = array<i64: 16, 512>}, {transform_indices = @transform_7, window_bounds = array<i64: 4>}, {transform_indices = @transform_8, window_bounds = array<i64: 4>}, {transform_indices = @transform_9, window_bounds = array<i64: 4>}, {pipeline_mode = #tpu.pipeline_mode<synchronous>, transform_indices = @transform_10, window_bounds = array<i64: 8, 16>}, {pipeline_mode = #tpu.pipeline_mode<synchronous>, transform_indices = @transform_11, window_bounds = array<i64: 8, 1>}, {transform_indices = @transform_12, window_bounds = array<i64: 8, 512>}]} {
    %c0 = arith.constant 0 : index
    %c0_0 = arith.constant 0 : index
    %0 = vector.load %arg1[%c0, %c0_0] : memref<16x512xf32, #tpu.memory_space<vmem>>, vector<16x512xf32>
    %c0_1 = arith.constant 0 : index
    %c0_2 = arith.constant 0 : index
    %1 = vector.load %arg2[%c0_1, %c0_2] : memref<96x16xbf16, #tpu.memory_space<vmem>>, vector<96x16xbf16>
    %c0_3 = arith.constant 0 : index
    %c0_4 = arith.constant 0 : index
    %2 = vector.load %arg3[%c0_3, %c0_4] : memref<96x1xf32, #tpu.memory_space<vmem>>, vector<96x1xf32>
    %c0_5 = arith.constant 0 : index
    %c0_6 = arith.constant 0 : index
    %3 = vector.load %arg4[%c0_5, %c0_6] : memref<16x32xbf16, #tpu.memory_space<vmem>>, vector<16x32xbf16>
    %c0_7 = arith.constant 0 : index
    %c0_8 = arith.constant 0 : index
    %4 = vector.load %arg5[%c0_7, %c0_8] : memref<16x1xf32, #tpu.memory_space<vmem>>, vector<16x1xf32>
    %c0_9 = arith.constant 0 : index
    %c0_10 = arith.constant 0 : index
    %5 = vector.load %arg11[%c0_9, %c0_10] : memref<8x16xf32, #tpu.memory_space<vmem>>, vector<8x16xf32>
    %c0_11 = arith.constant 0 : index
    %c0_12 = arith.constant 0 : index
    %6 = vector.load %arg12[%c0_11, %c0_12] : memref<8x1xf32, #tpu.memory_space<vmem>>, vector<8x1xf32>
    %c0_13 = arith.constant 0 : index
    %c0_14 = arith.constant 0 : index
    %7 = vector.load %arg6[%c0_13, %c0_14] : memref<16x512xf32, #tpu.memory_space<vmem>>, vector<16x512xf32>
    %c0_15 = arith.constant 0 : index
    %c0_16 = arith.constant 0 : index
    %8 = vector.load %arg7[%c0_15, %c0_16] : memref<16x512xf32, #tpu.memory_space<vmem>>, vector<16x512xf32>
    %c0_17 = arith.constant 0 : index
    %9 = memref.load %arg8[%c0_17] : memref<4xf32, #tpu.memory_space<smem>>
    %10 = vector.broadcast %9 : f32 to vector<1x128xf32>
    %c1 = arith.constant 1 : index
    %11 = memref.load %arg8[%c1] : memref<4xf32, #tpu.memory_space<smem>>
    %12 = vector.broadcast %11 : f32 to vector<1x128xf32>
    %c2 = arith.constant 2 : index
    %13 = memref.load %arg8[%c2] : memref<4xf32, #tpu.memory_space<smem>>
    %14 = vector.broadcast %13 : f32 to vector<1x128xf32>
    %c3 = arith.constant 3 : index
    %15 = memref.load %arg8[%c3] : memref<4xf32, #tpu.memory_space<smem>>
    %16 = vector.broadcast %15 : f32 to vector<1x128xf32>
    %17 = tpu.concatenate %10, %12, %14, %16 in 1 : vector<1x128xf32>, vector<1x128xf32>, vector<1x128xf32>, vector<1x128xf32> -> vector<1x512xf32>
    %c0_18 = arith.constant 0 : index
    %18 = memref.load %arg9[%c0_18] : memref<4xf32, #tpu.memory_space<smem>>
    %19 = vector.broadcast %18 : f32 to vector<1x128xf32>
    %c1_19 = arith.constant 1 : index
    %20 = memref.load %arg9[%c1_19] : memref<4xf32, #tpu.memory_space<smem>>
    %21 = vector.broadcast %20 : f32 to vector<1x128xf32>
    %c2_20 = arith.constant 2 : index
    %22 = memref.load %arg9[%c2_20] : memref<4xf32, #tpu.memory_space<smem>>
    %23 = vector.broadcast %22 : f32 to vector<1x128xf32>
    %c3_21 = arith.constant 3 : index
    %24 = memref.load %arg9[%c3_21] : memref<4xf32, #tpu.memory_space<smem>>
    %25 = vector.broadcast %24 : f32 to vector<1x128xf32>
    %26 = tpu.concatenate %19, %21, %23, %25 in 1 : vector<1x128xf32>, vector<1x128xf32>, vector<1x128xf32>, vector<1x128xf32> -> vector<1x512xf32>
    %c0_22 = arith.constant 0 : index
    %27 = memref.load %arg10[%c0_22] : memref<4xf32, #tpu.memory_space<smem>>
    %28 = vector.broadcast %27 : f32 to vector<1x128xf32>
    %c1_23 = arith.constant 1 : index
    %29 = memref.load %arg10[%c1_23] : memref<4xf32, #tpu.memory_space<smem>>
    %30 = vector.broadcast %29 : f32 to vector<1x128xf32>
    %c2_24 = arith.constant 2 : index
    %31 = memref.load %arg10[%c2_24] : memref<4xf32, #tpu.memory_space<smem>>
    %32 = vector.broadcast %31 : f32 to vector<1x128xf32>
    %c3_25 = arith.constant 3 : index
    %33 = memref.load %arg10[%c3_25] : memref<4xf32, #tpu.memory_space<smem>>
    %34 = vector.broadcast %33 : f32 to vector<1x128xf32>
    %35 = tpu.concatenate %28, %30, %32, %34 in 1 : vector<1x128xf32>, vector<1x128xf32>, vector<1x128xf32>, vector<1x128xf32> -> vector<1x512xf32>
    %cst = arith.constant dense<0.000000e+00> : vector<512xf32>
    %36 = vector.multi_reduction <add>, %0, %cst [0] : vector<16x512xf32> to vector<512xf32>
    %37 = vector.shape_cast %36 : vector<512xf32> to vector<1x512xf32>
    %cst_26 = arith.constant 1.600000e+01 : f32
    %38 = vector.broadcast %cst_26 : f32 to vector<1x512xf32>
    %39 = arith.divf %37, %38 : vector<1x512xf32>
    %40 = vector.broadcast %39 : vector<1x512xf32> to vector<16x512xf32>
    %41 = arith.subf %0, %40 : vector<16x512xf32>
    %42 = arith.mulf %41, %41 : vector<16x512xf32>
    %cst_27 = arith.constant dense<0.000000e+00> : vector<512xf32>
    %43 = vector.multi_reduction <add>, %42, %cst_27 [0] : vector<16x512xf32> to vector<512xf32>
    %44 = vector.shape_cast %43 : vector<512xf32> to vector<1x512xf32>
    %cst_28 = arith.constant 1.600000e+01 : f32
    %45 = vector.broadcast %cst_28 : f32 to vector<1x512xf32>
    %46 = arith.divf %44, %45 : vector<1x512xf32>
    %cst_29 = arith.constant 9.99999974E-6 : f32
    %47 = vector.broadcast %cst_29 : f32 to vector<1x512xf32>
    %48 = arith.addf %46, %47 : vector<1x512xf32>
    %49 = math.rsqrt %48 : vector<1x512xf32>
    %cst_30 = arith.constant 9.99999974E-6 : f32
    %50 = vector.broadcast %cst_30 : f32 to vector<1x512xf32>
    %51 = arith.addf %46, %50 : vector<1x512xf32>
    %52 = arith.mulf %51, %49 : vector<1x512xf32>
    %53 = vector.broadcast %39 : vector<1x512xf32> to vector<16x512xf32>
    %54 = arith.subf %0, %53 : vector<16x512xf32>
    %55 = arith.mulf %49, %17 : vector<1x512xf32>
    %56 = vector.broadcast %55 : vector<1x512xf32> to vector<16x512xf32>
    %57 = arith.mulf %54, %56 : vector<16x512xf32>
    %58 = vector.broadcast %26 : vector<1x512xf32> to vector<16x512xf32>
    %59 = arith.addf %57, %58 : vector<16x512xf32>
    %60 = arith.truncf %59 : vector<16x512xf32> to vector<16x512xbf16>
    %cst_31 = arith.constant dense<0.000000e+00> : vector<96x512xf32>
    %61 = tpu.matmul %1, %60, %cst_31 {dimension_numbers = #tpu.dot_dimension_numbers<[1], [0], [0], [1], [0, 0, 1, 1], [], []>} : vector<96x16xbf16>, vector<16x512xbf16>, vector<96x512xf32> -> vector<96x512xf32>
    %62 = vector.broadcast %2 : vector<96x1xf32> to vector<96x512xf32>
    %63 = arith.addf %61, %62 : vector<96x512xf32>
    %64 = vector.extract_strided_slice %63 {offsets = [0, 0], sizes = [8, 512], strides = [1, 1]} : vector<96x512xf32> to vector<8x512xf32>
    %65 = vector.extract_strided_slice %63 {offsets = [16, 0], sizes = [8, 512], strides = [1, 1]} : vector<96x512xf32> to vector<8x512xf32>
    %66 = vector.extract_strided_slice %63 {offsets = [32, 0], sizes = [8, 512], strides = [1, 1]} : vector<96x512xf32> to vector<8x512xf32>
    %67 = vector.extract_strided_slice %64 {offsets = [0, 0], sizes = [8, 128], strides = [1, 1]} : vector<8x512xf32> to vector<8x128xf32>
    %68 = vector.extract_strided_slice %65 {offsets = [0, 0], sizes = [8, 128], strides = [1, 1]} : vector<8x512xf32> to vector<8x128xf32>
    %69 = arith.mulf %67, %68 : vector<8x128xf32>
    %c4_i32 = arith.constant 4 : i32
    %70 = tpu.dynamic_rotate %69 by %c4_i32 dim 0 : vector<8x128xf32>, i32 -> vector<8x128xf32>
    %71 = arith.addf %69, %70 : vector<8x128xf32>
    %c2_i32 = arith.constant 2 : i32
    %72 = tpu.dynamic_rotate %71 by %c2_i32 dim 0 : vector<8x128xf32>, i32 -> vector<8x128xf32>
    %73 = arith.addf %71, %72 : vector<8x128xf32>
    %c1_i32 = arith.constant 1 : i32
    %74 = tpu.dynamic_rotate %73 by %c1_i32 dim 0 : vector<8x128xf32>, i32 -> vector<8x128xf32>
    %75 = arith.addf %73, %74 : vector<8x128xf32>
    %76 = vector.extract_strided_slice %65 {offsets = [0, 128], sizes = [8, 128], strides = [1, 1]} : vector<8x512xf32> to vector<8x128xf32>
    %77 = arith.mulf %67, %76 : vector<8x128xf32>
    %c4_i32_32 = arith.constant 4 : i32
    %78 = tpu.dynamic_rotate %77 by %c4_i32_32 dim 0 : vector<8x128xf32>, i32 -> vector<8x128xf32>
    %79 = arith.addf %77, %78 : vector<8x128xf32>
    %c2_i32_33 = arith.constant 2 : i32
    %80 = tpu.dynamic_rotate %79 by %c2_i32_33 dim 0 : vector<8x128xf32>, i32 -> vector<8x128xf32>
    %81 = arith.addf %79, %80 : vector<8x128xf32>
    %c1_i32_34 = arith.constant 1 : i32
    %82 = tpu.dynamic_rotate %81 by %c1_i32_34 dim 0 : vector<8x128xf32>, i32 -> vector<8x128xf32>
    %83 = arith.addf %81, %82 : vector<8x128xf32>
    %84 = vector.extract_strided_slice %65 {offsets = [0, 256], sizes = [8, 128], strides = [1, 1]} : vector<8x512xf32> to vector<8x128xf32>
    %85 = arith.mulf %67, %84 : vector<8x128xf32>
    %c4_i32_35 = arith.constant 4 : i32
    %86 = tpu.dynamic_rotate %85 by %c4_i32_35 dim 0 : vector<8x128xf32>, i32 -> vector<8x128xf32>
    %87 = arith.addf %85, %86 : vector<8x128xf32>
    %c2_i32_36 = arith.constant 2 : i32
    %88 = tpu.dynamic_rotate %87 by %c2_i32_36 dim 0 : vector<8x128xf32>, i32 -> vector<8x128xf32>
    %89 = arith.addf %87, %88 : vector<8x128xf32>
    %c1_i32_37 = arith.constant 1 : i32
    %90 = tpu.dynamic_rotate %89 by %c1_i32_37 dim 0 : vector<8x128xf32>, i32 -> vector<8x128xf32>
    %91 = arith.addf %89, %90 : vector<8x128xf32>
    %92 = vector.extract_strided_slice %65 {offsets = [0, 384], sizes = [8, 128], strides = [1, 1]} : vector<8x512xf32> to vector<8x128xf32>
    %93 = arith.mulf %67, %92 : vector<8x128xf32>
    %c4_i32_38 = arith.constant 4 : i32
    %94 = tpu.dynamic_rotate %93 by %c4_i32_38 dim 0 : vector<8x128xf32>, i32 -> vector<8x128xf32>
    %95 = arith.addf %93, %94 : vector<8x128xf32>
    %c2_i32_39 = arith.constant 2 : i32
    %96 = tpu.dynamic_rotate %95 by %c2_i32_39 dim 0 : vector<8x128xf32>, i32 -> vector<8x128xf32>
    %97 = arith.addf %95, %96 : vector<8x128xf32>
    %c1_i32_40 = arith.constant 1 : i32
    %98 = tpu.dynamic_rotate %97 by %c1_i32_40 dim 0 : vector<8x128xf32>, i32 -> vector<8x128xf32>
    %99 = arith.addf %97, %98 : vector<8x128xf32>
    %100 = arith.maximumf %75, %83 : vector<8x128xf32>
    %101 = arith.maximumf %100, %91 : vector<8x128xf32>
    %102 = arith.maximumf %101, %99 : vector<8x128xf32>
    %103 = arith.subf %75, %102 : vector<8x128xf32>
    %104 = math.exp %103 : vector<8x128xf32>
    %105 = arith.subf %83, %102 : vector<8x128xf32>
    %106 = math.exp %105 : vector<8x128xf32>
    %107 = arith.subf %91, %102 : vector<8x128xf32>
    %108 = math.exp %107 : vector<8x128xf32>
    %109 = arith.subf %99, %102 : vector<8x128xf32>
    %110 = math.exp %109 : vector<8x128xf32>
    %111 = arith.addf %104, %106 : vector<8x128xf32>
    %112 = arith.addf %111, %108 : vector<8x128xf32>
    %113 = arith.addf %112, %110 : vector<8x128xf32>
    %114 = vector.extract_strided_slice %66 {offsets = [0, 0], sizes = [8, 128], strides = [1, 1]} : vector<8x512xf32> to vector<8x128xf32>
    %115 = arith.mulf %104, %114 : vector<8x128xf32>
    %116 = vector.extract_strided_slice %66 {offsets = [0, 128], sizes = [8, 128], strides = [1, 1]} : vector<8x512xf32> to vector<8x128xf32>
    %117 = arith.mulf %106, %116 : vector<8x128xf32>
    %118 = arith.addf %115, %117 : vector<8x128xf32>
    %119 = vector.extract_strided_slice %66 {offsets = [0, 256], sizes = [8, 128], strides = [1, 1]} : vector<8x512xf32> to vector<8x128xf32>
    %120 = arith.mulf %108, %119 : vector<8x128xf32>
    %121 = arith.addf %118, %120 : vector<8x128xf32>
    %122 = vector.extract_strided_slice %66 {offsets = [0, 384], sizes = [8, 128], strides = [1, 1]} : vector<8x512xf32> to vector<8x128xf32>
    %123 = arith.mulf %110, %122 : vector<8x128xf32>
    %124 = arith.addf %121, %123 : vector<8x128xf32>
    %125 = tpu.reciprocal %113 {approx = true} : vector<8x128xf32> -> vector<8x128xf32>
    %126 = arith.mulf %124, %125 : vector<8x128xf32>
    %c0_41 = arith.constant 0 : index
    %c0_42 = arith.constant 0 : index
    %127 = vector.load %arg14[%c0_41, %c0_42] : memref<32x512xf32, #tpu.memory_space<vmem>>, vector<8x128xf32>
    tpu.vector_store %arg14[%c0_41, %c0_42], %126 {strides = array<i32>} : memref<32x512xf32, #tpu.memory_space<vmem>>, vector<8x128xf32>,
    %128 = vector.extract_strided_slice %64 {offsets = [0, 128], sizes = [8, 128], strides = [1, 1]} : vector<8x512xf32> to vector<8x128xf32>
    %129 = vector.extract_strided_slice %65 {offsets = [0, 0], sizes = [8, 128], strides = [1, 1]} : vector<8x512xf32> to vector<8x128xf32>
    %130 = arith.mulf %128, %129 : vector<8x128xf32>
    %c4_i32_43 = arith.constant 4 : i32
    %131 = tpu.dynamic_rotate %130 by %c4_i32_43 dim 0 : vector<8x128xf32>, i32 -> vector<8x128xf32>
    %132 = arith.addf %130, %131 : vector<8x128xf32>
    %c2_i32_44 = arith.constant 2 : i32
    %133 = tpu.dynamic_rotate %132 by %c2_i32_44 dim 0 : vector<8x128xf32>, i32 -> vector<8x128xf32>
    %134 = arith.addf %132, %133 : vector<8x128xf32>
    %c1_i32_45 = arith.constant 1 : i32
    %135 = tpu.dynamic_rotate %134 by %c1_i32_45 dim 0 : vector<8x128xf32>, i32 -> vector<8x128xf32>
    %136 = arith.addf %134, %135 : vector<8x128xf32>
    %137 = vector.extract_strided_slice %65 {offsets = [0, 128], sizes = [8, 128], strides = [1, 1]} : vector<8x512xf32> to vector<8x128xf32>
    %138 = arith.mulf %128, %137 : vector<8x128xf32>
    %c4_i32_46 = arith.constant 4 : i32
    %139 = tpu.dynamic_rotate %138 by %c4_i32_46 dim 0 : vector<8x128xf32>, i32 -> vector<8x128xf32>
    %140 = arith.addf %138, %139 : vector<8x128xf32>
    %c2_i32_47 = arith.constant 2 : i32
    %141 = tpu.dynamic_rotate %140 by %c2_i32_47 dim 0 : vector<8x128xf32>, i32 -> vector<8x128xf32>
    %142 = arith.addf %140, %141 : vector<8x128xf32>
    %c1_i32_48 = arith.constant 1 : i32
    %143 = tpu.dynamic_rotate %142 by %c1_i32_48 dim 0 : vector<8x128xf32>, i32 -> vector<8x128xf32>
    %144 = arith.addf %142, %143 : vector<8x128xf32>
    %145 = vector.extract_strided_slice %65 {offsets = [0, 256], sizes = [8, 128], strides = [1, 1]} : vector<8x512xf32> to vector<8x128xf32>
    %146 = arith.mulf %128, %145 : vector<8x128xf32>
    %c4_i32_49 = arith.constant 4 : i32
    %147 = tpu.dynamic_rotate %146 by %c4_i32_49 dim 0 : vector<8x128xf32>, i32 -> vector<8x128xf32>
    %148 = arith.addf %146, %147 : vector<8x128xf32>
    %c2_i32_50 = arith.constant 2 : i32
    %149 = tpu.dynamic_rotate %148 by %c2_i32_50 dim 0 : vector<8x128xf32>, i32 -> vector<8x128xf32>
    %150 = arith.addf %148, %149 : vector<8x128xf32>
    %c1_i32_51 = arith.constant 1 : i32
    %151 = tpu.dynamic_rotate %150 by %c1_i32_51 dim 0 : vector<8x128xf32>, i32 -> vector<8x128xf32>
    %152 = arith.addf %150, %151 : vector<8x128xf32>
    %153 = vector.extract_strided_slice %65 {offsets = [0, 384], sizes = [8, 128], strides = [1, 1]} : vector<8x512xf32> to vector<8x128xf32>
    %154 = arith.mulf %128, %153 : vector<8x128xf32>
    %c4_i32_52 = arith.constant 4 : i32
    %155 = tpu.dynamic_rotate %154 by %c4_i32_52 dim 0 : vector<8x128xf32>, i32 -> vector<8x128xf32>
    %156 = arith.addf %154, %155 : vector<8x128xf32>
    %c2_i32_53 = arith.constant 2 : i32
    %157 = tpu.dynamic_rotate %156 by %c2_i32_53 dim 0 : vector<8x128xf32>, i32 -> vector<8x128xf32>
    %158 = arith.addf %156, %157 : vector<8x128xf32>
    %c1_i32_54 = arith.constant 1 : i32
    %159 = tpu.dynamic_rotate %158 by %c1_i32_54 dim 0 : vector<8x128xf32>, i32 -> vector<8x128xf32>
    %160 = arith.addf %158, %159 : vector<8x128xf32>
    %161 = arith.maximumf %136, %144 : vector<8x128xf32>
    %162 = arith.maximumf %161, %152 : vector<8x128xf32>
    %163 = arith.maximumf %162, %160 : vector<8x128xf32>
    %164 = arith.subf %136, %163 : vector<8x128xf32>
    %165 = math.exp %164 : vector<8x128xf32>
    %166 = arith.subf %144, %163 : vector<8x128xf32>
    %167 = math.exp %166 : vector<8x128xf32>
    %168 = arith.subf %152, %163 : vector<8x128xf32>
    %169 = math.exp %168 : vector<8x128xf32>
    %170 = arith.subf %160, %163 : vector<8x128xf32>
    %171 = math.exp %170 : vector<8x128xf32>
    %172 = arith.addf %165, %167 : vector<8x128xf32>
    %173 = arith.addf %172, %169 : vector<8x128xf32>
    %174 = arith.addf %173, %171 : vector<8x128xf32>
    %175 = vector.extract_strided_slice %66 {offsets = [0, 0], sizes = [8, 128], strides = [1, 1]} : vector<8x512xf32> to vector<8x128xf32>
    %176 = arith.mulf %165, %175 : vector<8x128xf32>
    %177 = vector.extract_strided_slice %66 {offsets = [0, 128], sizes = [8, 128], strides = [1, 1]} : vector<8x512xf32> to vector<8x128xf32>
    %178 = arith.mulf %167, %177 : vector<8x128xf32>
    %179 = arith.addf %176, %178 : vector<8x128xf32>
    %180 = vector.extract_strided_slice %66 {offsets = [0, 256], sizes = [8, 128], strides = [1, 1]} : vector<8x512xf32> to vector<8x128xf32>
    %181 = arith.mulf %169, %180 : vector<8x128xf32>
    %182 = arith.addf %179, %181 : vector<8x128xf32>
    %183 = vector.extract_strided_slice %66 {offsets = [0, 384], sizes = [8, 128], strides = [1, 1]} : vector<8x512xf32> to vector<8x128xf32>
    %184 = arith.mulf %171, %183 : vector<8x128xf32>
    %185 = arith.addf %182, %184 : vector<8x128xf32>
    %186 = tpu.reciprocal %174 {approx = true} : vector<8x128xf32> -> vector<8x128xf32>
    %187 = arith.mulf %185, %186 : vector<8x128xf32>
    %c0_55 = arith.constant 0 : index
    %c128 = arith.constant 128 : index
    %188 = vector.load %arg14[%c0_55, %c128] : memref<32x512xf32, #tpu.memory_space<vmem>>, vector<8x128xf32>
    tpu.vector_store %arg14[%c0_55, %c128], %187 {strides = array<i32>} : memref<32x512xf32, #tpu.memory_space<vmem>>, vector<8x128xf32>,
    %189 = vector.extract_strided_slice %64 {offsets = [0, 256], sizes = [8, 128], strides = [1, 1]} : vector<8x512xf32> to vector<8x128xf32>
    %190 = vector.extract_strided_slice %65 {offsets = [0, 0], sizes = [8, 128], strides = [1, 1]} : vector<8x512xf32> to vector<8x128xf32>
    %191 = arith.mulf %189, %190 : vector<8x128xf32>
    %c4_i32_56 = arith.constant 4 : i32
    %192 = tpu.dynamic_rotate %191 by %c4_i32_56 dim 0 : vector<8x128xf32>, i32 -> vector<8x128xf32>
    %193 = arith.addf %191, %192 : vector<8x128xf32>
    %c2_i32_57 = arith.constant 2 : i32
    %194 = tpu.dynamic_rotate %193 by %c2_i32_57 dim 0 : vector<8x128xf32>, i32 -> vector<8x128xf32>
    %195 = arith.addf %193, %194 : vector<8x128xf32>
    %c1_i32_58 = arith.constant 1 : i32
    %196 = tpu.dynamic_rotate %195 by %c1_i32_58 dim 0 : vector<8x128xf32>, i32 -> vector<8x128xf32>
    %197 = arith.addf %195, %196 : vector<8x128xf32>
    %198 = vector.extract_strided_slice %65 {offsets = [0, 128], sizes = [8, 128], strides = [1, 1]} : vector<8x512xf32> to vector<8x128xf32>
    %199 = arith.mulf %189, %198 : vector<8x128xf32>
    %c4_i32_59 = arith.constant 4 : i32
    %200 = tpu.dynamic_rotate %199 by %c4_i32_59 dim 0 : vector<8x128xf32>, i32 -> vector<8x128xf32>
    %201 = arith.addf %199, %200 : vector<8x128xf32>
    %c2_i32_60 = arith.constant 2 : i32
    %202 = tpu.dynamic_rotate %201 by %c2_i32_60 dim 0 : vector<8x128xf32>, i32 -> vector<8x128xf32>
    %203 = arith.addf %201, %202 : vector<8x128xf32>
    %c1_i32_61 = arith.constant 1 : i32
    %204 = tpu.dynamic_rotate %203 by %c1_i32_61 dim 0 : vector<8x128xf32>, i32 -> vector<8x128xf32>
    %205 = arith.addf %203, %204 : vector<8x128xf32>
    %206 = vector.extract_strided_slice %65 {offsets = [0, 256], sizes = [8, 128], strides = [1, 1]} : vector<8x512xf32> to vector<8x128xf32>
    %207 = arith.mulf %189, %206 : vector<8x128xf32>
    %c4_i32_62 = arith.constant 4 : i32
    %208 = tpu.dynamic_rotate %207 by %c4_i32_62 dim 0 : vector<8x128xf32>, i32 -> vector<8x128xf32>
    %209 = arith.addf %207, %208 : vector<8x128xf32>
    %c2_i32_63 = arith.constant 2 : i32
    %210 = tpu.dynamic_rotate %209 by %c2_i32_63 dim 0 : vector<8x128xf32>, i32 -> vector<8x128xf32>
    %211 = arith.addf %209, %210 : vector<8x128xf32>
    %c1_i32_64 = arith.constant 1 : i32
    %212 = tpu.dynamic_rotate %211 by %c1_i32_64 dim 0 : vector<8x128xf32>, i32 -> vector<8x128xf32>
    %213 = arith.addf %211, %212 : vector<8x128xf32>
    %214 = vector.extract_strided_slice %65 {offsets = [0, 384], sizes = [8, 128], strides = [1, 1]} : vector<8x512xf32> to vector<8x128xf32>
    %215 = arith.mulf %189, %214 : vector<8x128xf32>
    %c4_i32_65 = arith.constant 4 : i32
    %216 = tpu.dynamic_rotate %215 by %c4_i32_65 dim 0 : vector<8x128xf32>, i32 -> vector<8x128xf32>
    %217 = arith.addf %215, %216 : vector<8x128xf32>
    %c2_i32_66 = arith.constant 2 : i32
    %218 = tpu.dynamic_rotate %217 by %c2_i32_66 dim 0 : vector<8x128xf32>, i32 -> vector<8x128xf32>
    %219 = arith.addf %217, %218 : vector<8x128xf32>
    %c1_i32_67 = arith.constant 1 : i32
    %220 = tpu.dynamic_rotate %219 by %c1_i32_67 dim 0 : vector<8x128xf32>, i32 -> vector<8x128xf32>
    %221 = arith.addf %219, %220 : vector<8x128xf32>
    %222 = arith.maximumf %197, %205 : vector<8x128xf32>
    %223 = arith.maximumf %222, %213 : vector<8x128xf32>
    %224 = arith.maximumf %223, %221 : vector<8x128xf32>
    %225 = arith.subf %197, %224 : vector<8x128xf32>
    %226 = math.exp %225 : vector<8x128xf32>
    %227 = arith.subf %205, %224 : vector<8x128xf32>
    %228 = math.exp %227 : vector<8x128xf32>
    %229 = arith.subf %213, %224 : vector<8x128xf32>
    %230 = math.exp %229 : vector<8x128xf32>
    %231 = arith.subf %221, %224 : vector<8x128xf32>
    %232 = math.exp %231 : vector<8x128xf32>
    %233 = arith.addf %226, %228 : vector<8x128xf32>
    %234 = arith.addf %233, %230 : vector<8x128xf32>
    %235 = arith.addf %234, %232 : vector<8x128xf32>
    %236 = vector.extract_strided_slice %66 {offsets = [0, 0], sizes = [8, 128], strides = [1, 1]} : vector<8x512xf32> to vector<8x128xf32>
    %237 = arith.mulf %226, %236 : vector<8x128xf32>
    %238 = vector.extract_strided_slice %66 {offsets = [0, 128], sizes = [8, 128], strides = [1, 1]} : vector<8x512xf32> to vector<8x128xf32>
    %239 = arith.mulf %228, %238 : vector<8x128xf32>
    %240 = arith.addf %237, %239 : vector<8x128xf32>
    %241 = vector.extract_strided_slice %66 {offsets = [0, 256], sizes = [8, 128], strides = [1, 1]} : vector<8x512xf32> to vector<8x128xf32>
    %242 = arith.mulf %230, %241 : vector<8x128xf32>
    %243 = arith.addf %240, %242 : vector<8x128xf32>
    %244 = vector.extract_strided_slice %66 {offsets = [0, 384], sizes = [8, 128], strides = [1, 1]} : vector<8x512xf32> to vector<8x128xf32>
    %245 = arith.mulf %232, %244 : vector<8x128xf32>
    %246 = arith.addf %243, %245 : vector<8x128xf32>
    %247 = tpu.reciprocal %235 {approx = true} : vector<8x128xf32> -> vector<8x128xf32>
    %248 = arith.mulf %246, %247 : vector<8x128xf32>
    %c0_68 = arith.constant 0 : index
    %c256 = arith.constant 256 : index
    %249 = vector.load %arg14[%c0_68, %c256] : memref<32x512xf32, #tpu.memory_space<vmem>>, vector<8x128xf32>
    tpu.vector_store %arg14[%c0_68, %c256], %248 {strides = array<i32>} : memref<32x512xf32, #tpu.memory_space<vmem>>, vector<8x128xf32>,
    %250 = vector.extract_strided_slice %64 {offsets = [0, 384], sizes = [8, 128], strides = [1, 1]} : vector<8x512xf32> to vector<8x128xf32>
    %251 = vector.extract_strided_slice %65 {offsets = [0, 0], sizes = [8, 128], strides = [1, 1]} : vector<8x512xf32> to vector<8x128xf32>
    %252 = arith.mulf %250, %251 : vector<8x128xf32>
    %c4_i32_69 = arith.constant 4 : i32
    %253 = tpu.dynamic_rotate %252 by %c4_i32_69 dim 0 : vector<8x128xf32>, i32 -> vector<8x128xf32>
    %254 = arith.addf %252, %253 : vector<8x128xf32>
    %c2_i32_70 = arith.constant 2 : i32
    %255 = tpu.dynamic_rotate %254 by %c2_i32_70 dim 0 : vector<8x128xf32>, i32 -> vector<8x128xf32>
    %256 = arith.addf %254, %255 : vector<8x128xf32>
    %c1_i32_71 = arith.constant 1 : i32
    %257 = tpu.dynamic_rotate %256 by %c1_i32_71 dim 0 : vector<8x128xf32>, i32 -> vector<8x128xf32>
    %258 = arith.addf %256, %257 : vector<8x128xf32>
    %259 = vector.extract_strided_slice %65 {offsets = [0, 128], sizes = [8, 128], strides = [1, 1]} : vector<8x512xf32> to vector<8x128xf32>
    %260 = arith.mulf %250, %259 : vector<8x128xf32>
    %c4_i32_72 = arith.constant 4 : i32
    %261 = tpu.dynamic_rotate %260 by %c4_i32_72 dim 0 : vector<8x128xf32>, i32 -> vector<8x128xf32>
    %262 = arith.addf %260, %261 : vector<8x128xf32>
    %c2_i32_73 = arith.constant 2 : i32
    %263 = tpu.dynamic_rotate %262 by %c2_i32_73 dim 0 : vector<8x128xf32>, i32 -> vector<8x128xf32>
    %264 = arith.addf %262, %263 : vector<8x128xf32>
    %c1_i32_74 = arith.constant 1 : i32
    %265 = tpu.dynamic_rotate %264 by %c1_i32_74 dim 0 : vector<8x128xf32>, i32 -> vector<8x128xf32>
    %266 = arith.addf %264, %265 : vector<8x128xf32>
    %267 = vector.extract_strided_slice %65 {offsets = [0, 256], sizes = [8, 128], strides = [1, 1]} : vector<8x512xf32> to vector<8x128xf32>
    %268 = arith.mulf %250, %267 : vector<8x128xf32>
    %c4_i32_75 = arith.constant 4 : i32
    %269 = tpu.dynamic_rotate %268 by %c4_i32_75 dim 0 : vector<8x128xf32>, i32 -> vector<8x128xf32>
    %270 = arith.addf %268, %269 : vector<8x128xf32>
    %c2_i32_76 = arith.constant 2 : i32
    %271 = tpu.dynamic_rotate %270 by %c2_i32_76 dim 0 : vector<8x128xf32>, i32 -> vector<8x128xf32>
    %272 = arith.addf %270, %271 : vector<8x128xf32>
    %c1_i32_77 = arith.constant 1 : i32
    %273 = tpu.dynamic_rotate %272 by %c1_i32_77 dim 0 : vector<8x128xf32>, i32 -> vector<8x128xf32>
    %274 = arith.addf %272, %273 : vector<8x128xf32>
    %275 = vector.extract_strided_slice %65 {offsets = [0, 384], sizes = [8, 128], strides = [1, 1]} : vector<8x512xf32> to vector<8x128xf32>
    %276 = arith.mulf %250, %275 : vector<8x128xf32>
    %c4_i32_78 = arith.constant 4 : i32
    %277 = tpu.dynamic_rotate %276 by %c4_i32_78 dim 0 : vector<8x128xf32>, i32 -> vector<8x128xf32>
    %278 = arith.addf %276, %277 : vector<8x128xf32>
    %c2_i32_79 = arith.constant 2 : i32
    %279 = tpu.dynamic_rotate %278 by %c2_i32_79 dim 0 : vector<8x128xf32>, i32 -> vector<8x128xf32>
    %280 = arith.addf %278, %279 : vector<8x128xf32>
    %c1_i32_80 = arith.constant 1 : i32
    %281 = tpu.dynamic_rotate %280 by %c1_i32_80 dim 0 : vector<8x128xf32>, i32 -> vector<8x128xf32>
    %282 = arith.addf %280, %281 : vector<8x128xf32>
    %283 = arith.maximumf %258, %266 : vector<8x128xf32>
    %284 = arith.maximumf %283, %274 : vector<8x128xf32>
    %285 = arith.maximumf %284, %282 : vector<8x128xf32>
    %286 = arith.subf %258, %285 : vector<8x128xf32>
    %287 = math.exp %286 : vector<8x128xf32>
    %288 = arith.subf %266, %285 : vector<8x128xf32>
    %289 = math.exp %288 : vector<8x128xf32>
    %290 = arith.subf %274, %285 : vector<8x128xf32>
    %291 = math.exp %290 : vector<8x128xf32>
    %292 = arith.subf %282, %285 : vector<8x128xf32>
    %293 = math.exp %292 : vector<8x128xf32>
    %294 = arith.addf %287, %289 : vector<8x128xf32>
    %295 = arith.addf %294, %291 : vector<8x128xf32>
    %296 = arith.addf %295, %293 : vector<8x128xf32>
    %297 = vector.extract_strided_slice %66 {offsets = [0, 0], sizes = [8, 128], strides = [1, 1]} : vector<8x512xf32> to vector<8x128xf32>
    %298 = arith.mulf %287, %297 : vector<8x128xf32>
    %299 = vector.extract_strided_slice %66 {offsets = [0, 128], sizes = [8, 128], strides = [1, 1]} : vector<8x512xf32> to vector<8x128xf32>
    %300 = arith.mulf %289, %299 : vector<8x128xf32>
    %301 = arith.addf %298, %300 : vector<8x128xf32>
    %302 = vector.extract_strided_slice %66 {offsets = [0, 256], sizes = [8, 128], strides = [1, 1]} : vector<8x512xf32> to vector<8x128xf32>
    %303 = arith.mulf %291, %302 : vector<8x128xf32>
    %304 = arith.addf %301, %303 : vector<8x128xf32>
    %305 = vector.extract_strided_slice %66 {offsets = [0, 384], sizes = [8, 128], strides = [1, 1]} : vector<8x512xf32> to vector<8x128xf32>
    %306 = arith.mulf %293, %305 : vector<8x128xf32>
    %307 = arith.addf %304, %306 : vector<8x128xf32>
    %308 = tpu.reciprocal %296 {approx = true} : vector<8x128xf32> -> vector<8x128xf32>
    %309 = arith.mulf %307, %308 : vector<8x128xf32>
    %c0_81 = arith.constant 0 : index
    %c384 = arith.constant 384 : index
    %310 = vector.load %arg14[%c0_81, %c384] : memref<32x512xf32, #tpu.memory_space<vmem>>, vector<8x128xf32>
    tpu.vector_store %arg14[%c0_81, %c384], %309 {strides = array<i32>} : memref<32x512xf32, #tpu.memory_space<vmem>>, vector<8x128xf32>,
    %311 = vector.extract_strided_slice %63 {offsets = [8, 0], sizes = [8, 512], strides = [1, 1]} : vector<96x512xf32> to vector<8x512xf32>
    %312 = vector.extract_strided_slice %63 {offsets = [24, 0], sizes = [8, 512], strides = [1, 1]} : vector<96x512xf32> to vector<8x512xf32>
    %313 = vector.extract_strided_slice %63 {offsets = [40, 0], sizes = [8, 512], strides = [1, 1]} : vector<96x512xf32> to vector<8x512xf32>
    %314 = vector.extract_strided_slice %311 {offsets = [0, 0], sizes = [8, 128], strides = [1, 1]} : vector<8x512xf32> to vector<8x128xf32>
    %315 = vector.extract_strided_slice %312 {offsets = [0, 0], sizes = [8, 128], strides = [1, 1]} : vector<8x512xf32> to vector<8x128xf32>
    %316 = arith.mulf %314, %315 : vector<8x128xf32>
    %c4_i32_82 = arith.constant 4 : i32
    %317 = tpu.dynamic_rotate %316 by %c4_i32_82 dim 0 : vector<8x128xf32>, i32 -> vector<8x128xf32>
    %318 = arith.addf %316, %317 : vector<8x128xf32>
    %c2_i32_83 = arith.constant 2 : i32
    %319 = tpu.dynamic_rotate %318 by %c2_i32_83 dim 0 : vector<8x128xf32>, i32 -> vector<8x128xf32>
    %320 = arith.addf %318, %319 : vector<8x128xf32>
    %c1_i32_84 = arith.constant 1 : i32
    %321 = tpu.dynamic_rotate %320 by %c1_i32_84 dim 0 : vector<8x128xf32>, i32 -> vector<8x128xf32>
    %322 = arith.addf %320, %321 : vector<8x128xf32>
    %323 = vector.extract_strided_slice %312 {offsets = [0, 128], sizes = [8, 128], strides = [1, 1]} : vector<8x512xf32> to vector<8x128xf32>
    %324 = arith.mulf %314, %323 : vector<8x128xf32>
    %c4_i32_85 = arith.constant 4 : i32
    %325 = tpu.dynamic_rotate %324 by %c4_i32_85 dim 0 : vector<8x128xf32>, i32 -> vector<8x128xf32>
    %326 = arith.addf %324, %325 : vector<8x128xf32>
    %c2_i32_86 = arith.constant 2 : i32
    %327 = tpu.dynamic_rotate %326 by %c2_i32_86 dim 0 : vector<8x128xf32>, i32 -> vector<8x128xf32>
    %328 = arith.addf %326, %327 : vector<8x128xf32>
    %c1_i32_87 = arith.constant 1 : i32
    %329 = tpu.dynamic_rotate %328 by %c1_i32_87 dim 0 : vector<8x128xf32>, i32 -> vector<8x128xf32>
    %330 = arith.addf %328, %329 : vector<8x128xf32>
    %331 = vector.extract_strided_slice %312 {offsets = [0, 256], sizes = [8, 128], strides = [1, 1]} : vector<8x512xf32> to vector<8x128xf32>
    %332 = arith.mulf %314, %331 : vector<8x128xf32>
    %c4_i32_88 = arith.constant 4 : i32
    %333 = tpu.dynamic_rotate %332 by %c4_i32_88 dim 0 : vector<8x128xf32>, i32 -> vector<8x128xf32>
    %334 = arith.addf %332, %333 : vector<8x128xf32>
    %c2_i32_89 = arith.constant 2 : i32
    %335 = tpu.dynamic_rotate %334 by %c2_i32_89 dim 0 : vector<8x128xf32>, i32 -> vector<8x128xf32>
    %336 = arith.addf %334, %335 : vector<8x128xf32>
    %c1_i32_90 = arith.constant 1 : i32
    %337 = tpu.dynamic_rotate %336 by %c1_i32_90 dim 0 : vector<8x128xf32>, i32 -> vector<8x128xf32>
    %338 = arith.addf %336, %337 : vector<8x128xf32>
    %339 = vector.extract_strided_slice %312 {offsets = [0, 384], sizes = [8, 128], strides = [1, 1]} : vector<8x512xf32> to vector<8x128xf32>
    %340 = arith.mulf %314, %339 : vector<8x128xf32>
    %c4_i32_91 = arith.constant 4 : i32
    %341 = tpu.dynamic_rotate %340 by %c4_i32_91 dim 0 : vector<8x128xf32>, i32 -> vector<8x128xf32>
    %342 = arith.addf %340, %341 : vector<8x128xf32>
    %c2_i32_92 = arith.constant 2 : i32
    %343 = tpu.dynamic_rotate %342 by %c2_i32_92 dim 0 : vector<8x128xf32>, i32 -> vector<8x128xf32>
    %344 = arith.addf %342, %343 : vector<8x128xf32>
    %c1_i32_93 = arith.constant 1 : i32
    %345 = tpu.dynamic_rotate %344 by %c1_i32_93 dim 0 : vector<8x128xf32>, i32 -> vector<8x128xf32>
    %346 = arith.addf %344, %345 : vector<8x128xf32>
    %347 = arith.maximumf %322, %330 : vector<8x128xf32>
    %348 = arith.maximumf %347, %338 : vector<8x128xf32>
    %349 = arith.maximumf %348, %346 : vector<8x128xf32>
    %350 = arith.subf %322, %349 : vector<8x128xf32>
    %351 = math.exp %350 : vector<8x128xf32>
    %352 = arith.subf %330, %349 : vector<8x128xf32>
    %353 = math.exp %352 : vector<8x128xf32>
    %354 = arith.subf %338, %349 : vector<8x128xf32>
    %355 = math.exp %354 : vector<8x128xf32>
    %356 = arith.subf %346, %349 : vector<8x128xf32>
    %357 = math.exp %356 : vector<8x128xf32>
    %358 = arith.addf %351, %353 : vector<8x128xf32>
    %359 = arith.addf %358, %355 : vector<8x128xf32>
    %360 = arith.addf %359, %357 : vector<8x128xf32>
    %361 = vector.extract_strided_slice %313 {offsets = [0, 0], sizes = [8, 128], strides = [1, 1]} : vector<8x512xf32> to vector<8x128xf32>
    %362 = arith.mulf %351, %361 : vector<8x128xf32>
    %363 = vector.extract_strided_slice %313 {offsets = [0, 128], sizes = [8, 128], strides = [1, 1]} : vector<8x512xf32> to vector<8x128xf32>
    %364 = arith.mulf %353, %363 : vector<8x128xf32>
    %365 = arith.addf %362, %364 : vector<8x128xf32>
    %366 = vector.extract_strided_slice %313 {offsets = [0, 256], sizes = [8, 128], strides = [1, 1]} : vector<8x512xf32> to vector<8x128xf32>
    %367 = arith.mulf %355, %366 : vector<8x128xf32>
    %368 = arith.addf %365, %367 : vector<8x128xf32>
    %369 = vector.extract_strided_slice %313 {offsets = [0, 384], sizes = [8, 128], strides = [1, 1]} : vector<8x512xf32> to vector<8x128xf32>
    %370 = arith.mulf %357, %369 : vector<8x128xf32>
    %371 = arith.addf %368, %370 : vector<8x128xf32>
    %372 = tpu.reciprocal %360 {approx = true} : vector<8x128xf32> -> vector<8x128xf32>
    %373 = arith.mulf %371, %372 : vector<8x128xf32>
    %c8 = arith.constant 8 : index
    %c0_94 = arith.constant 0 : index
    %374 = vector.load %arg14[%c8, %c0_94] : memref<32x512xf32, #tpu.memory_space<vmem>>, vector<8x128xf32>
    tpu.vector_store %arg14[%c8, %c0_94], %373 {strides = array<i32>} : memref<32x512xf32, #tpu.memory_space<vmem>>, vector<8x128xf32>,
    %375 = vector.extract_strided_slice %311 {offsets = [0, 128], sizes = [8, 128], strides = [1, 1]} : vector<8x512xf32> to vector<8x128xf32>
    %376 = vector.extract_strided_slice %312 {offsets = [0, 0], sizes = [8, 128], strides = [1, 1]} : vector<8x512xf32> to vector<8x128xf32>
    %377 = arith.mulf %375, %376 : vector<8x128xf32>
    %c4_i32_95 = arith.constant 4 : i32
    %378 = tpu.dynamic_rotate %377 by %c4_i32_95 dim 0 : vector<8x128xf32>, i32 -> vector<8x128xf32>
    %379 = arith.addf %377, %378 : vector<8x128xf32>
    %c2_i32_96 = arith.constant 2 : i32
    %380 = tpu.dynamic_rotate %379 by %c2_i32_96 dim 0 : vector<8x128xf32>, i32 -> vector<8x128xf32>
    %381 = arith.addf %379, %380 : vector<8x128xf32>
    %c1_i32_97 = arith.constant 1 : i32
    %382 = tpu.dynamic_rotate %381 by %c1_i32_97 dim 0 : vector<8x128xf32>, i32 -> vector<8x128xf32>
    %383 = arith.addf %381, %382 : vector<8x128xf32>
    %384 = vector.extract_strided_slice %312 {offsets = [0, 128], sizes = [8, 128], strides = [1, 1]} : vector<8x512xf32> to vector<8x128xf32>
    %385 = arith.mulf %375, %384 : vector<8x128xf32>
    %c4_i32_98 = arith.constant 4 : i32
    %386 = tpu.dynamic_rotate %385 by %c4_i32_98 dim 0 : vector<8x128xf32>, i32 -> vector<8x128xf32>
    %387 = arith.addf %385, %386 : vector<8x128xf32>
    %c2_i32_99 = arith.constant 2 : i32
    %388 = tpu.dynamic_rotate %387 by %c2_i32_99 dim 0 : vector<8x128xf32>, i32 -> vector<8x128xf32>
    %389 = arith.addf %387, %388 : vector<8x128xf32>
    %c1_i32_100 = arith.constant 1 : i32
    %390 = tpu.dynamic_rotate %389 by %c1_i32_100 dim 0 : vector<8x128xf32>, i32 -> vector<8x128xf32>
    %391 = arith.addf %389, %390 : vector<8x128xf32>
    %392 = vector.extract_strided_slice %312 {offsets = [0, 256], sizes = [8, 128], strides = [1, 1]} : vector<8x512xf32> to vector<8x128xf32>
    %393 = arith.mulf %375, %392 : vector<8x128xf32>
    %c4_i32_101 = arith.constant 4 : i32
    %394 = tpu.dynamic_rotate %393 by %c4_i32_101 dim 0 : vector<8x128xf32>, i32 -> vector<8x128xf32>
    %395 = arith.addf %393, %394 : vector<8x128xf32>
    %c2_i32_102 = arith.constant 2 : i32
    %396 = tpu.dynamic_rotate %395 by %c2_i32_102 dim 0 : vector<8x128xf32>, i32 -> vector<8x128xf32>
    %397 = arith.addf %395, %396 : vector<8x128xf32>
    %c1_i32_103 = arith.constant 1 : i32
    %398 = tpu.dynamic_rotate %397 by %c1_i32_103 dim 0 : vector<8x128xf32>, i32 -> vector<8x128xf32>
    %399 = arith.addf %397, %398 : vector<8x128xf32>
    %400 = vector.extract_strided_slice %312 {offsets = [0, 384], sizes = [8, 128], strides = [1, 1]} : vector<8x512xf32> to vector<8x128xf32>
    %401 = arith.mulf %375, %400 : vector<8x128xf32>
    %c4_i32_104 = arith.constant 4 : i32
    %402 = tpu.dynamic_rotate %401 by %c4_i32_104 dim 0 : vector<8x128xf32>, i32 -> vector<8x128xf32>
    %403 = arith.addf %401, %402 : vector<8x128xf32>
    %c2_i32_105 = arith.constant 2 : i32
    %404 = tpu.dynamic_rotate %403 by %c2_i32_105 dim 0 : vector<8x128xf32>, i32 -> vector<8x128xf32>
    %405 = arith.addf %403, %404 : vector<8x128xf32>
    %c1_i32_106 = arith.constant 1 : i32
    %406 = tpu.dynamic_rotate %405 by %c1_i32_106 dim 0 : vector<8x128xf32>, i32 -> vector<8x128xf32>
    %407 = arith.addf %405, %406 : vector<8x128xf32>
    %408 = arith.maximumf %383, %391 : vector<8x128xf32>
    %409 = arith.maximumf %408, %399 : vector<8x128xf32>
    %410 = arith.maximumf %409, %407 : vector<8x128xf32>
    %411 = arith.subf %383, %410 : vector<8x128xf32>
    %412 = math.exp %411 : vector<8x128xf32>
    %413 = arith.subf %391, %410 : vector<8x128xf32>
    %414 = math.exp %413 : vector<8x128xf32>
    %415 = arith.subf %399, %410 : vector<8x128xf32>
    %416 = math.exp %415 : vector<8x128xf32>
    %417 = arith.subf %407, %410 : vector<8x128xf32>
    %418 = math.exp %417 : vector<8x128xf32>
    %419 = arith.addf %412, %414 : vector<8x128xf32>
    %420 = arith.addf %419, %416 : vector<8x128xf32>
    %421 = arith.addf %420, %418 : vector<8x128xf32>
    %422 = vector.extract_strided_slice %313 {offsets = [0, 0], sizes = [8, 128], strides = [1, 1]} : vector<8x512xf32> to vector<8x128xf32>
    %423 = arith.mulf %412, %422 : vector<8x128xf32>
    %424 = vector.extract_strided_slice %313 {offsets = [0, 128], sizes = [8, 128], strides = [1, 1]} : vector<8x512xf32> to vector<8x128xf32>
    %425 = arith.mulf %414, %424 : vector<8x128xf32>
    %426 = arith.addf %423, %425 : vector<8x128xf32>
    %427 = vector.extract_strided_slice %313 {offsets = [0, 256], sizes = [8, 128], strides = [1, 1]} : vector<8x512xf32> to vector<8x128xf32>
    %428 = arith.mulf %416, %427 : vector<8x128xf32>
    %429 = arith.addf %426, %428 : vector<8x128xf32>
    %430 = vector.extract_strided_slice %313 {offsets = [0, 384], sizes = [8, 128], strides = [1, 1]} : vector<8x512xf32> to vector<8x128xf32>
    %431 = arith.mulf %418, %430 : vector<8x128xf32>
    %432 = arith.addf %429, %431 : vector<8x128xf32>
    %433 = tpu.reciprocal %421 {approx = true} : vector<8x128xf32> -> vector<8x128xf32>
    %434 = arith.mulf %432, %433 : vector<8x128xf32>
    %c8_107 = arith.constant 8 : index
    %c128_108 = arith.constant 128 : index
    %435 = vector.load %arg14[%c8_107, %c128_108] : memref<32x512xf32, #tpu.memory_space<vmem>>, vector<8x128xf32>
    tpu.vector_store %arg14[%c8_107, %c128_108], %434 {strides = array<i32>} : memref<32x512xf32, #tpu.memory_space<vmem>>, vector<8x128xf32>,
    %436 = vector.extract_strided_slice %311 {offsets = [0, 256], sizes = [8, 128], strides = [1, 1]} : vector<8x512xf32> to vector<8x128xf32>
    %437 = vector.extract_strided_slice %312 {offsets = [0, 0], sizes = [8, 128], strides = [1, 1]} : vector<8x512xf32> to vector<8x128xf32>
    %438 = arith.mulf %436, %437 : vector<8x128xf32>
    %c4_i32_109 = arith.constant 4 : i32
    %439 = tpu.dynamic_rotate %438 by %c4_i32_109 dim 0 : vector<8x128xf32>, i32 -> vector<8x128xf32>
    %440 = arith.addf %438, %439 : vector<8x128xf32>
    %c2_i32_110 = arith.constant 2 : i32
    %441 = tpu.dynamic_rotate %440 by %c2_i32_110 dim 0 : vector<8x128xf32>, i32 -> vector<8x128xf32>
    %442 = arith.addf %440, %441 : vector<8x128xf32>
    %c1_i32_111 = arith.constant 1 : i32
    %443 = tpu.dynamic_rotate %442 by %c1_i32_111 dim 0 : vector<8x128xf32>, i32 -> vector<8x128xf32>
    %444 = arith.addf %442, %443 : vector<8x128xf32>
    %445 = vector.extract_strided_slice %312 {offsets = [0, 128], sizes = [8, 128], strides = [1, 1]} : vector<8x512xf32> to vector<8x128xf32>
    %446 = arith.mulf %436, %445 : vector<8x128xf32>
    %c4_i32_112 = arith.constant 4 : i32
    %447 = tpu.dynamic_rotate %446 by %c4_i32_112 dim 0 : vector<8x128xf32>, i32 -> vector<8x128xf32>
    %448 = arith.addf %446, %447 : vector<8x128xf32>
    %c2_i32_113 = arith.constant 2 : i32
    %449 = tpu.dynamic_rotate %448 by %c2_i32_113 dim 0 : vector<8x128xf32>, i32 -> vector<8x128xf32>
    %450 = arith.addf %448, %449 : vector<8x128xf32>
    %c1_i32_114 = arith.constant 1 : i32
    %451 = tpu.dynamic_rotate %450 by %c1_i32_114 dim 0 : vector<8x128xf32>, i32 -> vector<8x128xf32>
    %452 = arith.addf %450, %451 : vector<8x128xf32>
    %453 = vector.extract_strided_slice %312 {offsets = [0, 256], sizes = [8, 128], strides = [1, 1]} : vector<8x512xf32> to vector<8x128xf32>
    %454 = arith.mulf %436, %453 : vector<8x128xf32>
    %c4_i32_115 = arith.constant 4 : i32
    %455 = tpu.dynamic_rotate %454 by %c4_i32_115 dim 0 : vector<8x128xf32>, i32 -> vector<8x128xf32>
    %456 = arith.addf %454, %455 : vector<8x128xf32>
    %c2_i32_116 = arith.constant 2 : i32
    %457 = tpu.dynamic_rotate %456 by %c2_i32_116 dim 0 : vector<8x128xf32>, i32 -> vector<8x128xf32>
    %458 = arith.addf %456, %457 : vector<8x128xf32>
    %c1_i32_117 = arith.constant 1 : i32
    %459 = tpu.dynamic_rotate %458 by %c1_i32_117 dim 0 : vector<8x128xf32>, i32 -> vector<8x128xf32>
    %460 = arith.addf %458, %459 : vector<8x128xf32>
    %461 = vector.extract_strided_slice %312 {offsets = [0, 384], sizes = [8, 128], strides = [1, 1]} : vector<8x512xf32> to vector<8x128xf32>
    %462 = arith.mulf %436, %461 : vector<8x128xf32>
    %c4_i32_118 = arith.constant 4 : i32
    %463 = tpu.dynamic_rotate %462 by %c4_i32_118 dim 0 : vector<8x128xf32>, i32 -> vector<8x128xf32>
    %464 = arith.addf %462, %463 : vector<8x128xf32>
    %c2_i32_119 = arith.constant 2 : i32
    %465 = tpu.dynamic_rotate %464 by %c2_i32_119 dim 0 : vector<8x128xf32>, i32 -> vector<8x128xf32>
    %466 = arith.addf %464, %465 : vector<8x128xf32>
    %c1_i32_120 = arith.constant 1 : i32
    %467 = tpu.dynamic_rotate %466 by %c1_i32_120 dim 0 : vector<8x128xf32>, i32 -> vector<8x128xf32>
    %468 = arith.addf %466, %467 : vector<8x128xf32>
    %469 = arith.maximumf %444, %452 : vector<8x128xf32>
    %470 = arith.maximumf %469, %460 : vector<8x128xf32>
    %471 = arith.maximumf %470, %468 : vector<8x128xf32>
    %472 = arith.subf %444, %471 : vector<8x128xf32>
    %473 = math.exp %472 : vector<8x128xf32>
    %474 = arith.subf %452, %471 : vector<8x128xf32>
    %475 = math.exp %474 : vector<8x128xf32>
    %476 = arith.subf %460, %471 : vector<8x128xf32>
    %477 = math.exp %476 : vector<8x128xf32>
    %478 = arith.subf %468, %471 : vector<8x128xf32>
    %479 = math.exp %478 : vector<8x128xf32>
    %480 = arith.addf %473, %475 : vector<8x128xf32>
    %481 = arith.addf %480, %477 : vector<8x128xf32>
    %482 = arith.addf %481, %479 : vector<8x128xf32>
    %483 = vector.extract_strided_slice %313 {offsets = [0, 0], sizes = [8, 128], strides = [1, 1]} : vector<8x512xf32> to vector<8x128xf32>
    %484 = arith.mulf %473, %483 : vector<8x128xf32>
    %485 = vector.extract_strided_slice %313 {offsets = [0, 128], sizes = [8, 128], strides = [1, 1]} : vector<8x512xf32> to vector<8x128xf32>
    %486 = arith.mulf %475, %485 : vector<8x128xf32>
    %487 = arith.addf %484, %486 : vector<8x128xf32>
    %488 = vector.extract_strided_slice %313 {offsets = [0, 256], sizes = [8, 128], strides = [1, 1]} : vector<8x512xf32> to vector<8x128xf32>
    %489 = arith.mulf %477, %488 : vector<8x128xf32>
    %490 = arith.addf %487, %489 : vector<8x128xf32>
    %491 = vector.extract_strided_slice %313 {offsets = [0, 384], sizes = [8, 128], strides = [1, 1]} : vector<8x512xf32> to vector<8x128xf32>
    %492 = arith.mulf %479, %491 : vector<8x128xf32>
    %493 = arith.addf %490, %492 : vector<8x128xf32>
    %494 = tpu.reciprocal %482 {approx = true} : vector<8x128xf32> -> vector<8x128xf32>
    %495 = arith.mulf %493, %494 : vector<8x128xf32>
    %c8_121 = arith.constant 8 : index
    %c256_122 = arith.constant 256 : index
    %496 = vector.load %arg14[%c8_121, %c256_122] : memref<32x512xf32, #tpu.memory_space<vmem>>, vector<8x128xf32>
    tpu.vector_store %arg14[%c8_121, %c256_122], %495 {strides = array<i32>} : memref<32x512xf32, #tpu.memory_space<vmem>>, vector<8x128xf32>,
    %497 = vector.extract_strided_slice %311 {offsets = [0, 384], sizes = [8, 128], strides = [1, 1]} : vector<8x512xf32> to vector<8x128xf32>
    %498 = vector.extract_strided_slice %312 {offsets = [0, 0], sizes = [8, 128], strides = [1, 1]} : vector<8x512xf32> to vector<8x128xf32>
    %499 = arith.mulf %497, %498 : vector<8x128xf32>
    %c4_i32_123 = arith.constant 4 : i32
    %500 = tpu.dynamic_rotate %499 by %c4_i32_123 dim 0 : vector<8x128xf32>, i32 -> vector<8x128xf32>
    %501 = arith.addf %499, %500 : vector<8x128xf32>
    %c2_i32_124 = arith.constant 2 : i32
    %502 = tpu.dynamic_rotate %501 by %c2_i32_124 dim 0 : vector<8x128xf32>, i32 -> vector<8x128xf32>
    %503 = arith.addf %501, %502 : vector<8x128xf32>
    %c1_i32_125 = arith.constant 1 : i32
    %504 = tpu.dynamic_rotate %503 by %c1_i32_125 dim 0 : vector<8x128xf32>, i32 -> vector<8x128xf32>
    %505 = arith.addf %503, %504 : vector<8x128xf32>
    %506 = vector.extract_strided_slice %312 {offsets = [0, 128], sizes = [8, 128], strides = [1, 1]} : vector<8x512xf32> to vector<8x128xf32>
    %507 = arith.mulf %497, %506 : vector<8x128xf32>
    %c4_i32_126 = arith.constant 4 : i32
    %508 = tpu.dynamic_rotate %507 by %c4_i32_126 dim 0 : vector<8x128xf32>, i32 -> vector<8x128xf32>
    %509 = arith.addf %507, %508 : vector<8x128xf32>
    %c2_i32_127 = arith.constant 2 : i32
    %510 = tpu.dynamic_rotate %509 by %c2_i32_127 dim 0 : vector<8x128xf32>, i32 -> vector<8x128xf32>
    %511 = arith.addf %509, %510 : vector<8x128xf32>
    %c1_i32_128 = arith.constant 1 : i32
    %512 = tpu.dynamic_rotate %511 by %c1_i32_128 dim 0 : vector<8x128xf32>, i32 -> vector<8x128xf32>
    %513 = arith.addf %511, %512 : vector<8x128xf32>
    %514 = vector.extract_strided_slice %312 {offsets = [0, 256], sizes = [8, 128], strides = [1, 1]} : vector<8x512xf32> to vector<8x128xf32>
    %515 = arith.mulf %497, %514 : vector<8x128xf32>
    %c4_i32_129 = arith.constant 4 : i32
    %516 = tpu.dynamic_rotate %515 by %c4_i32_129 dim 0 : vector<8x128xf32>, i32 -> vector<8x128xf32>
    %517 = arith.addf %515, %516 : vector<8x128xf32>
    %c2_i32_130 = arith.constant 2 : i32
    %518 = tpu.dynamic_rotate %517 by %c2_i32_130 dim 0 : vector<8x128xf32>, i32 -> vector<8x128xf32>
    %519 = arith.addf %517, %518 : vector<8x128xf32>
    %c1_i32_131 = arith.constant 1 : i32
    %520 = tpu.dynamic_rotate %519 by %c1_i32_131 dim 0 : vector<8x128xf32>, i32 -> vector<8x128xf32>
    %521 = arith.addf %519, %520 : vector<8x128xf32>
    %522 = vector.extract_strided_slice %312 {offsets = [0, 384], sizes = [8, 128], strides = [1, 1]} : vector<8x512xf32> to vector<8x128xf32>
    %523 = arith.mulf %497, %522 : vector<8x128xf32>
    %c4_i32_132 = arith.constant 4 : i32
    %524 = tpu.dynamic_rotate %523 by %c4_i32_132 dim 0 : vector<8x128xf32>, i32 -> vector<8x128xf32>
    %525 = arith.addf %523, %524 : vector<8x128xf32>
    %c2_i32_133 = arith.constant 2 : i32
    %526 = tpu.dynamic_rotate %525 by %c2_i32_133 dim 0 : vector<8x128xf32>, i32 -> vector<8x128xf32>
    %527 = arith.addf %525, %526 : vector<8x128xf32>
    %c1_i32_134 = arith.constant 1 : i32
    %528 = tpu.dynamic_rotate %527 by %c1_i32_134 dim 0 : vector<8x128xf32>, i32 -> vector<8x128xf32>
    %529 = arith.addf %527, %528 : vector<8x128xf32>
    %530 = arith.maximumf %505, %513 : vector<8x128xf32>
    %531 = arith.maximumf %530, %521 : vector<8x128xf32>
    %532 = arith.maximumf %531, %529 : vector<8x128xf32>
    %533 = arith.subf %505, %532 : vector<8x128xf32>
    %534 = math.exp %533 : vector<8x128xf32>
    %535 = arith.subf %513, %532 : vector<8x128xf32>
    %536 = math.exp %535 : vector<8x128xf32>
    %537 = arith.subf %521, %532 : vector<8x128xf32>
    %538 = math.exp %537 : vector<8x128xf32>
    %539 = arith.subf %529, %532 : vector<8x128xf32>
    %540 = math.exp %539 : vector<8x128xf32>
    %541 = arith.addf %534, %536 : vector<8x128xf32>
    %542 = arith.addf %541, %538 : vector<8x128xf32>
    %543 = arith.addf %542, %540 : vector<8x128xf32>
    %544 = vector.extract_strided_slice %313 {offsets = [0, 0], sizes = [8, 128], strides = [1, 1]} : vector<8x512xf32> to vector<8x128xf32>
    %545 = arith.mulf %534, %544 : vector<8x128xf32>
    %546 = vector.extract_strided_slice %313 {offsets = [0, 128], sizes = [8, 128], strides = [1, 1]} : vector<8x512xf32> to vector<8x128xf32>
    %547 = arith.mulf %536, %546 : vector<8x128xf32>
    %548 = arith.addf %545, %547 : vector<8x128xf32>
    %549 = vector.extract_strided_slice %313 {offsets = [0, 256], sizes = [8, 128], strides = [1, 1]} : vector<8x512xf32> to vector<8x128xf32>
    %550 = arith.mulf %538, %549 : vector<8x128xf32>
    %551 = arith.addf %548, %550 : vector<8x128xf32>
    %552 = vector.extract_strided_slice %313 {offsets = [0, 384], sizes = [8, 128], strides = [1, 1]} : vector<8x512xf32> to vector<8x128xf32>
    %553 = arith.mulf %540, %552 : vector<8x128xf32>
    %554 = arith.addf %551, %553 : vector<8x128xf32>
    %555 = tpu.reciprocal %543 {approx = true} : vector<8x128xf32> -> vector<8x128xf32>
    %556 = arith.mulf %554, %555 : vector<8x128xf32>
    %c8_135 = arith.constant 8 : index
    %c384_136 = arith.constant 384 : index
    %557 = vector.load %arg14[%c8_135, %c384_136] : memref<32x512xf32, #tpu.memory_space<vmem>>, vector<8x128xf32>
    tpu.vector_store %arg14[%c8_135, %c384_136], %556 {strides = array<i32>} : memref<32x512xf32, #tpu.memory_space<vmem>>, vector<8x128xf32>,
    %558 = vector.extract_strided_slice %63 {offsets = [48, 0], sizes = [8, 512], strides = [1, 1]} : vector<96x512xf32> to vector<8x512xf32>
    %559 = vector.extract_strided_slice %63 {offsets = [64, 0], sizes = [8, 512], strides = [1, 1]} : vector<96x512xf32> to vector<8x512xf32>
    %560 = vector.extract_strided_slice %63 {offsets = [80, 0], sizes = [8, 512], strides = [1, 1]} : vector<96x512xf32> to vector<8x512xf32>
    %561 = vector.extract_strided_slice %558 {offsets = [0, 0], sizes = [8, 128], strides = [1, 1]} : vector<8x512xf32> to vector<8x128xf32>
    %562 = vector.extract_strided_slice %559 {offsets = [0, 0], sizes = [8, 128], strides = [1, 1]} : vector<8x512xf32> to vector<8x128xf32>
    %563 = arith.mulf %561, %562 : vector<8x128xf32>
    %c4_i32_137 = arith.constant 4 : i32
    %564 = tpu.dynamic_rotate %563 by %c4_i32_137 dim 0 : vector<8x128xf32>, i32 -> vector<8x128xf32>
    %565 = arith.addf %563, %564 : vector<8x128xf32>
    %c2_i32_138 = arith.constant 2 : i32
    %566 = tpu.dynamic_rotate %565 by %c2_i32_138 dim 0 : vector<8x128xf32>, i32 -> vector<8x128xf32>
    %567 = arith.addf %565, %566 : vector<8x128xf32>
    %c1_i32_139 = arith.constant 1 : i32
    %568 = tpu.dynamic_rotate %567 by %c1_i32_139 dim 0 : vector<8x128xf32>, i32 -> vector<8x128xf32>
    %569 = arith.addf %567, %568 : vector<8x128xf32>
    %570 = vector.extract_strided_slice %559 {offsets = [0, 128], sizes = [8, 128], strides = [1, 1]} : vector<8x512xf32> to vector<8x128xf32>
    %571 = arith.mulf %561, %570 : vector<8x128xf32>
    %c4_i32_140 = arith.constant 4 : i32
    %572 = tpu.dynamic_rotate %571 by %c4_i32_140 dim 0 : vector<8x128xf32>, i32 -> vector<8x128xf32>
    %573 = arith.addf %571, %572 : vector<8x128xf32>
    %c2_i32_141 = arith.constant 2 : i32
    %574 = tpu.dynamic_rotate %573 by %c2_i32_141 dim 0 : vector<8x128xf32>, i32 -> vector<8x128xf32>
    %575 = arith.addf %573, %574 : vector<8x128xf32>
    %c1_i32_142 = arith.constant 1 : i32
    %576 = tpu.dynamic_rotate %575 by %c1_i32_142 dim 0 : vector<8x128xf32>, i32 -> vector<8x128xf32>
    %577 = arith.addf %575, %576 : vector<8x128xf32>
    %578 = vector.extract_strided_slice %559 {offsets = [0, 256], sizes = [8, 128], strides = [1, 1]} : vector<8x512xf32> to vector<8x128xf32>
    %579 = arith.mulf %561, %578 : vector<8x128xf32>
    %c4_i32_143 = arith.constant 4 : i32
    %580 = tpu.dynamic_rotate %579 by %c4_i32_143 dim 0 : vector<8x128xf32>, i32 -> vector<8x128xf32>
    %581 = arith.addf %579, %580 : vector<8x128xf32>
    %c2_i32_144 = arith.constant 2 : i32
    %582 = tpu.dynamic_rotate %581 by %c2_i32_144 dim 0 : vector<8x128xf32>, i32 -> vector<8x128xf32>
    %583 = arith.addf %581, %582 : vector<8x128xf32>
    %c1_i32_145 = arith.constant 1 : i32
    %584 = tpu.dynamic_rotate %583 by %c1_i32_145 dim 0 : vector<8x128xf32>, i32 -> vector<8x128xf32>
    %585 = arith.addf %583, %584 : vector<8x128xf32>
    %586 = vector.extract_strided_slice %559 {offsets = [0, 384], sizes = [8, 128], strides = [1, 1]} : vector<8x512xf32> to vector<8x128xf32>
    %587 = arith.mulf %561, %586 : vector<8x128xf32>
    %c4_i32_146 = arith.constant 4 : i32
    %588 = tpu.dynamic_rotate %587 by %c4_i32_146 dim 0 : vector<8x128xf32>, i32 -> vector<8x128xf32>
    %589 = arith.addf %587, %588 : vector<8x128xf32>
    %c2_i32_147 = arith.constant 2 : i32
    %590 = tpu.dynamic_rotate %589 by %c2_i32_147 dim 0 : vector<8x128xf32>, i32 -> vector<8x128xf32>
    %591 = arith.addf %589, %590 : vector<8x128xf32>
    %c1_i32_148 = arith.constant 1 : i32
    %592 = tpu.dynamic_rotate %591 by %c1_i32_148 dim 0 : vector<8x128xf32>, i32 -> vector<8x128xf32>
    %593 = arith.addf %591, %592 : vector<8x128xf32>
    %594 = arith.maximumf %569, %577 : vector<8x128xf32>
    %595 = arith.maximumf %594, %585 : vector<8x128xf32>
    %596 = arith.maximumf %595, %593 : vector<8x128xf32>
    %597 = arith.subf %569, %596 : vector<8x128xf32>
    %598 = math.exp %597 : vector<8x128xf32>
    %599 = arith.subf %577, %596 : vector<8x128xf32>
    %600 = math.exp %599 : vector<8x128xf32>
    %601 = arith.subf %585, %596 : vector<8x128xf32>
    %602 = math.exp %601 : vector<8x128xf32>
    %603 = arith.subf %593, %596 : vector<8x128xf32>
    %604 = math.exp %603 : vector<8x128xf32>
    %605 = arith.addf %598, %600 : vector<8x128xf32>
    %606 = arith.addf %605, %602 : vector<8x128xf32>
    %607 = arith.addf %606, %604 : vector<8x128xf32>
    %608 = vector.extract_strided_slice %560 {offsets = [0, 0], sizes = [8, 128], strides = [1, 1]} : vector<8x512xf32> to vector<8x128xf32>
    %609 = arith.mulf %598, %608 : vector<8x128xf32>
    %610 = vector.extract_strided_slice %560 {offsets = [0, 128], sizes = [8, 128], strides = [1, 1]} : vector<8x512xf32> to vector<8x128xf32>
    %611 = arith.mulf %600, %610 : vector<8x128xf32>
    %612 = arith.addf %609, %611 : vector<8x128xf32>
    %613 = vector.extract_strided_slice %560 {offsets = [0, 256], sizes = [8, 128], strides = [1, 1]} : vector<8x512xf32> to vector<8x128xf32>
    %614 = arith.mulf %602, %613 : vector<8x128xf32>
    %615 = arith.addf %612, %614 : vector<8x128xf32>
    %616 = vector.extract_strided_slice %560 {offsets = [0, 384], sizes = [8, 128], strides = [1, 1]} : vector<8x512xf32> to vector<8x128xf32>
    %617 = arith.mulf %604, %616 : vector<8x128xf32>
    %618 = arith.addf %615, %617 : vector<8x128xf32>
    %619 = tpu.reciprocal %607 {approx = true} : vector<8x128xf32> -> vector<8x128xf32>
    %620 = arith.mulf %618, %619 : vector<8x128xf32>
    %c16 = arith.constant 16 : index
    %c0_149 = arith.constant 0 : index
    %621 = vector.load %arg14[%c16, %c0_149] : memref<32x512xf32, #tpu.memory_space<vmem>>, vector<8x128xf32>
    tpu.vector_store %arg14[%c16, %c0_149], %620 {strides = array<i32>} : memref<32x512xf32, #tpu.memory_space<vmem>>, vector<8x128xf32>,
    %622 = vector.extract_strided_slice %558 {offsets = [0, 128], sizes = [8, 128], strides = [1, 1]} : vector<8x512xf32> to vector<8x128xf32>
    %623 = vector.extract_strided_slice %559 {offsets = [0, 0], sizes = [8, 128], strides = [1, 1]} : vector<8x512xf32> to vector<8x128xf32>
    %624 = arith.mulf %622, %623 : vector<8x128xf32>
    %c4_i32_150 = arith.constant 4 : i32
    %625 = tpu.dynamic_rotate %624 by %c4_i32_150 dim 0 : vector<8x128xf32>, i32 -> vector<8x128xf32>
    %626 = arith.addf %624, %625 : vector<8x128xf32>
    %c2_i32_151 = arith.constant 2 : i32
    %627 = tpu.dynamic_rotate %626 by %c2_i32_151 dim 0 : vector<8x128xf32>, i32 -> vector<8x128xf32>
    %628 = arith.addf %626, %627 : vector<8x128xf32>
    %c1_i32_152 = arith.constant 1 : i32
    %629 = tpu.dynamic_rotate %628 by %c1_i32_152 dim 0 : vector<8x128xf32>, i32 -> vector<8x128xf32>
    %630 = arith.addf %628, %629 : vector<8x128xf32>
    %631 = vector.extract_strided_slice %559 {offsets = [0, 128], sizes = [8, 128], strides = [1, 1]} : vector<8x512xf32> to vector<8x128xf32>
    %632 = arith.mulf %622, %631 : vector<8x128xf32>
    %c4_i32_153 = arith.constant 4 : i32
    %633 = tpu.dynamic_rotate %632 by %c4_i32_153 dim 0 : vector<8x128xf32>, i32 -> vector<8x128xf32>
    %634 = arith.addf %632, %633 : vector<8x128xf32>
    %c2_i32_154 = arith.constant 2 : i32
    %635 = tpu.dynamic_rotate %634 by %c2_i32_154 dim 0 : vector<8x128xf32>, i32 -> vector<8x128xf32>
    %636 = arith.addf %634, %635 : vector<8x128xf32>
    %c1_i32_155 = arith.constant 1 : i32
    %637 = tpu.dynamic_rotate %636 by %c1_i32_155 dim 0 : vector<8x128xf32>, i32 -> vector<8x128xf32>
    %638 = arith.addf %636, %637 : vector<8x128xf32>
    %639 = vector.extract_strided_slice %559 {offsets = [0, 256], sizes = [8, 128], strides = [1, 1]} : vector<8x512xf32> to vector<8x128xf32>
    %640 = arith.mulf %622, %639 : vector<8x128xf32>
    %c4_i32_156 = arith.constant 4 : i32
    %641 = tpu.dynamic_rotate %640 by %c4_i32_156 dim 0 : vector<8x128xf32>, i32 -> vector<8x128xf32>
    %642 = arith.addf %640, %641 : vector<8x128xf32>
    %c2_i32_157 = arith.constant 2 : i32
    %643 = tpu.dynamic_rotate %642 by %c2_i32_157 dim 0 : vector<8x128xf32>, i32 -> vector<8x128xf32>
    %644 = arith.addf %642, %643 : vector<8x128xf32>
    %c1_i32_158 = arith.constant 1 : i32
    %645 = tpu.dynamic_rotate %644 by %c1_i32_158 dim 0 : vector<8x128xf32>, i32 -> vector<8x128xf32>
    %646 = arith.addf %644, %645 : vector<8x128xf32>
    %647 = vector.extract_strided_slice %559 {offsets = [0, 384], sizes = [8, 128], strides = [1, 1]} : vector<8x512xf32> to vector<8x128xf32>
    %648 = arith.mulf %622, %647 : vector<8x128xf32>
    %c4_i32_159 = arith.constant 4 : i32
    %649 = tpu.dynamic_rotate %648 by %c4_i32_159 dim 0 : vector<8x128xf32>, i32 -> vector<8x128xf32>
    %650 = arith.addf %648, %649 : vector<8x128xf32>
    %c2_i32_160 = arith.constant 2 : i32
    %651 = tpu.dynamic_rotate %650 by %c2_i32_160 dim 0 : vector<8x128xf32>, i32 -> vector<8x128xf32>
    %652 = arith.addf %650, %651 : vector<8x128xf32>
    %c1_i32_161 = arith.constant 1 : i32
    %653 = tpu.dynamic_rotate %652 by %c1_i32_161 dim 0 : vector<8x128xf32>, i32 -> vector<8x128xf32>
    %654 = arith.addf %652, %653 : vector<8x128xf32>
    %655 = arith.maximumf %630, %638 : vector<8x128xf32>
    %656 = arith.maximumf %655, %646 : vector<8x128xf32>
    %657 = arith.maximumf %656, %654 : vector<8x128xf32>
    %658 = arith.subf %630, %657 : vector<8x128xf32>
    %659 = math.exp %658 : vector<8x128xf32>
    %660 = arith.subf %638, %657 : vector<8x128xf32>
    %661 = math.exp %660 : vector<8x128xf32>
    %662 = arith.subf %646, %657 : vector<8x128xf32>
    %663 = math.exp %662 : vector<8x128xf32>
    %664 = arith.subf %654, %657 : vector<8x128xf32>
    %665 = math.exp %664 : vector<8x128xf32>
    %666 = arith.addf %659, %661 : vector<8x128xf32>
    %667 = arith.addf %666, %663 : vector<8x128xf32>
    %668 = arith.addf %667, %665 : vector<8x128xf32>
    %669 = vector.extract_strided_slice %560 {offsets = [0, 0], sizes = [8, 128], strides = [1, 1]} : vector<8x512xf32> to vector<8x128xf32>
    %670 = arith.mulf %659, %669 : vector<8x128xf32>
    %671 = vector.extract_strided_slice %560 {offsets = [0, 128], sizes = [8, 128], strides = [1, 1]} : vector<8x512xf32> to vector<8x128xf32>
    %672 = arith.mulf %661, %671 : vector<8x128xf32>
    %673 = arith.addf %670, %672 : vector<8x128xf32>
    %674 = vector.extract_strided_slice %560 {offsets = [0, 256], sizes = [8, 128], strides = [1, 1]} : vector<8x512xf32> to vector<8x128xf32>
    %675 = arith.mulf %663, %674 : vector<8x128xf32>
    %676 = arith.addf %673, %675 : vector<8x128xf32>
    %677 = vector.extract_strided_slice %560 {offsets = [0, 384], sizes = [8, 128], strides = [1, 1]} : vector<8x512xf32> to vector<8x128xf32>
    %678 = arith.mulf %665, %677 : vector<8x128xf32>
    %679 = arith.addf %676, %678 : vector<8x128xf32>
    %680 = tpu.reciprocal %668 {approx = true} : vector<8x128xf32> -> vector<8x128xf32>
    %681 = arith.mulf %679, %680 : vector<8x128xf32>
    %c16_162 = arith.constant 16 : index
    %c128_163 = arith.constant 128 : index
    %682 = vector.load %arg14[%c16_162, %c128_163] : memref<32x512xf32, #tpu.memory_space<vmem>>, vector<8x128xf32>
    tpu.vector_store %arg14[%c16_162, %c128_163], %681 {strides = array<i32>} : memref<32x512xf32, #tpu.memory_space<vmem>>, vector<8x128xf32>,
    %683 = vector.extract_strided_slice %558 {offsets = [0, 256], sizes = [8, 128], strides = [1, 1]} : vector<8x512xf32> to vector<8x128xf32>
    %684 = vector.extract_strided_slice %559 {offsets = [0, 0], sizes = [8, 128], strides = [1, 1]} : vector<8x512xf32> to vector<8x128xf32>
    %685 = arith.mulf %683, %684 : vector<8x128xf32>
    %c4_i32_164 = arith.constant 4 : i32
    %686 = tpu.dynamic_rotate %685 by %c4_i32_164 dim 0 : vector<8x128xf32>, i32 -> vector<8x128xf32>
    %687 = arith.addf %685, %686 : vector<8x128xf32>
    %c2_i32_165 = arith.constant 2 : i32
    %688 = tpu.dynamic_rotate %687 by %c2_i32_165 dim 0 : vector<8x128xf32>, i32 -> vector<8x128xf32>
    %689 = arith.addf %687, %688 : vector<8x128xf32>
    %c1_i32_166 = arith.constant 1 : i32
    %690 = tpu.dynamic_rotate %689 by %c1_i32_166 dim 0 : vector<8x128xf32>, i32 -> vector<8x128xf32>
    %691 = arith.addf %689, %690 : vector<8x128xf32>
    %692 = vector.extract_strided_slice %559 {offsets = [0, 128], sizes = [8, 128], strides = [1, 1]} : vector<8x512xf32> to vector<8x128xf32>
    %693 = arith.mulf %683, %692 : vector<8x128xf32>
    %c4_i32_167 = arith.constant 4 : i32
    %694 = tpu.dynamic_rotate %693 by %c4_i32_167 dim 0 : vector<8x128xf32>, i32 -> vector<8x128xf32>
    %695 = arith.addf %693, %694 : vector<8x128xf32>
    %c2_i32_168 = arith.constant 2 : i32
    %696 = tpu.dynamic_rotate %695 by %c2_i32_168 dim 0 : vector<8x128xf32>, i32 -> vector<8x128xf32>
    %697 = arith.addf %695, %696 : vector<8x128xf32>
    %c1_i32_169 = arith.constant 1 : i32
    %698 = tpu.dynamic_rotate %697 by %c1_i32_169 dim 0 : vector<8x128xf32>, i32 -> vector<8x128xf32>
    %699 = arith.addf %697, %698 : vector<8x128xf32>
    %700 = vector.extract_strided_slice %559 {offsets = [0, 256], sizes = [8, 128], strides = [1, 1]} : vector<8x512xf32> to vector<8x128xf32>
    %701 = arith.mulf %683, %700 : vector<8x128xf32>
    %c4_i32_170 = arith.constant 4 : i32
    %702 = tpu.dynamic_rotate %701 by %c4_i32_170 dim 0 : vector<8x128xf32>, i32 -> vector<8x128xf32>
    %703 = arith.addf %701, %702 : vector<8x128xf32>
    %c2_i32_171 = arith.constant 2 : i32
    %704 = tpu.dynamic_rotate %703 by %c2_i32_171 dim 0 : vector<8x128xf32>, i32 -> vector<8x128xf32>
    %705 = arith.addf %703, %704 : vector<8x128xf32>
    %c1_i32_172 = arith.constant 1 : i32
    %706 = tpu.dynamic_rotate %705 by %c1_i32_172 dim 0 : vector<8x128xf32>, i32 -> vector<8x128xf32>
    %707 = arith.addf %705, %706 : vector<8x128xf32>
    %708 = vector.extract_strided_slice %559 {offsets = [0, 384], sizes = [8, 128], strides = [1, 1]} : vector<8x512xf32> to vector<8x128xf32>
    %709 = arith.mulf %683, %708 : vector<8x128xf32>
    %c4_i32_173 = arith.constant 4 : i32
    %710 = tpu.dynamic_rotate %709 by %c4_i32_173 dim 0 : vector<8x128xf32>, i32 -> vector<8x128xf32>
    %711 = arith.addf %709, %710 : vector<8x128xf32>
    %c2_i32_174 = arith.constant 2 : i32
    %712 = tpu.dynamic_rotate %711 by %c2_i32_174 dim 0 : vector<8x128xf32>, i32 -> vector<8x128xf32>
    %713 = arith.addf %711, %712 : vector<8x128xf32>
    %c1_i32_175 = arith.constant 1 : i32
    %714 = tpu.dynamic_rotate %713 by %c1_i32_175 dim 0 : vector<8x128xf32>, i32 -> vector<8x128xf32>
    %715 = arith.addf %713, %714 : vector<8x128xf32>
    %716 = arith.maximumf %691, %699 : vector<8x128xf32>
    %717 = arith.maximumf %716, %707 : vector<8x128xf32>
    %718 = arith.maximumf %717, %715 : vector<8x128xf32>
    %719 = arith.subf %691, %718 : vector<8x128xf32>
    %720 = math.exp %719 : vector<8x128xf32>
    %721 = arith.subf %699, %718 : vector<8x128xf32>
    %722 = math.exp %721 : vector<8x128xf32>
    %723 = arith.subf %707, %718 : vector<8x128xf32>
    %724 = math.exp %723 : vector<8x128xf32>
    %725 = arith.subf %715, %718 : vector<8x128xf32>
    %726 = math.exp %725 : vector<8x128xf32>
    %727 = arith.addf %720, %722 : vector<8x128xf32>
    %728 = arith.addf %727, %724 : vector<8x128xf32>
    %729 = arith.addf %728, %726 : vector<8x128xf32>
    %730 = vector.extract_strided_slice %560 {offsets = [0, 0], sizes = [8, 128], strides = [1, 1]} : vector<8x512xf32> to vector<8x128xf32>
    %731 = arith.mulf %720, %730 : vector<8x128xf32>
    %732 = vector.extract_strided_slice %560 {offsets = [0, 128], sizes = [8, 128], strides = [1, 1]} : vector<8x512xf32> to vector<8x128xf32>
    %733 = arith.mulf %722, %732 : vector<8x128xf32>
    %734 = arith.addf %731, %733 : vector<8x128xf32>
    %735 = vector.extract_strided_slice %560 {offsets = [0, 256], sizes = [8, 128], strides = [1, 1]} : vector<8x512xf32> to vector<8x128xf32>
    %736 = arith.mulf %724, %735 : vector<8x128xf32>
    %737 = arith.addf %734, %736 : vector<8x128xf32>
    %738 = vector.extract_strided_slice %560 {offsets = [0, 384], sizes = [8, 128], strides = [1, 1]} : vector<8x512xf32> to vector<8x128xf32>
    %739 = arith.mulf %726, %738 : vector<8x128xf32>
    %740 = arith.addf %737, %739 : vector<8x128xf32>
    %741 = tpu.reciprocal %729 {approx = true} : vector<8x128xf32> -> vector<8x128xf32>
    %742 = arith.mulf %740, %741 : vector<8x128xf32>
    %c16_176 = arith.constant 16 : index
    %c256_177 = arith.constant 256 : index
    %743 = vector.load %arg14[%c16_176, %c256_177] : memref<32x512xf32, #tpu.memory_space<vmem>>, vector<8x128xf32>
    tpu.vector_store %arg14[%c16_176, %c256_177], %742 {strides = array<i32>} : memref<32x512xf32, #tpu.memory_space<vmem>>, vector<8x128xf32>,
    %744 = vector.extract_strided_slice %558 {offsets = [0, 384], sizes = [8, 128], strides = [1, 1]} : vector<8x512xf32> to vector<8x128xf32>
    %745 = vector.extract_strided_slice %559 {offsets = [0, 0], sizes = [8, 128], strides = [1, 1]} : vector<8x512xf32> to vector<8x128xf32>
    %746 = arith.mulf %744, %745 : vector<8x128xf32>
    %c4_i32_178 = arith.constant 4 : i32
    %747 = tpu.dynamic_rotate %746 by %c4_i32_178 dim 0 : vector<8x128xf32>, i32 -> vector<8x128xf32>
    %748 = arith.addf %746, %747 : vector<8x128xf32>
    %c2_i32_179 = arith.constant 2 : i32
    %749 = tpu.dynamic_rotate %748 by %c2_i32_179 dim 0 : vector<8x128xf32>, i32 -> vector<8x128xf32>
    %750 = arith.addf %748, %749 : vector<8x128xf32>
    %c1_i32_180 = arith.constant 1 : i32
    %751 = tpu.dynamic_rotate %750 by %c1_i32_180 dim 0 : vector<8x128xf32>, i32 -> vector<8x128xf32>
    %752 = arith.addf %750, %751 : vector<8x128xf32>
    %753 = vector.extract_strided_slice %559 {offsets = [0, 128], sizes = [8, 128], strides = [1, 1]} : vector<8x512xf32> to vector<8x128xf32>
    %754 = arith.mulf %744, %753 : vector<8x128xf32>
    %c4_i32_181 = arith.constant 4 : i32
    %755 = tpu.dynamic_rotate %754 by %c4_i32_181 dim 0 : vector<8x128xf32>, i32 -> vector<8x128xf32>
    %756 = arith.addf %754, %755 : vector<8x128xf32>
    %c2_i32_182 = arith.constant 2 : i32
    %757 = tpu.dynamic_rotate %756 by %c2_i32_182 dim 0 : vector<8x128xf32>, i32 -> vector<8x128xf32>
    %758 = arith.addf %756, %757 : vector<8x128xf32>
    %c1_i32_183 = arith.constant 1 : i32
    %759 = tpu.dynamic_rotate %758 by %c1_i32_183 dim 0 : vector<8x128xf32>, i32 -> vector<8x128xf32>
    %760 = arith.addf %758, %759 : vector<8x128xf32>
    %761 = vector.extract_strided_slice %559 {offsets = [0, 256], sizes = [8, 128], strides = [1, 1]} : vector<8x512xf32> to vector<8x128xf32>
    %762 = arith.mulf %744, %761 : vector<8x128xf32>
    %c4_i32_184 = arith.constant 4 : i32
    %763 = tpu.dynamic_rotate %762 by %c4_i32_184 dim 0 : vector<8x128xf32>, i32 -> vector<8x128xf32>
    %764 = arith.addf %762, %763 : vector<8x128xf32>
    %c2_i32_185 = arith.constant 2 : i32
    %765 = tpu.dynamic_rotate %764 by %c2_i32_185 dim 0 : vector<8x128xf32>, i32 -> vector<8x128xf32>
    %766 = arith.addf %764, %765 : vector<8x128xf32>
    %c1_i32_186 = arith.constant 1 : i32
    %767 = tpu.dynamic_rotate %766 by %c1_i32_186 dim 0 : vector<8x128xf32>, i32 -> vector<8x128xf32>
    %768 = arith.addf %766, %767 : vector<8x128xf32>
    %769 = vector.extract_strided_slice %559 {offsets = [0, 384], sizes = [8, 128], strides = [1, 1]} : vector<8x512xf32> to vector<8x128xf32>
    %770 = arith.mulf %744, %769 : vector<8x128xf32>
    %c4_i32_187 = arith.constant 4 : i32
    %771 = tpu.dynamic_rotate %770 by %c4_i32_187 dim 0 : vector<8x128xf32>, i32 -> vector<8x128xf32>
    %772 = arith.addf %770, %771 : vector<8x128xf32>
    %c2_i32_188 = arith.constant 2 : i32
    %773 = tpu.dynamic_rotate %772 by %c2_i32_188 dim 0 : vector<8x128xf32>, i32 -> vector<8x128xf32>
    %774 = arith.addf %772, %773 : vector<8x128xf32>
    %c1_i32_189 = arith.constant 1 : i32
    %775 = tpu.dynamic_rotate %774 by %c1_i32_189 dim 0 : vector<8x128xf32>, i32 -> vector<8x128xf32>
    %776 = arith.addf %774, %775 : vector<8x128xf32>
    %777 = arith.maximumf %752, %760 : vector<8x128xf32>
    %778 = arith.maximumf %777, %768 : vector<8x128xf32>
    %779 = arith.maximumf %778, %776 : vector<8x128xf32>
    %780 = arith.subf %752, %779 : vector<8x128xf32>
    %781 = math.exp %780 : vector<8x128xf32>
    %782 = arith.subf %760, %779 : vector<8x128xf32>
    %783 = math.exp %782 : vector<8x128xf32>
    %784 = arith.subf %768, %779 : vector<8x128xf32>
    %785 = math.exp %784 : vector<8x128xf32>
    %786 = arith.subf %776, %779 : vector<8x128xf32>
    %787 = math.exp %786 : vector<8x128xf32>
    %788 = arith.addf %781, %783 : vector<8x128xf32>
    %789 = arith.addf %788, %785 : vector<8x128xf32>
    %790 = arith.addf %789, %787 : vector<8x128xf32>
    %791 = vector.extract_strided_slice %560 {offsets = [0, 0], sizes = [8, 128], strides = [1, 1]} : vector<8x512xf32> to vector<8x128xf32>
    %792 = arith.mulf %781, %791 : vector<8x128xf32>
    %793 = vector.extract_strided_slice %560 {offsets = [0, 128], sizes = [8, 128], strides = [1, 1]} : vector<8x512xf32> to vector<8x128xf32>
    %794 = arith.mulf %783, %793 : vector<8x128xf32>
    %795 = arith.addf %792, %794 : vector<8x128xf32>
    %796 = vector.extract_strided_slice %560 {offsets = [0, 256], sizes = [8, 128], strides = [1, 1]} : vector<8x512xf32> to vector<8x128xf32>
    %797 = arith.mulf %785, %796 : vector<8x128xf32>
    %798 = arith.addf %795, %797 : vector<8x128xf32>
    %799 = vector.extract_strided_slice %560 {offsets = [0, 384], sizes = [8, 128], strides = [1, 1]} : vector<8x512xf32> to vector<8x128xf32>
    %800 = arith.mulf %787, %799 : vector<8x128xf32>
    %801 = arith.addf %798, %800 : vector<8x128xf32>
    %802 = tpu.reciprocal %790 {approx = true} : vector<8x128xf32> -> vector<8x128xf32>
    %803 = arith.mulf %801, %802 : vector<8x128xf32>
    %c16_190 = arith.constant 16 : index
    %c384_191 = arith.constant 384 : index
    %804 = vector.load %arg14[%c16_190, %c384_191] : memref<32x512xf32, #tpu.memory_space<vmem>>, vector<8x128xf32>
    tpu.vector_store %arg14[%c16_190, %c384_191], %803 {strides = array<i32>} : memref<32x512xf32, #tpu.memory_space<vmem>>, vector<8x128xf32>,
    %805 = vector.extract_strided_slice %63 {offsets = [56, 0], sizes = [8, 512], strides = [1, 1]} : vector<96x512xf32> to vector<8x512xf32>
    %806 = vector.extract_strided_slice %63 {offsets = [72, 0], sizes = [8, 512], strides = [1, 1]} : vector<96x512xf32> to vector<8x512xf32>
    %807 = vector.extract_strided_slice %63 {offsets = [88, 0], sizes = [8, 512], strides = [1, 1]} : vector<96x512xf32> to vector<8x512xf32>
    %808 = vector.extract_strided_slice %805 {offsets = [0, 0], sizes = [8, 128], strides = [1, 1]} : vector<8x512xf32> to vector<8x128xf32>
    %809 = vector.extract_strided_slice %806 {offsets = [0, 0], sizes = [8, 128], strides = [1, 1]} : vector<8x512xf32> to vector<8x128xf32>
    %810 = arith.mulf %808, %809 : vector<8x128xf32>
    %c4_i32_192 = arith.constant 4 : i32
    %811 = tpu.dynamic_rotate %810 by %c4_i32_192 dim 0 : vector<8x128xf32>, i32 -> vector<8x128xf32>
    %812 = arith.addf %810, %811 : vector<8x128xf32>
    %c2_i32_193 = arith.constant 2 : i32
    %813 = tpu.dynamic_rotate %812 by %c2_i32_193 dim 0 : vector<8x128xf32>, i32 -> vector<8x128xf32>
    %814 = arith.addf %812, %813 : vector<8x128xf32>
    %c1_i32_194 = arith.constant 1 : i32
    %815 = tpu.dynamic_rotate %814 by %c1_i32_194 dim 0 : vector<8x128xf32>, i32 -> vector<8x128xf32>
    %816 = arith.addf %814, %815 : vector<8x128xf32>
    %817 = vector.extract_strided_slice %806 {offsets = [0, 128], sizes = [8, 128], strides = [1, 1]} : vector<8x512xf32> to vector<8x128xf32>
    %818 = arith.mulf %808, %817 : vector<8x128xf32>
    %c4_i32_195 = arith.constant 4 : i32
    %819 = tpu.dynamic_rotate %818 by %c4_i32_195 dim 0 : vector<8x128xf32>, i32 -> vector<8x128xf32>
    %820 = arith.addf %818, %819 : vector<8x128xf32>
    %c2_i32_196 = arith.constant 2 : i32
    %821 = tpu.dynamic_rotate %820 by %c2_i32_196 dim 0 : vector<8x128xf32>, i32 -> vector<8x128xf32>
    %822 = arith.addf %820, %821 : vector<8x128xf32>
    %c1_i32_197 = arith.constant 1 : i32
    %823 = tpu.dynamic_rotate %822 by %c1_i32_197 dim 0 : vector<8x128xf32>, i32 -> vector<8x128xf32>
    %824 = arith.addf %822, %823 : vector<8x128xf32>
    %825 = vector.extract_strided_slice %806 {offsets = [0, 256], sizes = [8, 128], strides = [1, 1]} : vector<8x512xf32> to vector<8x128xf32>
    %826 = arith.mulf %808, %825 : vector<8x128xf32>
    %c4_i32_198 = arith.constant 4 : i32
    %827 = tpu.dynamic_rotate %826 by %c4_i32_198 dim 0 : vector<8x128xf32>, i32 -> vector<8x128xf32>
    %828 = arith.addf %826, %827 : vector<8x128xf32>
    %c2_i32_199 = arith.constant 2 : i32
    %829 = tpu.dynamic_rotate %828 by %c2_i32_199 dim 0 : vector<8x128xf32>, i32 -> vector<8x128xf32>
    %830 = arith.addf %828, %829 : vector<8x128xf32>
    %c1_i32_200 = arith.constant 1 : i32
    %831 = tpu.dynamic_rotate %830 by %c1_i32_200 dim 0 : vector<8x128xf32>, i32 -> vector<8x128xf32>
    %832 = arith.addf %830, %831 : vector<8x128xf32>
    %833 = vector.extract_strided_slice %806 {offsets = [0, 384], sizes = [8, 128], strides = [1, 1]} : vector<8x512xf32> to vector<8x128xf32>
    %834 = arith.mulf %808, %833 : vector<8x128xf32>
    %c4_i32_201 = arith.constant 4 : i32
    %835 = tpu.dynamic_rotate %834 by %c4_i32_201 dim 0 : vector<8x128xf32>, i32 -> vector<8x128xf32>
    %836 = arith.addf %834, %835 : vector<8x128xf32>
    %c2_i32_202 = arith.constant 2 : i32
    %837 = tpu.dynamic_rotate %836 by %c2_i32_202 dim 0 : vector<8x128xf32>, i32 -> vector<8x128xf32>
    %838 = arith.addf %836, %837 : vector<8x128xf32>
    %c1_i32_203 = arith.constant 1 : i32
    %839 = tpu.dynamic_rotate %838 by %c1_i32_203 dim 0 : vector<8x128xf32>, i32 -> vector<8x128xf32>
    %840 = arith.addf %838, %839 : vector<8x128xf32>
    %841 = arith.maximumf %816, %824 : vector<8x128xf32>
    %842 = arith.maximumf %841, %832 : vector<8x128xf32>
    %843 = arith.maximumf %842, %840 : vector<8x128xf32>
    %844 = arith.subf %816, %843 : vector<8x128xf32>
    %845 = math.exp %844 : vector<8x128xf32>
    %846 = arith.subf %824, %843 : vector<8x128xf32>
    %847 = math.exp %846 : vector<8x128xf32>
    %848 = arith.subf %832, %843 : vector<8x128xf32>
    %849 = math.exp %848 : vector<8x128xf32>
    %850 = arith.subf %840, %843 : vector<8x128xf32>
    %851 = math.exp %850 : vector<8x128xf32>
    %852 = arith.addf %845, %847 : vector<8x128xf32>
    %853 = arith.addf %852, %849 : vector<8x128xf32>
    %854 = arith.addf %853, %851 : vector<8x128xf32>
    %855 = vector.extract_strided_slice %807 {offsets = [0, 0], sizes = [8, 128], strides = [1, 1]} : vector<8x512xf32> to vector<8x128xf32>
    %856 = arith.mulf %845, %855 : vector<8x128xf32>
    %857 = vector.extract_strided_slice %807 {offsets = [0, 128], sizes = [8, 128], strides = [1, 1]} : vector<8x512xf32> to vector<8x128xf32>
    %858 = arith.mulf %847, %857 : vector<8x128xf32>
    %859 = arith.addf %856, %858 : vector<8x128xf32>
    %860 = vector.extract_strided_slice %807 {offsets = [0, 256], sizes = [8, 128], strides = [1, 1]} : vector<8x512xf32> to vector<8x128xf32>
    %861 = arith.mulf %849, %860 : vector<8x128xf32>
    %862 = arith.addf %859, %861 : vector<8x128xf32>
    %863 = vector.extract_strided_slice %807 {offsets = [0, 384], sizes = [8, 128], strides = [1, 1]} : vector<8x512xf32> to vector<8x128xf32>
    %864 = arith.mulf %851, %863 : vector<8x128xf32>
    %865 = arith.addf %862, %864 : vector<8x128xf32>
    %866 = tpu.reciprocal %854 {approx = true} : vector<8x128xf32> -> vector<8x128xf32>
    %867 = arith.mulf %865, %866 : vector<8x128xf32>
    %c24 = arith.constant 24 : index
    %c0_204 = arith.constant 0 : index
    %868 = vector.load %arg14[%c24, %c0_204] : memref<32x512xf32, #tpu.memory_space<vmem>>, vector<8x128xf32>
    tpu.vector_store %arg14[%c24, %c0_204], %867 {strides = array<i32>} : memref<32x512xf32, #tpu.memory_space<vmem>>, vector<8x128xf32>,
    %869 = vector.extract_strided_slice %805 {offsets = [0, 128], sizes = [8, 128], strides = [1, 1]} : vector<8x512xf32> to vector<8x128xf32>
    %870 = vector.extract_strided_slice %806 {offsets = [0, 0], sizes = [8, 128], strides = [1, 1]} : vector<8x512xf32> to vector<8x128xf32>
    %871 = arith.mulf %869, %870 : vector<8x128xf32>
    %c4_i32_205 = arith.constant 4 : i32
    %872 = tpu.dynamic_rotate %871 by %c4_i32_205 dim 0 : vector<8x128xf32>, i32 -> vector<8x128xf32>
    %873 = arith.addf %871, %872 : vector<8x128xf32>
    %c2_i32_206 = arith.constant 2 : i32
    %874 = tpu.dynamic_rotate %873 by %c2_i32_206 dim 0 : vector<8x128xf32>, i32 -> vector<8x128xf32>
    %875 = arith.addf %873, %874 : vector<8x128xf32>
    %c1_i32_207 = arith.constant 1 : i32
    %876 = tpu.dynamic_rotate %875 by %c1_i32_207 dim 0 : vector<8x128xf32>, i32 -> vector<8x128xf32>
    %877 = arith.addf %875, %876 : vector<8x128xf32>
    %878 = vector.extract_strided_slice %806 {offsets = [0, 128], sizes = [8, 128], strides = [1, 1]} : vector<8x512xf32> to vector<8x128xf32>
    %879 = arith.mulf %869, %878 : vector<8x128xf32>
    %c4_i32_208 = arith.constant 4 : i32
    %880 = tpu.dynamic_rotate %879 by %c4_i32_208 dim 0 : vector<8x128xf32>, i32 -> vector<8x128xf32>
    %881 = arith.addf %879, %880 : vector<8x128xf32>
    %c2_i32_209 = arith.constant 2 : i32
    %882 = tpu.dynamic_rotate %881 by %c2_i32_209 dim 0 : vector<8x128xf32>, i32 -> vector<8x128xf32>
    %883 = arith.addf %881, %882 : vector<8x128xf32>
    %c1_i32_210 = arith.constant 1 : i32
    %884 = tpu.dynamic_rotate %883 by %c1_i32_210 dim 0 : vector<8x128xf32>, i32 -> vector<8x128xf32>
    %885 = arith.addf %883, %884 : vector<8x128xf32>
    %886 = vector.extract_strided_slice %806 {offsets = [0, 256], sizes = [8, 128], strides = [1, 1]} : vector<8x512xf32> to vector<8x128xf32>
    %887 = arith.mulf %869, %886 : vector<8x128xf32>
    %c4_i32_211 = arith.constant 4 : i32
    %888 = tpu.dynamic_rotate %887 by %c4_i32_211 dim 0 : vector<8x128xf32>, i32 -> vector<8x128xf32>
    %889 = arith.addf %887, %888 : vector<8x128xf32>
    %c2_i32_212 = arith.constant 2 : i32
    %890 = tpu.dynamic_rotate %889 by %c2_i32_212 dim 0 : vector<8x128xf32>, i32 -> vector<8x128xf32>
    %891 = arith.addf %889, %890 : vector<8x128xf32>
    %c1_i32_213 = arith.constant 1 : i32
    %892 = tpu.dynamic_rotate %891 by %c1_i32_213 dim 0 : vector<8x128xf32>, i32 -> vector<8x128xf32>
    %893 = arith.addf %891, %892 : vector<8x128xf32>
    %894 = vector.extract_strided_slice %806 {offsets = [0, 384], sizes = [8, 128], strides = [1, 1]} : vector<8x512xf32> to vector<8x128xf32>
    %895 = arith.mulf %869, %894 : vector<8x128xf32>
    %c4_i32_214 = arith.constant 4 : i32
    %896 = tpu.dynamic_rotate %895 by %c4_i32_214 dim 0 : vector<8x128xf32>, i32 -> vector<8x128xf32>
    %897 = arith.addf %895, %896 : vector<8x128xf32>
    %c2_i32_215 = arith.constant 2 : i32
    %898 = tpu.dynamic_rotate %897 by %c2_i32_215 dim 0 : vector<8x128xf32>, i32 -> vector<8x128xf32>
    %899 = arith.addf %897, %898 : vector<8x128xf32>
    %c1_i32_216 = arith.constant 1 : i32
    %900 = tpu.dynamic_rotate %899 by %c1_i32_216 dim 0 : vector<8x128xf32>, i32 -> vector<8x128xf32>
    %901 = arith.addf %899, %900 : vector<8x128xf32>
    %902 = arith.maximumf %877, %885 : vector<8x128xf32>
    %903 = arith.maximumf %902, %893 : vector<8x128xf32>
    %904 = arith.maximumf %903, %901 : vector<8x128xf32>
    %905 = arith.subf %877, %904 : vector<8x128xf32>
    %906 = math.exp %905 : vector<8x128xf32>
    %907 = arith.subf %885, %904 : vector<8x128xf32>
    %908 = math.exp %907 : vector<8x128xf32>
    %909 = arith.subf %893, %904 : vector<8x128xf32>
    %910 = math.exp %909 : vector<8x128xf32>
    %911 = arith.subf %901, %904 : vector<8x128xf32>
    %912 = math.exp %911 : vector<8x128xf32>
    %913 = arith.addf %906, %908 : vector<8x128xf32>
    %914 = arith.addf %913, %910 : vector<8x128xf32>
    %915 = arith.addf %914, %912 : vector<8x128xf32>
    %916 = vector.extract_strided_slice %807 {offsets = [0, 0], sizes = [8, 128], strides = [1, 1]} : vector<8x512xf32> to vector<8x128xf32>
    %917 = arith.mulf %906, %916 : vector<8x128xf32>
    %918 = vector.extract_strided_slice %807 {offsets = [0, 128], sizes = [8, 128], strides = [1, 1]} : vector<8x512xf32> to vector<8x128xf32>
    %919 = arith.mulf %908, %918 : vector<8x128xf32>
    %920 = arith.addf %917, %919 : vector<8x128xf32>
    %921 = vector.extract_strided_slice %807 {offsets = [0, 256], sizes = [8, 128], strides = [1, 1]} : vector<8x512xf32> to vector<8x128xf32>
    %922 = arith.mulf %910, %921 : vector<8x128xf32>
    %923 = arith.addf %920, %922 : vector<8x128xf32>
    %924 = vector.extract_strided_slice %807 {offsets = [0, 384], sizes = [8, 128], strides = [1, 1]} : vector<8x512xf32> to vector<8x128xf32>
    %925 = arith.mulf %912, %924 : vector<8x128xf32>
    %926 = arith.addf %923, %925 : vector<8x128xf32>
    %927 = tpu.reciprocal %915 {approx = true} : vector<8x128xf32> -> vector<8x128xf32>
    %928 = arith.mulf %926, %927 : vector<8x128xf32>
    %c24_217 = arith.constant 24 : index
    %c128_218 = arith.constant 128 : index
    %929 = vector.load %arg14[%c24_217, %c128_218] : memref<32x512xf32, #tpu.memory_space<vmem>>, vector<8x128xf32>
    tpu.vector_store %arg14[%c24_217, %c128_218], %928 {strides = array<i32>} : memref<32x512xf32, #tpu.memory_space<vmem>>, vector<8x128xf32>,
    %930 = vector.extract_strided_slice %805 {offsets = [0, 256], sizes = [8, 128], strides = [1, 1]} : vector<8x512xf32> to vector<8x128xf32>
    %931 = vector.extract_strided_slice %806 {offsets = [0, 0], sizes = [8, 128], strides = [1, 1]} : vector<8x512xf32> to vector<8x128xf32>
    %932 = arith.mulf %930, %931 : vector<8x128xf32>
    %c4_i32_219 = arith.constant 4 : i32
    %933 = tpu.dynamic_rotate %932 by %c4_i32_219 dim 0 : vector<8x128xf32>, i32 -> vector<8x128xf32>
    %934 = arith.addf %932, %933 : vector<8x128xf32>
    %c2_i32_220 = arith.constant 2 : i32
    %935 = tpu.dynamic_rotate %934 by %c2_i32_220 dim 0 : vector<8x128xf32>, i32 -> vector<8x128xf32>
    %936 = arith.addf %934, %935 : vector<8x128xf32>
    %c1_i32_221 = arith.constant 1 : i32
    %937 = tpu.dynamic_rotate %936 by %c1_i32_221 dim 0 : vector<8x128xf32>, i32 -> vector<8x128xf32>
    %938 = arith.addf %936, %937 : vector<8x128xf32>
    %939 = vector.extract_strided_slice %806 {offsets = [0, 128], sizes = [8, 128], strides = [1, 1]} : vector<8x512xf32> to vector<8x128xf32>
    %940 = arith.mulf %930, %939 : vector<8x128xf32>
    %c4_i32_222 = arith.constant 4 : i32
    %941 = tpu.dynamic_rotate %940 by %c4_i32_222 dim 0 : vector<8x128xf32>, i32 -> vector<8x128xf32>
    %942 = arith.addf %940, %941 : vector<8x128xf32>
    %c2_i32_223 = arith.constant 2 : i32
    %943 = tpu.dynamic_rotate %942 by %c2_i32_223 dim 0 : vector<8x128xf32>, i32 -> vector<8x128xf32>
    %944 = arith.addf %942, %943 : vector<8x128xf32>
    %c1_i32_224 = arith.constant 1 : i32
    %945 = tpu.dynamic_rotate %944 by %c1_i32_224 dim 0 : vector<8x128xf32>, i32 -> vector<8x128xf32>
    %946 = arith.addf %944, %945 : vector<8x128xf32>
    %947 = vector.extract_strided_slice %806 {offsets = [0, 256], sizes = [8, 128], strides = [1, 1]} : vector<8x512xf32> to vector<8x128xf32>
    %948 = arith.mulf %930, %947 : vector<8x128xf32>
    %c4_i32_225 = arith.constant 4 : i32
    %949 = tpu.dynamic_rotate %948 by %c4_i32_225 dim 0 : vector<8x128xf32>, i32 -> vector<8x128xf32>
    %950 = arith.addf %948, %949 : vector<8x128xf32>
    %c2_i32_226 = arith.constant 2 : i32
    %951 = tpu.dynamic_rotate %950 by %c2_i32_226 dim 0 : vector<8x128xf32>, i32 -> vector<8x128xf32>
    %952 = arith.addf %950, %951 : vector<8x128xf32>
    %c1_i32_227 = arith.constant 1 : i32
    %953 = tpu.dynamic_rotate %952 by %c1_i32_227 dim 0 : vector<8x128xf32>, i32 -> vector<8x128xf32>
    %954 = arith.addf %952, %953 : vector<8x128xf32>
    %955 = vector.extract_strided_slice %806 {offsets = [0, 384], sizes = [8, 128], strides = [1, 1]} : vector<8x512xf32> to vector<8x128xf32>
    %956 = arith.mulf %930, %955 : vector<8x128xf32>
    %c4_i32_228 = arith.constant 4 : i32
    %957 = tpu.dynamic_rotate %956 by %c4_i32_228 dim 0 : vector<8x128xf32>, i32 -> vector<8x128xf32>
    %958 = arith.addf %956, %957 : vector<8x128xf32>
    %c2_i32_229 = arith.constant 2 : i32
    %959 = tpu.dynamic_rotate %958 by %c2_i32_229 dim 0 : vector<8x128xf32>, i32 -> vector<8x128xf32>
    %960 = arith.addf %958, %959 : vector<8x128xf32>
    %c1_i32_230 = arith.constant 1 : i32
    %961 = tpu.dynamic_rotate %960 by %c1_i32_230 dim 0 : vector<8x128xf32>, i32 -> vector<8x128xf32>
    %962 = arith.addf %960, %961 : vector<8x128xf32>
    %963 = arith.maximumf %938, %946 : vector<8x128xf32>
    %964 = arith.maximumf %963, %954 : vector<8x128xf32>
    %965 = arith.maximumf %964, %962 : vector<8x128xf32>
    %966 = arith.subf %938, %965 : vector<8x128xf32>
    %967 = math.exp %966 : vector<8x128xf32>
    %968 = arith.subf %946, %965 : vector<8x128xf32>
    %969 = math.exp %968 : vector<8x128xf32>
    %970 = arith.subf %954, %965 : vector<8x128xf32>
    %971 = math.exp %970 : vector<8x128xf32>
    %972 = arith.subf %962, %965 : vector<8x128xf32>
    %973 = math.exp %972 : vector<8x128xf32>
    %974 = arith.addf %967, %969 : vector<8x128xf32>
    %975 = arith.addf %974, %971 : vector<8x128xf32>
    %976 = arith.addf %975, %973 : vector<8x128xf32>
    %977 = vector.extract_strided_slice %807 {offsets = [0, 0], sizes = [8, 128], strides = [1, 1]} : vector<8x512xf32> to vector<8x128xf32>
    %978 = arith.mulf %967, %977 : vector<8x128xf32>
    %979 = vector.extract_strided_slice %807 {offsets = [0, 128], sizes = [8, 128], strides = [1, 1]} : vector<8x512xf32> to vector<8x128xf32>
    %980 = arith.mulf %969, %979 : vector<8x128xf32>
    %981 = arith.addf %978, %980 : vector<8x128xf32>
    %982 = vector.extract_strided_slice %807 {offsets = [0, 256], sizes = [8, 128], strides = [1, 1]} : vector<8x512xf32> to vector<8x128xf32>
    %983 = arith.mulf %971, %982 : vector<8x128xf32>
    %984 = arith.addf %981, %983 : vector<8x128xf32>
    %985 = vector.extract_strided_slice %807 {offsets = [0, 384], sizes = [8, 128], strides = [1, 1]} : vector<8x512xf32> to vector<8x128xf32>
    %986 = arith.mulf %973, %985 : vector<8x128xf32>
    %987 = arith.addf %984, %986 : vector<8x128xf32>
    %988 = tpu.reciprocal %976 {approx = true} : vector<8x128xf32> -> vector<8x128xf32>
    %989 = arith.mulf %987, %988 : vector<8x128xf32>
    %c24_231 = arith.constant 24 : index
    %c256_232 = arith.constant 256 : index
    %990 = vector.load %arg14[%c24_231, %c256_232] : memref<32x512xf32, #tpu.memory_space<vmem>>, vector<8x128xf32>
    tpu.vector_store %arg14[%c24_231, %c256_232], %989 {strides = array<i32>} : memref<32x512xf32, #tpu.memory_space<vmem>>, vector<8x128xf32>,
    %991 = vector.extract_strided_slice %805 {offsets = [0, 384], sizes = [8, 128], strides = [1, 1]} : vector<8x512xf32> to vector<8x128xf32>
    %992 = vector.extract_strided_slice %806 {offsets = [0, 0], sizes = [8, 128], strides = [1, 1]} : vector<8x512xf32> to vector<8x128xf32>
    %993 = arith.mulf %991, %992 : vector<8x128xf32>
    %c4_i32_233 = arith.constant 4 : i32
    %994 = tpu.dynamic_rotate %993 by %c4_i32_233 dim 0 : vector<8x128xf32>, i32 -> vector<8x128xf32>
    %995 = arith.addf %993, %994 : vector<8x128xf32>
    %c2_i32_234 = arith.constant 2 : i32
    %996 = tpu.dynamic_rotate %995 by %c2_i32_234 dim 0 : vector<8x128xf32>, i32 -> vector<8x128xf32>
    %997 = arith.addf %995, %996 : vector<8x128xf32>
    %c1_i32_235 = arith.constant 1 : i32
    %998 = tpu.dynamic_rotate %997 by %c1_i32_235 dim 0 : vector<8x128xf32>, i32 -> vector<8x128xf32>
    %999 = arith.addf %997, %998 : vector<8x128xf32>
    %1000 = vector.extract_strided_slice %806 {offsets = [0, 128], sizes = [8, 128], strides = [1, 1]} : vector<8x512xf32> to vector<8x128xf32>
    %1001 = arith.mulf %991, %1000 : vector<8x128xf32>
    %c4_i32_236 = arith.constant 4 : i32
    %1002 = tpu.dynamic_rotate %1001 by %c4_i32_236 dim 0 : vector<8x128xf32>, i32 -> vector<8x128xf32>
    %1003 = arith.addf %1001, %1002 : vector<8x128xf32>
    %c2_i32_237 = arith.constant 2 : i32
    %1004 = tpu.dynamic_rotate %1003 by %c2_i32_237 dim 0 : vector<8x128xf32>, i32 -> vector<8x128xf32>
    %1005 = arith.addf %1003, %1004 : vector<8x128xf32>
    %c1_i32_238 = arith.constant 1 : i32
    %1006 = tpu.dynamic_rotate %1005 by %c1_i32_238 dim 0 : vector<8x128xf32>, i32 -> vector<8x128xf32>
    %1007 = arith.addf %1005, %1006 : vector<8x128xf32>
    %1008 = vector.extract_strided_slice %806 {offsets = [0, 256], sizes = [8, 128], strides = [1, 1]} : vector<8x512xf32> to vector<8x128xf32>
    %1009 = arith.mulf %991, %1008 : vector<8x128xf32>
    %c4_i32_239 = arith.constant 4 : i32
    %1010 = tpu.dynamic_rotate %1009 by %c4_i32_239 dim 0 : vector<8x128xf32>, i32 -> vector<8x128xf32>
    %1011 = arith.addf %1009, %1010 : vector<8x128xf32>
    %c2_i32_240 = arith.constant 2 : i32
    %1012 = tpu.dynamic_rotate %1011 by %c2_i32_240 dim 0 : vector<8x128xf32>, i32 -> vector<8x128xf32>
    %1013 = arith.addf %1011, %1012 : vector<8x128xf32>
    %c1_i32_241 = arith.constant 1 : i32
    %1014 = tpu.dynamic_rotate %1013 by %c1_i32_241 dim 0 : vector<8x128xf32>, i32 -> vector<8x128xf32>
    %1015 = arith.addf %1013, %1014 : vector<8x128xf32>
    %1016 = vector.extract_strided_slice %806 {offsets = [0, 384], sizes = [8, 128], strides = [1, 1]} : vector<8x512xf32> to vector<8x128xf32>
    %1017 = arith.mulf %991, %1016 : vector<8x128xf32>
    %c4_i32_242 = arith.constant 4 : i32
    %1018 = tpu.dynamic_rotate %1017 by %c4_i32_242 dim 0 : vector<8x128xf32>, i32 -> vector<8x128xf32>
    %1019 = arith.addf %1017, %1018 : vector<8x128xf32>
    %c2_i32_243 = arith.constant 2 : i32
    %1020 = tpu.dynamic_rotate %1019 by %c2_i32_243 dim 0 : vector<8x128xf32>, i32 -> vector<8x128xf32>
    %1021 = arith.addf %1019, %1020 : vector<8x128xf32>
    %c1_i32_244 = arith.constant 1 : i32
    %1022 = tpu.dynamic_rotate %1021 by %c1_i32_244 dim 0 : vector<8x128xf32>, i32 -> vector<8x128xf32>
    %1023 = arith.addf %1021, %1022 : vector<8x128xf32>
    %1024 = arith.maximumf %999, %1007 : vector<8x128xf32>
    %1025 = arith.maximumf %1024, %1015 : vector<8x128xf32>
    %1026 = arith.maximumf %1025, %1023 : vector<8x128xf32>
    %1027 = arith.subf %999, %1026 : vector<8x128xf32>
    %1028 = math.exp %1027 : vector<8x128xf32>
    %1029 = arith.subf %1007, %1026 : vector<8x128xf32>
    %1030 = math.exp %1029 : vector<8x128xf32>
    %1031 = arith.subf %1015, %1026 : vector<8x128xf32>
    %1032 = math.exp %1031 : vector<8x128xf32>
    %1033 = arith.subf %1023, %1026 : vector<8x128xf32>
    %1034 = math.exp %1033 : vector<8x128xf32>
    %1035 = arith.addf %1028, %1030 : vector<8x128xf32>
    %1036 = arith.addf %1035, %1032 : vector<8x128xf32>
    %1037 = arith.addf %1036, %1034 : vector<8x128xf32>
    %1038 = vector.extract_strided_slice %807 {offsets = [0, 0], sizes = [8, 128], strides = [1, 1]} : vector<8x512xf32> to vector<8x128xf32>
    %1039 = arith.mulf %1028, %1038 : vector<8x128xf32>
    %1040 = vector.extract_strided_slice %807 {offsets = [0, 128], sizes = [8, 128], strides = [1, 1]} : vector<8x512xf32> to vector<8x128xf32>
    %1041 = arith.mulf %1030, %1040 : vector<8x128xf32>
    %1042 = arith.addf %1039, %1041 : vector<8x128xf32>
    %1043 = vector.extract_strided_slice %807 {offsets = [0, 256], sizes = [8, 128], strides = [1, 1]} : vector<8x512xf32> to vector<8x128xf32>
    %1044 = arith.mulf %1032, %1043 : vector<8x128xf32>
    %1045 = arith.addf %1042, %1044 : vector<8x128xf32>
    %1046 = vector.extract_strided_slice %807 {offsets = [0, 384], sizes = [8, 128], strides = [1, 1]} : vector<8x512xf32> to vector<8x128xf32>
    %1047 = arith.mulf %1034, %1046 : vector<8x128xf32>
    %1048 = arith.addf %1045, %1047 : vector<8x128xf32>
    %1049 = tpu.reciprocal %1037 {approx = true} : vector<8x128xf32> -> vector<8x128xf32>
    %1050 = arith.mulf %1048, %1049 : vector<8x128xf32>
    %c24_245 = arith.constant 24 : index
    %c384_246 = arith.constant 384 : index
    %1051 = vector.load %arg14[%c24_245, %c384_246] : memref<32x512xf32, #tpu.memory_space<vmem>>, vector<8x128xf32>
    tpu.vector_store %arg14[%c24_245, %c384_246], %1050 {strides = array<i32>} : memref<32x512xf32, #tpu.memory_space<vmem>>, vector<8x128xf32>,
    %c0_247 = arith.constant 0 : index
    %c0_248 = arith.constant 0 : index
    %1052 = vector.load %arg14[%c0_247, %c0_248] : memref<32x512xf32, #tpu.memory_space<vmem>>, vector<32x512xf32>
    %1053 = arith.truncf %1052 : vector<32x512xf32> to vector<32x512xbf16>
    %cst_249 = arith.constant dense<0.000000e+00> : vector<16x512xf32>
    %1054 = tpu.matmul %3, %1053, %cst_249 {dimension_numbers = #tpu.dot_dimension_numbers<[1], [0], [0], [1], [0, 0, 1, 1], [], []>} : vector<16x32xbf16>, vector<32x512xbf16>, vector<16x512xf32> -> vector<16x512xf32>
    %1055 = vector.broadcast %4 : vector<16x1xf32> to vector<16x512xf32>
    %1056 = arith.addf %1054, %1055 : vector<16x512xf32>
    %1057 = arith.addf %59, %1056 : vector<16x512xf32>
    %cst_250 = arith.constant dense<0.000000e+00> : vector<512xf32>
    %1058 = vector.multi_reduction <add>, %1057, %cst_250 [0] : vector<16x512xf32> to vector<512xf32>
    %1059 = vector.shape_cast %1058 : vector<512xf32> to vector<1x512xf32>
    %1060 = vector.extract_strided_slice %1059 {offsets = [0, 0], sizes = [1, 128], strides = [1, 1]} : vector<1x512xf32> to vector<1x128xf32>
    %1061 = vector.extract_strided_slice %1059 {offsets = [0, 128], sizes = [1, 128], strides = [1, 1]} : vector<1x512xf32> to vector<1x128xf32>
    %1062 = arith.addf %1060, %1061 : vector<1x128xf32>
    %1063 = vector.extract_strided_slice %1059 {offsets = [0, 256], sizes = [1, 128], strides = [1, 1]} : vector<1x512xf32> to vector<1x128xf32>
    %1064 = arith.addf %1062, %1063 : vector<1x128xf32>
    %1065 = vector.extract_strided_slice %1059 {offsets = [0, 384], sizes = [1, 128], strides = [1, 1]} : vector<1x512xf32> to vector<1x128xf32>
    %1066 = arith.addf %1064, %1065 : vector<1x128xf32>
    %cst_251 = arith.constant 1.562500e-02 : f32
    %1067 = vector.broadcast %cst_251 : f32 to vector<1x128xf32>
    %1068 = arith.mulf %1066, %1067 : vector<1x128xf32>
    %1069 = tpu.concatenate %1068, %1068, %1068, %1068 in 1 : vector<1x128xf32>, vector<1x128xf32>, vector<1x128xf32>, vector<1x128xf32> -> vector<1x512xf32>
    %1070 = vector.broadcast %1069 : vector<1x512xf32> to vector<16x512xf32>
    %1071 = arith.subf %1057, %1070 : vector<16x512xf32>
    %1072 = arith.mulf %1071, %1071 : vector<16x512xf32>
    %cst_252 = arith.constant dense<0.000000e+00> : vector<512xf32>
    %1073 = vector.multi_reduction <add>, %1072, %cst_252 [0] : vector<16x512xf32> to vector<512xf32>
    %1074 = vector.shape_cast %1073 : vector<512xf32> to vector<1x512xf32>
    %1075 = vector.extract_strided_slice %1074 {offsets = [0, 0], sizes = [1, 128], strides = [1, 1]} : vector<1x512xf32> to vector<1x128xf32>
    %1076 = vector.extract_strided_slice %1074 {offsets = [0, 128], sizes = [1, 128], strides = [1, 1]} : vector<1x512xf32> to vector<1x128xf32>
    %1077 = arith.addf %1075, %1076 : vector<1x128xf32>
    %1078 = vector.extract_strided_slice %1074 {offsets = [0, 256], sizes = [1, 128], strides = [1, 1]} : vector<1x512xf32> to vector<1x128xf32>
    %1079 = arith.addf %1077, %1078 : vector<1x128xf32>
    %1080 = vector.extract_strided_slice %1074 {offsets = [0, 384], sizes = [1, 128], strides = [1, 1]} : vector<1x512xf32> to vector<1x128xf32>
    %1081 = arith.addf %1079, %1080 : vector<1x128xf32>
    %cst_253 = arith.constant 1.562500e-02 : f32
    %1082 = vector.broadcast %cst_253 : f32 to vector<1x128xf32>
    %1083 = arith.mulf %1081, %1082 : vector<1x128xf32>
    %cst_254 = arith.constant 9.99999974E-6 : f32
    %1084 = vector.broadcast %cst_254 : f32 to vector<1x128xf32>
    %1085 = arith.addf %1083, %1084 : vector<1x128xf32>
    %1086 = math.rsqrt %1085 : vector<1x128xf32>
    %1087 = tpu.concatenate %1086, %1086, %1086, %1086 in 1 : vector<1x128xf32>, vector<1x128xf32>, vector<1x128xf32>, vector<1x128xf32> -> vector<1x512xf32>
    %1088 = vector.broadcast %1087 : vector<1x512xf32> to vector<16x512xf32>
    %1089 = arith.mulf %1071, %1088 : vector<16x512xf32>
    %1090 = arith.mulf %1089, %7 : vector<16x512xf32>
    %1091 = arith.addf %1090, %8 : vector<16x512xf32>
    %1092 = arith.truncf %1091 : vector<16x512xf32> to vector<16x512xbf16>
    %cst_255 = arith.constant dense<0.000000e+00> : vector<96x512xf32>
    %1093 = tpu.matmul %1, %1092, %cst_255 {dimension_numbers = #tpu.dot_dimension_numbers<[1], [0], [0], [1], [0, 0, 1, 1], [], []>} : vector<96x16xbf16>, vector<16x512xbf16>, vector<96x512xf32> -> vector<96x512xf32>
    %1094 = vector.broadcast %2 : vector<96x1xf32> to vector<96x512xf32>
    %1095 = arith.addf %1093, %1094 : vector<96x512xf32>
    %1096 = vector.extract_strided_slice %1095 {offsets = [0, 0], sizes = [8, 512], strides = [1, 1]} : vector<96x512xf32> to vector<8x512xf32>
    %1097 = vector.extract_strided_slice %1095 {offsets = [16, 0], sizes = [8, 512], strides = [1, 1]} : vector<96x512xf32> to vector<8x512xf32>
    %1098 = vector.extract_strided_slice %1095 {offsets = [32, 0], sizes = [8, 512], strides = [1, 1]} : vector<96x512xf32> to vector<8x512xf32>
    %1099 = vector.extract_strided_slice %1096 {offsets = [0, 0], sizes = [8, 128], strides = [1, 1]} : vector<8x512xf32> to vector<8x128xf32>
    %1100 = vector.extract_strided_slice %1097 {offsets = [0, 0], sizes = [8, 128], strides = [1, 1]} : vector<8x512xf32> to vector<8x128xf32>
    %1101 = arith.mulf %1099, %1100 : vector<8x128xf32>
    %c4_i32_256 = arith.constant 4 : i32
    %1102 = tpu.dynamic_rotate %1101 by %c4_i32_256 dim 0 : vector<8x128xf32>, i32 -> vector<8x128xf32>
    %1103 = arith.addf %1101, %1102 : vector<8x128xf32>
    %c2_i32_257 = arith.constant 2 : i32
    %1104 = tpu.dynamic_rotate %1103 by %c2_i32_257 dim 0 : vector<8x128xf32>, i32 -> vector<8x128xf32>
    %1105 = arith.addf %1103, %1104 : vector<8x128xf32>
    %c1_i32_258 = arith.constant 1 : i32
    %1106 = tpu.dynamic_rotate %1105 by %c1_i32_258 dim 0 : vector<8x128xf32>, i32 -> vector<8x128xf32>
    %1107 = arith.addf %1105, %1106 : vector<8x128xf32>
    %1108 = vector.extract_strided_slice %1097 {offsets = [0, 128], sizes = [8, 128], strides = [1, 1]} : vector<8x512xf32> to vector<8x128xf32>
    %1109 = arith.mulf %1099, %1108 : vector<8x128xf32>
    %c4_i32_259 = arith.constant 4 : i32
    %1110 = tpu.dynamic_rotate %1109 by %c4_i32_259 dim 0 : vector<8x128xf32>, i32 -> vector<8x128xf32>
    %1111 = arith.addf %1109, %1110 : vector<8x128xf32>
    %c2_i32_260 = arith.constant 2 : i32
    %1112 = tpu.dynamic_rotate %1111 by %c2_i32_260 dim 0 : vector<8x128xf32>, i32 -> vector<8x128xf32>
    %1113 = arith.addf %1111, %1112 : vector<8x128xf32>
    %c1_i32_261 = arith.constant 1 : i32
    %1114 = tpu.dynamic_rotate %1113 by %c1_i32_261 dim 0 : vector<8x128xf32>, i32 -> vector<8x128xf32>
    %1115 = arith.addf %1113, %1114 : vector<8x128xf32>
    %1116 = vector.extract_strided_slice %1097 {offsets = [0, 256], sizes = [8, 128], strides = [1, 1]} : vector<8x512xf32> to vector<8x128xf32>
    %1117 = arith.mulf %1099, %1116 : vector<8x128xf32>
    %c4_i32_262 = arith.constant 4 : i32
    %1118 = tpu.dynamic_rotate %1117 by %c4_i32_262 dim 0 : vector<8x128xf32>, i32 -> vector<8x128xf32>
    %1119 = arith.addf %1117, %1118 : vector<8x128xf32>
    %c2_i32_263 = arith.constant 2 : i32
    %1120 = tpu.dynamic_rotate %1119 by %c2_i32_263 dim 0 : vector<8x128xf32>, i32 -> vector<8x128xf32>
    %1121 = arith.addf %1119, %1120 : vector<8x128xf32>
    %c1_i32_264 = arith.constant 1 : i32
    %1122 = tpu.dynamic_rotate %1121 by %c1_i32_264 dim 0 : vector<8x128xf32>, i32 -> vector<8x128xf32>
    %1123 = arith.addf %1121, %1122 : vector<8x128xf32>
    %1124 = vector.extract_strided_slice %1097 {offsets = [0, 384], sizes = [8, 128], strides = [1, 1]} : vector<8x512xf32> to vector<8x128xf32>
    %1125 = arith.mulf %1099, %1124 : vector<8x128xf32>
    %c4_i32_265 = arith.constant 4 : i32
    %1126 = tpu.dynamic_rotate %1125 by %c4_i32_265 dim 0 : vector<8x128xf32>, i32 -> vector<8x128xf32>
    %1127 = arith.addf %1125, %1126 : vector<8x128xf32>
    %c2_i32_266 = arith.constant 2 : i32
    %1128 = tpu.dynamic_rotate %1127 by %c2_i32_266 dim 0 : vector<8x128xf32>, i32 -> vector<8x128xf32>
    %1129 = arith.addf %1127, %1128 : vector<8x128xf32>
    %c1_i32_267 = arith.constant 1 : i32
    %1130 = tpu.dynamic_rotate %1129 by %c1_i32_267 dim 0 : vector<8x128xf32>, i32 -> vector<8x128xf32>
    %1131 = arith.addf %1129, %1130 : vector<8x128xf32>
    %1132 = arith.maximumf %1107, %1115 : vector<8x128xf32>
    %1133 = arith.maximumf %1132, %1123 : vector<8x128xf32>
    %1134 = arith.maximumf %1133, %1131 : vector<8x128xf32>
    %1135 = arith.subf %1107, %1134 : vector<8x128xf32>
    %1136 = math.exp %1135 : vector<8x128xf32>
    %1137 = arith.subf %1115, %1134 : vector<8x128xf32>
    %1138 = math.exp %1137 : vector<8x128xf32>
    %1139 = arith.subf %1123, %1134 : vector<8x128xf32>
    %1140 = math.exp %1139 : vector<8x128xf32>
    %1141 = arith.subf %1131, %1134 : vector<8x128xf32>
    %1142 = math.exp %1141 : vector<8x128xf32>
    %1143 = arith.addf %1136, %1138 : vector<8x128xf32>
    %1144 = arith.addf %1143, %1140 : vector<8x128xf32>
    %1145 = arith.addf %1144, %1142 : vector<8x128xf32>
    %1146 = vector.extract_strided_slice %1098 {offsets = [0, 0], sizes = [8, 128], strides = [1, 1]} : vector<8x512xf32> to vector<8x128xf32>
    %1147 = arith.mulf %1136, %1146 : vector<8x128xf32>
    %1148 = vector.extract_strided_slice %1098 {offsets = [0, 128], sizes = [8, 128], strides = [1, 1]} : vector<8x512xf32> to vector<8x128xf32>
    %1149 = arith.mulf %1138, %1148 : vector<8x128xf32>
    %1150 = arith.addf %1147, %1149 : vector<8x128xf32>
    %1151 = vector.extract_strided_slice %1098 {offsets = [0, 256], sizes = [8, 128], strides = [1, 1]} : vector<8x512xf32> to vector<8x128xf32>
    %1152 = arith.mulf %1140, %1151 : vector<8x128xf32>
    %1153 = arith.addf %1150, %1152 : vector<8x128xf32>
    %1154 = vector.extract_strided_slice %1098 {offsets = [0, 384], sizes = [8, 128], strides = [1, 1]} : vector<8x512xf32> to vector<8x128xf32>
    %1155 = arith.mulf %1142, %1154 : vector<8x128xf32>
    %1156 = arith.addf %1153, %1155 : vector<8x128xf32>
    %1157 = tpu.reciprocal %1145 {approx = true} : vector<8x128xf32> -> vector<8x128xf32>
    %1158 = arith.mulf %1156, %1157 : vector<8x128xf32>
    %c0_268 = arith.constant 0 : index
    %c0_269 = arith.constant 0 : index
    %1159 = vector.load %arg14[%c0_268, %c0_269] : memref<32x512xf32, #tpu.memory_space<vmem>>, vector<8x128xf32>
    tpu.vector_store %arg14[%c0_268, %c0_269], %1158 {strides = array<i32>} : memref<32x512xf32, #tpu.memory_space<vmem>>, vector<8x128xf32>,
    %1160 = vector.extract_strided_slice %1096 {offsets = [0, 128], sizes = [8, 128], strides = [1, 1]} : vector<8x512xf32> to vector<8x128xf32>
    %1161 = vector.extract_strided_slice %1097 {offsets = [0, 0], sizes = [8, 128], strides = [1, 1]} : vector<8x512xf32> to vector<8x128xf32>
    %1162 = arith.mulf %1160, %1161 : vector<8x128xf32>
    %c4_i32_270 = arith.constant 4 : i32
    %1163 = tpu.dynamic_rotate %1162 by %c4_i32_270 dim 0 : vector<8x128xf32>, i32 -> vector<8x128xf32>
    %1164 = arith.addf %1162, %1163 : vector<8x128xf32>
    %c2_i32_271 = arith.constant 2 : i32
    %1165 = tpu.dynamic_rotate %1164 by %c2_i32_271 dim 0 : vector<8x128xf32>, i32 -> vector<8x128xf32>
    %1166 = arith.addf %1164, %1165 : vector<8x128xf32>
    %c1_i32_272 = arith.constant 1 : i32
    %1167 = tpu.dynamic_rotate %1166 by %c1_i32_272 dim 0 : vector<8x128xf32>, i32 -> vector<8x128xf32>
    %1168 = arith.addf %1166, %1167 : vector<8x128xf32>
    %1169 = vector.extract_strided_slice %1097 {offsets = [0, 128], sizes = [8, 128], strides = [1, 1]} : vector<8x512xf32> to vector<8x128xf32>
    %1170 = arith.mulf %1160, %1169 : vector<8x128xf32>
    %c4_i32_273 = arith.constant 4 : i32
    %1171 = tpu.dynamic_rotate %1170 by %c4_i32_273 dim 0 : vector<8x128xf32>, i32 -> vector<8x128xf32>
    %1172 = arith.addf %1170, %1171 : vector<8x128xf32>
    %c2_i32_274 = arith.constant 2 : i32
    %1173 = tpu.dynamic_rotate %1172 by %c2_i32_274 dim 0 : vector<8x128xf32>, i32 -> vector<8x128xf32>
    %1174 = arith.addf %1172, %1173 : vector<8x128xf32>
    %c1_i32_275 = arith.constant 1 : i32
    %1175 = tpu.dynamic_rotate %1174 by %c1_i32_275 dim 0 : vector<8x128xf32>, i32 -> vector<8x128xf32>
    %1176 = arith.addf %1174, %1175 : vector<8x128xf32>
    %1177 = vector.extract_strided_slice %1097 {offsets = [0, 256], sizes = [8, 128], strides = [1, 1]} : vector<8x512xf32> to vector<8x128xf32>
    %1178 = arith.mulf %1160, %1177 : vector<8x128xf32>
    %c4_i32_276 = arith.constant 4 : i32
    %1179 = tpu.dynamic_rotate %1178 by %c4_i32_276 dim 0 : vector<8x128xf32>, i32 -> vector<8x128xf32>
    %1180 = arith.addf %1178, %1179 : vector<8x128xf32>
    %c2_i32_277 = arith.constant 2 : i32
    %1181 = tpu.dynamic_rotate %1180 by %c2_i32_277 dim 0 : vector<8x128xf32>, i32 -> vector<8x128xf32>
    %1182 = arith.addf %1180, %1181 : vector<8x128xf32>
    %c1_i32_278 = arith.constant 1 : i32
    %1183 = tpu.dynamic_rotate %1182 by %c1_i32_278 dim 0 : vector<8x128xf32>, i32 -> vector<8x128xf32>
    %1184 = arith.addf %1182, %1183 : vector<8x128xf32>
    %1185 = vector.extract_strided_slice %1097 {offsets = [0, 384], sizes = [8, 128], strides = [1, 1]} : vector<8x512xf32> to vector<8x128xf32>
    %1186 = arith.mulf %1160, %1185 : vector<8x128xf32>
    %c4_i32_279 = arith.constant 4 : i32
    %1187 = tpu.dynamic_rotate %1186 by %c4_i32_279 dim 0 : vector<8x128xf32>, i32 -> vector<8x128xf32>
    %1188 = arith.addf %1186, %1187 : vector<8x128xf32>
    %c2_i32_280 = arith.constant 2 : i32
    %1189 = tpu.dynamic_rotate %1188 by %c2_i32_280 dim 0 : vector<8x128xf32>, i32 -> vector<8x128xf32>
    %1190 = arith.addf %1188, %1189 : vector<8x128xf32>
    %c1_i32_281 = arith.constant 1 : i32
    %1191 = tpu.dynamic_rotate %1190 by %c1_i32_281 dim 0 : vector<8x128xf32>, i32 -> vector<8x128xf32>
    %1192 = arith.addf %1190, %1191 : vector<8x128xf32>
    %1193 = arith.maximumf %1168, %1176 : vector<8x128xf32>
    %1194 = arith.maximumf %1193, %1184 : vector<8x128xf32>
    %1195 = arith.maximumf %1194, %1192 : vector<8x128xf32>
    %1196 = arith.subf %1168, %1195 : vector<8x128xf32>
    %1197 = math.exp %1196 : vector<8x128xf32>
    %1198 = arith.subf %1176, %1195 : vector<8x128xf32>
    %1199 = math.exp %1198 : vector<8x128xf32>
    %1200 = arith.subf %1184, %1195 : vector<8x128xf32>
    %1201 = math.exp %1200 : vector<8x128xf32>
    %1202 = arith.subf %1192, %1195 : vector<8x128xf32>
    %1203 = math.exp %1202 : vector<8x128xf32>
    %1204 = arith.addf %1197, %1199 : vector<8x128xf32>
    %1205 = arith.addf %1204, %1201 : vector<8x128xf32>
    %1206 = arith.addf %1205, %1203 : vector<8x128xf32>
    %1207 = vector.extract_strided_slice %1098 {offsets = [0, 0], sizes = [8, 128], strides = [1, 1]} : vector<8x512xf32> to vector<8x128xf32>
    %1208 = arith.mulf %1197, %1207 : vector<8x128xf32>
    %1209 = vector.extract_strided_slice %1098 {offsets = [0, 128], sizes = [8, 128], strides = [1, 1]} : vector<8x512xf32> to vector<8x128xf32>
    %1210 = arith.mulf %1199, %1209 : vector<8x128xf32>
    %1211 = arith.addf %1208, %1210 : vector<8x128xf32>
    %1212 = vector.extract_strided_slice %1098 {offsets = [0, 256], sizes = [8, 128], strides = [1, 1]} : vector<8x512xf32> to vector<8x128xf32>
    %1213 = arith.mulf %1201, %1212 : vector<8x128xf32>
    %1214 = arith.addf %1211, %1213 : vector<8x128xf32>
    %1215 = vector.extract_strided_slice %1098 {offsets = [0, 384], sizes = [8, 128], strides = [1, 1]} : vector<8x512xf32> to vector<8x128xf32>
    %1216 = arith.mulf %1203, %1215 : vector<8x128xf32>
    %1217 = arith.addf %1214, %1216 : vector<8x128xf32>
    %1218 = tpu.reciprocal %1206 {approx = true} : vector<8x128xf32> -> vector<8x128xf32>
    %1219 = arith.mulf %1217, %1218 : vector<8x128xf32>
    %c0_282 = arith.constant 0 : index
    %c128_283 = arith.constant 128 : index
    %1220 = vector.load %arg14[%c0_282, %c128_283] : memref<32x512xf32, #tpu.memory_space<vmem>>, vector<8x128xf32>
    tpu.vector_store %arg14[%c0_282, %c128_283], %1219 {strides = array<i32>} : memref<32x512xf32, #tpu.memory_space<vmem>>, vector<8x128xf32>,
    %1221 = vector.extract_strided_slice %1096 {offsets = [0, 256], sizes = [8, 128], strides = [1, 1]} : vector<8x512xf32> to vector<8x128xf32>
    %1222 = vector.extract_strided_slice %1097 {offsets = [0, 0], sizes = [8, 128], strides = [1, 1]} : vector<8x512xf32> to vector<8x128xf32>
    %1223 = arith.mulf %1221, %1222 : vector<8x128xf32>
    %c4_i32_284 = arith.constant 4 : i32
    %1224 = tpu.dynamic_rotate %1223 by %c4_i32_284 dim 0 : vector<8x128xf32>, i32 -> vector<8x128xf32>
    %1225 = arith.addf %1223, %1224 : vector<8x128xf32>
    %c2_i32_285 = arith.constant 2 : i32
    %1226 = tpu.dynamic_rotate %1225 by %c2_i32_285 dim 0 : vector<8x128xf32>, i32 -> vector<8x128xf32>
    %1227 = arith.addf %1225, %1226 : vector<8x128xf32>
    %c1_i32_286 = arith.constant 1 : i32
    %1228 = tpu.dynamic_rotate %1227 by %c1_i32_286 dim 0 : vector<8x128xf32>, i32 -> vector<8x128xf32>
    %1229 = arith.addf %1227, %1228 : vector<8x128xf32>
    %1230 = vector.extract_strided_slice %1097 {offsets = [0, 128], sizes = [8, 128], strides = [1, 1]} : vector<8x512xf32> to vector<8x128xf32>
    %1231 = arith.mulf %1221, %1230 : vector<8x128xf32>
    %c4_i32_287 = arith.constant 4 : i32
    %1232 = tpu.dynamic_rotate %1231 by %c4_i32_287 dim 0 : vector<8x128xf32>, i32 -> vector<8x128xf32>
    %1233 = arith.addf %1231, %1232 : vector<8x128xf32>
    %c2_i32_288 = arith.constant 2 : i32
    %1234 = tpu.dynamic_rotate %1233 by %c2_i32_288 dim 0 : vector<8x128xf32>, i32 -> vector<8x128xf32>
    %1235 = arith.addf %1233, %1234 : vector<8x128xf32>
    %c1_i32_289 = arith.constant 1 : i32
    %1236 = tpu.dynamic_rotate %1235 by %c1_i32_289 dim 0 : vector<8x128xf32>, i32 -> vector<8x128xf32>
    %1237 = arith.addf %1235, %1236 : vector<8x128xf32>
    %1238 = vector.extract_strided_slice %1097 {offsets = [0, 256], sizes = [8, 128], strides = [1, 1]} : vector<8x512xf32> to vector<8x128xf32>
    %1239 = arith.mulf %1221, %1238 : vector<8x128xf32>
    %c4_i32_290 = arith.constant 4 : i32
    %1240 = tpu.dynamic_rotate %1239 by %c4_i32_290 dim 0 : vector<8x128xf32>, i32 -> vector<8x128xf32>
    %1241 = arith.addf %1239, %1240 : vector<8x128xf32>
    %c2_i32_291 = arith.constant 2 : i32
    %1242 = tpu.dynamic_rotate %1241 by %c2_i32_291 dim 0 : vector<8x128xf32>, i32 -> vector<8x128xf32>
    %1243 = arith.addf %1241, %1242 : vector<8x128xf32>
    %c1_i32_292 = arith.constant 1 : i32
    %1244 = tpu.dynamic_rotate %1243 by %c1_i32_292 dim 0 : vector<8x128xf32>, i32 -> vector<8x128xf32>
    %1245 = arith.addf %1243, %1244 : vector<8x128xf32>
    %1246 = vector.extract_strided_slice %1097 {offsets = [0, 384], sizes = [8, 128], strides = [1, 1]} : vector<8x512xf32> to vector<8x128xf32>
    %1247 = arith.mulf %1221, %1246 : vector<8x128xf32>
    %c4_i32_293 = arith.constant 4 : i32
    %1248 = tpu.dynamic_rotate %1247 by %c4_i32_293 dim 0 : vector<8x128xf32>, i32 -> vector<8x128xf32>
    %1249 = arith.addf %1247, %1248 : vector<8x128xf32>
    %c2_i32_294 = arith.constant 2 : i32
    %1250 = tpu.dynamic_rotate %1249 by %c2_i32_294 dim 0 : vector<8x128xf32>, i32 -> vector<8x128xf32>
    %1251 = arith.addf %1249, %1250 : vector<8x128xf32>
    %c1_i32_295 = arith.constant 1 : i32
    %1252 = tpu.dynamic_rotate %1251 by %c1_i32_295 dim 0 : vector<8x128xf32>, i32 -> vector<8x128xf32>
    %1253 = arith.addf %1251, %1252 : vector<8x128xf32>
    %1254 = arith.maximumf %1229, %1237 : vector<8x128xf32>
    %1255 = arith.maximumf %1254, %1245 : vector<8x128xf32>
    %1256 = arith.maximumf %1255, %1253 : vector<8x128xf32>
    %1257 = arith.subf %1229, %1256 : vector<8x128xf32>
    %1258 = math.exp %1257 : vector<8x128xf32>
    %1259 = arith.subf %1237, %1256 : vector<8x128xf32>
    %1260 = math.exp %1259 : vector<8x128xf32>
    %1261 = arith.subf %1245, %1256 : vector<8x128xf32>
    %1262 = math.exp %1261 : vector<8x128xf32>
    %1263 = arith.subf %1253, %1256 : vector<8x128xf32>
    %1264 = math.exp %1263 : vector<8x128xf32>
    %1265 = arith.addf %1258, %1260 : vector<8x128xf32>
    %1266 = arith.addf %1265, %1262 : vector<8x128xf32>
    %1267 = arith.addf %1266, %1264 : vector<8x128xf32>
    %1268 = vector.extract_strided_slice %1098 {offsets = [0, 0], sizes = [8, 128], strides = [1, 1]} : vector<8x512xf32> to vector<8x128xf32>
    %1269 = arith.mulf %1258, %1268 : vector<8x128xf32>
    %1270 = vector.extract_strided_slice %1098 {offsets = [0, 128], sizes = [8, 128], strides = [1, 1]} : vector<8x512xf32> to vector<8x128xf32>
    %1271 = arith.mulf %1260, %1270 : vector<8x128xf32>
    %1272 = arith.addf %1269, %1271 : vector<8x128xf32>
    %1273 = vector.extract_strided_slice %1098 {offsets = [0, 256], sizes = [8, 128], strides = [1, 1]} : vector<8x512xf32> to vector<8x128xf32>
    %1274 = arith.mulf %1262, %1273 : vector<8x128xf32>
    %1275 = arith.addf %1272, %1274 : vector<8x128xf32>
    %1276 = vector.extract_strided_slice %1098 {offsets = [0, 384], sizes = [8, 128], strides = [1, 1]} : vector<8x512xf32> to vector<8x128xf32>
    %1277 = arith.mulf %1264, %1276 : vector<8x128xf32>
    %1278 = arith.addf %1275, %1277 : vector<8x128xf32>
    %1279 = tpu.reciprocal %1267 {approx = true} : vector<8x128xf32> -> vector<8x128xf32>
    %1280 = arith.mulf %1278, %1279 : vector<8x128xf32>
    %c0_296 = arith.constant 0 : index
    %c256_297 = arith.constant 256 : index
    %1281 = vector.load %arg14[%c0_296, %c256_297] : memref<32x512xf32, #tpu.memory_space<vmem>>, vector<8x128xf32>
    tpu.vector_store %arg14[%c0_296, %c256_297], %1280 {strides = array<i32>} : memref<32x512xf32, #tpu.memory_space<vmem>>, vector<8x128xf32>,
    %1282 = vector.extract_strided_slice %1096 {offsets = [0, 384], sizes = [8, 128], strides = [1, 1]} : vector<8x512xf32> to vector<8x128xf32>
    %1283 = vector.extract_strided_slice %1097 {offsets = [0, 0], sizes = [8, 128], strides = [1, 1]} : vector<8x512xf32> to vector<8x128xf32>
    %1284 = arith.mulf %1282, %1283 : vector<8x128xf32>
    %c4_i32_298 = arith.constant 4 : i32
    %1285 = tpu.dynamic_rotate %1284 by %c4_i32_298 dim 0 : vector<8x128xf32>, i32 -> vector<8x128xf32>
    %1286 = arith.addf %1284, %1285 : vector<8x128xf32>
    %c2_i32_299 = arith.constant 2 : i32
    %1287 = tpu.dynamic_rotate %1286 by %c2_i32_299 dim 0 : vector<8x128xf32>, i32 -> vector<8x128xf32>
    %1288 = arith.addf %1286, %1287 : vector<8x128xf32>
    %c1_i32_300 = arith.constant 1 : i32
    %1289 = tpu.dynamic_rotate %1288 by %c1_i32_300 dim 0 : vector<8x128xf32>, i32 -> vector<8x128xf32>
    %1290 = arith.addf %1288, %1289 : vector<8x128xf32>
    %1291 = vector.extract_strided_slice %1097 {offsets = [0, 128], sizes = [8, 128], strides = [1, 1]} : vector<8x512xf32> to vector<8x128xf32>
    %1292 = arith.mulf %1282, %1291 : vector<8x128xf32>
    %c4_i32_301 = arith.constant 4 : i32
    %1293 = tpu.dynamic_rotate %1292 by %c4_i32_301 dim 0 : vector<8x128xf32>, i32 -> vector<8x128xf32>
    %1294 = arith.addf %1292, %1293 : vector<8x128xf32>
    %c2_i32_302 = arith.constant 2 : i32
    %1295 = tpu.dynamic_rotate %1294 by %c2_i32_302 dim 0 : vector<8x128xf32>, i32 -> vector<8x128xf32>
    %1296 = arith.addf %1294, %1295 : vector<8x128xf32>
    %c1_i32_303 = arith.constant 1 : i32
    %1297 = tpu.dynamic_rotate %1296 by %c1_i32_303 dim 0 : vector<8x128xf32>, i32 -> vector<8x128xf32>
    %1298 = arith.addf %1296, %1297 : vector<8x128xf32>
    %1299 = vector.extract_strided_slice %1097 {offsets = [0, 256], sizes = [8, 128], strides = [1, 1]} : vector<8x512xf32> to vector<8x128xf32>
    %1300 = arith.mulf %1282, %1299 : vector<8x128xf32>
    %c4_i32_304 = arith.constant 4 : i32
    %1301 = tpu.dynamic_rotate %1300 by %c4_i32_304 dim 0 : vector<8x128xf32>, i32 -> vector<8x128xf32>
    %1302 = arith.addf %1300, %1301 : vector<8x128xf32>
    %c2_i32_305 = arith.constant 2 : i32
    %1303 = tpu.dynamic_rotate %1302 by %c2_i32_305 dim 0 : vector<8x128xf32>, i32 -> vector<8x128xf32>
    %1304 = arith.addf %1302, %1303 : vector<8x128xf32>
    %c1_i32_306 = arith.constant 1 : i32
    %1305 = tpu.dynamic_rotate %1304 by %c1_i32_306 dim 0 : vector<8x128xf32>, i32 -> vector<8x128xf32>
    %1306 = arith.addf %1304, %1305 : vector<8x128xf32>
    %1307 = vector.extract_strided_slice %1097 {offsets = [0, 384], sizes = [8, 128], strides = [1, 1]} : vector<8x512xf32> to vector<8x128xf32>
    %1308 = arith.mulf %1282, %1307 : vector<8x128xf32>
    %c4_i32_307 = arith.constant 4 : i32
    %1309 = tpu.dynamic_rotate %1308 by %c4_i32_307 dim 0 : vector<8x128xf32>, i32 -> vector<8x128xf32>
    %1310 = arith.addf %1308, %1309 : vector<8x128xf32>
    %c2_i32_308 = arith.constant 2 : i32
    %1311 = tpu.dynamic_rotate %1310 by %c2_i32_308 dim 0 : vector<8x128xf32>, i32 -> vector<8x128xf32>
    %1312 = arith.addf %1310, %1311 : vector<8x128xf32>
    %c1_i32_309 = arith.constant 1 : i32
    %1313 = tpu.dynamic_rotate %1312 by %c1_i32_309 dim 0 : vector<8x128xf32>, i32 -> vector<8x128xf32>
    %1314 = arith.addf %1312, %1313 : vector<8x128xf32>
    %1315 = arith.maximumf %1290, %1298 : vector<8x128xf32>
    %1316 = arith.maximumf %1315, %1306 : vector<8x128xf32>
    %1317 = arith.maximumf %1316, %1314 : vector<8x128xf32>
    %1318 = arith.subf %1290, %1317 : vector<8x128xf32>
    %1319 = math.exp %1318 : vector<8x128xf32>
    %1320 = arith.subf %1298, %1317 : vector<8x128xf32>
    %1321 = math.exp %1320 : vector<8x128xf32>
    %1322 = arith.subf %1306, %1317 : vector<8x128xf32>
    %1323 = math.exp %1322 : vector<8x128xf32>
    %1324 = arith.subf %1314, %1317 : vector<8x128xf32>
    %1325 = math.exp %1324 : vector<8x128xf32>
    %1326 = arith.addf %1319, %1321 : vector<8x128xf32>
    %1327 = arith.addf %1326, %1323 : vector<8x128xf32>
    %1328 = arith.addf %1327, %1325 : vector<8x128xf32>
    %1329 = vector.extract_strided_slice %1098 {offsets = [0, 0], sizes = [8, 128], strides = [1, 1]} : vector<8x512xf32> to vector<8x128xf32>
    %1330 = arith.mulf %1319, %1329 : vector<8x128xf32>
    %1331 = vector.extract_strided_slice %1098 {offsets = [0, 128], sizes = [8, 128], strides = [1, 1]} : vector<8x512xf32> to vector<8x128xf32>
    %1332 = arith.mulf %1321, %1331 : vector<8x128xf32>
    %1333 = arith.addf %1330, %1332 : vector<8x128xf32>
    %1334 = vector.extract_strided_slice %1098 {offsets = [0, 256], sizes = [8, 128], strides = [1, 1]} : vector<8x512xf32> to vector<8x128xf32>
    %1335 = arith.mulf %1323, %1334 : vector<8x128xf32>
    %1336 = arith.addf %1333, %1335 : vector<8x128xf32>
    %1337 = vector.extract_strided_slice %1098 {offsets = [0, 384], sizes = [8, 128], strides = [1, 1]} : vector<8x512xf32> to vector<8x128xf32>
    %1338 = arith.mulf %1325, %1337 : vector<8x128xf32>
    %1339 = arith.addf %1336, %1338 : vector<8x128xf32>
    %1340 = tpu.reciprocal %1328 {approx = true} : vector<8x128xf32> -> vector<8x128xf32>
    %1341 = arith.mulf %1339, %1340 : vector<8x128xf32>
    %c0_310 = arith.constant 0 : index
    %c384_311 = arith.constant 384 : index
    %1342 = vector.load %arg14[%c0_310, %c384_311] : memref<32x512xf32, #tpu.memory_space<vmem>>, vector<8x128xf32>
    tpu.vector_store %arg14[%c0_310, %c384_311], %1341 {strides = array<i32>} : memref<32x512xf32, #tpu.memory_space<vmem>>, vector<8x128xf32>,
    %1343 = vector.extract_strided_slice %1095 {offsets = [8, 0], sizes = [8, 512], strides = [1, 1]} : vector<96x512xf32> to vector<8x512xf32>
    %1344 = vector.extract_strided_slice %1095 {offsets = [24, 0], sizes = [8, 512], strides = [1, 1]} : vector<96x512xf32> to vector<8x512xf32>
    %1345 = vector.extract_strided_slice %1095 {offsets = [40, 0], sizes = [8, 512], strides = [1, 1]} : vector<96x512xf32> to vector<8x512xf32>
    %1346 = vector.extract_strided_slice %1343 {offsets = [0, 0], sizes = [8, 128], strides = [1, 1]} : vector<8x512xf32> to vector<8x128xf32>
    %1347 = vector.extract_strided_slice %1344 {offsets = [0, 0], sizes = [8, 128], strides = [1, 1]} : vector<8x512xf32> to vector<8x128xf32>
    %1348 = arith.mulf %1346, %1347 : vector<8x128xf32>
    %c4_i32_312 = arith.constant 4 : i32
    %1349 = tpu.dynamic_rotate %1348 by %c4_i32_312 dim 0 : vector<8x128xf32>, i32 -> vector<8x128xf32>
    %1350 = arith.addf %1348, %1349 : vector<8x128xf32>
    %c2_i32_313 = arith.constant 2 : i32
    %1351 = tpu.dynamic_rotate %1350 by %c2_i32_313 dim 0 : vector<8x128xf32>, i32 -> vector<8x128xf32>
    %1352 = arith.addf %1350, %1351 : vector<8x128xf32>
    %c1_i32_314 = arith.constant 1 : i32
    %1353 = tpu.dynamic_rotate %1352 by %c1_i32_314 dim 0 : vector<8x128xf32>, i32 -> vector<8x128xf32>
    %1354 = arith.addf %1352, %1353 : vector<8x128xf32>
    %1355 = vector.extract_strided_slice %1344 {offsets = [0, 128], sizes = [8, 128], strides = [1, 1]} : vector<8x512xf32> to vector<8x128xf32>
    %1356 = arith.mulf %1346, %1355 : vector<8x128xf32>
    %c4_i32_315 = arith.constant 4 : i32
    %1357 = tpu.dynamic_rotate %1356 by %c4_i32_315 dim 0 : vector<8x128xf32>, i32 -> vector<8x128xf32>
    %1358 = arith.addf %1356, %1357 : vector<8x128xf32>
    %c2_i32_316 = arith.constant 2 : i32
    %1359 = tpu.dynamic_rotate %1358 by %c2_i32_316 dim 0 : vector<8x128xf32>, i32 -> vector<8x128xf32>
    %1360 = arith.addf %1358, %1359 : vector<8x128xf32>
    %c1_i32_317 = arith.constant 1 : i32
    %1361 = tpu.dynamic_rotate %1360 by %c1_i32_317 dim 0 : vector<8x128xf32>, i32 -> vector<8x128xf32>
    %1362 = arith.addf %1360, %1361 : vector<8x128xf32>
    %1363 = vector.extract_strided_slice %1344 {offsets = [0, 256], sizes = [8, 128], strides = [1, 1]} : vector<8x512xf32> to vector<8x128xf32>
    %1364 = arith.mulf %1346, %1363 : vector<8x128xf32>
    %c4_i32_318 = arith.constant 4 : i32
    %1365 = tpu.dynamic_rotate %1364 by %c4_i32_318 dim 0 : vector<8x128xf32>, i32 -> vector<8x128xf32>
    %1366 = arith.addf %1364, %1365 : vector<8x128xf32>
    %c2_i32_319 = arith.constant 2 : i32
    %1367 = tpu.dynamic_rotate %1366 by %c2_i32_319 dim 0 : vector<8x128xf32>, i32 -> vector<8x128xf32>
    %1368 = arith.addf %1366, %1367 : vector<8x128xf32>
    %c1_i32_320 = arith.constant 1 : i32
    %1369 = tpu.dynamic_rotate %1368 by %c1_i32_320 dim 0 : vector<8x128xf32>, i32 -> vector<8x128xf32>
    %1370 = arith.addf %1368, %1369 : vector<8x128xf32>
    %1371 = vector.extract_strided_slice %1344 {offsets = [0, 384], sizes = [8, 128], strides = [1, 1]} : vector<8x512xf32> to vector<8x128xf32>
    %1372 = arith.mulf %1346, %1371 : vector<8x128xf32>
    %c4_i32_321 = arith.constant 4 : i32
    %1373 = tpu.dynamic_rotate %1372 by %c4_i32_321 dim 0 : vector<8x128xf32>, i32 -> vector<8x128xf32>
    %1374 = arith.addf %1372, %1373 : vector<8x128xf32>
    %c2_i32_322 = arith.constant 2 : i32
    %1375 = tpu.dynamic_rotate %1374 by %c2_i32_322 dim 0 : vector<8x128xf32>, i32 -> vector<8x128xf32>
    %1376 = arith.addf %1374, %1375 : vector<8x128xf32>
    %c1_i32_323 = arith.constant 1 : i32
    %1377 = tpu.dynamic_rotate %1376 by %c1_i32_323 dim 0 : vector<8x128xf32>, i32 -> vector<8x128xf32>
    %1378 = arith.addf %1376, %1377 : vector<8x128xf32>
    %1379 = arith.maximumf %1354, %1362 : vector<8x128xf32>
    %1380 = arith.maximumf %1379, %1370 : vector<8x128xf32>
    %1381 = arith.maximumf %1380, %1378 : vector<8x128xf32>
    %1382 = arith.subf %1354, %1381 : vector<8x128xf32>
    %1383 = math.exp %1382 : vector<8x128xf32>
    %1384 = arith.subf %1362, %1381 : vector<8x128xf32>
    %1385 = math.exp %1384 : vector<8x128xf32>
    %1386 = arith.subf %1370, %1381 : vector<8x128xf32>
    %1387 = math.exp %1386 : vector<8x128xf32>
    %1388 = arith.subf %1378, %1381 : vector<8x128xf32>
    %1389 = math.exp %1388 : vector<8x128xf32>
    %1390 = arith.addf %1383, %1385 : vector<8x128xf32>
    %1391 = arith.addf %1390, %1387 : vector<8x128xf32>
    %1392 = arith.addf %1391, %1389 : vector<8x128xf32>
    %1393 = vector.extract_strided_slice %1345 {offsets = [0, 0], sizes = [8, 128], strides = [1, 1]} : vector<8x512xf32> to vector<8x128xf32>
    %1394 = arith.mulf %1383, %1393 : vector<8x128xf32>
    %1395 = vector.extract_strided_slice %1345 {offsets = [0, 128], sizes = [8, 128], strides = [1, 1]} : vector<8x512xf32> to vector<8x128xf32>
    %1396 = arith.mulf %1385, %1395 : vector<8x128xf32>
    %1397 = arith.addf %1394, %1396 : vector<8x128xf32>
    %1398 = vector.extract_strided_slice %1345 {offsets = [0, 256], sizes = [8, 128], strides = [1, 1]} : vector<8x512xf32> to vector<8x128xf32>
    %1399 = arith.mulf %1387, %1398 : vector<8x128xf32>
    %1400 = arith.addf %1397, %1399 : vector<8x128xf32>
    %1401 = vector.extract_strided_slice %1345 {offsets = [0, 384], sizes = [8, 128], strides = [1, 1]} : vector<8x512xf32> to vector<8x128xf32>
    %1402 = arith.mulf %1389, %1401 : vector<8x128xf32>
    %1403 = arith.addf %1400, %1402 : vector<8x128xf32>
    %1404 = tpu.reciprocal %1392 {approx = true} : vector<8x128xf32> -> vector<8x128xf32>
    %1405 = arith.mulf %1403, %1404 : vector<8x128xf32>
    %c8_324 = arith.constant 8 : index
    %c0_325 = arith.constant 0 : index
    %1406 = vector.load %arg14[%c8_324, %c0_325] : memref<32x512xf32, #tpu.memory_space<vmem>>, vector<8x128xf32>
    tpu.vector_store %arg14[%c8_324, %c0_325], %1405 {strides = array<i32>} : memref<32x512xf32, #tpu.memory_space<vmem>>, vector<8x128xf32>,
    %1407 = vector.extract_strided_slice %1343 {offsets = [0, 128], sizes = [8, 128], strides = [1, 1]} : vector<8x512xf32> to vector<8x128xf32>
    %1408 = vector.extract_strided_slice %1344 {offsets = [0, 0], sizes = [8, 128], strides = [1, 1]} : vector<8x512xf32> to vector<8x128xf32>
    %1409 = arith.mulf %1407, %1408 : vector<8x128xf32>
    %c4_i32_326 = arith.constant 4 : i32
    %1410 = tpu.dynamic_rotate %1409 by %c4_i32_326 dim 0 : vector<8x128xf32>, i32 -> vector<8x128xf32>
    %1411 = arith.addf %1409, %1410 : vector<8x128xf32>
    %c2_i32_327 = arith.constant 2 : i32
    %1412 = tpu.dynamic_rotate %1411 by %c2_i32_327 dim 0 : vector<8x128xf32>, i32 -> vector<8x128xf32>
    %1413 = arith.addf %1411, %1412 : vector<8x128xf32>
    %c1_i32_328 = arith.constant 1 : i32
    %1414 = tpu.dynamic_rotate %1413 by %c1_i32_328 dim 0 : vector<8x128xf32>, i32 -> vector<8x128xf32>
    %1415 = arith.addf %1413, %1414 : vector<8x128xf32>
    %1416 = vector.extract_strided_slice %1344 {offsets = [0, 128], sizes = [8, 128], strides = [1, 1]} : vector<8x512xf32> to vector<8x128xf32>
    %1417 = arith.mulf %1407, %1416 : vector<8x128xf32>
    %c4_i32_329 = arith.constant 4 : i32
    %1418 = tpu.dynamic_rotate %1417 by %c4_i32_329 dim 0 : vector<8x128xf32>, i32 -> vector<8x128xf32>
    %1419 = arith.addf %1417, %1418 : vector<8x128xf32>
    %c2_i32_330 = arith.constant 2 : i32
    %1420 = tpu.dynamic_rotate %1419 by %c2_i32_330 dim 0 : vector<8x128xf32>, i32 -> vector<8x128xf32>
    %1421 = arith.addf %1419, %1420 : vector<8x128xf32>
    %c1_i32_331 = arith.constant 1 : i32
    %1422 = tpu.dynamic_rotate %1421 by %c1_i32_331 dim 0 : vector<8x128xf32>, i32 -> vector<8x128xf32>
    %1423 = arith.addf %1421, %1422 : vector<8x128xf32>
    %1424 = vector.extract_strided_slice %1344 {offsets = [0, 256], sizes = [8, 128], strides = [1, 1]} : vector<8x512xf32> to vector<8x128xf32>
    %1425 = arith.mulf %1407, %1424 : vector<8x128xf32>
    %c4_i32_332 = arith.constant 4 : i32
    %1426 = tpu.dynamic_rotate %1425 by %c4_i32_332 dim 0 : vector<8x128xf32>, i32 -> vector<8x128xf32>
    %1427 = arith.addf %1425, %1426 : vector<8x128xf32>
    %c2_i32_333 = arith.constant 2 : i32
    %1428 = tpu.dynamic_rotate %1427 by %c2_i32_333 dim 0 : vector<8x128xf32>, i32 -> vector<8x128xf32>
    %1429 = arith.addf %1427, %1428 : vector<8x128xf32>
    %c1_i32_334 = arith.constant 1 : i32
    %1430 = tpu.dynamic_rotate %1429 by %c1_i32_334 dim 0 : vector<8x128xf32>, i32 -> vector<8x128xf32>
    %1431 = arith.addf %1429, %1430 : vector<8x128xf32>
    %1432 = vector.extract_strided_slice %1344 {offsets = [0, 384], sizes = [8, 128], strides = [1, 1]} : vector<8x512xf32> to vector<8x128xf32>
    %1433 = arith.mulf %1407, %1432 : vector<8x128xf32>
    %c4_i32_335 = arith.constant 4 : i32
    %1434 = tpu.dynamic_rotate %1433 by %c4_i32_335 dim 0 : vector<8x128xf32>, i32 -> vector<8x128xf32>
    %1435 = arith.addf %1433, %1434 : vector<8x128xf32>
    %c2_i32_336 = arith.constant 2 : i32
    %1436 = tpu.dynamic_rotate %1435 by %c2_i32_336 dim 0 : vector<8x128xf32>, i32 -> vector<8x128xf32>
    %1437 = arith.addf %1435, %1436 : vector<8x128xf32>
    %c1_i32_337 = arith.constant 1 : i32
    %1438 = tpu.dynamic_rotate %1437 by %c1_i32_337 dim 0 : vector<8x128xf32>, i32 -> vector<8x128xf32>
    %1439 = arith.addf %1437, %1438 : vector<8x128xf32>
    %1440 = arith.maximumf %1415, %1423 : vector<8x128xf32>
    %1441 = arith.maximumf %1440, %1431 : vector<8x128xf32>
    %1442 = arith.maximumf %1441, %1439 : vector<8x128xf32>
    %1443 = arith.subf %1415, %1442 : vector<8x128xf32>
    %1444 = math.exp %1443 : vector<8x128xf32>
    %1445 = arith.subf %1423, %1442 : vector<8x128xf32>
    %1446 = math.exp %1445 : vector<8x128xf32>
    %1447 = arith.subf %1431, %1442 : vector<8x128xf32>
    %1448 = math.exp %1447 : vector<8x128xf32>
    %1449 = arith.subf %1439, %1442 : vector<8x128xf32>
    %1450 = math.exp %1449 : vector<8x128xf32>
    %1451 = arith.addf %1444, %1446 : vector<8x128xf32>
    %1452 = arith.addf %1451, %1448 : vector<8x128xf32>
    %1453 = arith.addf %1452, %1450 : vector<8x128xf32>
    %1454 = vector.extract_strided_slice %1345 {offsets = [0, 0], sizes = [8, 128], strides = [1, 1]} : vector<8x512xf32> to vector<8x128xf32>
    %1455 = arith.mulf %1444, %1454 : vector<8x128xf32>
    %1456 = vector.extract_strided_slice %1345 {offsets = [0, 128], sizes = [8, 128], strides = [1, 1]} : vector<8x512xf32> to vector<8x128xf32>
    %1457 = arith.mulf %1446, %1456 : vector<8x128xf32>
    %1458 = arith.addf %1455, %1457 : vector<8x128xf32>
    %1459 = vector.extract_strided_slice %1345 {offsets = [0, 256], sizes = [8, 128], strides = [1, 1]} : vector<8x512xf32> to vector<8x128xf32>
    %1460 = arith.mulf %1448, %1459 : vector<8x128xf32>
    %1461 = arith.addf %1458, %1460 : vector<8x128xf32>
    %1462 = vector.extract_strided_slice %1345 {offsets = [0, 384], sizes = [8, 128], strides = [1, 1]} : vector<8x512xf32> to vector<8x128xf32>
    %1463 = arith.mulf %1450, %1462 : vector<8x128xf32>
    %1464 = arith.addf %1461, %1463 : vector<8x128xf32>
    %1465 = tpu.reciprocal %1453 {approx = true} : vector<8x128xf32> -> vector<8x128xf32>
    %1466 = arith.mulf %1464, %1465 : vector<8x128xf32>
    %c8_338 = arith.constant 8 : index
    %c128_339 = arith.constant 128 : index
    %1467 = vector.load %arg14[%c8_338, %c128_339] : memref<32x512xf32, #tpu.memory_space<vmem>>, vector<8x128xf32>
    tpu.vector_store %arg14[%c8_338, %c128_339], %1466 {strides = array<i32>} : memref<32x512xf32, #tpu.memory_space<vmem>>, vector<8x128xf32>,
    %1468 = vector.extract_strided_slice %1343 {offsets = [0, 256], sizes = [8, 128], strides = [1, 1]} : vector<8x512xf32> to vector<8x128xf32>
    %1469 = vector.extract_strided_slice %1344 {offsets = [0, 0], sizes = [8, 128], strides = [1, 1]} : vector<8x512xf32> to vector<8x128xf32>
    %1470 = arith.mulf %1468, %1469 : vector<8x128xf32>
    %c4_i32_340 = arith.constant 4 : i32
    %1471 = tpu.dynamic_rotate %1470 by %c4_i32_340 dim 0 : vector<8x128xf32>, i32 -> vector<8x128xf32>
    %1472 = arith.addf %1470, %1471 : vector<8x128xf32>
    %c2_i32_341 = arith.constant 2 : i32
    %1473 = tpu.dynamic_rotate %1472 by %c2_i32_341 dim 0 : vector<8x128xf32>, i32 -> vector<8x128xf32>
    %1474 = arith.addf %1472, %1473 : vector<8x128xf32>
    %c1_i32_342 = arith.constant 1 : i32
    %1475 = tpu.dynamic_rotate %1474 by %c1_i32_342 dim 0 : vector<8x128xf32>, i32 -> vector<8x128xf32>
    %1476 = arith.addf %1474, %1475 : vector<8x128xf32>
    %1477 = vector.extract_strided_slice %1344 {offsets = [0, 128], sizes = [8, 128], strides = [1, 1]} : vector<8x512xf32> to vector<8x128xf32>
    %1478 = arith.mulf %1468, %1477 : vector<8x128xf32>
    %c4_i32_343 = arith.constant 4 : i32
    %1479 = tpu.dynamic_rotate %1478 by %c4_i32_343 dim 0 : vector<8x128xf32>, i32 -> vector<8x128xf32>
    %1480 = arith.addf %1478, %1479 : vector<8x128xf32>
    %c2_i32_344 = arith.constant 2 : i32
    %1481 = tpu.dynamic_rotate %1480 by %c2_i32_344 dim 0 : vector<8x128xf32>, i32 -> vector<8x128xf32>
    %1482 = arith.addf %1480, %1481 : vector<8x128xf32>
    %c1_i32_345 = arith.constant 1 : i32
    %1483 = tpu.dynamic_rotate %1482 by %c1_i32_345 dim 0 : vector<8x128xf32>, i32 -> vector<8x128xf32>
    %1484 = arith.addf %1482, %1483 : vector<8x128xf32>
    %1485 = vector.extract_strided_slice %1344 {offsets = [0, 256], sizes = [8, 128], strides = [1, 1]} : vector<8x512xf32> to vector<8x128xf32>
    %1486 = arith.mulf %1468, %1485 : vector<8x128xf32>
    %c4_i32_346 = arith.constant 4 : i32
    %1487 = tpu.dynamic_rotate %1486 by %c4_i32_346 dim 0 : vector<8x128xf32>, i32 -> vector<8x128xf32>
    %1488 = arith.addf %1486, %1487 : vector<8x128xf32>
    %c2_i32_347 = arith.constant 2 : i32
    %1489 = tpu.dynamic_rotate %1488 by %c2_i32_347 dim 0 : vector<8x128xf32>, i32 -> vector<8x128xf32>
    %1490 = arith.addf %1488, %1489 : vector<8x128xf32>
    %c1_i32_348 = arith.constant 1 : i32
    %1491 = tpu.dynamic_rotate %1490 by %c1_i32_348 dim 0 : vector<8x128xf32>, i32 -> vector<8x128xf32>
    %1492 = arith.addf %1490, %1491 : vector<8x128xf32>
    %1493 = vector.extract_strided_slice %1344 {offsets = [0, 384], sizes = [8, 128], strides = [1, 1]} : vector<8x512xf32> to vector<8x128xf32>
    %1494 = arith.mulf %1468, %1493 : vector<8x128xf32>
    %c4_i32_349 = arith.constant 4 : i32
    %1495 = tpu.dynamic_rotate %1494 by %c4_i32_349 dim 0 : vector<8x128xf32>, i32 -> vector<8x128xf32>
    %1496 = arith.addf %1494, %1495 : vector<8x128xf32>
    %c2_i32_350 = arith.constant 2 : i32
    %1497 = tpu.dynamic_rotate %1496 by %c2_i32_350 dim 0 : vector<8x128xf32>, i32 -> vector<8x128xf32>
    %1498 = arith.addf %1496, %1497 : vector<8x128xf32>
    %c1_i32_351 = arith.constant 1 : i32
    %1499 = tpu.dynamic_rotate %1498 by %c1_i32_351 dim 0 : vector<8x128xf32>, i32 -> vector<8x128xf32>
    %1500 = arith.addf %1498, %1499 : vector<8x128xf32>
    %1501 = arith.maximumf %1476, %1484 : vector<8x128xf32>
    %1502 = arith.maximumf %1501, %1492 : vector<8x128xf32>
    %1503 = arith.maximumf %1502, %1500 : vector<8x128xf32>
    %1504 = arith.subf %1476, %1503 : vector<8x128xf32>
    %1505 = math.exp %1504 : vector<8x128xf32>
    %1506 = arith.subf %1484, %1503 : vector<8x128xf32>
    %1507 = math.exp %1506 : vector<8x128xf32>
    %1508 = arith.subf %1492, %1503 : vector<8x128xf32>
    %1509 = math.exp %1508 : vector<8x128xf32>
    %1510 = arith.subf %1500, %1503 : vector<8x128xf32>
    %1511 = math.exp %1510 : vector<8x128xf32>
    %1512 = arith.addf %1505, %1507 : vector<8x128xf32>
    %1513 = arith.addf %1512, %1509 : vector<8x128xf32>
    %1514 = arith.addf %1513, %1511 : vector<8x128xf32>
    %1515 = vector.extract_strided_slice %1345 {offsets = [0, 0], sizes = [8, 128], strides = [1, 1]} : vector<8x512xf32> to vector<8x128xf32>
    %1516 = arith.mulf %1505, %1515 : vector<8x128xf32>
    %1517 = vector.extract_strided_slice %1345 {offsets = [0, 128], sizes = [8, 128], strides = [1, 1]} : vector<8x512xf32> to vector<8x128xf32>
    %1518 = arith.mulf %1507, %1517 : vector<8x128xf32>
    %1519 = arith.addf %1516, %1518 : vector<8x128xf32>
    %1520 = vector.extract_strided_slice %1345 {offsets = [0, 256], sizes = [8, 128], strides = [1, 1]} : vector<8x512xf32> to vector<8x128xf32>
    %1521 = arith.mulf %1509, %1520 : vector<8x128xf32>
    %1522 = arith.addf %1519, %1521 : vector<8x128xf32>
    %1523 = vector.extract_strided_slice %1345 {offsets = [0, 384], sizes = [8, 128], strides = [1, 1]} : vector<8x512xf32> to vector<8x128xf32>
    %1524 = arith.mulf %1511, %1523 : vector<8x128xf32>
    %1525 = arith.addf %1522, %1524 : vector<8x128xf32>
    %1526 = tpu.reciprocal %1514 {approx = true} : vector<8x128xf32> -> vector<8x128xf32>
    %1527 = arith.mulf %1525, %1526 : vector<8x128xf32>
    %c8_352 = arith.constant 8 : index
    %c256_353 = arith.constant 256 : index
    %1528 = vector.load %arg14[%c8_352, %c256_353] : memref<32x512xf32, #tpu.memory_space<vmem>>, vector<8x128xf32>
    tpu.vector_store %arg14[%c8_352, %c256_353], %1527 {strides = array<i32>} : memref<32x512xf32, #tpu.memory_space<vmem>>, vector<8x128xf32>,
    %1529 = vector.extract_strided_slice %1343 {offsets = [0, 384], sizes = [8, 128], strides = [1, 1]} : vector<8x512xf32> to vector<8x128xf32>
    %1530 = vector.extract_strided_slice %1344 {offsets = [0, 0], sizes = [8, 128], strides = [1, 1]} : vector<8x512xf32> to vector<8x128xf32>
    %1531 = arith.mulf %1529, %1530 : vector<8x128xf32>
    %c4_i32_354 = arith.constant 4 : i32
    %1532 = tpu.dynamic_rotate %1531 by %c4_i32_354 dim 0 : vector<8x128xf32>, i32 -> vector<8x128xf32>
    %1533 = arith.addf %1531, %1532 : vector<8x128xf32>
    %c2_i32_355 = arith.constant 2 : i32
    %1534 = tpu.dynamic_rotate %1533 by %c2_i32_355 dim 0 : vector<8x128xf32>, i32 -> vector<8x128xf32>
    %1535 = arith.addf %1533, %1534 : vector<8x128xf32>
    %c1_i32_356 = arith.constant 1 : i32
    %1536 = tpu.dynamic_rotate %1535 by %c1_i32_356 dim 0 : vector<8x128xf32>, i32 -> vector<8x128xf32>
    %1537 = arith.addf %1535, %1536 : vector<8x128xf32>
    %1538 = vector.extract_strided_slice %1344 {offsets = [0, 128], sizes = [8, 128], strides = [1, 1]} : vector<8x512xf32> to vector<8x128xf32>
    %1539 = arith.mulf %1529, %1538 : vector<8x128xf32>
    %c4_i32_357 = arith.constant 4 : i32
    %1540 = tpu.dynamic_rotate %1539 by %c4_i32_357 dim 0 : vector<8x128xf32>, i32 -> vector<8x128xf32>
    %1541 = arith.addf %1539, %1540 : vector<8x128xf32>
    %c2_i32_358 = arith.constant 2 : i32
    %1542 = tpu.dynamic_rotate %1541 by %c2_i32_358 dim 0 : vector<8x128xf32>, i32 -> vector<8x128xf32>
    %1543 = arith.addf %1541, %1542 : vector<8x128xf32>
    %c1_i32_359 = arith.constant 1 : i32
    %1544 = tpu.dynamic_rotate %1543 by %c1_i32_359 dim 0 : vector<8x128xf32>, i32 -> vector<8x128xf32>
    %1545 = arith.addf %1543, %1544 : vector<8x128xf32>
    %1546 = vector.extract_strided_slice %1344 {offsets = [0, 256], sizes = [8, 128], strides = [1, 1]} : vector<8x512xf32> to vector<8x128xf32>
    %1547 = arith.mulf %1529, %1546 : vector<8x128xf32>
    %c4_i32_360 = arith.constant 4 : i32
    %1548 = tpu.dynamic_rotate %1547 by %c4_i32_360 dim 0 : vector<8x128xf32>, i32 -> vector<8x128xf32>
    %1549 = arith.addf %1547, %1548 : vector<8x128xf32>
    %c2_i32_361 = arith.constant 2 : i32
    %1550 = tpu.dynamic_rotate %1549 by %c2_i32_361 dim 0 : vector<8x128xf32>, i32 -> vector<8x128xf32>
    %1551 = arith.addf %1549, %1550 : vector<8x128xf32>
    %c1_i32_362 = arith.constant 1 : i32
    %1552 = tpu.dynamic_rotate %1551 by %c1_i32_362 dim 0 : vector<8x128xf32>, i32 -> vector<8x128xf32>
    %1553 = arith.addf %1551, %1552 : vector<8x128xf32>
    %1554 = vector.extract_strided_slice %1344 {offsets = [0, 384], sizes = [8, 128], strides = [1, 1]} : vector<8x512xf32> to vector<8x128xf32>
    %1555 = arith.mulf %1529, %1554 : vector<8x128xf32>
    %c4_i32_363 = arith.constant 4 : i32
    %1556 = tpu.dynamic_rotate %1555 by %c4_i32_363 dim 0 : vector<8x128xf32>, i32 -> vector<8x128xf32>
    %1557 = arith.addf %1555, %1556 : vector<8x128xf32>
    %c2_i32_364 = arith.constant 2 : i32
    %1558 = tpu.dynamic_rotate %1557 by %c2_i32_364 dim 0 : vector<8x128xf32>, i32 -> vector<8x128xf32>
    %1559 = arith.addf %1557, %1558 : vector<8x128xf32>
    %c1_i32_365 = arith.constant 1 : i32
    %1560 = tpu.dynamic_rotate %1559 by %c1_i32_365 dim 0 : vector<8x128xf32>, i32 -> vector<8x128xf32>
    %1561 = arith.addf %1559, %1560 : vector<8x128xf32>
    %1562 = arith.maximumf %1537, %1545 : vector<8x128xf32>
    %1563 = arith.maximumf %1562, %1553 : vector<8x128xf32>
    %1564 = arith.maximumf %1563, %1561 : vector<8x128xf32>
    %1565 = arith.subf %1537, %1564 : vector<8x128xf32>
    %1566 = math.exp %1565 : vector<8x128xf32>
    %1567 = arith.subf %1545, %1564 : vector<8x128xf32>
    %1568 = math.exp %1567 : vector<8x128xf32>
    %1569 = arith.subf %1553, %1564 : vector<8x128xf32>
    %1570 = math.exp %1569 : vector<8x128xf32>
    %1571 = arith.subf %1561, %1564 : vector<8x128xf32>
    %1572 = math.exp %1571 : vector<8x128xf32>
    %1573 = arith.addf %1566, %1568 : vector<8x128xf32>
    %1574 = arith.addf %1573, %1570 : vector<8x128xf32>
    %1575 = arith.addf %1574, %1572 : vector<8x128xf32>
    %1576 = vector.extract_strided_slice %1345 {offsets = [0, 0], sizes = [8, 128], strides = [1, 1]} : vector<8x512xf32> to vector<8x128xf32>
    %1577 = arith.mulf %1566, %1576 : vector<8x128xf32>
    %1578 = vector.extract_strided_slice %1345 {offsets = [0, 128], sizes = [8, 128], strides = [1, 1]} : vector<8x512xf32> to vector<8x128xf32>
    %1579 = arith.mulf %1568, %1578 : vector<8x128xf32>
    %1580 = arith.addf %1577, %1579 : vector<8x128xf32>
    %1581 = vector.extract_strided_slice %1345 {offsets = [0, 256], sizes = [8, 128], strides = [1, 1]} : vector<8x512xf32> to vector<8x128xf32>
    %1582 = arith.mulf %1570, %1581 : vector<8x128xf32>
    %1583 = arith.addf %1580, %1582 : vector<8x128xf32>
    %1584 = vector.extract_strided_slice %1345 {offsets = [0, 384], sizes = [8, 128], strides = [1, 1]} : vector<8x512xf32> to vector<8x128xf32>
    %1585 = arith.mulf %1572, %1584 : vector<8x128xf32>
    %1586 = arith.addf %1583, %1585 : vector<8x128xf32>
    %1587 = tpu.reciprocal %1575 {approx = true} : vector<8x128xf32> -> vector<8x128xf32>
    %1588 = arith.mulf %1586, %1587 : vector<8x128xf32>
    %c8_366 = arith.constant 8 : index
    %c384_367 = arith.constant 384 : index
    %1589 = vector.load %arg14[%c8_366, %c384_367] : memref<32x512xf32, #tpu.memory_space<vmem>>, vector<8x128xf32>
    tpu.vector_store %arg14[%c8_366, %c384_367], %1588 {strides = array<i32>} : memref<32x512xf32, #tpu.memory_space<vmem>>, vector<8x128xf32>,
    %1590 = vector.extract_strided_slice %1095 {offsets = [48, 0], sizes = [8, 512], strides = [1, 1]} : vector<96x512xf32> to vector<8x512xf32>
    %1591 = vector.extract_strided_slice %1095 {offsets = [64, 0], sizes = [8, 512], strides = [1, 1]} : vector<96x512xf32> to vector<8x512xf32>
    %1592 = vector.extract_strided_slice %1095 {offsets = [80, 0], sizes = [8, 512], strides = [1, 1]} : vector<96x512xf32> to vector<8x512xf32>
    %1593 = vector.extract_strided_slice %1590 {offsets = [0, 0], sizes = [8, 128], strides = [1, 1]} : vector<8x512xf32> to vector<8x128xf32>
    %1594 = vector.extract_strided_slice %1591 {offsets = [0, 0], sizes = [8, 128], strides = [1, 1]} : vector<8x512xf32> to vector<8x128xf32>
    %1595 = arith.mulf %1593, %1594 : vector<8x128xf32>
    %c4_i32_368 = arith.constant 4 : i32
    %1596 = tpu.dynamic_rotate %1595 by %c4_i32_368 dim 0 : vector<8x128xf32>, i32 -> vector<8x128xf32>
    %1597 = arith.addf %1595, %1596 : vector<8x128xf32>
    %c2_i32_369 = arith.constant 2 : i32
    %1598 = tpu.dynamic_rotate %1597 by %c2_i32_369 dim 0 : vector<8x128xf32>, i32 -> vector<8x128xf32>
    %1599 = arith.addf %1597, %1598 : vector<8x128xf32>
    %c1_i32_370 = arith.constant 1 : i32
    %1600 = tpu.dynamic_rotate %1599 by %c1_i32_370 dim 0 : vector<8x128xf32>, i32 -> vector<8x128xf32>
    %1601 = arith.addf %1599, %1600 : vector<8x128xf32>
    %1602 = vector.extract_strided_slice %1591 {offsets = [0, 128], sizes = [8, 128], strides = [1, 1]} : vector<8x512xf32> to vector<8x128xf32>
    %1603 = arith.mulf %1593, %1602 : vector<8x128xf32>
    %c4_i32_371 = arith.constant 4 : i32
    %1604 = tpu.dynamic_rotate %1603 by %c4_i32_371 dim 0 : vector<8x128xf32>, i32 -> vector<8x128xf32>
    %1605 = arith.addf %1603, %1604 : vector<8x128xf32>
    %c2_i32_372 = arith.constant 2 : i32
    %1606 = tpu.dynamic_rotate %1605 by %c2_i32_372 dim 0 : vector<8x128xf32>, i32 -> vector<8x128xf32>
    %1607 = arith.addf %1605, %1606 : vector<8x128xf32>
    %c1_i32_373 = arith.constant 1 : i32
    %1608 = tpu.dynamic_rotate %1607 by %c1_i32_373 dim 0 : vector<8x128xf32>, i32 -> vector<8x128xf32>
    %1609 = arith.addf %1607, %1608 : vector<8x128xf32>
    %1610 = vector.extract_strided_slice %1591 {offsets = [0, 256], sizes = [8, 128], strides = [1, 1]} : vector<8x512xf32> to vector<8x128xf32>
    %1611 = arith.mulf %1593, %1610 : vector<8x128xf32>
    %c4_i32_374 = arith.constant 4 : i32
    %1612 = tpu.dynamic_rotate %1611 by %c4_i32_374 dim 0 : vector<8x128xf32>, i32 -> vector<8x128xf32>
    %1613 = arith.addf %1611, %1612 : vector<8x128xf32>
    %c2_i32_375 = arith.constant 2 : i32
    %1614 = tpu.dynamic_rotate %1613 by %c2_i32_375 dim 0 : vector<8x128xf32>, i32 -> vector<8x128xf32>
    %1615 = arith.addf %1613, %1614 : vector<8x128xf32>
    %c1_i32_376 = arith.constant 1 : i32
    %1616 = tpu.dynamic_rotate %1615 by %c1_i32_376 dim 0 : vector<8x128xf32>, i32 -> vector<8x128xf32>
    %1617 = arith.addf %1615, %1616 : vector<8x128xf32>
    %1618 = vector.extract_strided_slice %1591 {offsets = [0, 384], sizes = [8, 128], strides = [1, 1]} : vector<8x512xf32> to vector<8x128xf32>
    %1619 = arith.mulf %1593, %1618 : vector<8x128xf32>
    %c4_i32_377 = arith.constant 4 : i32
    %1620 = tpu.dynamic_rotate %1619 by %c4_i32_377 dim 0 : vector<8x128xf32>, i32 -> vector<8x128xf32>
    %1621 = arith.addf %1619, %1620 : vector<8x128xf32>
    %c2_i32_378 = arith.constant 2 : i32
    %1622 = tpu.dynamic_rotate %1621 by %c2_i32_378 dim 0 : vector<8x128xf32>, i32 -> vector<8x128xf32>
    %1623 = arith.addf %1621, %1622 : vector<8x128xf32>
    %c1_i32_379 = arith.constant 1 : i32
    %1624 = tpu.dynamic_rotate %1623 by %c1_i32_379 dim 0 : vector<8x128xf32>, i32 -> vector<8x128xf32>
    %1625 = arith.addf %1623, %1624 : vector<8x128xf32>
    %1626 = arith.maximumf %1601, %1609 : vector<8x128xf32>
    %1627 = arith.maximumf %1626, %1617 : vector<8x128xf32>
    %1628 = arith.maximumf %1627, %1625 : vector<8x128xf32>
    %1629 = arith.subf %1601, %1628 : vector<8x128xf32>
    %1630 = math.exp %1629 : vector<8x128xf32>
    %1631 = arith.subf %1609, %1628 : vector<8x128xf32>
    %1632 = math.exp %1631 : vector<8x128xf32>
    %1633 = arith.subf %1617, %1628 : vector<8x128xf32>
    %1634 = math.exp %1633 : vector<8x128xf32>
    %1635 = arith.subf %1625, %1628 : vector<8x128xf32>
    %1636 = math.exp %1635 : vector<8x128xf32>
    %1637 = arith.addf %1630, %1632 : vector<8x128xf32>
    %1638 = arith.addf %1637, %1634 : vector<8x128xf32>
    %1639 = arith.addf %1638, %1636 : vector<8x128xf32>
    %1640 = vector.extract_strided_slice %1592 {offsets = [0, 0], sizes = [8, 128], strides = [1, 1]} : vector<8x512xf32> to vector<8x128xf32>
    %1641 = arith.mulf %1630, %1640 : vector<8x128xf32>
    %1642 = vector.extract_strided_slice %1592 {offsets = [0, 128], sizes = [8, 128], strides = [1, 1]} : vector<8x512xf32> to vector<8x128xf32>
    %1643 = arith.mulf %1632, %1642 : vector<8x128xf32>
    %1644 = arith.addf %1641, %1643 : vector<8x128xf32>
    %1645 = vector.extract_strided_slice %1592 {offsets = [0, 256], sizes = [8, 128], strides = [1, 1]} : vector<8x512xf32> to vector<8x128xf32>
    %1646 = arith.mulf %1634, %1645 : vector<8x128xf32>
    %1647 = arith.addf %1644, %1646 : vector<8x128xf32>
    %1648 = vector.extract_strided_slice %1592 {offsets = [0, 384], sizes = [8, 128], strides = [1, 1]} : vector<8x512xf32> to vector<8x128xf32>
    %1649 = arith.mulf %1636, %1648 : vector<8x128xf32>
    %1650 = arith.addf %1647, %1649 : vector<8x128xf32>
    %1651 = tpu.reciprocal %1639 {approx = true} : vector<8x128xf32> -> vector<8x128xf32>
    %1652 = arith.mulf %1650, %1651 : vector<8x128xf32>
    %c16_380 = arith.constant 16 : index
    %c0_381 = arith.constant 0 : index
    %1653 = vector.load %arg14[%c16_380, %c0_381] : memref<32x512xf32, #tpu.memory_space<vmem>>, vector<8x128xf32>
    tpu.vector_store %arg14[%c16_380, %c0_381], %1652 {strides = array<i32>} : memref<32x512xf32, #tpu.memory_space<vmem>>, vector<8x128xf32>,
    %1654 = vector.extract_strided_slice %1590 {offsets = [0, 128], sizes = [8, 128], strides = [1, 1]} : vector<8x512xf32> to vector<8x128xf32>
    %1655 = vector.extract_strided_slice %1591 {offsets = [0, 0], sizes = [8, 128], strides = [1, 1]} : vector<8x512xf32> to vector<8x128xf32>
    %1656 = arith.mulf %1654, %1655 : vector<8x128xf32>
    %c4_i32_382 = arith.constant 4 : i32
    %1657 = tpu.dynamic_rotate %1656 by %c4_i32_382 dim 0 : vector<8x128xf32>, i32 -> vector<8x128xf32>
    %1658 = arith.addf %1656, %1657 : vector<8x128xf32>
    %c2_i32_383 = arith.constant 2 : i32
    %1659 = tpu.dynamic_rotate %1658 by %c2_i32_383 dim 0 : vector<8x128xf32>, i32 -> vector<8x128xf32>
    %1660 = arith.addf %1658, %1659 : vector<8x128xf32>
    %c1_i32_384 = arith.constant 1 : i32
    %1661 = tpu.dynamic_rotate %1660 by %c1_i32_384 dim 0 : vector<8x128xf32>, i32 -> vector<8x128xf32>
    %1662 = arith.addf %1660, %1661 : vector<8x128xf32>
    %1663 = vector.extract_strided_slice %1591 {offsets = [0, 128], sizes = [8, 128], strides = [1, 1]} : vector<8x512xf32> to vector<8x128xf32>
    %1664 = arith.mulf %1654, %1663 : vector<8x128xf32>
    %c4_i32_385 = arith.constant 4 : i32
    %1665 = tpu.dynamic_rotate %1664 by %c4_i32_385 dim 0 : vector<8x128xf32>, i32 -> vector<8x128xf32>
    %1666 = arith.addf %1664, %1665 : vector<8x128xf32>
    %c2_i32_386 = arith.constant 2 : i32
    %1667 = tpu.dynamic_rotate %1666 by %c2_i32_386 dim 0 : vector<8x128xf32>, i32 -> vector<8x128xf32>
    %1668 = arith.addf %1666, %1667 : vector<8x128xf32>
    %c1_i32_387 = arith.constant 1 : i32
    %1669 = tpu.dynamic_rotate %1668 by %c1_i32_387 dim 0 : vector<8x128xf32>, i32 -> vector<8x128xf32>
    %1670 = arith.addf %1668, %1669 : vector<8x128xf32>
    %1671 = vector.extract_strided_slice %1591 {offsets = [0, 256], sizes = [8, 128], strides = [1, 1]} : vector<8x512xf32> to vector<8x128xf32>
    %1672 = arith.mulf %1654, %1671 : vector<8x128xf32>
    %c4_i32_388 = arith.constant 4 : i32
    %1673 = tpu.dynamic_rotate %1672 by %c4_i32_388 dim 0 : vector<8x128xf32>, i32 -> vector<8x128xf32>
    %1674 = arith.addf %1672, %1673 : vector<8x128xf32>
    %c2_i32_389 = arith.constant 2 : i32
    %1675 = tpu.dynamic_rotate %1674 by %c2_i32_389 dim 0 : vector<8x128xf32>, i32 -> vector<8x128xf32>
    %1676 = arith.addf %1674, %1675 : vector<8x128xf32>
    %c1_i32_390 = arith.constant 1 : i32
    %1677 = tpu.dynamic_rotate %1676 by %c1_i32_390 dim 0 : vector<8x128xf32>, i32 -> vector<8x128xf32>
    %1678 = arith.addf %1676, %1677 : vector<8x128xf32>
    %1679 = vector.extract_strided_slice %1591 {offsets = [0, 384], sizes = [8, 128], strides = [1, 1]} : vector<8x512xf32> to vector<8x128xf32>
    %1680 = arith.mulf %1654, %1679 : vector<8x128xf32>
    %c4_i32_391 = arith.constant 4 : i32
    %1681 = tpu.dynamic_rotate %1680 by %c4_i32_391 dim 0 : vector<8x128xf32>, i32 -> vector<8x128xf32>
    %1682 = arith.addf %1680, %1681 : vector<8x128xf32>
    %c2_i32_392 = arith.constant 2 : i32
    %1683 = tpu.dynamic_rotate %1682 by %c2_i32_392 dim 0 : vector<8x128xf32>, i32 -> vector<8x128xf32>
    %1684 = arith.addf %1682, %1683 : vector<8x128xf32>
    %c1_i32_393 = arith.constant 1 : i32
    %1685 = tpu.dynamic_rotate %1684 by %c1_i32_393 dim 0 : vector<8x128xf32>, i32 -> vector<8x128xf32>
    %1686 = arith.addf %1684, %1685 : vector<8x128xf32>
    %1687 = arith.maximumf %1662, %1670 : vector<8x128xf32>
    %1688 = arith.maximumf %1687, %1678 : vector<8x128xf32>
    %1689 = arith.maximumf %1688, %1686 : vector<8x128xf32>
    %1690 = arith.subf %1662, %1689 : vector<8x128xf32>
    %1691 = math.exp %1690 : vector<8x128xf32>
    %1692 = arith.subf %1670, %1689 : vector<8x128xf32>
    %1693 = math.exp %1692 : vector<8x128xf32>
    %1694 = arith.subf %1678, %1689 : vector<8x128xf32>
    %1695 = math.exp %1694 : vector<8x128xf32>
    %1696 = arith.subf %1686, %1689 : vector<8x128xf32>
    %1697 = math.exp %1696 : vector<8x128xf32>
    %1698 = arith.addf %1691, %1693 : vector<8x128xf32>
    %1699 = arith.addf %1698, %1695 : vector<8x128xf32>
    %1700 = arith.addf %1699, %1697 : vector<8x128xf32>
    %1701 = vector.extract_strided_slice %1592 {offsets = [0, 0], sizes = [8, 128], strides = [1, 1]} : vector<8x512xf32> to vector<8x128xf32>
    %1702 = arith.mulf %1691, %1701 : vector<8x128xf32>
    %1703 = vector.extract_strided_slice %1592 {offsets = [0, 128], sizes = [8, 128], strides = [1, 1]} : vector<8x512xf32> to vector<8x128xf32>
    %1704 = arith.mulf %1693, %1703 : vector<8x128xf32>
    %1705 = arith.addf %1702, %1704 : vector<8x128xf32>
    %1706 = vector.extract_strided_slice %1592 {offsets = [0, 256], sizes = [8, 128], strides = [1, 1]} : vector<8x512xf32> to vector<8x128xf32>
    %1707 = arith.mulf %1695, %1706 : vector<8x128xf32>
    %1708 = arith.addf %1705, %1707 : vector<8x128xf32>
    %1709 = vector.extract_strided_slice %1592 {offsets = [0, 384], sizes = [8, 128], strides = [1, 1]} : vector<8x512xf32> to vector<8x128xf32>
    %1710 = arith.mulf %1697, %1709 : vector<8x128xf32>
    %1711 = arith.addf %1708, %1710 : vector<8x128xf32>
    %1712 = tpu.reciprocal %1700 {approx = true} : vector<8x128xf32> -> vector<8x128xf32>
    %1713 = arith.mulf %1711, %1712 : vector<8x128xf32>
    %c16_394 = arith.constant 16 : index
    %c128_395 = arith.constant 128 : index
    %1714 = vector.load %arg14[%c16_394, %c128_395] : memref<32x512xf32, #tpu.memory_space<vmem>>, vector<8x128xf32>
    tpu.vector_store %arg14[%c16_394, %c128_395], %1713 {strides = array<i32>} : memref<32x512xf32, #tpu.memory_space<vmem>>, vector<8x128xf32>,
    %1715 = vector.extract_strided_slice %1590 {offsets = [0, 256], sizes = [8, 128], strides = [1, 1]} : vector<8x512xf32> to vector<8x128xf32>
    %1716 = vector.extract_strided_slice %1591 {offsets = [0, 0], sizes = [8, 128], strides = [1, 1]} : vector<8x512xf32> to vector<8x128xf32>
    %1717 = arith.mulf %1715, %1716 : vector<8x128xf32>
    %c4_i32_396 = arith.constant 4 : i32
    %1718 = tpu.dynamic_rotate %1717 by %c4_i32_396 dim 0 : vector<8x128xf32>, i32 -> vector<8x128xf32>
    %1719 = arith.addf %1717, %1718 : vector<8x128xf32>
    %c2_i32_397 = arith.constant 2 : i32
    %1720 = tpu.dynamic_rotate %1719 by %c2_i32_397 dim 0 : vector<8x128xf32>, i32 -> vector<8x128xf32>
    %1721 = arith.addf %1719, %1720 : vector<8x128xf32>
    %c1_i32_398 = arith.constant 1 : i32
    %1722 = tpu.dynamic_rotate %1721 by %c1_i32_398 dim 0 : vector<8x128xf32>, i32 -> vector<8x128xf32>
    %1723 = arith.addf %1721, %1722 : vector<8x128xf32>
    %1724 = vector.extract_strided_slice %1591 {offsets = [0, 128], sizes = [8, 128], strides = [1, 1]} : vector<8x512xf32> to vector<8x128xf32>
    %1725 = arith.mulf %1715, %1724 : vector<8x128xf32>
    %c4_i32_399 = arith.constant 4 : i32
    %1726 = tpu.dynamic_rotate %1725 by %c4_i32_399 dim 0 : vector<8x128xf32>, i32 -> vector<8x128xf32>
    %1727 = arith.addf %1725, %1726 : vector<8x128xf32>
    %c2_i32_400 = arith.constant 2 : i32
    %1728 = tpu.dynamic_rotate %1727 by %c2_i32_400 dim 0 : vector<8x128xf32>, i32 -> vector<8x128xf32>
    %1729 = arith.addf %1727, %1728 : vector<8x128xf32>
    %c1_i32_401 = arith.constant 1 : i32
    %1730 = tpu.dynamic_rotate %1729 by %c1_i32_401 dim 0 : vector<8x128xf32>, i32 -> vector<8x128xf32>
    %1731 = arith.addf %1729, %1730 : vector<8x128xf32>
    %1732 = vector.extract_strided_slice %1591 {offsets = [0, 256], sizes = [8, 128], strides = [1, 1]} : vector<8x512xf32> to vector<8x128xf32>
    %1733 = arith.mulf %1715, %1732 : vector<8x128xf32>
    %c4_i32_402 = arith.constant 4 : i32
    %1734 = tpu.dynamic_rotate %1733 by %c4_i32_402 dim 0 : vector<8x128xf32>, i32 -> vector<8x128xf32>
    %1735 = arith.addf %1733, %1734 : vector<8x128xf32>
    %c2_i32_403 = arith.constant 2 : i32
    %1736 = tpu.dynamic_rotate %1735 by %c2_i32_403 dim 0 : vector<8x128xf32>, i32 -> vector<8x128xf32>
    %1737 = arith.addf %1735, %1736 : vector<8x128xf32>
    %c1_i32_404 = arith.constant 1 : i32
    %1738 = tpu.dynamic_rotate %1737 by %c1_i32_404 dim 0 : vector<8x128xf32>, i32 -> vector<8x128xf32>
    %1739 = arith.addf %1737, %1738 : vector<8x128xf32>
    %1740 = vector.extract_strided_slice %1591 {offsets = [0, 384], sizes = [8, 128], strides = [1, 1]} : vector<8x512xf32> to vector<8x128xf32>
    %1741 = arith.mulf %1715, %1740 : vector<8x128xf32>
    %c4_i32_405 = arith.constant 4 : i32
    %1742 = tpu.dynamic_rotate %1741 by %c4_i32_405 dim 0 : vector<8x128xf32>, i32 -> vector<8x128xf32>
    %1743 = arith.addf %1741, %1742 : vector<8x128xf32>
    %c2_i32_406 = arith.constant 2 : i32
    %1744 = tpu.dynamic_rotate %1743 by %c2_i32_406 dim 0 : vector<8x128xf32>, i32 -> vector<8x128xf32>
    %1745 = arith.addf %1743, %1744 : vector<8x128xf32>
    %c1_i32_407 = arith.constant 1 : i32
    %1746 = tpu.dynamic_rotate %1745 by %c1_i32_407 dim 0 : vector<8x128xf32>, i32 -> vector<8x128xf32>
    %1747 = arith.addf %1745, %1746 : vector<8x128xf32>
    %1748 = arith.maximumf %1723, %1731 : vector<8x128xf32>
    %1749 = arith.maximumf %1748, %1739 : vector<8x128xf32>
    %1750 = arith.maximumf %1749, %1747 : vector<8x128xf32>
    %1751 = arith.subf %1723, %1750 : vector<8x128xf32>
    %1752 = math.exp %1751 : vector<8x128xf32>
    %1753 = arith.subf %1731, %1750 : vector<8x128xf32>
    %1754 = math.exp %1753 : vector<8x128xf32>
    %1755 = arith.subf %1739, %1750 : vector<8x128xf32>
    %1756 = math.exp %1755 : vector<8x128xf32>
    %1757 = arith.subf %1747, %1750 : vector<8x128xf32>
    %1758 = math.exp %1757 : vector<8x128xf32>
    %1759 = arith.addf %1752, %1754 : vector<8x128xf32>
    %1760 = arith.addf %1759, %1756 : vector<8x128xf32>
    %1761 = arith.addf %1760, %1758 : vector<8x128xf32>
    %1762 = vector.extract_strided_slice %1592 {offsets = [0, 0], sizes = [8, 128], strides = [1, 1]} : vector<8x512xf32> to vector<8x128xf32>
    %1763 = arith.mulf %1752, %1762 : vector<8x128xf32>
    %1764 = vector.extract_strided_slice %1592 {offsets = [0, 128], sizes = [8, 128], strides = [1, 1]} : vector<8x512xf32> to vector<8x128xf32>
    %1765 = arith.mulf %1754, %1764 : vector<8x128xf32>
    %1766 = arith.addf %1763, %1765 : vector<8x128xf32>
    %1767 = vector.extract_strided_slice %1592 {offsets = [0, 256], sizes = [8, 128], strides = [1, 1]} : vector<8x512xf32> to vector<8x128xf32>
    %1768 = arith.mulf %1756, %1767 : vector<8x128xf32>
    %1769 = arith.addf %1766, %1768 : vector<8x128xf32>
    %1770 = vector.extract_strided_slice %1592 {offsets = [0, 384], sizes = [8, 128], strides = [1, 1]} : vector<8x512xf32> to vector<8x128xf32>
    %1771 = arith.mulf %1758, %1770 : vector<8x128xf32>
    %1772 = arith.addf %1769, %1771 : vector<8x128xf32>
    %1773 = tpu.reciprocal %1761 {approx = true} : vector<8x128xf32> -> vector<8x128xf32>
    %1774 = arith.mulf %1772, %1773 : vector<8x128xf32>
    %c16_408 = arith.constant 16 : index
    %c256_409 = arith.constant 256 : index
    %1775 = vector.load %arg14[%c16_408, %c256_409] : memref<32x512xf32, #tpu.memory_space<vmem>>, vector<8x128xf32>
    tpu.vector_store %arg14[%c16_408, %c256_409], %1774 {strides = array<i32>} : memref<32x512xf32, #tpu.memory_space<vmem>>, vector<8x128xf32>,
    %1776 = vector.extract_strided_slice %1590 {offsets = [0, 384], sizes = [8, 128], strides = [1, 1]} : vector<8x512xf32> to vector<8x128xf32>
    %1777 = vector.extract_strided_slice %1591 {offsets = [0, 0], sizes = [8, 128], strides = [1, 1]} : vector<8x512xf32> to vector<8x128xf32>
    %1778 = arith.mulf %1776, %1777 : vector<8x128xf32>
    %c4_i32_410 = arith.constant 4 : i32
    %1779 = tpu.dynamic_rotate %1778 by %c4_i32_410 dim 0 : vector<8x128xf32>, i32 -> vector<8x128xf32>
    %1780 = arith.addf %1778, %1779 : vector<8x128xf32>
    %c2_i32_411 = arith.constant 2 : i32
    %1781 = tpu.dynamic_rotate %1780 by %c2_i32_411 dim 0 : vector<8x128xf32>, i32 -> vector<8x128xf32>
    %1782 = arith.addf %1780, %1781 : vector<8x128xf32>
    %c1_i32_412 = arith.constant 1 : i32
    %1783 = tpu.dynamic_rotate %1782 by %c1_i32_412 dim 0 : vector<8x128xf32>, i32 -> vector<8x128xf32>
    %1784 = arith.addf %1782, %1783 : vector<8x128xf32>
    %1785 = vector.extract_strided_slice %1591 {offsets = [0, 128], sizes = [8, 128], strides = [1, 1]} : vector<8x512xf32> to vector<8x128xf32>
    %1786 = arith.mulf %1776, %1785 : vector<8x128xf32>
    %c4_i32_413 = arith.constant 4 : i32
    %1787 = tpu.dynamic_rotate %1786 by %c4_i32_413 dim 0 : vector<8x128xf32>, i32 -> vector<8x128xf32>
    %1788 = arith.addf %1786, %1787 : vector<8x128xf32>
    %c2_i32_414 = arith.constant 2 : i32
    %1789 = tpu.dynamic_rotate %1788 by %c2_i32_414 dim 0 : vector<8x128xf32>, i32 -> vector<8x128xf32>
    %1790 = arith.addf %1788, %1789 : vector<8x128xf32>
    %c1_i32_415 = arith.constant 1 : i32
    %1791 = tpu.dynamic_rotate %1790 by %c1_i32_415 dim 0 : vector<8x128xf32>, i32 -> vector<8x128xf32>
    %1792 = arith.addf %1790, %1791 : vector<8x128xf32>
    %1793 = vector.extract_strided_slice %1591 {offsets = [0, 256], sizes = [8, 128], strides = [1, 1]} : vector<8x512xf32> to vector<8x128xf32>
    %1794 = arith.mulf %1776, %1793 : vector<8x128xf32>
    %c4_i32_416 = arith.constant 4 : i32
    %1795 = tpu.dynamic_rotate %1794 by %c4_i32_416 dim 0 : vector<8x128xf32>, i32 -> vector<8x128xf32>
    %1796 = arith.addf %1794, %1795 : vector<8x128xf32>
    %c2_i32_417 = arith.constant 2 : i32
    %1797 = tpu.dynamic_rotate %1796 by %c2_i32_417 dim 0 : vector<8x128xf32>, i32 -> vector<8x128xf32>
    %1798 = arith.addf %1796, %1797 : vector<8x128xf32>
    %c1_i32_418 = arith.constant 1 : i32
    %1799 = tpu.dynamic_rotate %1798 by %c1_i32_418 dim 0 : vector<8x128xf32>, i32 -> vector<8x128xf32>
    %1800 = arith.addf %1798, %1799 : vector<8x128xf32>
    %1801 = vector.extract_strided_slice %1591 {offsets = [0, 384], sizes = [8, 128], strides = [1, 1]} : vector<8x512xf32> to vector<8x128xf32>
    %1802 = arith.mulf %1776, %1801 : vector<8x128xf32>
    %c4_i32_419 = arith.constant 4 : i32
    %1803 = tpu.dynamic_rotate %1802 by %c4_i32_419 dim 0 : vector<8x128xf32>, i32 -> vector<8x128xf32>
    %1804 = arith.addf %1802, %1803 : vector<8x128xf32>
    %c2_i32_420 = arith.constant 2 : i32
    %1805 = tpu.dynamic_rotate %1804 by %c2_i32_420 dim 0 : vector<8x128xf32>, i32 -> vector<8x128xf32>
    %1806 = arith.addf %1804, %1805 : vector<8x128xf32>
    %c1_i32_421 = arith.constant 1 : i32
    %1807 = tpu.dynamic_rotate %1806 by %c1_i32_421 dim 0 : vector<8x128xf32>, i32 -> vector<8x128xf32>
    %1808 = arith.addf %1806, %1807 : vector<8x128xf32>
    %1809 = arith.maximumf %1784, %1792 : vector<8x128xf32>
    %1810 = arith.maximumf %1809, %1800 : vector<8x128xf32>
    %1811 = arith.maximumf %1810, %1808 : vector<8x128xf32>
    %1812 = arith.subf %1784, %1811 : vector<8x128xf32>
    %1813 = math.exp %1812 : vector<8x128xf32>
    %1814 = arith.subf %1792, %1811 : vector<8x128xf32>
    %1815 = math.exp %1814 : vector<8x128xf32>
    %1816 = arith.subf %1800, %1811 : vector<8x128xf32>
    %1817 = math.exp %1816 : vector<8x128xf32>
    %1818 = arith.subf %1808, %1811 : vector<8x128xf32>
    %1819 = math.exp %1818 : vector<8x128xf32>
    %1820 = arith.addf %1813, %1815 : vector<8x128xf32>
    %1821 = arith.addf %1820, %1817 : vector<8x128xf32>
    %1822 = arith.addf %1821, %1819 : vector<8x128xf32>
    %1823 = vector.extract_strided_slice %1592 {offsets = [0, 0], sizes = [8, 128], strides = [1, 1]} : vector<8x512xf32> to vector<8x128xf32>
    %1824 = arith.mulf %1813, %1823 : vector<8x128xf32>
    %1825 = vector.extract_strided_slice %1592 {offsets = [0, 128], sizes = [8, 128], strides = [1, 1]} : vector<8x512xf32> to vector<8x128xf32>
    %1826 = arith.mulf %1815, %1825 : vector<8x128xf32>
    %1827 = arith.addf %1824, %1826 : vector<8x128xf32>
    %1828 = vector.extract_strided_slice %1592 {offsets = [0, 256], sizes = [8, 128], strides = [1, 1]} : vector<8x512xf32> to vector<8x128xf32>
    %1829 = arith.mulf %1817, %1828 : vector<8x128xf32>
    %1830 = arith.addf %1827, %1829 : vector<8x128xf32>
    %1831 = vector.extract_strided_slice %1592 {offsets = [0, 384], sizes = [8, 128], strides = [1, 1]} : vector<8x512xf32> to vector<8x128xf32>
    %1832 = arith.mulf %1819, %1831 : vector<8x128xf32>
    %1833 = arith.addf %1830, %1832 : vector<8x128xf32>
    %1834 = tpu.reciprocal %1822 {approx = true} : vector<8x128xf32> -> vector<8x128xf32>
    %1835 = arith.mulf %1833, %1834 : vector<8x128xf32>
    %c16_422 = arith.constant 16 : index
    %c384_423 = arith.constant 384 : index
    %1836 = vector.load %arg14[%c16_422, %c384_423] : memref<32x512xf32, #tpu.memory_space<vmem>>, vector<8x128xf32>
    tpu.vector_store %arg14[%c16_422, %c384_423], %1835 {strides = array<i32>} : memref<32x512xf32, #tpu.memory_space<vmem>>, vector<8x128xf32>,
    %1837 = vector.extract_strided_slice %1095 {offsets = [56, 0], sizes = [8, 512], strides = [1, 1]} : vector<96x512xf32> to vector<8x512xf32>
    %1838 = vector.extract_strided_slice %1095 {offsets = [72, 0], sizes = [8, 512], strides = [1, 1]} : vector<96x512xf32> to vector<8x512xf32>
    %1839 = vector.extract_strided_slice %1095 {offsets = [88, 0], sizes = [8, 512], strides = [1, 1]} : vector<96x512xf32> to vector<8x512xf32>
    %1840 = vector.extract_strided_slice %1837 {offsets = [0, 0], sizes = [8, 128], strides = [1, 1]} : vector<8x512xf32> to vector<8x128xf32>
    %1841 = vector.extract_strided_slice %1838 {offsets = [0, 0], sizes = [8, 128], strides = [1, 1]} : vector<8x512xf32> to vector<8x128xf32>
    %1842 = arith.mulf %1840, %1841 : vector<8x128xf32>
    %c4_i32_424 = arith.constant 4 : i32
    %1843 = tpu.dynamic_rotate %1842 by %c4_i32_424 dim 0 : vector<8x128xf32>, i32 -> vector<8x128xf32>
    %1844 = arith.addf %1842, %1843 : vector<8x128xf32>
    %c2_i32_425 = arith.constant 2 : i32
    %1845 = tpu.dynamic_rotate %1844 by %c2_i32_425 dim 0 : vector<8x128xf32>, i32 -> vector<8x128xf32>
    %1846 = arith.addf %1844, %1845 : vector<8x128xf32>
    %c1_i32_426 = arith.constant 1 : i32
    %1847 = tpu.dynamic_rotate %1846 by %c1_i32_426 dim 0 : vector<8x128xf32>, i32 -> vector<8x128xf32>
    %1848 = arith.addf %1846, %1847 : vector<8x128xf32>
    %1849 = vector.extract_strided_slice %1838 {offsets = [0, 128], sizes = [8, 128], strides = [1, 1]} : vector<8x512xf32> to vector<8x128xf32>
    %1850 = arith.mulf %1840, %1849 : vector<8x128xf32>
    %c4_i32_427 = arith.constant 4 : i32
    %1851 = tpu.dynamic_rotate %1850 by %c4_i32_427 dim 0 : vector<8x128xf32>, i32 -> vector<8x128xf32>
    %1852 = arith.addf %1850, %1851 : vector<8x128xf32>
    %c2_i32_428 = arith.constant 2 : i32
    %1853 = tpu.dynamic_rotate %1852 by %c2_i32_428 dim 0 : vector<8x128xf32>, i32 -> vector<8x128xf32>
    %1854 = arith.addf %1852, %1853 : vector<8x128xf32>
    %c1_i32_429 = arith.constant 1 : i32
    %1855 = tpu.dynamic_rotate %1854 by %c1_i32_429 dim 0 : vector<8x128xf32>, i32 -> vector<8x128xf32>
    %1856 = arith.addf %1854, %1855 : vector<8x128xf32>
    %1857 = vector.extract_strided_slice %1838 {offsets = [0, 256], sizes = [8, 128], strides = [1, 1]} : vector<8x512xf32> to vector<8x128xf32>
    %1858 = arith.mulf %1840, %1857 : vector<8x128xf32>
    %c4_i32_430 = arith.constant 4 : i32
    %1859 = tpu.dynamic_rotate %1858 by %c4_i32_430 dim 0 : vector<8x128xf32>, i32 -> vector<8x128xf32>
    %1860 = arith.addf %1858, %1859 : vector<8x128xf32>
    %c2_i32_431 = arith.constant 2 : i32
    %1861 = tpu.dynamic_rotate %1860 by %c2_i32_431 dim 0 : vector<8x128xf32>, i32 -> vector<8x128xf32>
    %1862 = arith.addf %1860, %1861 : vector<8x128xf32>
    %c1_i32_432 = arith.constant 1 : i32
    %1863 = tpu.dynamic_rotate %1862 by %c1_i32_432 dim 0 : vector<8x128xf32>, i32 -> vector<8x128xf32>
    %1864 = arith.addf %1862, %1863 : vector<8x128xf32>
    %1865 = vector.extract_strided_slice %1838 {offsets = [0, 384], sizes = [8, 128], strides = [1, 1]} : vector<8x512xf32> to vector<8x128xf32>
    %1866 = arith.mulf %1840, %1865 : vector<8x128xf32>
    %c4_i32_433 = arith.constant 4 : i32
    %1867 = tpu.dynamic_rotate %1866 by %c4_i32_433 dim 0 : vector<8x128xf32>, i32 -> vector<8x128xf32>
    %1868 = arith.addf %1866, %1867 : vector<8x128xf32>
    %c2_i32_434 = arith.constant 2 : i32
    %1869 = tpu.dynamic_rotate %1868 by %c2_i32_434 dim 0 : vector<8x128xf32>, i32 -> vector<8x128xf32>
    %1870 = arith.addf %1868, %1869 : vector<8x128xf32>
    %c1_i32_435 = arith.constant 1 : i32
    %1871 = tpu.dynamic_rotate %1870 by %c1_i32_435 dim 0 : vector<8x128xf32>, i32 -> vector<8x128xf32>
    %1872 = arith.addf %1870, %1871 : vector<8x128xf32>
    %1873 = arith.maximumf %1848, %1856 : vector<8x128xf32>
    %1874 = arith.maximumf %1873, %1864 : vector<8x128xf32>
    %1875 = arith.maximumf %1874, %1872 : vector<8x128xf32>
    %1876 = arith.subf %1848, %1875 : vector<8x128xf32>
    %1877 = math.exp %1876 : vector<8x128xf32>
    %1878 = arith.subf %1856, %1875 : vector<8x128xf32>
    %1879 = math.exp %1878 : vector<8x128xf32>
    %1880 = arith.subf %1864, %1875 : vector<8x128xf32>
    %1881 = math.exp %1880 : vector<8x128xf32>
    %1882 = arith.subf %1872, %1875 : vector<8x128xf32>
    %1883 = math.exp %1882 : vector<8x128xf32>
    %1884 = arith.addf %1877, %1879 : vector<8x128xf32>
    %1885 = arith.addf %1884, %1881 : vector<8x128xf32>
    %1886 = arith.addf %1885, %1883 : vector<8x128xf32>
    %1887 = vector.extract_strided_slice %1839 {offsets = [0, 0], sizes = [8, 128], strides = [1, 1]} : vector<8x512xf32> to vector<8x128xf32>
    %1888 = arith.mulf %1877, %1887 : vector<8x128xf32>
    %1889 = vector.extract_strided_slice %1839 {offsets = [0, 128], sizes = [8, 128], strides = [1, 1]} : vector<8x512xf32> to vector<8x128xf32>
    %1890 = arith.mulf %1879, %1889 : vector<8x128xf32>
    %1891 = arith.addf %1888, %1890 : vector<8x128xf32>
    %1892 = vector.extract_strided_slice %1839 {offsets = [0, 256], sizes = [8, 128], strides = [1, 1]} : vector<8x512xf32> to vector<8x128xf32>
    %1893 = arith.mulf %1881, %1892 : vector<8x128xf32>
    %1894 = arith.addf %1891, %1893 : vector<8x128xf32>
    %1895 = vector.extract_strided_slice %1839 {offsets = [0, 384], sizes = [8, 128], strides = [1, 1]} : vector<8x512xf32> to vector<8x128xf32>
    %1896 = arith.mulf %1883, %1895 : vector<8x128xf32>
    %1897 = arith.addf %1894, %1896 : vector<8x128xf32>
    %1898 = tpu.reciprocal %1886 {approx = true} : vector<8x128xf32> -> vector<8x128xf32>
    %1899 = arith.mulf %1897, %1898 : vector<8x128xf32>
    %c24_436 = arith.constant 24 : index
    %c0_437 = arith.constant 0 : index
    %1900 = vector.load %arg14[%c24_436, %c0_437] : memref<32x512xf32, #tpu.memory_space<vmem>>, vector<8x128xf32>
    tpu.vector_store %arg14[%c24_436, %c0_437], %1899 {strides = array<i32>} : memref<32x512xf32, #tpu.memory_space<vmem>>, vector<8x128xf32>,
    %1901 = vector.extract_strided_slice %1837 {offsets = [0, 128], sizes = [8, 128], strides = [1, 1]} : vector<8x512xf32> to vector<8x128xf32>
    %1902 = vector.extract_strided_slice %1838 {offsets = [0, 0], sizes = [8, 128], strides = [1, 1]} : vector<8x512xf32> to vector<8x128xf32>
    %1903 = arith.mulf %1901, %1902 : vector<8x128xf32>
    %c4_i32_438 = arith.constant 4 : i32
    %1904 = tpu.dynamic_rotate %1903 by %c4_i32_438 dim 0 : vector<8x128xf32>, i32 -> vector<8x128xf32>
    %1905 = arith.addf %1903, %1904 : vector<8x128xf32>
    %c2_i32_439 = arith.constant 2 : i32
    %1906 = tpu.dynamic_rotate %1905 by %c2_i32_439 dim 0 : vector<8x128xf32>, i32 -> vector<8x128xf32>
    %1907 = arith.addf %1905, %1906 : vector<8x128xf32>
    %c1_i32_440 = arith.constant 1 : i32
    %1908 = tpu.dynamic_rotate %1907 by %c1_i32_440 dim 0 : vector<8x128xf32>, i32 -> vector<8x128xf32>
    %1909 = arith.addf %1907, %1908 : vector<8x128xf32>
    %1910 = vector.extract_strided_slice %1838 {offsets = [0, 128], sizes = [8, 128], strides = [1, 1]} : vector<8x512xf32> to vector<8x128xf32>
    %1911 = arith.mulf %1901, %1910 : vector<8x128xf32>
    %c4_i32_441 = arith.constant 4 : i32
    %1912 = tpu.dynamic_rotate %1911 by %c4_i32_441 dim 0 : vector<8x128xf32>, i32 -> vector<8x128xf32>
    %1913 = arith.addf %1911, %1912 : vector<8x128xf32>
    %c2_i32_442 = arith.constant 2 : i32
    %1914 = tpu.dynamic_rotate %1913 by %c2_i32_442 dim 0 : vector<8x128xf32>, i32 -> vector<8x128xf32>
    %1915 = arith.addf %1913, %1914 : vector<8x128xf32>
    %c1_i32_443 = arith.constant 1 : i32
    %1916 = tpu.dynamic_rotate %1915 by %c1_i32_443 dim 0 : vector<8x128xf32>, i32 -> vector<8x128xf32>
    %1917 = arith.addf %1915, %1916 : vector<8x128xf32>
    %1918 = vector.extract_strided_slice %1838 {offsets = [0, 256], sizes = [8, 128], strides = [1, 1]} : vector<8x512xf32> to vector<8x128xf32>
    %1919 = arith.mulf %1901, %1918 : vector<8x128xf32>
    %c4_i32_444 = arith.constant 4 : i32
    %1920 = tpu.dynamic_rotate %1919 by %c4_i32_444 dim 0 : vector<8x128xf32>, i32 -> vector<8x128xf32>
    %1921 = arith.addf %1919, %1920 : vector<8x128xf32>
    %c2_i32_445 = arith.constant 2 : i32
    %1922 = tpu.dynamic_rotate %1921 by %c2_i32_445 dim 0 : vector<8x128xf32>, i32 -> vector<8x128xf32>
    %1923 = arith.addf %1921, %1922 : vector<8x128xf32>
    %c1_i32_446 = arith.constant 1 : i32
    %1924 = tpu.dynamic_rotate %1923 by %c1_i32_446 dim 0 : vector<8x128xf32>, i32 -> vector<8x128xf32>
    %1925 = arith.addf %1923, %1924 : vector<8x128xf32>
    %1926 = vector.extract_strided_slice %1838 {offsets = [0, 384], sizes = [8, 128], strides = [1, 1]} : vector<8x512xf32> to vector<8x128xf32>
    %1927 = arith.mulf %1901, %1926 : vector<8x128xf32>
    %c4_i32_447 = arith.constant 4 : i32
    %1928 = tpu.dynamic_rotate %1927 by %c4_i32_447 dim 0 : vector<8x128xf32>, i32 -> vector<8x128xf32>
    %1929 = arith.addf %1927, %1928 : vector<8x128xf32>
    %c2_i32_448 = arith.constant 2 : i32
    %1930 = tpu.dynamic_rotate %1929 by %c2_i32_448 dim 0 : vector<8x128xf32>, i32 -> vector<8x128xf32>
    %1931 = arith.addf %1929, %1930 : vector<8x128xf32>
    %c1_i32_449 = arith.constant 1 : i32
    %1932 = tpu.dynamic_rotate %1931 by %c1_i32_449 dim 0 : vector<8x128xf32>, i32 -> vector<8x128xf32>
    %1933 = arith.addf %1931, %1932 : vector<8x128xf32>
    %1934 = arith.maximumf %1909, %1917 : vector<8x128xf32>
    %1935 = arith.maximumf %1934, %1925 : vector<8x128xf32>
    %1936 = arith.maximumf %1935, %1933 : vector<8x128xf32>
    %1937 = arith.subf %1909, %1936 : vector<8x128xf32>
    %1938 = math.exp %1937 : vector<8x128xf32>
    %1939 = arith.subf %1917, %1936 : vector<8x128xf32>
    %1940 = math.exp %1939 : vector<8x128xf32>
    %1941 = arith.subf %1925, %1936 : vector<8x128xf32>
    %1942 = math.exp %1941 : vector<8x128xf32>
    %1943 = arith.subf %1933, %1936 : vector<8x128xf32>
    %1944 = math.exp %1943 : vector<8x128xf32>
    %1945 = arith.addf %1938, %1940 : vector<8x128xf32>
    %1946 = arith.addf %1945, %1942 : vector<8x128xf32>
    %1947 = arith.addf %1946, %1944 : vector<8x128xf32>
    %1948 = vector.extract_strided_slice %1839 {offsets = [0, 0], sizes = [8, 128], strides = [1, 1]} : vector<8x512xf32> to vector<8x128xf32>
    %1949 = arith.mulf %1938, %1948 : vector<8x128xf32>
    %1950 = vector.extract_strided_slice %1839 {offsets = [0, 128], sizes = [8, 128], strides = [1, 1]} : vector<8x512xf32> to vector<8x128xf32>
    %1951 = arith.mulf %1940, %1950 : vector<8x128xf32>
    %1952 = arith.addf %1949, %1951 : vector<8x128xf32>
    %1953 = vector.extract_strided_slice %1839 {offsets = [0, 256], sizes = [8, 128], strides = [1, 1]} : vector<8x512xf32> to vector<8x128xf32>
    %1954 = arith.mulf %1942, %1953 : vector<8x128xf32>
    %1955 = arith.addf %1952, %1954 : vector<8x128xf32>
    %1956 = vector.extract_strided_slice %1839 {offsets = [0, 384], sizes = [8, 128], strides = [1, 1]} : vector<8x512xf32> to vector<8x128xf32>
    %1957 = arith.mulf %1944, %1956 : vector<8x128xf32>
    %1958 = arith.addf %1955, %1957 : vector<8x128xf32>
    %1959 = tpu.reciprocal %1947 {approx = true} : vector<8x128xf32> -> vector<8x128xf32>
    %1960 = arith.mulf %1958, %1959 : vector<8x128xf32>
    %c24_450 = arith.constant 24 : index
    %c128_451 = arith.constant 128 : index
    %1961 = vector.load %arg14[%c24_450, %c128_451] : memref<32x512xf32, #tpu.memory_space<vmem>>, vector<8x128xf32>
    tpu.vector_store %arg14[%c24_450, %c128_451], %1960 {strides = array<i32>} : memref<32x512xf32, #tpu.memory_space<vmem>>, vector<8x128xf32>,
    %1962 = vector.extract_strided_slice %1837 {offsets = [0, 256], sizes = [8, 128], strides = [1, 1]} : vector<8x512xf32> to vector<8x128xf32>
    %1963 = vector.extract_strided_slice %1838 {offsets = [0, 0], sizes = [8, 128], strides = [1, 1]} : vector<8x512xf32> to vector<8x128xf32>
    %1964 = arith.mulf %1962, %1963 : vector<8x128xf32>
    %c4_i32_452 = arith.constant 4 : i32
    %1965 = tpu.dynamic_rotate %1964 by %c4_i32_452 dim 0 : vector<8x128xf32>, i32 -> vector<8x128xf32>
    %1966 = arith.addf %1964, %1965 : vector<8x128xf32>
    %c2_i32_453 = arith.constant 2 : i32
    %1967 = tpu.dynamic_rotate %1966 by %c2_i32_453 dim 0 : vector<8x128xf32>, i32 -> vector<8x128xf32>
    %1968 = arith.addf %1966, %1967 : vector<8x128xf32>
    %c1_i32_454 = arith.constant 1 : i32
    %1969 = tpu.dynamic_rotate %1968 by %c1_i32_454 dim 0 : vector<8x128xf32>, i32 -> vector<8x128xf32>
    %1970 = arith.addf %1968, %1969 : vector<8x128xf32>
    %1971 = vector.extract_strided_slice %1838 {offsets = [0, 128], sizes = [8, 128], strides = [1, 1]} : vector<8x512xf32> to vector<8x128xf32>
    %1972 = arith.mulf %1962, %1971 : vector<8x128xf32>
    %c4_i32_455 = arith.constant 4 : i32
    %1973 = tpu.dynamic_rotate %1972 by %c4_i32_455 dim 0 : vector<8x128xf32>, i32 -> vector<8x128xf32>
    %1974 = arith.addf %1972, %1973 : vector<8x128xf32>
    %c2_i32_456 = arith.constant 2 : i32
    %1975 = tpu.dynamic_rotate %1974 by %c2_i32_456 dim 0 : vector<8x128xf32>, i32 -> vector<8x128xf32>
    %1976 = arith.addf %1974, %1975 : vector<8x128xf32>
    %c1_i32_457 = arith.constant 1 : i32
    %1977 = tpu.dynamic_rotate %1976 by %c1_i32_457 dim 0 : vector<8x128xf32>, i32 -> vector<8x128xf32>
    %1978 = arith.addf %1976, %1977 : vector<8x128xf32>
    %1979 = vector.extract_strided_slice %1838 {offsets = [0, 256], sizes = [8, 128], strides = [1, 1]} : vector<8x512xf32> to vector<8x128xf32>
    %1980 = arith.mulf %1962, %1979 : vector<8x128xf32>
    %c4_i32_458 = arith.constant 4 : i32
    %1981 = tpu.dynamic_rotate %1980 by %c4_i32_458 dim 0 : vector<8x128xf32>, i32 -> vector<8x128xf32>
    %1982 = arith.addf %1980, %1981 : vector<8x128xf32>
    %c2_i32_459 = arith.constant 2 : i32
    %1983 = tpu.dynamic_rotate %1982 by %c2_i32_459 dim 0 : vector<8x128xf32>, i32 -> vector<8x128xf32>
    %1984 = arith.addf %1982, %1983 : vector<8x128xf32>
    %c1_i32_460 = arith.constant 1 : i32
    %1985 = tpu.dynamic_rotate %1984 by %c1_i32_460 dim 0 : vector<8x128xf32>, i32 -> vector<8x128xf32>
    %1986 = arith.addf %1984, %1985 : vector<8x128xf32>
    %1987 = vector.extract_strided_slice %1838 {offsets = [0, 384], sizes = [8, 128], strides = [1, 1]} : vector<8x512xf32> to vector<8x128xf32>
    %1988 = arith.mulf %1962, %1987 : vector<8x128xf32>
    %c4_i32_461 = arith.constant 4 : i32
    %1989 = tpu.dynamic_rotate %1988 by %c4_i32_461 dim 0 : vector<8x128xf32>, i32 -> vector<8x128xf32>
    %1990 = arith.addf %1988, %1989 : vector<8x128xf32>
    %c2_i32_462 = arith.constant 2 : i32
    %1991 = tpu.dynamic_rotate %1990 by %c2_i32_462 dim 0 : vector<8x128xf32>, i32 -> vector<8x128xf32>
    %1992 = arith.addf %1990, %1991 : vector<8x128xf32>
    %c1_i32_463 = arith.constant 1 : i32
    %1993 = tpu.dynamic_rotate %1992 by %c1_i32_463 dim 0 : vector<8x128xf32>, i32 -> vector<8x128xf32>
    %1994 = arith.addf %1992, %1993 : vector<8x128xf32>
    %1995 = arith.maximumf %1970, %1978 : vector<8x128xf32>
    %1996 = arith.maximumf %1995, %1986 : vector<8x128xf32>
    %1997 = arith.maximumf %1996, %1994 : vector<8x128xf32>
    %1998 = arith.subf %1970, %1997 : vector<8x128xf32>
    %1999 = math.exp %1998 : vector<8x128xf32>
    %2000 = arith.subf %1978, %1997 : vector<8x128xf32>
    %2001 = math.exp %2000 : vector<8x128xf32>
    %2002 = arith.subf %1986, %1997 : vector<8x128xf32>
    %2003 = math.exp %2002 : vector<8x128xf32>
    %2004 = arith.subf %1994, %1997 : vector<8x128xf32>
    %2005 = math.exp %2004 : vector<8x128xf32>
    %2006 = arith.addf %1999, %2001 : vector<8x128xf32>
    %2007 = arith.addf %2006, %2003 : vector<8x128xf32>
    %2008 = arith.addf %2007, %2005 : vector<8x128xf32>
    %2009 = vector.extract_strided_slice %1839 {offsets = [0, 0], sizes = [8, 128], strides = [1, 1]} : vector<8x512xf32> to vector<8x128xf32>
    %2010 = arith.mulf %1999, %2009 : vector<8x128xf32>
    %2011 = vector.extract_strided_slice %1839 {offsets = [0, 128], sizes = [8, 128], strides = [1, 1]} : vector<8x512xf32> to vector<8x128xf32>
    %2012 = arith.mulf %2001, %2011 : vector<8x128xf32>
    %2013 = arith.addf %2010, %2012 : vector<8x128xf32>
    %2014 = vector.extract_strided_slice %1839 {offsets = [0, 256], sizes = [8, 128], strides = [1, 1]} : vector<8x512xf32> to vector<8x128xf32>
    %2015 = arith.mulf %2003, %2014 : vector<8x128xf32>
    %2016 = arith.addf %2013, %2015 : vector<8x128xf32>
    %2017 = vector.extract_strided_slice %1839 {offsets = [0, 384], sizes = [8, 128], strides = [1, 1]} : vector<8x512xf32> to vector<8x128xf32>
    %2018 = arith.mulf %2005, %2017 : vector<8x128xf32>
    %2019 = arith.addf %2016, %2018 : vector<8x128xf32>
    %2020 = tpu.reciprocal %2008 {approx = true} : vector<8x128xf32> -> vector<8x128xf32>
    %2021 = arith.mulf %2019, %2020 : vector<8x128xf32>
    %c24_464 = arith.constant 24 : index
    %c256_465 = arith.constant 256 : index
    %2022 = vector.load %arg14[%c24_464, %c256_465] : memref<32x512xf32, #tpu.memory_space<vmem>>, vector<8x128xf32>
    tpu.vector_store %arg14[%c24_464, %c256_465], %2021 {strides = array<i32>} : memref<32x512xf32, #tpu.memory_space<vmem>>, vector<8x128xf32>,
    %2023 = vector.extract_strided_slice %1837 {offsets = [0, 384], sizes = [8, 128], strides = [1, 1]} : vector<8x512xf32> to vector<8x128xf32>
    %2024 = vector.extract_strided_slice %1838 {offsets = [0, 0], sizes = [8, 128], strides = [1, 1]} : vector<8x512xf32> to vector<8x128xf32>
    %2025 = arith.mulf %2023, %2024 : vector<8x128xf32>
    %c4_i32_466 = arith.constant 4 : i32
    %2026 = tpu.dynamic_rotate %2025 by %c4_i32_466 dim 0 : vector<8x128xf32>, i32 -> vector<8x128xf32>
    %2027 = arith.addf %2025, %2026 : vector<8x128xf32>
    %c2_i32_467 = arith.constant 2 : i32
    %2028 = tpu.dynamic_rotate %2027 by %c2_i32_467 dim 0 : vector<8x128xf32>, i32 -> vector<8x128xf32>
    %2029 = arith.addf %2027, %2028 : vector<8x128xf32>
    %c1_i32_468 = arith.constant 1 : i32
    %2030 = tpu.dynamic_rotate %2029 by %c1_i32_468 dim 0 : vector<8x128xf32>, i32 -> vector<8x128xf32>
    %2031 = arith.addf %2029, %2030 : vector<8x128xf32>
    %2032 = vector.extract_strided_slice %1838 {offsets = [0, 128], sizes = [8, 128], strides = [1, 1]} : vector<8x512xf32> to vector<8x128xf32>
    %2033 = arith.mulf %2023, %2032 : vector<8x128xf32>
    %c4_i32_469 = arith.constant 4 : i32
    %2034 = tpu.dynamic_rotate %2033 by %c4_i32_469 dim 0 : vector<8x128xf32>, i32 -> vector<8x128xf32>
    %2035 = arith.addf %2033, %2034 : vector<8x128xf32>
    %c2_i32_470 = arith.constant 2 : i32
    %2036 = tpu.dynamic_rotate %2035 by %c2_i32_470 dim 0 : vector<8x128xf32>, i32 -> vector<8x128xf32>
    %2037 = arith.addf %2035, %2036 : vector<8x128xf32>
    %c1_i32_471 = arith.constant 1 : i32
    %2038 = tpu.dynamic_rotate %2037 by %c1_i32_471 dim 0 : vector<8x128xf32>, i32 -> vector<8x128xf32>
    %2039 = arith.addf %2037, %2038 : vector<8x128xf32>
    %2040 = vector.extract_strided_slice %1838 {offsets = [0, 256], sizes = [8, 128], strides = [1, 1]} : vector<8x512xf32> to vector<8x128xf32>
    %2041 = arith.mulf %2023, %2040 : vector<8x128xf32>
    %c4_i32_472 = arith.constant 4 : i32
    %2042 = tpu.dynamic_rotate %2041 by %c4_i32_472 dim 0 : vector<8x128xf32>, i32 -> vector<8x128xf32>
    %2043 = arith.addf %2041, %2042 : vector<8x128xf32>
    %c2_i32_473 = arith.constant 2 : i32
    %2044 = tpu.dynamic_rotate %2043 by %c2_i32_473 dim 0 : vector<8x128xf32>, i32 -> vector<8x128xf32>
    %2045 = arith.addf %2043, %2044 : vector<8x128xf32>
    %c1_i32_474 = arith.constant 1 : i32
    %2046 = tpu.dynamic_rotate %2045 by %c1_i32_474 dim 0 : vector<8x128xf32>, i32 -> vector<8x128xf32>
    %2047 = arith.addf %2045, %2046 : vector<8x128xf32>
    %2048 = vector.extract_strided_slice %1838 {offsets = [0, 384], sizes = [8, 128], strides = [1, 1]} : vector<8x512xf32> to vector<8x128xf32>
    %2049 = arith.mulf %2023, %2048 : vector<8x128xf32>
    %c4_i32_475 = arith.constant 4 : i32
    %2050 = tpu.dynamic_rotate %2049 by %c4_i32_475 dim 0 : vector<8x128xf32>, i32 -> vector<8x128xf32>
    %2051 = arith.addf %2049, %2050 : vector<8x128xf32>
    %c2_i32_476 = arith.constant 2 : i32
    %2052 = tpu.dynamic_rotate %2051 by %c2_i32_476 dim 0 : vector<8x128xf32>, i32 -> vector<8x128xf32>
    %2053 = arith.addf %2051, %2052 : vector<8x128xf32>
    %c1_i32_477 = arith.constant 1 : i32
    %2054 = tpu.dynamic_rotate %2053 by %c1_i32_477 dim 0 : vector<8x128xf32>, i32 -> vector<8x128xf32>
    %2055 = arith.addf %2053, %2054 : vector<8x128xf32>
    %2056 = arith.maximumf %2031, %2039 : vector<8x128xf32>
    %2057 = arith.maximumf %2056, %2047 : vector<8x128xf32>
    %2058 = arith.maximumf %2057, %2055 : vector<8x128xf32>
    %2059 = arith.subf %2031, %2058 : vector<8x128xf32>
    %2060 = math.exp %2059 : vector<8x128xf32>
    %2061 = arith.subf %2039, %2058 : vector<8x128xf32>
    %2062 = math.exp %2061 : vector<8x128xf32>
    %2063 = arith.subf %2047, %2058 : vector<8x128xf32>
    %2064 = math.exp %2063 : vector<8x128xf32>
    %2065 = arith.subf %2055, %2058 : vector<8x128xf32>
    %2066 = math.exp %2065 : vector<8x128xf32>
    %2067 = arith.addf %2060, %2062 : vector<8x128xf32>
    %2068 = arith.addf %2067, %2064 : vector<8x128xf32>
    %2069 = arith.addf %2068, %2066 : vector<8x128xf32>
    %2070 = vector.extract_strided_slice %1839 {offsets = [0, 0], sizes = [8, 128], strides = [1, 1]} : vector<8x512xf32> to vector<8x128xf32>
    %2071 = arith.mulf %2060, %2070 : vector<8x128xf32>
    %2072 = vector.extract_strided_slice %1839 {offsets = [0, 128], sizes = [8, 128], strides = [1, 1]} : vector<8x512xf32> to vector<8x128xf32>
    %2073 = arith.mulf %2062, %2072 : vector<8x128xf32>
    %2074 = arith.addf %2071, %2073 : vector<8x128xf32>
    %2075 = vector.extract_strided_slice %1839 {offsets = [0, 256], sizes = [8, 128], strides = [1, 1]} : vector<8x512xf32> to vector<8x128xf32>
    %2076 = arith.mulf %2064, %2075 : vector<8x128xf32>
    %2077 = arith.addf %2074, %2076 : vector<8x128xf32>
    %2078 = vector.extract_strided_slice %1839 {offsets = [0, 384], sizes = [8, 128], strides = [1, 1]} : vector<8x512xf32> to vector<8x128xf32>
    %2079 = arith.mulf %2066, %2078 : vector<8x128xf32>
    %2080 = arith.addf %2077, %2079 : vector<8x128xf32>
    %2081 = tpu.reciprocal %2069 {approx = true} : vector<8x128xf32> -> vector<8x128xf32>
    %2082 = arith.mulf %2080, %2081 : vector<8x128xf32>
    %c24_478 = arith.constant 24 : index
    %c384_479 = arith.constant 384 : index
    %2083 = vector.load %arg14[%c24_478, %c384_479] : memref<32x512xf32, #tpu.memory_space<vmem>>, vector<8x128xf32>
    tpu.vector_store %arg14[%c24_478, %c384_479], %2082 {strides = array<i32>} : memref<32x512xf32, #tpu.memory_space<vmem>>, vector<8x128xf32>,
    %c0_480 = arith.constant 0 : index
    %c0_481 = arith.constant 0 : index
    %2084 = vector.load %arg14[%c0_480, %c0_481] : memref<32x512xf32, #tpu.memory_space<vmem>>, vector<32x512xf32>
    %2085 = arith.truncf %2084 : vector<32x512xf32> to vector<32x512xbf16>
    %cst_482 = arith.constant dense<0.000000e+00> : vector<16x512xf32>
    %2086 = tpu.matmul %3, %2085, %cst_482 {dimension_numbers = #tpu.dot_dimension_numbers<[1], [0], [0], [1], [0, 0, 1, 1], [], []>} : vector<16x32xbf16>, vector<32x512xbf16>, vector<16x512xf32> -> vector<16x512xf32>
    %2087 = vector.broadcast %4 : vector<16x1xf32> to vector<16x512xf32>
    %2088 = arith.addf %2086, %2087 : vector<16x512xf32>
    %2089 = arith.addf %1091, %2088 : vector<16x512xf32>
    %cst_483 = arith.constant dense<0.000000e+00> : vector<512xf32>
    %2090 = vector.multi_reduction <add>, %2089, %cst_483 [0] : vector<16x512xf32> to vector<512xf32>
    %2091 = vector.shape_cast %2090 : vector<512xf32> to vector<1x512xf32>
    %2092 = vector.extract_strided_slice %2091 {offsets = [0, 0], sizes = [1, 128], strides = [1, 1]} : vector<1x512xf32> to vector<1x128xf32>
    %2093 = vector.extract_strided_slice %2091 {offsets = [0, 128], sizes = [1, 128], strides = [1, 1]} : vector<1x512xf32> to vector<1x128xf32>
    %2094 = arith.addf %2092, %2093 : vector<1x128xf32>
    %2095 = vector.extract_strided_slice %2091 {offsets = [0, 256], sizes = [1, 128], strides = [1, 1]} : vector<1x512xf32> to vector<1x128xf32>
    %2096 = arith.addf %2094, %2095 : vector<1x128xf32>
    %2097 = vector.extract_strided_slice %2091 {offsets = [0, 384], sizes = [1, 128], strides = [1, 1]} : vector<1x512xf32> to vector<1x128xf32>
    %2098 = arith.addf %2096, %2097 : vector<1x128xf32>
    %cst_484 = arith.constant 1.562500e-02 : f32
    %2099 = vector.broadcast %cst_484 : f32 to vector<1x128xf32>
    %2100 = arith.mulf %2098, %2099 : vector<1x128xf32>
    %2101 = tpu.concatenate %2100, %2100, %2100, %2100 in 1 : vector<1x128xf32>, vector<1x128xf32>, vector<1x128xf32>, vector<1x128xf32> -> vector<1x512xf32>
    %2102 = vector.broadcast %2101 : vector<1x512xf32> to vector<16x512xf32>
    %2103 = arith.subf %2089, %2102 : vector<16x512xf32>
    %2104 = arith.mulf %2103, %2103 : vector<16x512xf32>
    %cst_485 = arith.constant dense<0.000000e+00> : vector<512xf32>
    %2105 = vector.multi_reduction <add>, %2104, %cst_485 [0] : vector<16x512xf32> to vector<512xf32>
    %2106 = vector.shape_cast %2105 : vector<512xf32> to vector<1x512xf32>
    %2107 = vector.extract_strided_slice %2106 {offsets = [0, 0], sizes = [1, 128], strides = [1, 1]} : vector<1x512xf32> to vector<1x128xf32>
    %2108 = vector.extract_strided_slice %2106 {offsets = [0, 128], sizes = [1, 128], strides = [1, 1]} : vector<1x512xf32> to vector<1x128xf32>
    %2109 = arith.addf %2107, %2108 : vector<1x128xf32>
    %2110 = vector.extract_strided_slice %2106 {offsets = [0, 256], sizes = [1, 128], strides = [1, 1]} : vector<1x512xf32> to vector<1x128xf32>
    %2111 = arith.addf %2109, %2110 : vector<1x128xf32>
    %2112 = vector.extract_strided_slice %2106 {offsets = [0, 384], sizes = [1, 128], strides = [1, 1]} : vector<1x512xf32> to vector<1x128xf32>
    %2113 = arith.addf %2111, %2112 : vector<1x128xf32>
    %cst_486 = arith.constant 1.562500e-02 : f32
    %2114 = vector.broadcast %cst_486 : f32 to vector<1x128xf32>
    %2115 = arith.mulf %2113, %2114 : vector<1x128xf32>
    %cst_487 = arith.constant 9.99999974E-6 : f32
    %2116 = vector.broadcast %cst_487 : f32 to vector<1x128xf32>
    %2117 = arith.addf %2115, %2116 : vector<1x128xf32>
    %2118 = math.rsqrt %2117 : vector<1x128xf32>
    %2119 = tpu.concatenate %2118, %2118, %2118, %2118 in 1 : vector<1x128xf32>, vector<1x128xf32>, vector<1x128xf32>, vector<1x128xf32> -> vector<1x512xf32>
    %2120 = vector.broadcast %2119 : vector<1x512xf32> to vector<16x512xf32>
    %2121 = arith.mulf %2103, %2120 : vector<16x512xf32>
    %2122 = arith.mulf %2121, %7 : vector<16x512xf32>
    %2123 = arith.addf %2122, %8 : vector<16x512xf32>
    %cst_488 = arith.constant dense<0.000000e+00> : vector<8x512xf32>
    %2124 = tpu.matmul %5, %2123, %cst_488 {dimension_numbers = #tpu.dot_dimension_numbers<[1], [0], [0], [1], [0, 0, 1, 1], [], []>} : vector<8x16xf32>, vector<16x512xf32>, vector<8x512xf32> -> vector<8x512xf32>
    %2125 = vector.broadcast %6 : vector<8x1xf32> to vector<8x512xf32>
    %2126 = arith.addf %2124, %2125 : vector<8x512xf32>
    %2127 = vector.broadcast %26 : vector<1x512xf32> to vector<8x512xf32>
    %2128 = arith.subf %2126, %2127 : vector<8x512xf32>
    %2129 = vector.broadcast %35 : vector<1x512xf32> to vector<8x512xf32>
    %2130 = arith.mulf %2128, %2129 : vector<8x512xf32>
    %2131 = vector.broadcast %52 : vector<1x512xf32> to vector<8x512xf32>
    %2132 = arith.mulf %2130, %2131 : vector<8x512xf32>
    %2133 = vector.broadcast %39 : vector<1x512xf32> to vector<8x512xf32>
    %2134 = arith.addf %2132, %2133 : vector<8x512xf32>
    %c0_489 = arith.constant 0 : index
    %c0_490 = arith.constant 0 : index
    %2135 = vector.load %arg13[%c0_489, %c0_490] : memref<8x512xf32, #tpu.memory_space<vmem>>, vector<8x512xf32>
    tpu.vector_store %arg13[%c0_489, %c0_490], %2134 {strides = array<i32>} : memref<8x512xf32, #tpu.memory_space<vmem>>, vector<8x512xf32>,
    return
  }
  func.func @transform_0(%arg0: i32) -> (i32, i32) {
    %c0_i32 = arith.constant 0 : i32
    %c0_i32_0 = arith.constant 0 : i32
    return %c0_i32, %arg0 : i32, i32
  }
  func.func @transform_1(%arg0: i32) -> (i32, i32) {
    %c0_i32 = arith.constant 0 : i32
    %c0_i32_0 = arith.constant 0 : i32
    %c0_i32_1 = arith.constant 0 : i32
    return %c0_i32, %c0_i32_0 : i32, i32
  }
  func.func @transform_2(%arg0: i32) -> (i32, i32) {
    %c0_i32 = arith.constant 0 : i32
    %c0_i32_0 = arith.constant 0 : i32
    %c0_i32_1 = arith.constant 0 : i32
    return %c0_i32, %c0_i32_0 : i32, i32
  }
  func.func @transform_3(%arg0: i32) -> (i32, i32) {
    %c0_i32 = arith.constant 0 : i32
    %c0_i32_0 = arith.constant 0 : i32
    %c0_i32_1 = arith.constant 0 : i32
    return %c0_i32, %c0_i32_0 : i32, i32
  }
  func.func @transform_4(%arg0: i32) -> (i32, i32) {
    %c0_i32 = arith.constant 0 : i32
    %c0_i32_0 = arith.constant 0 : i32
    %c0_i32_1 = arith.constant 0 : i32
    return %c0_i32, %c0_i32_0 : i32, i32
  }
  func.func @transform_5(%arg0: i32) -> (i32, i32) {
    %c0_i32 = arith.constant 0 : i32
    %c0_i32_0 = arith.constant 0 : i32
    %c0_i32_1 = arith.constant 0 : i32
    return %c0_i32, %c0_i32_0 : i32, i32
  }
  func.func @transform_6(%arg0: i32) -> (i32, i32) {
    %c0_i32 = arith.constant 0 : i32
    %c0_i32_0 = arith.constant 0 : i32
    %c0_i32_1 = arith.constant 0 : i32
    return %c0_i32, %c0_i32_0 : i32, i32
  }
  func.func @transform_7(%arg0: i32) -> i32 {
    %c0_i32 = arith.constant 0 : i32
    %c0_i32_0 = arith.constant 0 : i32
    return %c0_i32 : i32
  }
  func.func @transform_8(%arg0: i32) -> i32 {
    %c0_i32 = arith.constant 0 : i32
    %c0_i32_0 = arith.constant 0 : i32
    return %c0_i32 : i32
  }
  func.func @transform_9(%arg0: i32) -> i32 {
    %c0_i32 = arith.constant 0 : i32
    %c0_i32_0 = arith.constant 0 : i32
    return %c0_i32 : i32
  }
  func.func @transform_10(%arg0: i32) -> (i32, i32) {
    %c0_i32 = arith.constant 0 : i32
    %c0_i32_0 = arith.constant 0 : i32
    %c0_i32_1 = arith.constant 0 : i32
    return %c0_i32, %c0_i32_0 : i32, i32
  }
  func.func @transform_11(%arg0: i32) -> (i32, i32) {
    %c0_i32 = arith.constant 0 : i32
    %c0_i32_0 = arith.constant 0 : i32
    %c0_i32_1 = arith.constant 0 : i32
    return %c0_i32, %c0_i32_0 : i32, i32
  }
  func.func @transform_12(%arg0: i32) -> (i32, i32) {
    %c0_i32 = arith.constant 0 : i32
    %c0_i32_0 = arith.constant 0 : i32
    return %c0_i32, %arg0 : i32, i32
  }
}

</mosaic_0001>

<llo_original>
// kernel: tpu_custom_call.1
$region0: #{tpu_custom_call.1}
  #allocation0 [shape = 'u32[]', space=smem, size = 0x4, offset = 0x4, fixed_abs, tag = 'smem constant byte address 0x4 - core index']
  #allocation1 [shape = 'u32[144,128]{1,0:T(1,128)}', space=vmem, size = 0x12000, scoped, tag = 'internal scratch']
  #allocation2 [shape = 'f32[32,512]{1,0:T(8,128)}', space=vmem, size = 0x10000, scoped, tag = 'scratch operand']
  %s0 = inlined_call_operand.vmem [shape: f32[16,512], index: 0, kind: input, shape index: {}]
  %s1 = inlined_call_operand.vmem [shape: bf16[96,16], index: 1, kind: input, shape index: {}]
  %s2 = inlined_call_operand.vmem [shape: f32[96,1], index: 2, kind: input, shape index: {}]
  %s3 = inlined_call_operand.vmem [shape: bf16[16,32], index: 3, kind: input, shape index: {}]
  %s4 = inlined_call_operand.vmem [shape: f32[16,1], index: 4, kind: input, shape index: {}]
  %s5 = inlined_call_operand.vmem [shape: f32[16,512], index: 5, kind: input, shape index: {}]
  %s6 = inlined_call_operand.hbm [shape: f32[16,512], index: 6, kind: input, shape index: {}]
  %s7 = inlined_call_operand.vmem [shape: f32[4], index: 7, kind: input, shape index: {}]
  %s8 = inlined_call_operand.vmem [shape: f32[4], index: 8, kind: input, shape index: {}]
  %s9 = inlined_call_operand.vmem [shape: f32[4], index: 9, kind: input, shape index: {}]
  %s10 = inlined_call_operand.vmem [shape: f32[8,16], index: 10, kind: input, shape index: {}]
  %s11 = inlined_call_operand.vmem [shape: f32[8,1], index: 11, kind: input, shape index: {}]
  %s12 = inlined_call_operand.hbm [shape: f32[8,512], index: 12, kind: output, shape index: {}]
  %s13 = sld [smem:[#allocation0]]
  $region74: #{tpu_custom_call.1} parent=0
    _
  %s15 = ssub.s32 1, %s13
  %s16 = scalar_select 0, %s15, %s13
  $region1: #{tpu_custom_call.1} parent=0
    #allocation3 [shape = 'u8[32768]{0}', space=vmem, size = 0x8000, scoped, tag = 'input window, operand 6, single buffered']
    #allocation4 [shape = 's32[1]{0}', space=sflag, size = 0x4, scoped, tag = 'scoped memory for tpu_custom_call.1']
    #allocation5 [shape = 's32[1]{0}', space=sflag, size = 0x4, scoped, tag = 'scoped memory for tpu_custom_call.1']
    #allocation6 [shape = 's32[1]{0}', space=sflag, size = 0x4, scoped, tag = 'scoped memory for tpu_custom_call.1']
    #allocation7 [shape = 'u8[512]{0}', space=smem, size = 0x200, scoped, tag = 'input window, operand 7, single buffered']
    #allocation8 [shape = 'u8[512]{0}', space=smem, size = 0x200, scoped, tag = 'input window, operand 8, single buffered']
    #allocation9 [shape = 's32[1]{0}', space=sflag, size = 0x4, scoped, tag = 'scoped memory for tpu_custom_call.1']
    #allocation10 [shape = 'u8[512]{0}', space=smem, size = 0x200, scoped, tag = 'input window, operand 9, single buffered']
    #allocation11 [shape = 'u8[16384]{0}', space=vmem, size = 0x4000, scoped, tag = 'output window, operand 0, single buffered']
    %17 = vsyncpa [#allocation4], 0
    %18 = vsyncpa [#allocation6], 0
    %19 = vsyncpa [#allocation9], 0
    %20 = vsyncpa [#allocation5], 0
    // Predicated region
    $region2: #{tpu_custom_call.1} parent=1 // pred_check
      _
    $region3: #{tpu_custom_call.1} parent=1 // pred_check_branch
      %22 = sbr.rel (0) target = $region5
    $region4: #{tpu_custom_call.1} parent=1 // pred_region
      _
    $region5: #{tpu_custom_call.1} parent=1 // pred_fallthru
      _
    // Predicated region
    $region6: #{tpu_custom_call.1} parent=1 // pred_check
      _
    $region7: #{tpu_custom_call.1} parent=1 // pred_check_branch
      %24 = sbr.rel (0) target = $region9
    $region8: #{tpu_custom_call.1} parent=1 // pred_region
      _
    $region9: #{tpu_custom_call.1} parent=1 // pred_fallthru
      _
    // Predicated region
    $region10: #{tpu_custom_call.1} parent=1 // pred_check
      _
    $region11: #{tpu_custom_call.1} parent=1 // pred_check_branch
      %26 = sbr.rel (0) target = $region13
    $region12: #{tpu_custom_call.1} parent=1 // pred_region
      _
    $region13: #{tpu_custom_call.1} parent=1 // pred_fallthru
      _
    // Predicated region
    $region14: #{tpu_custom_call.1} parent=1 // pred_check
      _
    $region15: #{tpu_custom_call.1} parent=1 // pred_check_branch
      %28 = sbr.rel (0) target = $region17
    $region16: #{tpu_custom_call.1} parent=1 // pred_region
      _
    $region17: #{tpu_custom_call.1} parent=1 // pred_fallthru
      _
    // Predicated region
    $region18: #{tpu_custom_call.1} parent=1 // pred_check
      _
    $region19: #{tpu_custom_call.1} parent=1 // pred_check_branch
      %30 = sbr.rel (0) target = $region21
    $region20: #{tpu_custom_call.1} parent=1 // pred_region
      _
    $region21: #{tpu_custom_call.1} parent=1 // pred_fallthru
      _
    // Predicated region
    $region22: #{tpu_custom_call.1} parent=1 // pred_check
      _
    $region23: #{tpu_custom_call.1} parent=1 // pred_check_branch
      %32 = sbr.rel (0) target = $region25
    $region24: #{tpu_custom_call.1} parent=1 // pred_region
      _
    $region25: #{tpu_custom_call.1} parent=1 // pred_fallthru
      _
    // Predicated region
    $region26: #{tpu_custom_call.1} parent=1 // pred_check
      _
    $region27: #{tpu_custom_call.1} parent=1 // pred_check_branch
      %34 = sbr.rel (0) target = $region29
    $region28: #{tpu_custom_call.1} parent=1 // pred_region
      %s36 = ssub.s32 1024, 1024
      %37 = vsyncadd [#allocation4], %s36
      %s38 = sshll.u32 [#allocation3], 4
      %s39 = int_to_ptr.vmem [resolvable:$true] %s38
      %44 = dma.hbm_to_vmem [thread:$0]  %s6, 1024, %s39, [#allocation4], 512, 512, 32
    $region29: #{tpu_custom_call.1} parent=1 // pred_fallthru
      _
    // Predicated region
    $region30: #{tpu_custom_call.1} parent=1 // pred_check
      _
    $region31: #{tpu_custom_call.1} parent=1 // pred_check_branch
      %46 = sbr.rel (0) target = $region33
    $region32: #{tpu_custom_call.1} parent=1 // pred_region
      %s48 = ssub.s32 16, 16
      %49 = vsyncadd [#allocation6], %s48
      %s51 = sshll.u32 %s7, 4
      %s52 = int_to_ptr.vmem [resolvable:$true] %s51
      %54 = dma.vmem_to_smem %s52, 16, [#allocation7], [#allocation6]
    $region33: #{tpu_custom_call.1} parent=1 // pred_fallthru
      _
    // Predicated region
    $region34: #{tpu_custom_call.1} parent=1 // pred_check
      _
    $region35: #{tpu_custom_call.1} parent=1 // pred_check_branch
      %56 = sbr.rel (0) target = $region37
    $region36: #{tpu_custom_call.1} parent=1 // pred_region
      %s58 = ssub.s32 16, 16
      %59 = vsyncadd [#allocation9], %s58
      %s61 = sshll.u32 %s8, 4
      %s62 = int_to_ptr.vmem [resolvable:$true] %s61
      %64 = dma.vmem_to_smem %s62, 16, [#allocation8], [#allocation9]
    $region37: #{tpu_custom_call.1} parent=1 // pred_fallthru
      _
    // Predicated region
    $region38: #{tpu_custom_call.1} parent=1 // pred_check
      _
    $region39: #{tpu_custom_call.1} parent=1 // pred_check_branch
      %66 = sbr.rel (0) target = $region41
    $region40: #{tpu_custom_call.1} parent=1 // pred_region
      %s68 = ssub.s32 16, 16
      %69 = vsyncadd [#allocation9], %s68
      %s71 = sshll.u32 %s9, 4
      %s72 = int_to_ptr.vmem [resolvable:$true] %s71
      %74 = dma.vmem_to_smem %s72, 16, [#allocation10], [#allocation9]
    $region41: #{tpu_custom_call.1} parent=1 // pred_fallthru
      _
    // Predicated region
    $region42: #{tpu_custom_call.1} parent=1 // pred_check
      _
    $region43: #{tpu_custom_call.1} parent=1 // pred_check_branch
      %76 = sbr.rel (0) target = $region45
    $region44: #{tpu_custom_call.1} parent=1 // pred_region
      _
    $region45: #{tpu_custom_call.1} parent=1 // pred_fallthru
      _
    // Predicated region
    $region46: #{tpu_custom_call.1} parent=1 // pred_check
      _
    $region47: #{tpu_custom_call.1} parent=1 // pred_check_branch
      %78 = sbr.rel (0) target = $region49
    $region48: #{tpu_custom_call.1} parent=1 // pred_region
      _
    $region49: #{tpu_custom_call.1} parent=1 // pred_fallthru
      _
    // Predicated region
    $region50: #{tpu_custom_call.1} parent=1 // pred_check
      _
    $region51: #{tpu_custom_call.1} parent=1 // pred_check_branch
      %80 = sbr.rel (0) target = $region53
    $region52: #{tpu_custom_call.1} parent=1 // pred_region
      %81 = dma.done [#allocation4], 1024
    $region53: #{tpu_custom_call.1} parent=1 // pred_fallthru
      _
    // Predicated region
    $region54: #{tpu_custom_call.1} parent=1 // pred_check
      _
    $region55: #{tpu_custom_call.1} parent=1 // pred_check_branch
      %83 = sbr.rel (0) target = $region57
    $region56: #{tpu_custom_call.1} parent=1 // pred_region
      %84 = dma.done [#allocation6], 16
    $region57: #{tpu_custom_call.1} parent=1 // pred_fallthru
      _
    // Predicated region
    $region58: #{tpu_custom_call.1} parent=1 // pred_check
      _
    $region59: #{tpu_custom_call.1} parent=1 // pred_check_branch
      %86 = sbr.rel (0) target = $region61
    $region60: #{tpu_custom_call.1} parent=1 // pred_region
      %87 = dma.done [#allocation9], 16
    $region61: #{tpu_custom_call.1} parent=1 // pred_fallthru
      _
    // Predicated region
    $region62: #{tpu_custom_call.1} parent=1 // pred_check
      _
    $region63: #{tpu_custom_call.1} parent=1 // pred_check_branch
      %89 = sbr.rel (0) target = $region65
    $region64: #{tpu_custom_call.1} parent=1 // pred_region
      %90 = dma.done [#allocation9], 16
    $region65: #{tpu_custom_call.1} parent=1 // pred_fallthru
      _
    %91 = sfence
    %v93 = vld [vmem:[%s0] sm:$0xff]
    %v94 = vld [vmem:[%s0 + $0x8] sm:$0xff]
    %v95 = vld [vmem:[%s0 + $0x10] sm:$0xff]
    %v96 = vld [vmem:[%s0 + $0x18] sm:$0xff]
    %v97 = vld [vmem:[%s0 + $0x20] sm:$0xff]
    %v98 = vld [vmem:[%s0 + $0x28] sm:$0xff]
    %v99 = vld [vmem:[%s0 + $0x30] sm:$0xff]
    %v100 = vld [vmem:[%s0 + $0x38] sm:$0xff]
    %v101 = vld [vmem:[%s1] sm:$0xf]
    %v102 = vld [vmem:[%s1 + $0x4] sm:$0xf]
    %v103 = vld [vmem:[%s1 + $0x8] sm:$0xf]
    %v104 = vld [vmem:[%s1 + $0xc] sm:$0xf]
    %v105 = vld [vmem:[%s1 + $0x10] sm:$0xf]
    %v106 = vld [vmem:[%s1 + $0x14] sm:$0xf]
    %v107 = vld [vmem:[%s1 + $0x18] sm:$0xf]
    %v108 = vld [vmem:[%s1 + $0x1c] sm:$0xf]
    %v109 = vld [vmem:[%s1 + $0x20] sm:$0xf]
    %v110 = vld [vmem:[%s1 + $0x24] sm:$0xf]
    %v111 = vld [vmem:[%s1 + $0x28] sm:$0xf]
    %v112 = vld [vmem:[%s1 + $0x2c] sm:$0xf]
    %v113 = vld [vmem:[%s2] sm:$0xff]
    %v114 = vld [vmem:[%s2 + $0x8] sm:$0xff]
    %v115 = vld [vmem:[%s2 + $0x10] sm:$0xff]
    %v116 = vld [vmem:[%s2 + $0x18] sm:$0xff]
    %v117 = vld [vmem:[%s2 + $0x20] sm:$0xff]
    %v118 = vld [vmem:[%s2 + $0x28] sm:$0xff]
    %v119 = vld [vmem:[%s2 + $0x30] sm:$0xff]
    %v120 = vld [vmem:[%s2 + $0x38] sm:$0xff]
    %v121 = vld [vmem:[%s2 + $0x40] sm:$0xff]
    %v122 = vld [vmem:[%s2 + $0x48] sm:$0xff]
    %v123 = vld [vmem:[%s2 + $0x50] sm:$0xff]
    %v124 = vld [vmem:[%s2 + $0x58] sm:$0xff]
    %v125 = vld [vmem:[%s3] sm:$0xf]
    %v126 = vld [vmem:[%s3 + $0x4] sm:$0xf]
    %v127 = vld [vmem:[%s4] sm:$0xff]
    %v128 = vld [vmem:[%s4 + $0x8] sm:$0xff]
    %v129 = vld [vmem:[%s10] sm:$0xff]
    %v130 = vld [vmem:[%s11] sm:$0xff]
    %v131 = vld [vmem:[%s5] sm:$0xff]
    %v132 = vld [vmem:[%s5 + $0x8] sm:$0xff]
    %v133 = vld [vmem:[%s5 + $0x10] sm:$0xff]
    %v134 = vld [vmem:[%s5 + $0x18] sm:$0xff]
    %v135 = vld [vmem:[%s5 + $0x20] sm:$0xff]
    %v136 = vld [vmem:[%s5 + $0x28] sm:$0xff]
    %v137 = vld [vmem:[%s5 + $0x30] sm:$0xff]
    %v138 = vld [vmem:[%s5 + $0x38] sm:$0xff]
    %v139 = vld [vmem:[#allocation3] sm:$0xff]
    %v140 = vld [vmem:[#allocation3 + $0x8] sm:$0xff]
    %v141 = vld [vmem:[#allocation3 + $0x10] sm:$0xff]
    %v142 = vld [vmem:[#allocation3 + $0x18] sm:$0xff]
    %v143 = vld [vmem:[#allocation3 + $0x20] sm:$0xff]
    %v144 = vld [vmem:[#allocation3 + $0x28] sm:$0xff]
    %v145 = vld [vmem:[#allocation3 + $0x30] sm:$0xff]
    %v146 = vld [vmem:[#allocation3 + $0x38] sm:$0xff]
    %s147 = sld [smem:[#allocation7]]
    %v148 = vstv %s147
    %s149 = sld [smem:[#allocation7 + $0x1]]
    %v150 = vstv %s149
    %s151 = sld [smem:[#allocation7 + $0x2]]
    %v152 = vstv %s151
    %s153 = sld [smem:[#allocation7 + $0x3]]
    %v154 = vstv %s153
    %s155 = sld [smem:[#allocation8]]
    %v156 = vstv %s155
    %s157 = sld [smem:[#allocation8 + $0x1]]
    %v158 = vstv %s157
    %s159 = sld [smem:[#allocation8 + $0x2]]
    %v160 = vstv %s159
    %s161 = sld [smem:[#allocation8 + $0x3]]
    %v162 = vstv %s161
    %s163 = sld [smem:[#allocation10]]
    %v164 = vstv %s163
    %s165 = sld [smem:[#allocation10 + $0x1]]
    %v166 = vstv %s165
    %s167 = sld [smem:[#allocation10 + $0x2]]
    %v168 = vstv %s167
    %s169 = sld [smem:[#allocation10 + $0x3]]
    %v170 = vstv %s169
    %v171 = vadd.f32 %v93, %v97
    %v172 = vrot.slane %v171, 4
    %v173 = vadd.f32 %v171, %v172
    %v174 = vrot.slane %v173, 2
    %v175 = vadd.f32 %v173, %v174
    %v176 = vrot.slane %v175, 1
    %v177 = vadd.f32 %v175, %v176
    %v178 = vadd.f32 %v94, %v98
    %v179 = vrot.slane %v178, 4
    %v180 = vadd.f32 %v178, %v179
    %v181 = vrot.slane %v180, 2
    %v182 = vadd.f32 %v180, %v181
    %v183 = vrot.slane %v182, 1
    %v184 = vadd.f32 %v182, %v183
    %v185 = vadd.f32 %v95, %v99
    %v186 = vrot.slane %v185, 4
    %v187 = vadd.f32 %v185, %v186
    %v188 = vrot.slane %v187, 2
    %v189 = vadd.f32 %v187, %v188
    %v190 = vrot.slane %v189, 1
    %v191 = vadd.f32 %v189, %v190
    %v192 = vadd.f32 %v96, %v100
    %v193 = vrot.slane %v192, 4
    %v194 = vadd.f32 %v192, %v193
    %v195 = vrot.slane %v194, 2
    %v196 = vadd.f32 %v194, %v195
    %v197 = vrot.slane %v196, 1
    %v198 = vadd.f32 %v196, %v197
    %v199 = vrcp.pop 16.0
    %v200 = vmul.f32 %v177, %v199
    %v201 = vmul.f32 %v184, %v199
    %v202 = vmul.f32 %v191, %v199
    %v203 = vmul.f32 %v198, %v199
    %v204 = vsub.f32 %v93, %v200
    %v205 = vsub.f32 %v94, %v201
    %v206 = vsub.f32 %v95, %v202
    %v207 = vsub.f32 %v96, %v203
    %v208 = vsub.f32 %v97, %v200
    %v209 = vsub.f32 %v98, %v201
    %v210 = vsub.f32 %v99, %v202
    %v211 = vsub.f32 %v100, %v203
    %v212 = vmul.f32 %v204, %v204
    %v213 = vmul.f32 %v205, %v205
    %v214 = vmul.f32 %v206, %v206
    %v215 = vmul.f32 %v207, %v207
    %v216 = vmul.f32 %v208, %v208
    %v217 = vmul.f32 %v209, %v209
    %v218 = vmul.f32 %v210, %v210
    %v219 = vmul.f32 %v211, %v211
    %v220 = vadd.f32 %v212, %v216
    %v221 = vrot.slane %v220, 4
    %v222 = vadd.f32 %v220, %v221
    %v223 = vrot.slane %v222, 2
    %v224 = vadd.f32 %v222, %v223
    %v225 = vrot.slane %v224, 1
    %v226 = vadd.f32 %v224, %v225
    %v227 = vadd.f32 %v213, %v217
    %v228 = vrot.slane %v227, 4
    %v229 = vadd.f32 %v227, %v228
    %v230 = vrot.slane %v229, 2
    %v231 = vadd.f32 %v229, %v230
    %v232 = vrot.slane %v231, 1
    %v233 = vadd.f32 %v231, %v232
    %v234 = vadd.f32 %v214, %v218
    %v235 = vrot.slane %v234, 4
    %v236 = vadd.f32 %v234, %v235
    %v237 = vrot.slane %v236, 2
    %v238 = vadd.f32 %v236, %v237
    %v239 = vrot.slane %v238, 1
    %v240 = vadd.f32 %v238, %v239
    %v241 = vadd.f32 %v215, %v219
    %v242 = vrot.slane %v241, 4
    %v243 = vadd.f32 %v241, %v242
    %v244 = vrot.slane %v243, 2
    %v245 = vadd.f32 %v243, %v244
    %v246 = vrot.slane %v245, 1
    %v247 = vadd.f32 %v245, %v246
    %v248 = vmul.f32 %v226, %v199
    %v249 = vmul.f32 %v233, %v199
    %v250 = vmul.f32 %v240, %v199
    %v251 = vmul.f32 %v247, %v199
    %v252 = vadd.f32 %v248, 1e-05
    %v253 = vadd.f32 %v249, 1e-05
    %v254 = vadd.f32 %v250, 1e-05
    %v255 = vadd.f32 %v251, 1e-05
    %v256 = vrsqrt.pop %v252
    %v257 = vrsqrt.pop %v253
    %v258 = vrsqrt.pop %v254
    %v259 = vrsqrt.pop %v255
    %v260 = vmul.f32 %v252, %v256
    %v261 = vmul.f32 %v253, %v257
    %v262 = vmul.f32 %v254, %v258
    %v263 = vmul.f32 %v255, %v259
    %v264 = vmul.f32 %v256, %v148
    %v265 = vmul.f32 %v257, %v150
    %v266 = vmul.f32 %v258, %v152
    %v267 = vmul.f32 %v259, %v154
    %v268 = vlaneseq
    %v269 = vshrl.u32 %v268, 7
    %v270 = vsub.s32 0, %v269
    %v271 = vrot.slane %v264, %v270
    %v272 = vlaneseq
    %v273 = vshrl.u32 %v272, 7
    %v274 = vsub.s32 0, %v273
    %v275 = vrot.slane %v265, %v274
    %v276 = vlaneseq
    %v277 = vshrl.u32 %v276, 7
    %v278 = vsub.s32 0, %v277
    %v279 = vrot.slane %v266, %v278
    %v280 = vlaneseq
    %v281 = vshrl.u32 %v280, 7
    %v282 = vsub.s32 0, %v281
    %v283 = vrot.slane %v267, %v282
    %v284 = vmul.f32 %v204, %v271
    %v285 = vmul.f32 %v205, %v275
    %v286 = vmul.f32 %v206, %v279
    %v287 = vmul.f32 %v207, %v283
    %v288 = vmul.f32 %v208, %v271
    %v289 = vmul.f32 %v209, %v275
    %v290 = vmul.f32 %v210, %v279
    %v291 = vmul.f32 %v211, %v283
    %v292 = vlaneseq
    %v293 = vshrl.u32 %v292, 7
    %v294 = vsub.s32 0, %v293
    %v295 = vlaneseq
    %v296 = vshrl.u32 %v295, 7
    %v297 = vsub.s32 0, %v296
    %v298 = vlaneseq
    %v299 = vshrl.u32 %v298, 7
    %v300 = vsub.s32 0, %v299
    %v301 = vlaneseq
    %v302 = vshrl.u32 %v301, 7
    %v303 = vsub.s32 0, %v302
    %v304 = vadd.f32 %v284, %v156
    %v305 = vadd.f32 %v285, %v158
    %v306 = vadd.f32 %v286, %v160
    %v307 = vadd.f32 %v287, %v162
    %v308 = vadd.f32 %v288, %v156
    %v309 = vadd.f32 %v289, %v158
    %v310 = vadd.f32 %v290, %v160
    %v311 = vadd.f32 %v291, %v162
    %v312 = vpack.c.bf16 %v308, %v304
    %v313 = vpack.c.bf16 %v309, %v305
    %v314 = vpack.c.bf16 %v310, %v306
    %v315 = vpack.c.bf16 %v311, %v307
    %317 = vset.pattern.permute.xlu0 0
    %318 = vperm.xlu0 %317, %v113
    %v319 = vpop.permute.xlu0 %318
    %322 = vset.pattern.permute.xlu0 0
    %323 = vperm.xlu0 %322, %v114
    %v324 = vpop.permute.xlu0 %323
    %327 = vset.pattern.permute.xlu0 0
    %328 = vperm.xlu0 %327, %v115
    %v329 = vpop.permute.xlu0 %328
    %332 = vset.pattern.permute.xlu0 0
    %333 = vperm.xlu0 %332, %v116
    %v334 = vpop.permute.xlu0 %333
    %337 = vset.pattern.permute.xlu0 0
    %338 = vperm.xlu0 %337, %v117
    %v339 = vpop.permute.xlu0 %338
    %342 = vset.pattern.permute.xlu0 0
    %343 = vperm.xlu0 %342, %v118
    %v344 = vpop.permute.xlu0 %343
    %347 = vset.pattern.permute.xlu0 0
    %348 = vperm.xlu0 %347, %v119
    %v349 = vpop.permute.xlu0 %348
    %352 = vset.pattern.permute.xlu0 0
    %353 = vperm.xlu0 %352, %v120
    %v354 = vpop.permute.xlu0 %353
    %357 = vset.pattern.permute.xlu0 0
    %358 = vperm.xlu0 %357, %v121
    %v359 = vpop.permute.xlu0 %358
    %362 = vset.pattern.permute.xlu0 0
    %363 = vperm.xlu0 %362, %v122
    %v364 = vpop.permute.xlu0 %363
    %367 = vset.pattern.permute.xlu0 0
    %368 = vperm.xlu0 %367, %v123
    %v369 = vpop.permute.xlu0 %368
    %372 = vset.pattern.permute.xlu0 0
    %373 = vperm.xlu0 %372, %v124
    %v374 = vpop.permute.xlu0 %373
    %v388 = vunpack.c.l.b16 %v101
    %v389 = vunpack.c.l.b16 %v102
    %v390 = vunpack.c.l.b16 %v103
    %v391 = vunpack.c.l.b16 %v104
    %v392 = vunpack.c.l.b16 %v105
    %v393 = vunpack.c.l.b16 %v106
    %v394 = vunpack.c.l.b16 %v107
    %v395 = vunpack.c.l.b16 %v108
    %v396 = vunpack.c.l.b16 %v109
    %v397 = vunpack.c.l.b16 %v110
    %v398 = vunpack.c.l.b16 %v111
    %v399 = vunpack.c.l.b16 %v112
    %v400 = vpack.c.b16 %v389, %v388
    %v401 = vpack.c.b16 %v391, %v390
    %v402 = vpack.c.b16 %v393, %v392
    %v403 = vpack.c.b16 %v395, %v394
    %v404 = vpack.c.b16 %v397, %v396
    %v405 = vpack.c.b16 %v399, %v398
    %vm406 = vcmask 130048
    %v408 = vsel %vm406, %v400, 0
    %v411 = vsel %vm406, %v401, 0
    %v414 = vsel %vm406, %v402, 0
    %v417 = vsel %vm406, %v403, 0
    %v420 = vsel %vm406, %v404, 0
    %v423 = vsel %vm406, %v405, 0
    %425 = vmatprep.subr.bf16.mxu0 0
    %426 = vmatpush1.bf16.msra.mxu0 0
    %427 = vmatprep.subr.bf16.mxu0 0
    %428 = vmatpush1.bf16.msra.mxu0 0
    %429 = vmatprep.subr.bf16.mxu0 0
    %430 = vmatpush1.bf16.msra.mxu0 0
    %431 = vmatprep.subr.bf16.mxu0 0
    %432 = vmatpush1.bf16.msra.mxu0 0
    %433 = vmatprep.subr.bf16.mxu0 0
    %434 = vmatpush1.bf16.msra.mxu0 0
    %435 = vmatprep.subr.bf16.mxu0 0
    %436 = vmatpush1.bf16.msra.mxu0 0
    %437 = vmatprep.subr.bf16.mxu0 0
    %438 = vmatpush1.bf16.msra.mxu0 0
    %439 = vmatprep.subr.bf16.mxu0 %v313
    %440 = vmatpush1.bf16.msra.mxu0 %v312
    %441 = vmatprep.subr.bf16.mxu0 0
    %442 = vmatpush2.bf16.msra.mxu0 0
    %443 = vmatprep.subr.bf16.mxu0 0
    %444 = vmatpush2.bf16.msra.mxu0 0
    %445 = vmatprep.subr.bf16.mxu0 0
    %446 = vmatpush2.bf16.msra.mxu0 0
    %447 = vmatprep.subr.bf16.mxu0 0
    %448 = vmatpush2.bf16.msra.mxu0 0
    %449 = vmatprep.subr.bf16.mxu0 0
    %450 = vmatpush2.bf16.msra.mxu0 0
    %451 = vmatprep.subr.bf16.mxu0 0
    %452 = vmatpush2.bf16.msra.mxu0 0
    %453 = vmatprep.subr.bf16.mxu0 0
    %454 = vmatpush2.bf16.msra.mxu0 0
    %455 = vmatprep.subr.bf16.mxu0 0
    %456 = vmatpush2.bf16.msra.mxu0 0
    %457 = vmatprep.mubr.bf16.mxu0 0
    %458 = vmatmul.mubr.bf16.gmra.mxu0 %v408
    %v459 = vpop.f32.mrf.mxu0
    %v460 = vadd.f32 %v319, %v459
    %v461 = vpop.f32.mrf.mxu0
    %v462 = vadd.f32 %v319, %v461
    %v463 = vpop.f32.mrf.mxu0
    %v464 = vadd.f32 %v324, %v463
    %v465 = vpop.f32.mrf.mxu0
    %v466 = vadd.f32 %v324, %v465
    %467 = vmatprep.mubr.bf16.mxu0 0
    %468 = vmatmul.mubr.bf16.gmra.mxu0 %v411
    %v469 = vpop.f32.mrf.mxu0
    %v470 = vadd.f32 %v329, %v469
    %v471 = vpop.f32.mrf.mxu0
    %v472 = vadd.f32 %v329, %v471
    %v473 = vpop.f32.mrf.mxu0
    %v474 = vadd.f32 %v334, %v473
    %v475 = vpop.f32.mrf.mxu0
    %v476 = vadd.f32 %v334, %v475
    %477 = vmatprep.mubr.bf16.mxu0 0
    %478 = vmatmul.mubr.bf16.gmra.mxu0 %v414
    %v479 = vpop.f32.mrf.mxu0
    %v480 = vadd.f32 %v339, %v479
    %v481 = vpop.f32.mrf.mxu0
    %v482 = vadd.f32 %v339, %v481
    %v483 = vpop.f32.mrf.mxu0
    %v484 = vadd.f32 %v344, %v483
    %v485 = vpop.f32.mrf.mxu0
    %v486 = vadd.f32 %v344, %v485
    %487 = vmatprep.mubr.bf16.mxu0 0
    %488 = vmatmul.mubr.bf16.gmra.mxu0 %v417
    %v489 = vpop.f32.mrf.mxu0
    %v490 = vadd.f32 %v349, %v489
    %v491 = vpop.f32.mrf.mxu0
    %v492 = vadd.f32 %v349, %v491
    %v493 = vpop.f32.mrf.mxu0
    %v494 = vadd.f32 %v354, %v493
    %v495 = vpop.f32.mrf.mxu0
    %v496 = vadd.f32 %v354, %v495
    %497 = vmatprep.mubr.bf16.mxu0 0
    %498 = vmatmul.mubr.bf16.gmra.mxu0 %v420
    %v499 = vpop.f32.mrf.mxu0
    %v500 = vadd.f32 %v359, %v499
    %v501 = vpop.f32.mrf.mxu0
    %v502 = vadd.f32 %v359, %v501
    %v503 = vpop.f32.mrf.mxu0
    %v504 = vadd.f32 %v364, %v503
    %v505 = vpop.f32.mrf.mxu0
    %v506 = vadd.f32 %v364, %v505
    %507 = vmatprep.mubr.bf16.mxu0 0
    %508 = vmatmul.mubr.bf16.gmra.mxu0 %v423
    %v509 = vpop.f32.mrf.mxu0
    %v510 = vadd.f32 %v369, %v509
    %v511 = vpop.f32.mrf.mxu0
    %v512 = vadd.f32 %v369, %v511
    %v513 = vpop.f32.mrf.mxu0
    %v514 = vadd.f32 %v374, %v513
    %v515 = vpop.f32.mrf.mxu0
    %v516 = vadd.f32 %v374, %v515
    %517 = vdwg.mxu0
    %518 = vmatprep.subr.bf16.mxu0 0
    %519 = vmatpush1.bf16.msra.mxu0 0
    %520 = vmatprep.subr.bf16.mxu0 0
    %521 = vmatpush1.bf16.msra.mxu0 0
    %522 = vmatprep.subr.bf16.mxu0 0
    %523 = vmatpush1.bf16.msra.mxu0 0
    %524 = vmatprep.subr.bf16.mxu0 0
    %525 = vmatpush1.bf16.msra.mxu0 0
    %526 = vmatprep.subr.bf16.mxu0 0
    %527 = vmatpush1.bf16.msra.mxu0 0
    %528 = vmatprep.subr.bf16.mxu0 0
    %529 = vmatpush1.bf16.msra.mxu0 0
    %530 = vmatprep.subr.bf16.mxu0 0
    %531 = vmatpush1.bf16.msra.mxu0 0
    %532 = vmatprep.subr.bf16.mxu0 %v315
    %533 = vmatpush1.bf16.msra.mxu0 %v314
    %534 = vmatprep.subr.bf16.mxu0 0
    %535 = vmatpush2.bf16.msra.mxu0 0
    %536 = vmatprep.subr.bf16.mxu0 0
    %537 = vmatpush2.bf16.msra.mxu0 0
    %538 = vmatprep.subr.bf16.mxu0 0
    %539 = vmatpush2.bf16.msra.mxu0 0
    %540 = vmatprep.subr.bf16.mxu0 0
    %541 = vmatpush2.bf16.msra.mxu0 0
    %542 = vmatprep.subr.bf16.mxu0 0
    %543 = vmatpush2.bf16.msra.mxu0 0
    %544 = vmatprep.subr.bf16.mxu0 0
    %545 = vmatpush2.bf16.msra.mxu0 0
    %546 = vmatprep.subr.bf16.mxu0 0
    %547 = vmatpush2.bf16.msra.mxu0 0
    %548 = vmatprep.subr.bf16.mxu0 0
    %549 = vmatpush2.bf16.msra.mxu0 0
    %550 = vmatprep.mubr.bf16.mxu0 0
    %551 = vmatmul.mubr.bf16.gmra.mxu0 %v408
    %v552 = vpop.f32.mrf.mxu0
    %v553 = vadd.f32 %v319, %v552
    %v554 = vpop.f32.mrf.mxu0
    %v555 = vadd.f32 %v319, %v554
    %v556 = vpop.f32.mrf.mxu0
    %v557 = vadd.f32 %v324, %v556
    %v558 = vpop.f32.mrf.mxu0
    %v559 = vadd.f32 %v324, %v558
    %560 = vmatprep.mubr.bf16.mxu0 0
    %561 = vmatmul.mubr.bf16.gmra.mxu0 %v411
    %v562 = vpop.f32.mrf.mxu0
    %v563 = vadd.f32 %v329, %v562
    %v564 = vpop.f32.mrf.mxu0
    %v565 = vadd.f32 %v329, %v564
    %v566 = vpop.f32.mrf.mxu0
    %v567 = vadd.f32 %v334, %v566
    %v568 = vpop.f32.mrf.mxu0
    %v569 = vadd.f32 %v334, %v568
    %570 = vmatprep.mubr.bf16.mxu0 0
    %571 = vmatmul.mubr.bf16.gmra.mxu0 %v414
    %v572 = vpop.f32.mrf.mxu0
    %v573 = vadd.f32 %v339, %v572
    %v574 = vpop.f32.mrf.mxu0
    %v575 = vadd.f32 %v339, %v574
    %v576 = vpop.f32.mrf.mxu0
    %v577 = vadd.f32 %v344, %v576
    %v578 = vpop.f32.mrf.mxu0
    %v579 = vadd.f32 %v344, %v578
    %580 = vmatprep.mubr.bf16.mxu0 0
    %581 = vmatmul.mubr.bf16.gmra.mxu0 %v417
    %v582 = vpop.f32.mrf.mxu0
    %v583 = vadd.f32 %v349, %v582
    %v584 = vpop.f32.mrf.mxu0
    %v585 = vadd.f32 %v349, %v584
    %v586 = vpop.f32.mrf.mxu0
    %v587 = vadd.f32 %v354, %v586
    %v588 = vpop.f32.mrf.mxu0
    %v589 = vadd.f32 %v354, %v588
    %590 = vmatprep.mubr.bf16.mxu0 0
    %591 = vmatmul.mubr.bf16.gmra.mxu0 %v420
    %v592 = vpop.f32.mrf.mxu0
    %v593 = vadd.f32 %v359, %v592
    %v594 = vpop.f32.mrf.mxu0
    %v595 = vadd.f32 %v359, %v594
    %v596 = vpop.f32.mrf.mxu0
    %v597 = vadd.f32 %v364, %v596
    %v598 = vpop.f32.mrf.mxu0
    %v599 = vadd.f32 %v364, %v598
    %600 = vmatprep.mubr.bf16.mxu0 0
    %601 = vmatmul.mubr.bf16.gmra.mxu0 %v423
    %v602 = vpop.f32.mrf.mxu0
    %v603 = vadd.f32 %v369, %v602
    %v604 = vpop.f32.mrf.mxu0
    %v605 = vadd.f32 %v369, %v604
    %v606 = vpop.f32.mrf.mxu0
    %v607 = vadd.f32 %v374, %v606
    %v608 = vpop.f32.mrf.mxu0
    %v609 = vadd.f32 %v374, %v608
    %610 = vdwg.mxu0
    %v611 = vmul.f32 %v460, %v470
    %v612 = vrot.slane %v611, 4
    %v613 = vadd.f32 %v611, %v612
    %v614 = vrot.slane %v613, 6
    %v615 = vadd.f32 %v613, %v614
    %v616 = vrot.slane %v615, 7
    %v617 = vadd.f32 %v615, %v616
    %v618 = vmul.f32 %v460, %v472
    %v619 = vrot.slane %v618, 4
    %v620 = vadd.f32 %v618, %v619
    %v621 = vrot.slane %v620, 6
    %v622 = vadd.f32 %v620, %v621
    %v623 = vrot.slane %v622, 7
    %v624 = vadd.f32 %v622, %v623
    %v625 = vmul.f32 %v460, %v563
    %v626 = vrot.slane %v625, 4
    %v627 = vadd.f32 %v625, %v626
    %v628 = vrot.slane %v627, 6
    %v629 = vadd.f32 %v627, %v628
    %v630 = vrot.slane %v629, 7
    %v631 = vadd.f32 %v629, %v630
    %v632 = vmul.f32 %v460, %v565
    %v633 = vrot.slane %v632, 4
    %v634 = vadd.f32 %v632, %v633
    %v635 = vrot.slane %v634, 6
    %v636 = vadd.f32 %v634, %v635
    %v637 = vrot.slane %v636, 7
    %v638 = vadd.f32 %v636, %v637
    %v639 = vmax.f32 %v617, %v624
    %v640 = vmax.f32 %v639, %v631
    %v641 = vmax.f32 %v640, %v638
    %v642 = vsub.f32 %v617, %v641
    %v643 = vmul.f32 %v642, 1.442695
    %v644 = vpow.pop %v643
    %v645 = vsub.f32 %v624, %v641
    %v646 = vmul.f32 %v645, 1.442695
    %v647 = vpow.pop %v646
    %v648 = vsub.f32 %v631, %v641
    %v649 = vmul.f32 %v648, 1.442695
    %v650 = vpow.pop %v649
    %v651 = vsub.f32 %v638, %v641
    %v652 = vmul.f32 %v651, 1.442695
    %v653 = vpow.pop %v652
    %v654 = vadd.f32 %v644, %v647
    %v655 = vadd.f32 %v654, %v650
    %v656 = vadd.f32 %v655, %v653
    %v657 = vmul.f32 %v644, %v480
    %v658 = vmul.f32 %v647, %v482
    %v659 = vadd.f32 %v657, %v658
    %v660 = vmul.f32 %v650, %v573
    %v661 = vadd.f32 %v659, %v660
    %v662 = vmul.f32 %v653, %v575
    %v663 = vadd.f32 %v661, %v662
    %v664 = vrcp.pop %v656
    %v665 = vmul.f32 %v663, %v664
    %666 = vst [vmem:[#allocation2] sm:$0xff] %v665
    %v667 = vmul.f32 %v462, %v470
    %v668 = vrot.slane %v667, 4
    %v669 = vadd.f32 %v667, %v668
    %v670 = vrot.slane %v669, 6
    %v671 = vadd.f32 %v669, %v670
    %v672 = vrot.slane %v671, 7
    %v673 = vadd.f32 %v671, %v672
    %v674 = vmul.f32 %v462, %v472
    %v675 = vrot.slane %v674, 4
    %v676 = vadd.f32 %v674, %v675
    %v677 = vrot.slane %v676, 6
    %v678 = vadd.f32 %v676, %v677
    %v679 = vrot.slane %v678, 7
    %v680 = vadd.f32 %v678, %v679
    %v681 = vmul.f32 %v462, %v563
    %v682 = vrot.slane %v681, 4
    %v683 = vadd.f32 %v681, %v682
    %v684 = vrot.slane %v683, 6
    %v685 = vadd.f32 %v683, %v684
    %v686 = vrot.slane %v685, 7
    %v687 = vadd.f32 %v685, %v686
    %v688 = vmul.f32 %v462, %v565
    %v689 = vrot.slane %v688, 4
    %v690 = vadd.f32 %v688, %v689
    %v691 = vrot.slane %v690, 6
    %v692 = vadd.f32 %v690, %v691
    %v693 = vrot.slane %v692, 7
    %v694 = vadd.f32 %v692, %v693
    %v695 = vmax.f32 %v673, %v680
    %v696 = vmax.f32 %v695, %v687
    %v697 = vmax.f32 %v696, %v694
    %v698 = vsub.f32 %v673, %v697
    %v699 = vmul.f32 %v698, 1.442695
    %v700 = vpow.pop %v699
    %v701 = vsub.f32 %v680, %v697
    %v702 = vmul.f32 %v701, 1.442695
    %v703 = vpow.pop %v702
    %v704 = vsub.f32 %v687, %v697
    %v705 = vmul.f32 %v704, 1.442695
    %v706 = vpow.pop %v705
    %v707 = vsub.f32 %v694, %v697
    %v708 = vmul.f32 %v707, 1.442695
    %v709 = vpow.pop %v708
    %v710 = vadd.f32 %v700, %v703
    %v711 = vadd.f32 %v710, %v706
    %v712 = vadd.f32 %v711, %v709
    %v713 = vmul.f32 %v700, %v480
    %v714 = vmul.f32 %v703, %v482
    %v715 = vadd.f32 %v713, %v714
    %v716 = vmul.f32 %v706, %v573
    %v717 = vadd.f32 %v715, %v716
    %v718 = vmul.f32 %v709, %v575
    %v719 = vadd.f32 %v717, %v718
    %v720 = vrcp.pop %v712
    %v721 = vmul.f32 %v719, %v720
    %722 = vst [vmem:[#allocation2 + $0x8] sm:$0xff] %v721
    %v723 = vmul.f32 %v553, %v470
    %v724 = vrot.slane %v723, 4
    %v725 = vadd.f32 %v723, %v724
    %v726 = vrot.slane %v725, 6
    %v727 = vadd.f32 %v725, %v726
    %v728 = vrot.slane %v727, 7
    %v729 = vadd.f32 %v727, %v728
    %v730 = vmul.f32 %v553, %v472
    %v731 = vrot.slane %v730, 4
    %v732 = vadd.f32 %v730, %v731
    %v733 = vrot.slane %v732, 6
    %v734 = vadd.f32 %v732, %v733
    %v735 = vrot.slane %v734, 7
    %v736 = vadd.f32 %v734, %v735
    %v737 = vmul.f32 %v553, %v563
    %v738 = vrot.slane %v737, 4
    %v739 = vadd.f32 %v737, %v738
    %v740 = vrot.slane %v739, 6
    %v741 = vadd.f32 %v739, %v740
    %v742 = vrot.slane %v741, 7
    %v743 = vadd.f32 %v741, %v742
    %v744 = vmul.f32 %v553, %v565
    %v745 = vrot.slane %v744, 4
    %v746 = vadd.f32 %v744, %v745
    %v747 = vrot.slane %v746, 6
    %v748 = vadd.f32 %v746, %v747
    %v749 = vrot.slane %v748, 7
    %v750 = vadd.f32 %v748, %v749
    %v751 = vmax.f32 %v729, %v736
    %v752 = vmax.f32 %v751, %v743
    %v753 = vmax.f32 %v752, %v750
    %v754 = vsub.f32 %v729, %v753
    %v755 = vmul.f32 %v754, 1.442695
    %v756 = vpow.pop %v755
    %v757 = vsub.f32 %v736, %v753
    %v758 = vmul.f32 %v757, 1.442695
    %v759 = vpow.pop %v758
    %v760 = vsub.f32 %v743, %v753
    %v761 = vmul.f32 %v760, 1.442695
    %v762 = vpow.pop %v761
    %v763 = vsub.f32 %v750, %v753
    %v764 = vmul.f32 %v763, 1.442695
    %v765 = vpow.pop %v764
    %v766 = vadd.f32 %v756, %v759
    %v767 = vadd.f32 %v766, %v762
    %v768 = vadd.f32 %v767, %v765
    %v769 = vmul.f32 %v756, %v480
    %v770 = vmul.f32 %v759, %v482
    %v771 = vadd.f32 %v769, %v770
    %v772 = vmul.f32 %v762, %v573
    %v773 = vadd.f32 %v771, %v772
    %v774 = vmul.f32 %v765, %v575
    %v775 = vadd.f32 %v773, %v774
    %v776 = vrcp.pop %v768
    %v777 = vmul.f32 %v775, %v776
    %778 = vst [vmem:[#allocation2 + $0x10] sm:$0xff] %v777
    %v779 = vmul.f32 %v555, %v470
    %v780 = vrot.slane %v779, 4
    %v781 = vadd.f32 %v779, %v780
    %v782 = vrot.slane %v781, 6
    %v783 = vadd.f32 %v781, %v782
    %v784 = vrot.slane %v783, 7
    %v785 = vadd.f32 %v783, %v784
    %v786 = vmul.f32 %v555, %v472
    %v787 = vrot.slane %v786, 4
    %v788 = vadd.f32 %v786, %v787
    %v789 = vrot.slane %v788, 6
    %v790 = vadd.f32 %v788, %v789
    %v791 = vrot.slane %v790, 7
    %v792 = vadd.f32 %v790, %v791
    %v793 = vmul.f32 %v555, %v563
    %v794 = vrot.slane %v793, 4
    %v795 = vadd.f32 %v793, %v794
    %v796 = vrot.slane %v795, 6
    %v797 = vadd.f32 %v795, %v796
    %v798 = vrot.slane %v797, 7
    %v799 = vadd.f32 %v797, %v798
    %v800 = vmul.f32 %v555, %v565
    %v801 = vrot.slane %v800, 4
    %v802 = vadd.f32 %v800, %v801
    %v803 = vrot.slane %v802, 6
    %v804 = vadd.f32 %v802, %v803
    %v805 = vrot.slane %v804, 7
    %v806 = vadd.f32 %v804, %v805
    %v807 = vmax.f32 %v785, %v792
    %v808 = vmax.f32 %v807, %v799
    %v809 = vmax.f32 %v808, %v806
    %v810 = vsub.f32 %v785, %v809
    %v811 = vmul.f32 %v810, 1.442695
    %v812 = vpow.pop %v811
    %v813 = vsub.f32 %v792, %v809
    %v814 = vmul.f32 %v813, 1.442695
    %v815 = vpow.pop %v814
    %v816 = vsub.f32 %v799, %v809
    %v817 = vmul.f32 %v816, 1.442695
    %v818 = vpow.pop %v817
    %v819 = vsub.f32 %v806, %v809
    %v820 = vmul.f32 %v819, 1.442695
    %v821 = vpow.pop %v820
    %v822 = vadd.f32 %v812, %v815
    %v823 = vadd.f32 %v822, %v818
    %v824 = vadd.f32 %v823, %v821
    %v825 = vmul.f32 %v812, %v480
    %v826 = vmul.f32 %v815, %v482
    %v827 = vadd.f32 %v825, %v826
    %v828 = vmul.f32 %v818, %v573
    %v829 = vadd.f32 %v827, %v828
    %v830 = vmul.f32 %v821, %v575
    %v831 = vadd.f32 %v829, %v830
    %v832 = vrcp.pop %v824
    %v833 = vmul.f32 %v831, %v832
    %834 = vst [vmem:[#allocation2 + $0x18] sm:$0xff] %v833
    %v835 = vmul.f32 %v464, %v474
    %v836 = vrot.slane %v835, 4
    %v837 = vadd.f32 %v835, %v836
    %v838 = vrot.slane %v837, 6
    %v839 = vadd.f32 %v837, %v838
    %v840 = vrot.slane %v839, 7
    %v841 = vadd.f32 %v839, %v840
    %v842 = vmul.f32 %v464, %v476
    %v843 = vrot.slane %v842, 4
    %v844 = vadd.f32 %v842, %v843
    %v845 = vrot.slane %v844, 6
    %v846 = vadd.f32 %v844, %v845
    %v847 = vrot.slane %v846, 7
    %v848 = vadd.f32 %v846, %v847
    %v849 = vmul.f32 %v464, %v567
    %v850 = vrot.slane %v849, 4
    %v851 = vadd.f32 %v849, %v850
    %v852 = vrot.slane %v851, 6
    %v853 = vadd.f32 %v851, %v852
    %v854 = vrot.slane %v853, 7
    %v855 = vadd.f32 %v853, %v854
    %v856 = vmul.f32 %v464, %v569
    %v857 = vrot.slane %v856, 4
    %v858 = vadd.f32 %v856, %v857
    %v859 = vrot.slane %v858, 6
    %v860 = vadd.f32 %v858, %v859
    %v861 = vrot.slane %v860, 7
    %v862 = vadd.f32 %v860, %v861
    %v863 = vmax.f32 %v841, %v848
    %v864 = vmax.f32 %v863, %v855
    %v865 = vmax.f32 %v864, %v862
    %v866 = vsub.f32 %v841, %v865
    %v867 = vmul.f32 %v866, 1.442695
    %v868 = vpow.pop %v867
    %v869 = vsub.f32 %v848, %v865
    %v870 = vmul.f32 %v869, 1.442695
    %v871 = vpow.pop %v870
    %v872 = vsub.f32 %v855, %v865
    %v873 = vmul.f32 %v872, 1.442695
    %v874 = vpow.pop %v873
    %v875 = vsub.f32 %v862, %v865
    %v876 = vmul.f32 %v875, 1.442695
    %v877 = vpow.pop %v876
    %v878 = vadd.f32 %v868, %v871
    %v879 = vadd.f32 %v878, %v874
    %v880 = vadd.f32 %v879, %v877
    %v881 = vmul.f32 %v868, %v484
    %v882 = vmul.f32 %v871, %v486
    %v883 = vadd.f32 %v881, %v882
    %v884 = vmul.f32 %v874, %v577
    %v885 = vadd.f32 %v883, %v884
    %v886 = vmul.f32 %v877, %v579
    %v887 = vadd.f32 %v885, %v886
    %v888 = vrcp.pop %v880
    %v889 = vmul.f32 %v887, %v888
    %890 = vst [vmem:[#allocation2 + $0x20] sm:$0xff] %v889
    %v891 = vmul.f32 %v466, %v474
    %v892 = vrot.slane %v891, 4
    %v893 = vadd.f32 %v891, %v892
    %v894 = vrot.slane %v893, 6
    %v895 = vadd.f32 %v893, %v894
    %v896 = vrot.slane %v895, 7
    %v897 = vadd.f32 %v895, %v896
    %v898 = vmul.f32 %v466, %v476
    %v899 = vrot.slane %v898, 4
    %v900 = vadd.f32 %v898, %v899
    %v901 = vrot.slane %v900, 6
    %v902 = vadd.f32 %v900, %v901
    %v903 = vrot.slane %v902, 7
    %v904 = vadd.f32 %v902, %v903
    %v905 = vmul.f32 %v466, %v567
    %v906 = vrot.slane %v905, 4
    %v907 = vadd.f32 %v905, %v906
    %v908 = vrot.slane %v907, 6
    %v909 = vadd.f32 %v907, %v908
    %v910 = vrot.slane %v909, 7
    %v911 = vadd.f32 %v909, %v910
    %v912 = vmul.f32 %v466, %v569
    %v913 = vrot.slane %v912, 4
    %v914 = vadd.f32 %v912, %v913
    %v915 = vrot.slane %v914, 6
    %v916 = vadd.f32 %v914, %v915
    %v917 = vrot.slane %v916, 7
    %v918 = vadd.f32 %v916, %v917
    %v919 = vmax.f32 %v897, %v904
    %v920 = vmax.f32 %v919, %v911
    %v921 = vmax.f32 %v920, %v918
    %v922 = vsub.f32 %v897, %v921
    %v923 = vmul.f32 %v922, 1.442695
    %v924 = vpow.pop %v923
    %v925 = vsub.f32 %v904, %v921
    %v926 = vmul.f32 %v925, 1.442695
    %v927 = vpow.pop %v926
    %v928 = vsub.f32 %v911, %v921
    %v929 = vmul.f32 %v928, 1.442695
    %v930 = vpow.pop %v929
    %v931 = vsub.f32 %v918, %v921
    %v932 = vmul.f32 %v931, 1.442695
    %v933 = vpow.pop %v932
    %v934 = vadd.f32 %v924, %v927
    %v935 = vadd.f32 %v934, %v930
    %v936 = vadd.f32 %v935, %v933
    %v937 = vmul.f32 %v924, %v484
    %v938 = vmul.f32 %v927, %v486
    %v939 = vadd.f32 %v937, %v938
    %v940 = vmul.f32 %v930, %v577
    %v941 = vadd.f32 %v939, %v940
    %v942 = vmul.f32 %v933, %v579
    %v943 = vadd.f32 %v941, %v942
    %v944 = vrcp.pop %v936
    %v945 = vmul.f32 %v943, %v944
    %946 = vst [vmem:[#allocation2 + $0x28] sm:$0xff] %v945
    %v947 = vmul.f32 %v557, %v474
    %v948 = vrot.slane %v947, 4
    %v949 = vadd.f32 %v947, %v948
    %v950 = vrot.slane %v949, 6
    %v951 = vadd.f32 %v949, %v950
    %v952 = vrot.slane %v951, 7
    %v953 = vadd.f32 %v951, %v952
    %v954 = vmul.f32 %v557, %v476
    %v955 = vrot.slane %v954, 4
    %v956 = vadd.f32 %v954, %v955
    %v957 = vrot.slane %v956, 6
    %v958 = vadd.f32 %v956, %v957
    %v959 = vrot.slane %v958, 7
    %v960 = vadd.f32 %v958, %v959
    %v961 = vmul.f32 %v557, %v567
    %v962 = vrot.slane %v961, 4
    %v963 = vadd.f32 %v961, %v962
    %v964 = vrot.slane %v963, 6
    %v965 = vadd.f32 %v963, %v964
    %v966 = vrot.slane %v965, 7
    %v967 = vadd.f32 %v965, %v966
    %v968 = vmul.f32 %v557, %v569
    %v969 = vrot.slane %v968, 4
    %v970 = vadd.f32 %v968, %v969
    %v971 = vrot.slane %v970, 6
    %v972 = vadd.f32 %v970, %v971
    %v973 = vrot.slane %v972, 7
    %v974 = vadd.f32 %v972, %v973
    %v975 = vmax.f32 %v953, %v960
    %v976 = vmax.f32 %v975, %v967
    %v977 = vmax.f32 %v976, %v974
    %v978 = vsub.f32 %v953, %v977
    %v979 = vmul.f32 %v978, 1.442695
    %v980 = vpow.pop %v979
    %v981 = vsub.f32 %v960, %v977
    %v982 = vmul.f32 %v981, 1.442695
    %v983 = vpow.pop %v982
    %v984 = vsub.f32 %v967, %v977
    %v985 = vmul.f32 %v984, 1.442695
    %v986 = vpow.pop %v985
    %v987 = vsub.f32 %v974, %v977
    %v988 = vmul.f32 %v987, 1.442695
    %v989 = vpow.pop %v988
    %v990 = vadd.f32 %v980, %v983
    %v991 = vadd.f32 %v990, %v986
    %v992 = vadd.f32 %v991, %v989
    %v993 = vmul.f32 %v980, %v484
    %v994 = vmul.f32 %v983, %v486
    %v995 = vadd.f32 %v993, %v994
    %v996 = vmul.f32 %v986, %v577
    %v997 = vadd.f32 %v995, %v996
    %v998 = vmul.f32 %v989, %v579
    %v999 = vadd.f32 %v997, %v998
    %v1000 = vrcp.pop %v992
    %v1001 = vmul.f32 %v999, %v1000
    %1002 = vst [vmem:[#allocation2 + $0x30] sm:$0xff] %v1001
    %v1003 = vmul.f32 %v559, %v474
    %v1004 = vrot.slane %v1003, 4
    %v1005 = vadd.f32 %v1003, %v1004
    %v1006 = vrot.slane %v1005, 6
    %v1007 = vadd.f32 %v1005, %v1006
    %v1008 = vrot.slane %v1007, 7
    %v1009 = vadd.f32 %v1007, %v1008
    %v1010 = vmul.f32 %v559, %v476
    %v1011 = vrot.slane %v1010, 4
    %v1012 = vadd.f32 %v1010, %v1011
    %v1013 = vrot.slane %v1012, 6
    %v1014 = vadd.f32 %v1012, %v1013
    %v1015 = vrot.slane %v1014, 7
    %v1016 = vadd.f32 %v1014, %v1015
    %v1017 = vmul.f32 %v559, %v567
    %v1018 = vrot.slane %v1017, 4
    %v1019 = vadd.f32 %v1017, %v1018
    %v1020 = vrot.slane %v1019, 6
    %v1021 = vadd.f32 %v1019, %v1020
    %v1022 = vrot.slane %v1021, 7
    %v1023 = vadd.f32 %v1021, %v1022
    %v1024 = vmul.f32 %v559, %v569
    %v1025 = vrot.slane %v1024, 4
    %v1026 = vadd.f32 %v1024, %v1025
    %v1027 = vrot.slane %v1026, 6
    %v1028 = vadd.f32 %v1026, %v1027
    %v1029 = vrot.slane %v1028, 7
    %v1030 = vadd.f32 %v1028, %v1029
    %v1031 = vmax.f32 %v1009, %v1016
    %v1032 = vmax.f32 %v1031, %v1023
    %v1033 = vmax.f32 %v1032, %v1030
    %v1034 = vsub.f32 %v1009, %v1033
    %v1035 = vmul.f32 %v1034, 1.442695
    %v1036 = vpow.pop %v1035
    %v1037 = vsub.f32 %v1016, %v1033
    %v1038 = vmul.f32 %v1037, 1.442695
    %v1039 = vpow.pop %v1038
    %v1040 = vsub.f32 %v1023, %v1033
    %v1041 = vmul.f32 %v1040, 1.442695
    %v1042 = vpow.pop %v1041
    %v1043 = vsub.f32 %v1030, %v1033
    %v1044 = vmul.f32 %v1043, 1.442695
    %v1045 = vpow.pop %v1044
    %v1046 = vadd.f32 %v1036, %v1039
    %v1047 = vadd.f32 %v1046, %v1042
    %v1048 = vadd.f32 %v1047, %v1045
    %v1049 = vmul.f32 %v1036, %v484
    %v1050 = vmul.f32 %v1039, %v486
    %v1051 = vadd.f32 %v1049, %v1050
    %v1052 = vmul.f32 %v1042, %v577
    %v1053 = vadd.f32 %v1051, %v1052
    %v1054 = vmul.f32 %v1045, %v579
    %v1055 = vadd.f32 %v1053, %v1054
    %v1056 = vrcp.pop %v1048
    %v1057 = vmul.f32 %v1055, %v1056
    %1058 = vst [vmem:[#allocation2 + $0x38] sm:$0xff] %v1057
    %v1059 = vmul.f32 %v490, %v500
    %v1060 = vrot.slane %v1059, 4
    %v1061 = vadd.f32 %v1059, %v1060
    %v1062 = vrot.slane %v1061, 6
    %v1063 = vadd.f32 %v1061, %v1062
    %v1064 = vrot.slane %v1063, 7
    %v1065 = vadd.f32 %v1063, %v1064
    %v1066 = vmul.f32 %v490, %v502
    %v1067 = vrot.slane %v1066, 4
    %v1068 = vadd.f32 %v1066, %v1067
    %v1069 = vrot.slane %v1068, 6
    %v1070 = vadd.f32 %v1068, %v1069
    %v1071 = vrot.slane %v1070, 7
    %v1072 = vadd.f32 %v1070, %v1071
    %v1073 = vmul.f32 %v490, %v593
    %v1074 = vrot.slane %v1073, 4
    %v1075 = vadd.f32 %v1073, %v1074
    %v1076 = vrot.slane %v1075, 6
    %v1077 = vadd.f32 %v1075, %v1076
    %v1078 = vrot.slane %v1077, 7
    %v1079 = vadd.f32 %v1077, %v1078
    %v1080 = vmul.f32 %v490, %v595
    %v1081 = vrot.slane %v1080, 4
    %v1082 = vadd.f32 %v1080, %v1081
    %v1083 = vrot.slane %v1082, 6
    %v1084 = vadd.f32 %v1082, %v1083
    %v1085 = vrot.slane %v1084, 7
    %v1086 = vadd.f32 %v1084, %v1085
    %v1087 = vmax.f32 %v1065, %v1072
    %v1088 = vmax.f32 %v1087, %v1079
    %v1089 = vmax.f32 %v1088, %v1086
    %v1090 = vsub.f32 %v1065, %v1089
    %v1091 = vmul.f32 %v1090, 1.442695
    %v1092 = vpow.pop %v1091
    %v1093 = vsub.f32 %v1072, %v1089
    %v1094 = vmul.f32 %v1093, 1.442695
    %v1095 = vpow.pop %v1094
    %v1096 = vsub.f32 %v1079, %v1089
    %v1097 = vmul.f32 %v1096, 1.442695
    %v1098 = vpow.pop %v1097
    %v1099 = vsub.f32 %v1086, %v1089
    %v1100 = vmul.f32 %v1099, 1.442695
    %v1101 = vpow.pop %v1100
    %v1102 = vadd.f32 %v1092, %v1095
    %v1103 = vadd.f32 %v1102, %v1098
    %v1104 = vadd.f32 %v1103, %v1101
    %v1105 = vmul.f32 %v1092, %v510
    %v1106 = vmul.f32 %v1095, %v512
    %v1107 = vadd.f32 %v1105, %v1106
    %v1108 = vmul.f32 %v1098, %v603
    %v1109 = vadd.f32 %v1107, %v1108
    %v1110 = vmul.f32 %v1101, %v605
    %v1111 = vadd.f32 %v1109, %v1110
    %v1112 = vrcp.pop %v1104
    %v1113 = vmul.f32 %v1111, %v1112
    %1114 = vst [vmem:[#allocation2 + $0x40] sm:$0xff] %v1113
    %v1115 = vmul.f32 %v492, %v500
    %v1116 = vrot.slane %v1115, 4
    %v1117 = vadd.f32 %v1115, %v1116
    %v1118 = vrot.slane %v1117, 6
    %v1119 = vadd.f32 %v1117, %v1118
    %v1120 = vrot.slane %v1119, 7
    %v1121 = vadd.f32 %v1119, %v1120
    %v1122 = vmul.f32 %v492, %v502
    %v1123 = vrot.slane %v1122, 4
    %v1124 = vadd.f32 %v1122, %v1123
    %v1125 = vrot.slane %v1124, 6
    %v1126 = vadd.f32 %v1124, %v1125
    %v1127 = vrot.slane %v1126, 7
    %v1128 = vadd.f32 %v1126, %v1127
    %v1129 = vmul.f32 %v492, %v593
    %v1130 = vrot.slane %v1129, 4
    %v1131 = vadd.f32 %v1129, %v1130
    %v1132 = vrot.slane %v1131, 6
    %v1133 = vadd.f32 %v1131, %v1132
    %v1134 = vrot.slane %v1133, 7
    %v1135 = vadd.f32 %v1133, %v1134
    %v1136 = vmul.f32 %v492, %v595
    %v1137 = vrot.slane %v1136, 4
    %v1138 = vadd.f32 %v1136, %v1137
    %v1139 = vrot.slane %v1138, 6
    %v1140 = vadd.f32 %v1138, %v1139
    %v1141 = vrot.slane %v1140, 7
    %v1142 = vadd.f32 %v1140, %v1141
    %v1143 = vmax.f32 %v1121, %v1128
    %v1144 = vmax.f32 %v1143, %v1135
    %v1145 = vmax.f32 %v1144, %v1142
    %v1146 = vsub.f32 %v1121, %v1145
    %v1147 = vmul.f32 %v1146, 1.442695
    %v1148 = vpow.pop %v1147
    %v1149 = vsub.f32 %v1128, %v1145
    %v1150 = vmul.f32 %v1149, 1.442695
    %v1151 = vpow.pop %v1150
    %v1152 = vsub.f32 %v1135, %v1145
    %v1153 = vmul.f32 %v1152, 1.442695
    %v1154 = vpow.pop %v1153
    %v1155 = vsub.f32 %v1142, %v1145
    %v1156 = vmul.f32 %v1155, 1.442695
    %v1157 = vpow.pop %v1156
    %v1158 = vadd.f32 %v1148, %v1151
    %v1159 = vadd.f32 %v1158, %v1154
    %v1160 = vadd.f32 %v1159, %v1157
    %v1161 = vmul.f32 %v1148, %v510
    %v1162 = vmul.f32 %v1151, %v512
    %v1163 = vadd.f32 %v1161, %v1162
    %v1164 = vmul.f32 %v1154, %v603
    %v1165 = vadd.f32 %v1163, %v1164
    %v1166 = vmul.f32 %v1157, %v605
    %v1167 = vadd.f32 %v1165, %v1166
    %v1168 = vrcp.pop %v1160
    %v1169 = vmul.f32 %v1167, %v1168
    %1170 = vst [vmem:[#allocation2 + $0x48] sm:$0xff] %v1169
    %v1171 = vmul.f32 %v583, %v500
    %v1172 = vrot.slane %v1171, 4
    %v1173 = vadd.f32 %v1171, %v1172
    %v1174 = vrot.slane %v1173, 6
    %v1175 = vadd.f32 %v1173, %v1174
    %v1176 = vrot.slane %v1175, 7
    %v1177 = vadd.f32 %v1175, %v1176
    %v1178 = vmul.f32 %v583, %v502
    %v1179 = vrot.slane %v1178, 4
    %v1180 = vadd.f32 %v1178, %v1179
    %v1181 = vrot.slane %v1180, 6
    %v1182 = vadd.f32 %v1180, %v1181
    %v1183 = vrot.slane %v1182, 7
    %v1184 = vadd.f32 %v1182, %v1183
    %v1185 = vmul.f32 %v583, %v593
    %v1186 = vrot.slane %v1185, 4
    %v1187 = vadd.f32 %v1185, %v1186
    %v1188 = vrot.slane %v1187, 6
    %v1189 = vadd.f32 %v1187, %v1188
    %v1190 = vrot.slane %v1189, 7
    %v1191 = vadd.f32 %v1189, %v1190
    %v1192 = vmul.f32 %v583, %v595
    %v1193 = vrot.slane %v1192, 4
    %v1194 = vadd.f32 %v1192, %v1193
    %v1195 = vrot.slane %v1194, 6
    %v1196 = vadd.f32 %v1194, %v1195
    %v1197 = vrot.slane %v1196, 7
    %v1198 = vadd.f32 %v1196, %v1197
    %v1199 = vmax.f32 %v1177, %v1184
    %v1200 = vmax.f32 %v1199, %v1191
    %v1201 = vmax.f32 %v1200, %v1198
    %v1202 = vsub.f32 %v1177, %v1201
    %v1203 = vmul.f32 %v1202, 1.442695
    %v1204 = vpow.pop %v1203
    %v1205 = vsub.f32 %v1184, %v1201
    %v1206 = vmul.f32 %v1205, 1.442695
    %v1207 = vpow.pop %v1206
    %v1208 = vsub.f32 %v1191, %v1201
    %v1209 = vmul.f32 %v1208, 1.442695
    %v1210 = vpow.pop %v1209
    %v1211 = vsub.f32 %v1198, %v1201
    %v1212 = vmul.f32 %v1211, 1.442695
    %v1213 = vpow.pop %v1212
    %v1214 = vadd.f32 %v1204, %v1207
    %v1215 = vadd.f32 %v1214, %v1210
    %v1216 = vadd.f32 %v1215, %v1213
    %v1217 = vmul.f32 %v1204, %v510
    %v1218 = vmul.f32 %v1207, %v512
    %v1219 = vadd.f32 %v1217, %v1218
    %v1220 = vmul.f32 %v1210, %v603
    %v1221 = vadd.f32 %v1219, %v1220
    %v1222 = vmul.f32 %v1213, %v605
    %v1223 = vadd.f32 %v1221, %v1222
    %v1224 = vrcp.pop %v1216
    %v1225 = vmul.f32 %v1223, %v1224
    %1226 = vst [vmem:[#allocation2 + $0x50] sm:$0xff] %v1225
    %v1227 = vmul.f32 %v585, %v500
    %v1228 = vrot.slane %v1227, 4
    %v1229 = vadd.f32 %v1227, %v1228
    %v1230 = vrot.slane %v1229, 6
    %v1231 = vadd.f32 %v1229, %v1230
    %v1232 = vrot.slane %v1231, 7
    %v1233 = vadd.f32 %v1231, %v1232
    %v1234 = vmul.f32 %v585, %v502
    %v1235 = vrot.slane %v1234, 4
    %v1236 = vadd.f32 %v1234, %v1235
    %v1237 = vrot.slane %v1236, 6
    %v1238 = vadd.f32 %v1236, %v1237
    %v1239 = vrot.slane %v1238, 7
    %v1240 = vadd.f32 %v1238, %v1239
    %v1241 = vmul.f32 %v585, %v593
    %v1242 = vrot.slane %v1241, 4
    %v1243 = vadd.f32 %v1241, %v1242
    %v1244 = vrot.slane %v1243, 6
    %v1245 = vadd.f32 %v1243, %v1244
    %v1246 = vrot.slane %v1245, 7
    %v1247 = vadd.f32 %v1245, %v1246
    %v1248 = vmul.f32 %v585, %v595
    %v1249 = vrot.slane %v1248, 4
    %v1250 = vadd.f32 %v1248, %v1249
    %v1251 = vrot.slane %v1250, 6
    %v1252 = vadd.f32 %v1250, %v1251
    %v1253 = vrot.slane %v1252, 7
    %v1254 = vadd.f32 %v1252, %v1253
    %v1255 = vmax.f32 %v1233, %v1240
    %v1256 = vmax.f32 %v1255, %v1247
    %v1257 = vmax.f32 %v1256, %v1254
    %v1258 = vsub.f32 %v1233, %v1257
    %v1259 = vmul.f32 %v1258, 1.442695
    %v1260 = vpow.pop %v1259
    %v1261 = vsub.f32 %v1240, %v1257
    %v1262 = vmul.f32 %v1261, 1.442695
    %v1263 = vpow.pop %v1262
    %v1264 = vsub.f32 %v1247, %v1257
    %v1265 = vmul.f32 %v1264, 1.442695
    %v1266 = vpow.pop %v1265
    %v1267 = vsub.f32 %v1254, %v1257
    %v1268 = vmul.f32 %v1267, 1.442695
    %v1269 = vpow.pop %v1268
    %v1270 = vadd.f32 %v1260, %v1263
    %v1271 = vadd.f32 %v1270, %v1266
    %v1272 = vadd.f32 %v1271, %v1269
    %v1273 = vmul.f32 %v1260, %v510
    %v1274 = vmul.f32 %v1263, %v512
    %v1275 = vadd.f32 %v1273, %v1274
    %v1276 = vmul.f32 %v1266, %v603
    %v1277 = vadd.f32 %v1275, %v1276
    %v1278 = vmul.f32 %v1269, %v605
    %v1279 = vadd.f32 %v1277, %v1278
    %v1280 = vrcp.pop %v1272
    %v1281 = vmul.f32 %v1279, %v1280
    %1282 = vst [vmem:[#allocation2 + $0x58] sm:$0xff] %v1281
    %v1283 = vmul.f32 %v494, %v504
    %v1284 = vrot.slane %v1283, 4
    %v1285 = vadd.f32 %v1283, %v1284
    %v1286 = vrot.slane %v1285, 6
    %v1287 = vadd.f32 %v1285, %v1286
    %v1288 = vrot.slane %v1287, 7
    %v1289 = vadd.f32 %v1287, %v1288
    %v1290 = vmul.f32 %v494, %v506
    %v1291 = vrot.slane %v1290, 4
    %v1292 = vadd.f32 %v1290, %v1291
    %v1293 = vrot.slane %v1292, 6
    %v1294 = vadd.f32 %v1292, %v1293
    %v1295 = vrot.slane %v1294, 7
    %v1296 = vadd.f32 %v1294, %v1295
    %v1297 = vmul.f32 %v494, %v597
    %v1298 = vrot.slane %v1297, 4
    %v1299 = vadd.f32 %v1297, %v1298
    %v1300 = vrot.slane %v1299, 6
    %v1301 = vadd.f32 %v1299, %v1300
    %v1302 = vrot.slane %v1301, 7
    %v1303 = vadd.f32 %v1301, %v1302
    %v1304 = vmul.f32 %v494, %v599
    %v1305 = vrot.slane %v1304, 4
    %v1306 = vadd.f32 %v1304, %v1305
    %v1307 = vrot.slane %v1306, 6
    %v1308 = vadd.f32 %v1306, %v1307
    %v1309 = vrot.slane %v1308, 7
    %v1310 = vadd.f32 %v1308, %v1309
    %v1311 = vmax.f32 %v1289, %v1296
    %v1312 = vmax.f32 %v1311, %v1303
    %v1313 = vmax.f32 %v1312, %v1310
    %v1314 = vsub.f32 %v1289, %v1313
    %v1315 = vmul.f32 %v1314, 1.442695
    %v1316 = vpow.pop %v1315
    %v1317 = vsub.f32 %v1296, %v1313
    %v1318 = vmul.f32 %v1317, 1.442695
    %v1319 = vpow.pop %v1318
    %v1320 = vsub.f32 %v1303, %v1313
    %v1321 = vmul.f32 %v1320, 1.442695
    %v1322 = vpow.pop %v1321
    %v1323 = vsub.f32 %v1310, %v1313
    %v1324 = vmul.f32 %v1323, 1.442695
    %v1325 = vpow.pop %v1324
    %v1326 = vadd.f32 %v1316, %v1319
    %v1327 = vadd.f32 %v1326, %v1322
    %v1328 = vadd.f32 %v1327, %v1325
    %v1329 = vmul.f32 %v1316, %v514
    %v1330 = vmul.f32 %v1319, %v516
    %v1331 = vadd.f32 %v1329, %v1330
    %v1332 = vmul.f32 %v1322, %v607
    %v1333 = vadd.f32 %v1331, %v1332
    %v1334 = vmul.f32 %v1325, %v609
    %v1335 = vadd.f32 %v1333, %v1334
    %v1336 = vrcp.pop %v1328
    %v1337 = vmul.f32 %v1335, %v1336
    %1338 = vst [vmem:[#allocation2 + $0x60] sm:$0xff] %v1337
    %v1339 = vmul.f32 %v496, %v504
    %v1340 = vrot.slane %v1339, 4
    %v1341 = vadd.f32 %v1339, %v1340
    %v1342 = vrot.slane %v1341, 6
    %v1343 = vadd.f32 %v1341, %v1342
    %v1344 = vrot.slane %v1343, 7
    %v1345 = vadd.f32 %v1343, %v1344
    %v1346 = vmul.f32 %v496, %v506
    %v1347 = vrot.slane %v1346, 4
    %v1348 = vadd.f32 %v1346, %v1347
    %v1349 = vrot.slane %v1348, 6
    %v1350 = vadd.f32 %v1348, %v1349
    %v1351 = vrot.slane %v1350, 7
    %v1352 = vadd.f32 %v1350, %v1351
    %v1353 = vmul.f32 %v496, %v597
    %v1354 = vrot.slane %v1353, 4
    %v1355 = vadd.f32 %v1353, %v1354
    %v1356 = vrot.slane %v1355, 6
    %v1357 = vadd.f32 %v1355, %v1356
    %v1358 = vrot.slane %v1357, 7
    %v1359 = vadd.f32 %v1357, %v1358
    %v1360 = vmul.f32 %v496, %v599
    %v1361 = vrot.slane %v1360, 4
    %v1362 = vadd.f32 %v1360, %v1361
    %v1363 = vrot.slane %v1362, 6
    %v1364 = vadd.f32 %v1362, %v1363
    %v1365 = vrot.slane %v1364, 7
    %v1366 = vadd.f32 %v1364, %v1365
    %v1367 = vmax.f32 %v1345, %v1352
    %v1368 = vmax.f32 %v1367, %v1359
    %v1369 = vmax.f32 %v1368, %v1366
    %v1370 = vsub.f32 %v1345, %v1369
    %v1371 = vmul.f32 %v1370, 1.442695
    %v1372 = vpow.pop %v1371
    %v1373 = vsub.f32 %v1352, %v1369
    %v1374 = vmul.f32 %v1373, 1.442695
    %v1375 = vpow.pop %v1374
    %v1376 = vsub.f32 %v1359, %v1369
    %v1377 = vmul.f32 %v1376, 1.442695
    %v1378 = vpow.pop %v1377
    %v1379 = vsub.f32 %v1366, %v1369
    %v1380 = vmul.f32 %v1379, 1.442695
    %v1381 = vpow.pop %v1380
    %v1382 = vadd.f32 %v1372, %v1375
    %v1383 = vadd.f32 %v1382, %v1378
    %v1384 = vadd.f32 %v1383, %v1381
    %v1385 = vmul.f32 %v1372, %v514
    %v1386 = vmul.f32 %v1375, %v516
    %v1387 = vadd.f32 %v1385, %v1386
    %v1388 = vmul.f32 %v1378, %v607
    %v1389 = vadd.f32 %v1387, %v1388
    %v1390 = vmul.f32 %v1381, %v609
    %v1391 = vadd.f32 %v1389, %v1390
    %v1392 = vrcp.pop %v1384
    %v1393 = vmul.f32 %v1391, %v1392
    %1394 = vst [vmem:[#allocation2 + $0x68] sm:$0xff] %v1393
    %v1395 = vmul.f32 %v587, %v504
    %v1396 = vrot.slane %v1395, 4
    %v1397 = vadd.f32 %v1395, %v1396
    %v1398 = vrot.slane %v1397, 6
    %v1399 = vadd.f32 %v1397, %v1398
    %v1400 = vrot.slane %v1399, 7
    %v1401 = vadd.f32 %v1399, %v1400
    %v1402 = vmul.f32 %v587, %v506
    %v1403 = vrot.slane %v1402, 4
    %v1404 = vadd.f32 %v1402, %v1403
    %v1405 = vrot.slane %v1404, 6
    %v1406 = vadd.f32 %v1404, %v1405
    %v1407 = vrot.slane %v1406, 7
    %v1408 = vadd.f32 %v1406, %v1407
    %v1409 = vmul.f32 %v587, %v597
    %v1410 = vrot.slane %v1409, 4
    %v1411 = vadd.f32 %v1409, %v1410
    %v1412 = vrot.slane %v1411, 6
    %v1413 = vadd.f32 %v1411, %v1412
    %v1414 = vrot.slane %v1413, 7
    %v1415 = vadd.f32 %v1413, %v1414
    %v1416 = vmul.f32 %v587, %v599
    %v1417 = vrot.slane %v1416, 4
    %v1418 = vadd.f32 %v1416, %v1417
    %v1419 = vrot.slane %v1418, 6
    %v1420 = vadd.f32 %v1418, %v1419
    %v1421 = vrot.slane %v1420, 7
    %v1422 = vadd.f32 %v1420, %v1421
    %v1423 = vmax.f32 %v1401, %v1408
    %v1424 = vmax.f32 %v1423, %v1415
    %v1425 = vmax.f32 %v1424, %v1422
    %v1426 = vsub.f32 %v1401, %v1425
    %v1427 = vmul.f32 %v1426, 1.442695
    %v1428 = vpow.pop %v1427
    %v1429 = vsub.f32 %v1408, %v1425
    %v1430 = vmul.f32 %v1429, 1.442695
    %v1431 = vpow.pop %v1430
    %v1432 = vsub.f32 %v1415, %v1425
    %v1433 = vmul.f32 %v1432, 1.442695
    %v1434 = vpow.pop %v1433
    %v1435 = vsub.f32 %v1422, %v1425
    %v1436 = vmul.f32 %v1435, 1.442695
    %v1437 = vpow.pop %v1436
    %v1438 = vadd.f32 %v1428, %v1431
    %v1439 = vadd.f32 %v1438, %v1434
    %v1440 = vadd.f32 %v1439, %v1437
    %v1441 = vmul.f32 %v1428, %v514
    %v1442 = vmul.f32 %v1431, %v516
    %v1443 = vadd.f32 %v1441, %v1442
    %v1444 = vmul.f32 %v1434, %v607
    %v1445 = vadd.f32 %v1443, %v1444
    %v1446 = vmul.f32 %v1437, %v609
    %v1447 = vadd.f32 %v1445, %v1446
    %v1448 = vrcp.pop %v1440
    %v1449 = vmul.f32 %v1447, %v1448
    %1450 = vst [vmem:[#allocation2 + $0x70] sm:$0xff] %v1449
    %v1451 = vmul.f32 %v589, %v504
    %v1452 = vrot.slane %v1451, 4
    %v1453 = vadd.f32 %v1451, %v1452
    %v1454 = vrot.slane %v1453, 6
    %v1455 = vadd.f32 %v1453, %v1454
    %v1456 = vrot.slane %v1455, 7
    %v1457 = vadd.f32 %v1455, %v1456
    %v1458 = vmul.f32 %v589, %v506
    %v1459 = vrot.slane %v1458, 4
    %v1460 = vadd.f32 %v1458, %v1459
    %v1461 = vrot.slane %v1460, 6
    %v1462 = vadd.f32 %v1460, %v1461
    %v1463 = vrot.slane %v1462, 7
    %v1464 = vadd.f32 %v1462, %v1463
    %v1465 = vmul.f32 %v589, %v597
    %v1466 = vrot.slane %v1465, 4
    %v1467 = vadd.f32 %v1465, %v1466
    %v1468 = vrot.slane %v1467, 6
    %v1469 = vadd.f32 %v1467, %v1468
    %v1470 = vrot.slane %v1469, 7
    %v1471 = vadd.f32 %v1469, %v1470
    %v1472 = vmul.f32 %v589, %v599
    %v1473 = vrot.slane %v1472, 4
    %v1474 = vadd.f32 %v1472, %v1473
    %v1475 = vrot.slane %v1474, 6
    %v1476 = vadd.f32 %v1474, %v1475
    %v1477 = vrot.slane %v1476, 7
    %v1478 = vadd.f32 %v1476, %v1477
    %v1479 = vmax.f32 %v1457, %v1464
    %v1480 = vmax.f32 %v1479, %v1471
    %v1481 = vmax.f32 %v1480, %v1478
    %v1482 = vsub.f32 %v1457, %v1481
    %v1483 = vmul.f32 %v1482, 1.442695
    %v1484 = vpow.pop %v1483
    %v1485 = vsub.f32 %v1464, %v1481
    %v1486 = vmul.f32 %v1485, 1.442695
    %v1487 = vpow.pop %v1486
    %v1488 = vsub.f32 %v1471, %v1481
    %v1489 = vmul.f32 %v1488, 1.442695
    %v1490 = vpow.pop %v1489
    %v1491 = vsub.f32 %v1478, %v1481
    %v1492 = vmul.f32 %v1491, 1.442695
    %v1493 = vpow.pop %v1492
    %v1494 = vadd.f32 %v1484, %v1487
    %v1495 = vadd.f32 %v1494, %v1490
    %v1496 = vadd.f32 %v1495, %v1493
    %v1497 = vmul.f32 %v1484, %v514
    %v1498 = vmul.f32 %v1487, %v516
    %v1499 = vadd.f32 %v1497, %v1498
    %v1500 = vmul.f32 %v1490, %v607
    %v1501 = vadd.f32 %v1499, %v1500
    %v1502 = vmul.f32 %v1493, %v609
    %v1503 = vadd.f32 %v1501, %v1502
    %v1504 = vrcp.pop %v1496
    %v1505 = vmul.f32 %v1503, %v1504
    %1506 = vst [vmem:[#allocation2 + $0x78] sm:$0xff] %v1505
    %v1507 = vld [vmem:[#allocation2] sm:$0xff]
    %v1508 = vld [vmem:[#allocation2 + $0x8] sm:$0xff]
    %v1509 = vld [vmem:[#allocation2 + $0x10] sm:$0xff]
    %v1510 = vld [vmem:[#allocation2 + $0x18] sm:$0xff]
    %v1511 = vld [vmem:[#allocation2 + $0x20] sm:$0xff]
    %v1512 = vld [vmem:[#allocation2 + $0x28] sm:$0xff]
    %v1513 = vld [vmem:[#allocation2 + $0x30] sm:$0xff]
    %v1514 = vld [vmem:[#allocation2 + $0x38] sm:$0xff]
    %v1515 = vld [vmem:[#allocation2 + $0x40] sm:$0xff]
    %v1516 = vld [vmem:[#allocation2 + $0x48] sm:$0xff]
    %v1517 = vld [vmem:[#allocation2 + $0x50] sm:$0xff]
    %v1518 = vld [vmem:[#allocation2 + $0x58] sm:$0xff]
    %v1519 = vld [vmem:[#allocation2 + $0x60] sm:$0xff]
    %v1520 = vld [vmem:[#allocation2 + $0x68] sm:$0xff]
    %v1521 = vld [vmem:[#allocation2 + $0x70] sm:$0xff]
    %v1522 = vld [vmem:[#allocation2 + $0x78] sm:$0xff]
    %v1523 = vpack.c.bf16 %v1511, %v1507
    %v1524 = vpack.c.bf16 %v1512, %v1508
    %v1525 = vpack.c.bf16 %v1513, %v1509
    %v1526 = vpack.c.bf16 %v1514, %v1510
    %v1527 = vpack.c.bf16 %v1519, %v1515
    %v1528 = vpack.c.bf16 %v1520, %v1516
    %v1529 = vpack.c.bf16 %v1521, %v1517
    %v1530 = vpack.c.bf16 %v1522, %v1518
    %1532 = vset.pattern.permute.xlu0 0
    %1533 = vperm.xlu0 %1532, %v127
    %v1534 = vpop.permute.xlu0 %1533
    %1537 = vset.pattern.permute.xlu0 0
    %1538 = vperm.xlu0 %1537, %v128
    %v1539 = vpop.permute.xlu0 %1538
    %v1543 = vunpack.c.l.b16 %v125
    %v1544 = vunpack.c.l.b16 %v126
    %v1545 = vpack.c.b16 %v1544, %v1543
    %vm1546 = vcmask 261120
    %v1548 = vsel %vm1546, %v1545, 0
    %1550 = vmatprep.subr.bf16.mxu0 0
    %1551 = vmatpush1.bf16.msra.mxu0 0
    %1552 = vmatprep.subr.bf16.mxu0 0
    %1553 = vmatpush1.bf16.msra.mxu0 0
    %1554 = vmatprep.subr.bf16.mxu0 0
    %1555 = vmatpush1.bf16.msra.mxu0 0
    %1556 = vmatprep.subr.bf16.mxu0 0
    %1557 = vmatpush1.bf16.msra.mxu0 0
    %1558 = vmatprep.subr.bf16.mxu0 0
    %1559 = vmatpush1.bf16.msra.mxu0 0
    %1560 = vmatprep.subr.bf16.mxu0 0
    %1561 = vmatpush1.bf16.msra.mxu0 0
    %1562 = vmatprep.subr.bf16.mxu0 %v1528
    %1563 = vmatpush1.bf16.msra.mxu0 %v1527
    %1564 = vmatprep.subr.bf16.mxu0 %v1524
    %1565 = vmatpush1.bf16.msra.mxu0 %v1523
    %1566 = vmatprep.subr.bf16.mxu0 0
    %1567 = vmatpush2.bf16.msra.mxu0 0
    %1568 = vmatprep.subr.bf16.mxu0 0
    %1569 = vmatpush2.bf16.msra.mxu0 0
    %1570 = vmatprep.subr.bf16.mxu0 0
    %1571 = vmatpush2.bf16.msra.mxu0 0
    %1572 = vmatprep.subr.bf16.mxu0 0
    %1573 = vmatpush2.bf16.msra.mxu0 0
    %1574 = vmatprep.subr.bf16.mxu0 0
    %1575 = vmatpush2.bf16.msra.mxu0 0
    %1576 = vmatprep.subr.bf16.mxu0 0
    %1577 = vmatpush2.bf16.msra.mxu0 0
    %1578 = vmatprep.subr.bf16.mxu0 0
    %1579 = vmatpush2.bf16.msra.mxu0 0
    %1580 = vmatprep.subr.bf16.mxu0 0
    %1581 = vmatpush2.bf16.msra.mxu0 0
    %1582 = vmatprep.mubr.bf16.mxu0 0
    %1583 = vmatmul.mubr.bf16.gmra.mxu0 %v1548
    %v1584 = vpop.f32.mrf.mxu0
    %v1585 = vadd.f32 %v1534, %v1584
    %v1586 = vpop.f32.mrf.mxu0
    %v1587 = vadd.f32 %v1534, %v1586
    %v1588 = vpop.f32.mrf.mxu0
    %v1589 = vadd.f32 %v1539, %v1588
    %v1590 = vpop.f32.mrf.mxu0
    %v1591 = vadd.f32 %v1539, %v1590
    %1592 = vdwg.mxu0
    %1593 = vmatprep.subr.bf16.mxu0 0
    %1594 = vmatpush1.bf16.msra.mxu0 0
    %1595 = vmatprep.subr.bf16.mxu0 0
    %1596 = vmatpush1.bf16.msra.mxu0 0
    %1597 = vmatprep.subr.bf16.mxu0 0
    %1598 = vmatpush1.bf16.msra.mxu0 0
    %1599 = vmatprep.subr.bf16.mxu0 0
    %1600 = vmatpush1.bf16.msra.mxu0 0
    %1601 = vmatprep.subr.bf16.mxu0 0
    %1602 = vmatpush1.bf16.msra.mxu0 0
    %1603 = vmatprep.subr.bf16.mxu0 0
    %1604 = vmatpush1.bf16.msra.mxu0 0
    %1605 = vmatprep.subr.bf16.mxu0 %v1530
    %1606 = vmatpush1.bf16.msra.mxu0 %v1529
    %1607 = vmatprep.subr.bf16.mxu0 %v1526
    %1608 = vmatpush1.bf16.msra.mxu0 %v1525
    %1609 = vmatprep.subr.bf16.mxu0 0
    %1610 = vmatpush2.bf16.msra.mxu0 0
    %1611 = vmatprep.subr.bf16.mxu0 0
    %1612 = vmatpush2.bf16.msra.mxu0 0
    %1613 = vmatprep.subr.bf16.mxu0 0
    %1614 = vmatpush2.bf16.msra.mxu0 0
    %1615 = vmatprep.subr.bf16.mxu0 0
    %1616 = vmatpush2.bf16.msra.mxu0 0
    %1617 = vmatprep.subr.bf16.mxu0 0
    %1618 = vmatpush2.bf16.msra.mxu0 0
    %1619 = vmatprep.subr.bf16.mxu0 0
    %1620 = vmatpush2.bf16.msra.mxu0 0
    %1621 = vmatprep.subr.bf16.mxu0 0
    %1622 = vmatpush2.bf16.msra.mxu0 0
    %1623 = vmatprep.subr.bf16.mxu0 0
    %1624 = vmatpush2.bf16.msra.mxu0 0
    %1625 = vmatprep.mubr.bf16.mxu0 0
    %1626 = vmatmul.mubr.bf16.gmra.mxu0 %v1548
    %v1627 = vpop.f32.mrf.mxu0
    %v1628 = vadd.f32 %v1534, %v1627
    %v1629 = vpop.f32.mrf.mxu0
    %v1630 = vadd.f32 %v1534, %v1629
    %v1631 = vpop.f32.mrf.mxu0
    %v1632 = vadd.f32 %v1539, %v1631
    %v1633 = vpop.f32.mrf.mxu0
    %v1634 = vadd.f32 %v1539, %v1633
    %1635 = vdwg.mxu0
    %v1636 = vadd.f32 %v304, %v1585
    %v1637 = vadd.f32 %v305, %v1587
    %v1638 = vadd.f32 %v306, %v1628
    %v1639 = vadd.f32 %v307, %v1630
    %v1640 = vadd.f32 %v308, %v1589
    %v1641 = vadd.f32 %v309, %v1591
    %v1642 = vadd.f32 %v310, %v1632
    %v1643 = vadd.f32 %v311, %v1634
    %v1644 = vadd.f32 %v1636, %v1640
    %v1645 = vrot.slane %v1644, 4
    %v1646 = vadd.f32 %v1644, %v1645
    %v1647 = vrot.slane %v1646, 2
    %v1648 = vadd.f32 %v1646, %v1647
    %v1649 = vrot.slane %v1648, 1
    %v1650 = vadd.f32 %v1648, %v1649
    %v1651 = vadd.f32 %v1637, %v1641
    %v1652 = vrot.slane %v1651, 4
    %v1653 = vadd.f32 %v1651, %v1652
    %v1654 = vrot.slane %v1653, 2
    %v1655 = vadd.f32 %v1653, %v1654
    %v1656 = vrot.slane %v1655, 1
    %v1657 = vadd.f32 %v1655, %v1656
    %v1658 = vadd.f32 %v1638, %v1642
    %v1659 = vrot.slane %v1658, 4
    %v1660 = vadd.f32 %v1658, %v1659
    %v1661 = vrot.slane %v1660, 2
    %v1662 = vadd.f32 %v1660, %v1661
    %v1663 = vrot.slane %v1662, 1
    %v1664 = vadd.f32 %v1662, %v1663
    %v1665 = vadd.f32 %v1639, %v1643
    %v1666 = vrot.slane %v1665, 4
    %v1667 = vadd.f32 %v1665, %v1666
    %v1668 = vrot.slane %v1667, 2
    %v1669 = vadd.f32 %v1667, %v1668
    %v1670 = vrot.slane %v1669, 1
    %v1671 = vadd.f32 %v1669, %v1670
    %v1672 = vadd.f32 %v1650, %v1657
    %v1673 = vadd.f32 %v1672, %v1664
    %v1674 = vadd.f32 %v1673, %v1671
    %v1675 = vmul.f32 %v1674, 0.015625
    %v1676 = vlaneseq
    %v1677 = vshrl.u32 %v1676, 7
    %v1678 = vsub.s32 0, %v1677
    %v1679 = vrot.slane %v1675, %v1678
    %v1680 = vsub.f32 %v1636, %v1679
    %v1681 = vsub.f32 %v1637, %v1679
    %v1682 = vsub.f32 %v1638, %v1679
    %v1683 = vsub.f32 %v1639, %v1679
    %v1684 = vsub.f32 %v1640, %v1679
    %v1685 = vsub.f32 %v1641, %v1679
    %v1686 = vsub.f32 %v1642, %v1679
    %v1687 = vsub.f32 %v1643, %v1679
    %v1688 = vmul.f32 %v1680, %v1680
    %v1689 = vmul.f32 %v1681, %v1681
    %v1690 = vmul.f32 %v1682, %v1682
    %v1691 = vmul.f32 %v1683, %v1683
    %v1692 = vmul.f32 %v1684, %v1684
    %v1693 = vmul.f32 %v1685, %v1685
    %v1694 = vmul.f32 %v1686, %v1686
    %v1695 = vmul.f32 %v1687, %v1687
    %v1696 = vadd.f32 %v1688, %v1692
    %v1697 = vrot.slane %v1696, 4
    %v1698 = vadd.f32 %v1696, %v1697
    %v1699 = vrot.slane %v1698, 2
    %v1700 = vadd.f32 %v1698, %v1699
    %v1701 = vrot.slane %v1700, 1
    %v1702 = vadd.f32 %v1700, %v1701
    %v1703 = vadd.f32 %v1689, %v1693
    %v1704 = vrot.slane %v1703, 4
    %v1705 = vadd.f32 %v1703, %v1704
    %v1706 = vrot.slane %v1705, 2
    %v1707 = vadd.f32 %v1705, %v1706
    %v1708 = vrot.slane %v1707, 1
    %v1709 = vadd.f32 %v1707, %v1708
    %v1710 = vadd.f32 %v1690, %v1694
    %v1711 = vrot.slane %v1710, 4
    %v1712 = vadd.f32 %v1710, %v1711
    %v1713 = vrot.slane %v1712, 2
    %v1714 = vadd.f32 %v1712, %v1713
    %v1715 = vrot.slane %v1714, 1
    %v1716 = vadd.f32 %v1714, %v1715
    %v1717 = vadd.f32 %v1691, %v1695
    %v1718 = vrot.slane %v1717, 4
    %v1719 = vadd.f32 %v1717, %v1718
    %v1720 = vrot.slane %v1719, 2
    %v1721 = vadd.f32 %v1719, %v1720
    %v1722 = vrot.slane %v1721, 1
    %v1723 = vadd.f32 %v1721, %v1722
    %v1724 = vadd.f32 %v1702, %v1709
    %v1725 = vadd.f32 %v1724, %v1716
    %v1726 = vadd.f32 %v1725, %v1723
    %v1727 = vmul.f32 %v1726, 0.015625
    %v1728 = vadd.f32 %v1727, 1e-05
    %v1729 = vrsqrt.pop %v1728
    %v1730 = vlaneseq
    %v1731 = vshrl.u32 %v1730, 7
    %v1732 = vsub.s32 0, %v1731
    %v1733 = vrot.slane %v1729, %v1732
    %v1734 = vmul.f32 %v1680, %v1733
    %v1735 = vmul.f32 %v1681, %v1733
    %v1736 = vmul.f32 %v1682, %v1733
    %v1737 = vmul.f32 %v1683, %v1733
    %v1738 = vmul.f32 %v1684, %v1733
    %v1739 = vmul.f32 %v1685, %v1733
    %v1740 = vmul.f32 %v1686, %v1733
    %v1741 = vmul.f32 %v1687, %v1733
    %v1742 = vmul.f32 %v1734, %v131
    %v1743 = vmul.f32 %v1735, %v132
    %v1744 = vmul.f32 %v1736, %v133
    %v1745 = vmul.f32 %v1737, %v134
    %v1746 = vmul.f32 %v1738, %v135
    %v1747 = vmul.f32 %v1739, %v136
    %v1748 = vmul.f32 %v1740, %v137
    %v1749 = vmul.f32 %v1741, %v138
    %v1750 = vadd.f32 %v1742, %v139
    %v1751 = vadd.f32 %v1743, %v140
    %v1752 = vadd.f32 %v1744, %v141
    %v1753 = vadd.f32 %v1745, %v142
    %v1754 = vadd.f32 %v1746, %v143
    %v1755 = vadd.f32 %v1747, %v144
    %v1756 = vadd.f32 %v1748, %v145
    %v1757 = vadd.f32 %v1749, %v146
    %v1758 = vpack.c.bf16 %v1754, %v1750
    %v1759 = vpack.c.bf16 %v1755, %v1751
    %v1760 = vpack.c.bf16 %v1756, %v1752
    %v1761 = vpack.c.bf16 %v1757, %v1753
    %1762 = vmatprep.subr.bf16.mxu0 0
    %1763 = vmatpush1.bf16.msra.mxu0 0
    %1764 = vmatprep.subr.bf16.mxu0 0
    %1765 = vmatpush1.bf16.msra.mxu0 0
    %1766 = vmatprep.subr.bf16.mxu0 0
    %1767 = vmatpush1.bf16.msra.mxu0 0
    %1768 = vmatprep.subr.bf16.mxu0 0
    %1769 = vmatpush1.bf16.msra.mxu0 0
    %1770 = vmatprep.subr.bf16.mxu0 0
    %1771 = vmatpush1.bf16.msra.mxu0 0
    %1772 = vmatprep.subr.bf16.mxu0 0
    %1773 = vmatpush1.bf16.msra.mxu0 0
    %1774 = vmatprep.subr.bf16.mxu0 0
    %1775 = vmatpush1.bf16.msra.mxu0 0
    %1776 = vmatprep.subr.bf16.mxu0 %v1759
    %1777 = vmatpush1.bf16.msra.mxu0 %v1758
    %1778 = vmatprep.subr.bf16.mxu0 0
    %1779 = vmatpush2.bf16.msra.mxu0 0
    %1780 = vmatprep.subr.bf16.mxu0 0
    %1781 = vmatpush2.bf16.msra.mxu0 0
    %1782 = vmatprep.subr.bf16.mxu0 0
    %1783 = vmatpush2.bf16.msra.mxu0 0
    %1784 = vmatprep.subr.bf16.mxu0 0
    %1785 = vmatpush2.bf16.msra.mxu0 0
    %1786 = vmatprep.subr.bf16.mxu0 0
    %1787 = vmatpush2.bf16.msra.mxu0 0
    %1788 = vmatprep.subr.bf16.mxu0 0
    %1789 = vmatpush2.bf16.msra.mxu0 0
    %1790 = vmatprep.subr.bf16.mxu0 0
    %1791 = vmatpush2.bf16.msra.mxu0 0
    %1792 = vmatprep.subr.bf16.mxu0 0
    %1793 = vmatpush2.bf16.msra.mxu0 0
    %1794 = vmatprep.mubr.bf16.mxu0 0
    %1795 = vmatmul.mubr.bf16.gmra.mxu0 %v408
    %v1796 = vpop.f32.mrf.mxu0
    %v1797 = vadd.f32 %v319, %v1796
    %v1798 = vpop.f32.mrf.mxu0
    %v1799 = vadd.f32 %v319, %v1798
    %v1800 = vpop.f32.mrf.mxu0
    %v1801 = vadd.f32 %v324, %v1800
    %v1802 = vpop.f32.mrf.mxu0
    %v1803 = vadd.f32 %v324, %v1802
    %1804 = vmatprep.mubr.bf16.mxu0 0
    %1805 = vmatmul.mubr.bf16.gmra.mxu0 %v411
    %v1806 = vpop.f32.mrf.mxu0
    %v1807 = vadd.f32 %v329, %v1806
    %v1808 = vpop.f32.mrf.mxu0
    %v1809 = vadd.f32 %v329, %v1808
    %v1810 = vpop.f32.mrf.mxu0
    %v1811 = vadd.f32 %v334, %v1810
    %v1812 = vpop.f32.mrf.mxu0
    %v1813 = vadd.f32 %v334, %v1812
    %1814 = vmatprep.mubr.bf16.mxu0 0
    %1815 = vmatmul.mubr.bf16.gmra.mxu0 %v414
    %v1816 = vpop.f32.mrf.mxu0
    %v1817 = vadd.f32 %v339, %v1816
    %v1818 = vpop.f32.mrf.mxu0
    %v1819 = vadd.f32 %v339, %v1818
    %v1820 = vpop.f32.mrf.mxu0
    %v1821 = vadd.f32 %v344, %v1820
    %v1822 = vpop.f32.mrf.mxu0
    %v1823 = vadd.f32 %v344, %v1822
    %1824 = vmatprep.mubr.bf16.mxu0 0
    %1825 = vmatmul.mubr.bf16.gmra.mxu0 %v417
    %v1826 = vpop.f32.mrf.mxu0
    %v1827 = vadd.f32 %v349, %v1826
    %v1828 = vpop.f32.mrf.mxu0
    %v1829 = vadd.f32 %v349, %v1828
    %v1830 = vpop.f32.mrf.mxu0
    %v1831 = vadd.f32 %v354, %v1830
    %v1832 = vpop.f32.mrf.mxu0
    %v1833 = vadd.f32 %v354, %v1832
    %1834 = vmatprep.mubr.bf16.mxu0 0
    %1835 = vmatmul.mubr.bf16.gmra.mxu0 %v420
    %v1836 = vpop.f32.mrf.mxu0
    %v1837 = vadd.f32 %v359, %v1836
    %v1838 = vpop.f32.mrf.mxu0
    %v1839 = vadd.f32 %v359, %v1838
    %v1840 = vpop.f32.mrf.mxu0
    %v1841 = vadd.f32 %v364, %v1840
    %v1842 = vpop.f32.mrf.mxu0
    %v1843 = vadd.f32 %v364, %v1842
    %1844 = vmatprep.mubr.bf16.mxu0 0
    %1845 = vmatmul.mubr.bf16.gmra.mxu0 %v423
    %v1846 = vpop.f32.mrf.mxu0
    %v1847 = vadd.f32 %v369, %v1846
    %v1848 = vpop.f32.mrf.mxu0
    %v1849 = vadd.f32 %v369, %v1848
    %v1850 = vpop.f32.mrf.mxu0
    %v1851 = vadd.f32 %v374, %v1850
    %v1852 = vpop.f32.mrf.mxu0
    %v1853 = vadd.f32 %v374, %v1852
    %1854 = vdwg.mxu0
    %1855 = vmatprep.subr.bf16.mxu0 0
    %1856 = vmatpush1.bf16.msra.mxu0 0
    %1857 = vmatprep.subr.bf16.mxu0 0
    %1858 = vmatpush1.bf16.msra.mxu0 0
    %1859 = vmatprep.subr.bf16.mxu0 0
    %1860 = vmatpush1.bf16.msra.mxu0 0
    %1861 = vmatprep.subr.bf16.mxu0 0
    %1862 = vmatpush1.bf16.msra.mxu0 0
    %1863 = vmatprep.subr.bf16.mxu0 0
    %1864 = vmatpush1.bf16.msra.mxu0 0
    %1865 = vmatprep.subr.bf16.mxu0 0
    %1866 = vmatpush1.bf16.msra.mxu0 0
    %1867 = vmatprep.subr.bf16.mxu0 0
    %1868 = vmatpush1.bf16.msra.mxu0 0
    %1869 = vmatprep.subr.bf16.mxu0 %v1761
    %1870 = vmatpush1.bf16.msra.mxu0 %v1760
    %1871 = vmatprep.subr.bf16.mxu0 0
    %1872 = vmatpush2.bf16.msra.mxu0 0
    %1873 = vmatprep.subr.bf16.mxu0 0
    %1874 = vmatpush2.bf16.msra.mxu0 0
    %1875 = vmatprep.subr.bf16.mxu0 0
    %1876 = vmatpush2.bf16.msra.mxu0 0
    %1877 = vmatprep.subr.bf16.mxu0 0
    %1878 = vmatpush2.bf16.msra.mxu0 0
    %1879 = vmatprep.subr.bf16.mxu0 0
    %1880 = vmatpush2.bf16.msra.mxu0 0
    %1881 = vmatprep.subr.bf16.mxu0 0
    %1882 = vmatpush2.bf16.msra.mxu0 0
    %1883 = vmatprep.subr.bf16.mxu0 0
    %1884 = vmatpush2.bf16.msra.mxu0 0
    %1885 = vmatprep.subr.bf16.mxu0 0
    %1886 = vmatpush2.bf16.msra.mxu0 0
    %1887 = vmatprep.mubr.bf16.mxu0 0
    %1888 = vmatmul.mubr.bf16.gmra.mxu0 %v408
    %v1889 = vpop.f32.mrf.mxu0
    %v1890 = vadd.f32 %v319, %v1889
    %v1891 = vpop.f32.mrf.mxu0
    %v1892 = vadd.f32 %v319, %v1891
    %v1893 = vpop.f32.mrf.mxu0
    %v1894 = vadd.f32 %v324, %v1893
    %v1895 = vpop.f32.mrf.mxu0
    %v1896 = vadd.f32 %v324, %v1895
    %1897 = vmatprep.mubr.bf16.mxu0 0
    %1898 = vmatmul.mubr.bf16.gmra.mxu0 %v411
    %v1899 = vpop.f32.mrf.mxu0
    %v1900 = vadd.f32 %v329, %v1899
    %v1901 = vpop.f32.mrf.mxu0
    %v1902 = vadd.f32 %v329, %v1901
    %v1903 = vpop.f32.mrf.mxu0
    %v1904 = vadd.f32 %v334, %v1903
    %v1905 = vpop.f32.mrf.mxu0
    %v1906 = vadd.f32 %v334, %v1905
    %1907 = vmatprep.mubr.bf16.mxu0 0
    %1908 = vmatmul.mubr.bf16.gmra.mxu0 %v414
    %v1909 = vpop.f32.mrf.mxu0
    %v1910 = vadd.f32 %v339, %v1909
    %v1911 = vpop.f32.mrf.mxu0
    %v1912 = vadd.f32 %v339, %v1911
    %v1913 = vpop.f32.mrf.mxu0
    %v1914 = vadd.f32 %v344, %v1913
    %v1915 = vpop.f32.mrf.mxu0
    %v1916 = vadd.f32 %v344, %v1915
    %1917 = vmatprep.mubr.bf16.mxu0 0
    %1918 = vmatmul.mubr.bf16.gmra.mxu0 %v417
    %v1919 = vpop.f32.mrf.mxu0
    %v1920 = vadd.f32 %v349, %v1919
    %v1921 = vpop.f32.mrf.mxu0
    %v1922 = vadd.f32 %v349, %v1921
    %v1923 = vpop.f32.mrf.mxu0
    %v1924 = vadd.f32 %v354, %v1923
    %v1925 = vpop.f32.mrf.mxu0
    %v1926 = vadd.f32 %v354, %v1925
    %1927 = vmatprep.mubr.bf16.mxu0 0
    %1928 = vmatmul.mubr.bf16.gmra.mxu0 %v420
    %v1929 = vpop.f32.mrf.mxu0
    %v1930 = vadd.f32 %v359, %v1929
    %v1931 = vpop.f32.mrf.mxu0
    %v1932 = vadd.f32 %v359, %v1931
    %v1933 = vpop.f32.mrf.mxu0
    %v1934 = vadd.f32 %v364, %v1933
    %v1935 = vpop.f32.mrf.mxu0
    %v1936 = vadd.f32 %v364, %v1935
    %1937 = vmatprep.mubr.bf16.mxu0 0
    %1938 = vmatmul.mubr.bf16.gmra.mxu0 %v423
    %v1939 = vpop.f32.mrf.mxu0
    %v1940 = vadd.f32 %v369, %v1939
    %v1941 = vpop.f32.mrf.mxu0
    %v1942 = vadd.f32 %v369, %v1941
    %v1943 = vpop.f32.mrf.mxu0
    %v1944 = vadd.f32 %v374, %v1943
    %v1945 = vpop.f32.mrf.mxu0
    %v1946 = vadd.f32 %v374, %v1945
    %1947 = vdwg.mxu0
    %v1948 = vmul.f32 %v1797, %v1807
    %v1949 = vrot.slane %v1948, 4
    %v1950 = vadd.f32 %v1948, %v1949
    %v1951 = vrot.slane %v1950, 6
    %v1952 = vadd.f32 %v1950, %v1951
    %v1953 = vrot.slane %v1952, 7
    %v1954 = vadd.f32 %v1952, %v1953
    %v1955 = vmul.f32 %v1797, %v1809
    %v1956 = vrot.slane %v1955, 4
    %v1957 = vadd.f32 %v1955, %v1956
    %v1958 = vrot.slane %v1957, 6
    %v1959 = vadd.f32 %v1957, %v1958
    %v1960 = vrot.slane %v1959, 7
    %v1961 = vadd.f32 %v1959, %v1960
    %v1962 = vmul.f32 %v1797, %v1900
    %v1963 = vrot.slane %v1962, 4
    %v1964 = vadd.f32 %v1962, %v1963
    %v1965 = vrot.slane %v1964, 6
    %v1966 = vadd.f32 %v1964, %v1965
    %v1967 = vrot.slane %v1966, 7
    %v1968 = vadd.f32 %v1966, %v1967
    %v1969 = vmul.f32 %v1797, %v1902
    %v1970 = vrot.slane %v1969, 4
    %v1971 = vadd.f32 %v1969, %v1970
    %v1972 = vrot.slane %v1971, 6
    %v1973 = vadd.f32 %v1971, %v1972
    %v1974 = vrot.slane %v1973, 7
    %v1975 = vadd.f32 %v1973, %v1974
    %v1976 = vmax.f32 %v1954, %v1961
    %v1977 = vmax.f32 %v1976, %v1968
    %v1978 = vmax.f32 %v1977, %v1975
    %v1979 = vsub.f32 %v1954, %v1978
    %v1980 = vmul.f32 %v1979, 1.442695
    %v1981 = vpow.pop %v1980
    %v1982 = vsub.f32 %v1961, %v1978
    %v1983 = vmul.f32 %v1982, 1.442695
    %v1984 = vpow.pop %v1983
    %v1985 = vsub.f32 %v1968, %v1978
    %v1986 = vmul.f32 %v1985, 1.442695
    %v1987 = vpow.pop %v1986
    %v1988 = vsub.f32 %v1975, %v1978
    %v1989 = vmul.f32 %v1988, 1.442695
    %v1990 = vpow.pop %v1989
    %v1991 = vadd.f32 %v1981, %v1984
    %v1992 = vadd.f32 %v1991, %v1987
    %v1993 = vadd.f32 %v1992, %v1990
    %v1994 = vmul.f32 %v1981, %v1817
    %v1995 = vmul.f32 %v1984, %v1819
    %v1996 = vadd.f32 %v1994, %v1995
    %v1997 = vmul.f32 %v1987, %v1910
    %v1998 = vadd.f32 %v1996, %v1997
    %v1999 = vmul.f32 %v1990, %v1912
    %v2000 = vadd.f32 %v1998, %v1999
    %v2001 = vrcp.pop %v1993
    %v2002 = vmul.f32 %v2000, %v2001
    %2003 = vst [vmem:[#allocation2] sm:$0xff] %v2002
    %v2004 = vmul.f32 %v1799, %v1807
    %v2005 = vrot.slane %v2004, 4
    %v2006 = vadd.f32 %v2004, %v2005
    %v2007 = vrot.slane %v2006, 6
    %v2008 = vadd.f32 %v2006, %v2007
    %v2009 = vrot.slane %v2008, 7
    %v2010 = vadd.f32 %v2008, %v2009
    %v2011 = vmul.f32 %v1799, %v1809
    %v2012 = vrot.slane %v2011, 4
    %v2013 = vadd.f32 %v2011, %v2012
    %v2014 = vrot.slane %v2013, 6
    %v2015 = vadd.f32 %v2013, %v2014
    %v2016 = vrot.slane %v2015, 7
    %v2017 = vadd.f32 %v2015, %v2016
    %v2018 = vmul.f32 %v1799, %v1900
    %v2019 = vrot.slane %v2018, 4
    %v2020 = vadd.f32 %v2018, %v2019
    %v2021 = vrot.slane %v2020, 6
    %v2022 = vadd.f32 %v2020, %v2021
    %v2023 = vrot.slane %v2022, 7
    %v2024 = vadd.f32 %v2022, %v2023
    %v2025 = vmul.f32 %v1799, %v1902
    %v2026 = vrot.slane %v2025, 4
    %v2027 = vadd.f32 %v2025, %v2026
    %v2028 = vrot.slane %v2027, 6
    %v2029 = vadd.f32 %v2027, %v2028
    %v2030 = vrot.slane %v2029, 7
    %v2031 = vadd.f32 %v2029, %v2030
    %v2032 = vmax.f32 %v2010, %v2017
    %v2033 = vmax.f32 %v2032, %v2024
    %v2034 = vmax.f32 %v2033, %v2031
    %v2035 = vsub.f32 %v2010, %v2034
    %v2036 = vmul.f32 %v2035, 1.442695
    %v2037 = vpow.pop %v2036
    %v2038 = vsub.f32 %v2017, %v2034
    %v2039 = vmul.f32 %v2038, 1.442695
    %v2040 = vpow.pop %v2039
    %v2041 = vsub.f32 %v2024, %v2034
    %v2042 = vmul.f32 %v2041, 1.442695
    %v2043 = vpow.pop %v2042
    %v2044 = vsub.f32 %v2031, %v2034
    %v2045 = vmul.f32 %v2044, 1.442695
    %v2046 = vpow.pop %v2045
    %v2047 = vadd.f32 %v2037, %v2040
    %v2048 = vadd.f32 %v2047, %v2043
    %v2049 = vadd.f32 %v2048, %v2046
    %v2050 = vmul.f32 %v2037, %v1817
    %v2051 = vmul.f32 %v2040, %v1819
    %v2052 = vadd.f32 %v2050, %v2051
    %v2053 = vmul.f32 %v2043, %v1910
    %v2054 = vadd.f32 %v2052, %v2053
    %v2055 = vmul.f32 %v2046, %v1912
    %v2056 = vadd.f32 %v2054, %v2055
    %v2057 = vrcp.pop %v2049
    %v2058 = vmul.f32 %v2056, %v2057
    %2059 = vst [vmem:[#allocation2 + $0x8] sm:$0xff] %v2058
    %v2060 = vmul.f32 %v1890, %v1807
    %v2061 = vrot.slane %v2060, 4
    %v2062 = vadd.f32 %v2060, %v2061
    %v2063 = vrot.slane %v2062, 6
    %v2064 = vadd.f32 %v2062, %v2063
    %v2065 = vrot.slane %v2064, 7
    %v2066 = vadd.f32 %v2064, %v2065
    %v2067 = vmul.f32 %v1890, %v1809
    %v2068 = vrot.slane %v2067, 4
    %v2069 = vadd.f32 %v2067, %v2068
    %v2070 = vrot.slane %v2069, 6
    %v2071 = vadd.f32 %v2069, %v2070
    %v2072 = vrot.slane %v2071, 7
    %v2073 = vadd.f32 %v2071, %v2072
    %v2074 = vmul.f32 %v1890, %v1900
    %v2075 = vrot.slane %v2074, 4
    %v2076 = vadd.f32 %v2074, %v2075
    %v2077 = vrot.slane %v2076, 6
    %v2078 = vadd.f32 %v2076, %v2077
    %v2079 = vrot.slane %v2078, 7
    %v2080 = vadd.f32 %v2078, %v2079
    %v2081 = vmul.f32 %v1890, %v1902
    %v2082 = vrot.slane %v2081, 4
    %v2083 = vadd.f32 %v2081, %v2082
    %v2084 = vrot.slane %v2083, 6
    %v2085 = vadd.f32 %v2083, %v2084
    %v2086 = vrot.slane %v2085, 7
    %v2087 = vadd.f32 %v2085, %v2086
    %v2088 = vmax.f32 %v2066, %v2073
    %v2089 = vmax.f32 %v2088, %v2080
    %v2090 = vmax.f32 %v2089, %v2087
    %v2091 = vsub.f32 %v2066, %v2090
    %v2092 = vmul.f32 %v2091, 1.442695
    %v2093 = vpow.pop %v2092
    %v2094 = vsub.f32 %v2073, %v2090
    %v2095 = vmul.f32 %v2094, 1.442695
    %v2096 = vpow.pop %v2095
    %v2097 = vsub.f32 %v2080, %v2090
    %v2098 = vmul.f32 %v2097, 1.442695
    %v2099 = vpow.pop %v2098
    %v2100 = vsub.f32 %v2087, %v2090
    %v2101 = vmul.f32 %v2100, 1.442695
    %v2102 = vpow.pop %v2101
    %v2103 = vadd.f32 %v2093, %v2096
    %v2104 = vadd.f32 %v2103, %v2099
    %v2105 = vadd.f32 %v2104, %v2102
    %v2106 = vmul.f32 %v2093, %v1817
    %v2107 = vmul.f32 %v2096, %v1819
    %v2108 = vadd.f32 %v2106, %v2107
    %v2109 = vmul.f32 %v2099, %v1910
    %v2110 = vadd.f32 %v2108, %v2109
    %v2111 = vmul.f32 %v2102, %v1912
    %v2112 = vadd.f32 %v2110, %v2111
    %v2113 = vrcp.pop %v2105
    %v2114 = vmul.f32 %v2112, %v2113
    %2115 = vst [vmem:[#allocation2 + $0x10] sm:$0xff] %v2114
    %v2116 = vmul.f32 %v1892, %v1807
    %v2117 = vrot.slane %v2116, 4
    %v2118 = vadd.f32 %v2116, %v2117
    %v2119 = vrot.slane %v2118, 6
    %v2120 = vadd.f32 %v2118, %v2119
    %v2121 = vrot.slane %v2120, 7
    %v2122 = vadd.f32 %v2120, %v2121
    %v2123 = vmul.f32 %v1892, %v1809
    %v2124 = vrot.slane %v2123, 4
    %v2125 = vadd.f32 %v2123, %v2124
    %v2126 = vrot.slane %v2125, 6
    %v2127 = vadd.f32 %v2125, %v2126
    %v2128 = vrot.slane %v2127, 7
    %v2129 = vadd.f32 %v2127, %v2128
    %v2130 = vmul.f32 %v1892, %v1900
    %v2131 = vrot.slane %v2130, 4
    %v2132 = vadd.f32 %v2130, %v2131
    %v2133 = vrot.slane %v2132, 6
    %v2134 = vadd.f32 %v2132, %v2133
    %v2135 = vrot.slane %v2134, 7
    %v2136 = vadd.f32 %v2134, %v2135
    %v2137 = vmul.f32 %v1892, %v1902
    %v2138 = vrot.slane %v2137, 4
    %v2139 = vadd.f32 %v2137, %v2138
    %v2140 = vrot.slane %v2139, 6
    %v2141 = vadd.f32 %v2139, %v2140
    %v2142 = vrot.slane %v2141, 7
    %v2143 = vadd.f32 %v2141, %v2142
    %v2144 = vmax.f32 %v2122, %v2129
    %v2145 = vmax.f32 %v2144, %v2136
    %v2146 = vmax.f32 %v2145, %v2143
    %v2147 = vsub.f32 %v2122, %v2146
    %v2148 = vmul.f32 %v2147, 1.442695
    %v2149 = vpow.pop %v2148
    %v2150 = vsub.f32 %v2129, %v2146
    %v2151 = vmul.f32 %v2150, 1.442695
    %v2152 = vpow.pop %v2151
    %v2153 = vsub.f32 %v2136, %v2146
    %v2154 = vmul.f32 %v2153, 1.442695
    %v2155 = vpow.pop %v2154
    %v2156 = vsub.f32 %v2143, %v2146
    %v2157 = vmul.f32 %v2156, 1.442695
    %v2158 = vpow.pop %v2157
    %v2159 = vadd.f32 %v2149, %v2152
    %v2160 = vadd.f32 %v2159, %v2155
    %v2161 = vadd.f32 %v2160, %v2158
    %v2162 = vmul.f32 %v2149, %v1817
    %v2163 = vmul.f32 %v2152, %v1819
    %v2164 = vadd.f32 %v2162, %v2163
    %v2165 = vmul.f32 %v2155, %v1910
    %v2166 = vadd.f32 %v2164, %v2165
    %v2167 = vmul.f32 %v2158, %v1912
    %v2168 = vadd.f32 %v2166, %v2167
    %v2169 = vrcp.pop %v2161
    %v2170 = vmul.f32 %v2168, %v2169
    %2171 = vst [vmem:[#allocation2 + $0x18] sm:$0xff] %v2170
    %v2172 = vmul.f32 %v1801, %v1811
    %v2173 = vrot.slane %v2172, 4
    %v2174 = vadd.f32 %v2172, %v2173
    %v2175 = vrot.slane %v2174, 6
    %v2176 = vadd.f32 %v2174, %v2175
    %v2177 = vrot.slane %v2176, 7
    %v2178 = vadd.f32 %v2176, %v2177
    %v2179 = vmul.f32 %v1801, %v1813
    %v2180 = vrot.slane %v2179, 4
    %v2181 = vadd.f32 %v2179, %v2180
    %v2182 = vrot.slane %v2181, 6
    %v2183 = vadd.f32 %v2181, %v2182
    %v2184 = vrot.slane %v2183, 7
    %v2185 = vadd.f32 %v2183, %v2184
    %v2186 = vmul.f32 %v1801, %v1904
    %v2187 = vrot.slane %v2186, 4
    %v2188 = vadd.f32 %v2186, %v2187
    %v2189 = vrot.slane %v2188, 6
    %v2190 = vadd.f32 %v2188, %v2189
    %v2191 = vrot.slane %v2190, 7
    %v2192 = vadd.f32 %v2190, %v2191
    %v2193 = vmul.f32 %v1801, %v1906
    %v2194 = vrot.slane %v2193, 4
    %v2195 = vadd.f32 %v2193, %v2194
    %v2196 = vrot.slane %v2195, 6
    %v2197 = vadd.f32 %v2195, %v2196
    %v2198 = vrot.slane %v2197, 7
    %v2199 = vadd.f32 %v2197, %v2198
    %v2200 = vmax.f32 %v2178, %v2185
    %v2201 = vmax.f32 %v2200, %v2192
    %v2202 = vmax.f32 %v2201, %v2199
    %v2203 = vsub.f32 %v2178, %v2202
    %v2204 = vmul.f32 %v2203, 1.442695
    %v2205 = vpow.pop %v2204
    %v2206 = vsub.f32 %v2185, %v2202
    %v2207 = vmul.f32 %v2206, 1.442695
    %v2208 = vpow.pop %v2207
    %v2209 = vsub.f32 %v2192, %v2202
    %v2210 = vmul.f32 %v2209, 1.442695
    %v2211 = vpow.pop %v2210
    %v2212 = vsub.f32 %v2199, %v2202
    %v2213 = vmul.f32 %v2212, 1.442695
    %v2214 = vpow.pop %v2213
    %v2215 = vadd.f32 %v2205, %v2208
    %v2216 = vadd.f32 %v2215, %v2211
    %v2217 = vadd.f32 %v2216, %v2214
    %v2218 = vmul.f32 %v2205, %v1821
    %v2219 = vmul.f32 %v2208, %v1823
    %v2220 = vadd.f32 %v2218, %v2219
    %v2221 = vmul.f32 %v2211, %v1914
    %v2222 = vadd.f32 %v2220, %v2221
    %v2223 = vmul.f32 %v2214, %v1916
    %v2224 = vadd.f32 %v2222, %v2223
    %v2225 = vrcp.pop %v2217
    %v2226 = vmul.f32 %v2224, %v2225
    %2227 = vst [vmem:[#allocation2 + $0x20] sm:$0xff] %v2226
    %v2228 = vmul.f32 %v1803, %v1811
    %v2229 = vrot.slane %v2228, 4
    %v2230 = vadd.f32 %v2228, %v2229
    %v2231 = vrot.slane %v2230, 6
    %v2232 = vadd.f32 %v2230, %v2231
    %v2233 = vrot.slane %v2232, 7
    %v2234 = vadd.f32 %v2232, %v2233
    %v2235 = vmul.f32 %v1803, %v1813
    %v2236 = vrot.slane %v2235, 4
    %v2237 = vadd.f32 %v2235, %v2236
    %v2238 = vrot.slane %v2237, 6
    %v2239 = vadd.f32 %v2237, %v2238
    %v2240 = vrot.slane %v2239, 7
    %v2241 = vadd.f32 %v2239, %v2240
    %v2242 = vmul.f32 %v1803, %v1904
    %v2243 = vrot.slane %v2242, 4
    %v2244 = vadd.f32 %v2242, %v2243
    %v2245 = vrot.slane %v2244, 6
    %v2246 = vadd.f32 %v2244, %v2245
    %v2247 = vrot.slane %v2246, 7
    %v2248 = vadd.f32 %v2246, %v2247
    %v2249 = vmul.f32 %v1803, %v1906
    %v2250 = vrot.slane %v2249, 4
    %v2251 = vadd.f32 %v2249, %v2250
    %v2252 = vrot.slane %v2251, 6
    %v2253 = vadd.f32 %v2251, %v2252
    %v2254 = vrot.slane %v2253, 7
    %v2255 = vadd.f32 %v2253, %v2254
    %v2256 = vmax.f32 %v2234, %v2241
    %v2257 = vmax.f32 %v2256, %v2248
    %v2258 = vmax.f32 %v2257, %v2255
    %v2259 = vsub.f32 %v2234, %v2258
    %v2260 = vmul.f32 %v2259, 1.442695
    %v2261 = vpow.pop %v2260
    %v2262 = vsub.f32 %v2241, %v2258
    %v2263 = vmul.f32 %v2262, 1.442695
    %v2264 = vpow.pop %v2263
    %v2265 = vsub.f32 %v2248, %v2258
    %v2266 = vmul.f32 %v2265, 1.442695
    %v2267 = vpow.pop %v2266
    %v2268 = vsub.f32 %v2255, %v2258
    %v2269 = vmul.f32 %v2268, 1.442695
    %v2270 = vpow.pop %v2269
    %v2271 = vadd.f32 %v2261, %v2264
    %v2272 = vadd.f32 %v2271, %v2267
    %v2273 = vadd.f32 %v2272, %v2270
    %v2274 = vmul.f32 %v2261, %v1821
    %v2275 = vmul.f32 %v2264, %v1823
    %v2276 = vadd.f32 %v2274, %v2275
    %v2277 = vmul.f32 %v2267, %v1914
    %v2278 = vadd.f32 %v2276, %v2277
    %v2279 = vmul.f32 %v2270, %v1916
    %v2280 = vadd.f32 %v2278, %v2279
    %v2281 = vrcp.pop %v2273
    %v2282 = vmul.f32 %v2280, %v2281
    %2283 = vst [vmem:[#allocation2 + $0x28] sm:$0xff] %v2282
    %v2284 = vmul.f32 %v1894, %v1811
    %v2285 = vrot.slane %v2284, 4
    %v2286 = vadd.f32 %v2284, %v2285
    %v2287 = vrot.slane %v2286, 6
    %v2288 = vadd.f32 %v2286, %v2287
    %v2289 = vrot.slane %v2288, 7
    %v2290 = vadd.f32 %v2288, %v2289
    %v2291 = vmul.f32 %v1894, %v1813
    %v2292 = vrot.slane %v2291, 4
    %v2293 = vadd.f32 %v2291, %v2292
    %v2294 = vrot.slane %v2293, 6
    %v2295 = vadd.f32 %v2293, %v2294
    %v2296 = vrot.slane %v2295, 7
    %v2297 = vadd.f32 %v2295, %v2296
    %v2298 = vmul.f32 %v1894, %v1904
    %v2299 = vrot.slane %v2298, 4
    %v2300 = vadd.f32 %v2298, %v2299
    %v2301 = vrot.slane %v2300, 6
    %v2302 = vadd.f32 %v2300, %v2301
    %v2303 = vrot.slane %v2302, 7
    %v2304 = vadd.f32 %v2302, %v2303
    %v2305 = vmul.f32 %v1894, %v1906
    %v2306 = vrot.slane %v2305, 4
    %v2307 = vadd.f32 %v2305, %v2306
    %v2308 = vrot.slane %v2307, 6
    %v2309 = vadd.f32 %v2307, %v2308
    %v2310 = vrot.slane %v2309, 7
    %v2311 = vadd.f32 %v2309, %v2310
    %v2312 = vmax.f32 %v2290, %v2297
    %v2313 = vmax.f32 %v2312, %v2304
    %v2314 = vmax.f32 %v2313, %v2311
    %v2315 = vsub.f32 %v2290, %v2314
    %v2316 = vmul.f32 %v2315, 1.442695
    %v2317 = vpow.pop %v2316
    %v2318 = vsub.f32 %v2297, %v2314
    %v2319 = vmul.f32 %v2318, 1.442695
    %v2320 = vpow.pop %v2319
    %v2321 = vsub.f32 %v2304, %v2314
    %v2322 = vmul.f32 %v2321, 1.442695
    %v2323 = vpow.pop %v2322
    %v2324 = vsub.f32 %v2311, %v2314
    %v2325 = vmul.f32 %v2324, 1.442695
    %v2326 = vpow.pop %v2325
    %v2327 = vadd.f32 %v2317, %v2320
    %v2328 = vadd.f32 %v2327, %v2323
    %v2329 = vadd.f32 %v2328, %v2326
    %v2330 = vmul.f32 %v2317, %v1821
    %v2331 = vmul.f32 %v2320, %v1823
    %v2332 = vadd.f32 %v2330, %v2331
    %v2333 = vmul.f32 %v2323, %v1914
    %v2334 = vadd.f32 %v2332, %v2333
    %v2335 = vmul.f32 %v2326, %v1916
    %v2336 = vadd.f32 %v2334, %v2335
    %v2337 = vrcp.pop %v2329
    %v2338 = vmul.f32 %v2336, %v2337
    %2339 = vst [vmem:[#allocation2 + $0x30] sm:$0xff] %v2338
    %v2340 = vmul.f32 %v1896, %v1811
    %v2341 = vrot.slane %v2340, 4
    %v2342 = vadd.f32 %v2340, %v2341
    %v2343 = vrot.slane %v2342, 6
    %v2344 = vadd.f32 %v2342, %v2343
    %v2345 = vrot.slane %v2344, 7
    %v2346 = vadd.f32 %v2344, %v2345
    %v2347 = vmul.f32 %v1896, %v1813
    %v2348 = vrot.slane %v2347, 4
    %v2349 = vadd.f32 %v2347, %v2348
    %v2350 = vrot.slane %v2349, 6
    %v2351 = vadd.f32 %v2349, %v2350
    %v2352 = vrot.slane %v2351, 7
    %v2353 = vadd.f32 %v2351, %v2352
    %v2354 = vmul.f32 %v1896, %v1904
    %v2355 = vrot.slane %v2354, 4
    %v2356 = vadd.f32 %v2354, %v2355
    %v2357 = vrot.slane %v2356, 6
    %v2358 = vadd.f32 %v2356, %v2357
    %v2359 = vrot.slane %v2358, 7
    %v2360 = vadd.f32 %v2358, %v2359
    %v2361 = vmul.f32 %v1896, %v1906
    %v2362 = vrot.slane %v2361, 4
    %v2363 = vadd.f32 %v2361, %v2362
    %v2364 = vrot.slane %v2363, 6
    %v2365 = vadd.f32 %v2363, %v2364
    %v2366 = vrot.slane %v2365, 7
    %v2367 = vadd.f32 %v2365, %v2366
    %v2368 = vmax.f32 %v2346, %v2353
    %v2369 = vmax.f32 %v2368, %v2360
    %v2370 = vmax.f32 %v2369, %v2367
    %v2371 = vsub.f32 %v2346, %v2370
    %v2372 = vmul.f32 %v2371, 1.442695
    %v2373 = vpow.pop %v2372
    %v2374 = vsub.f32 %v2353, %v2370
    %v2375 = vmul.f32 %v2374, 1.442695
    %v2376 = vpow.pop %v2375
    %v2377 = vsub.f32 %v2360, %v2370
    %v2378 = vmul.f32 %v2377, 1.442695
    %v2379 = vpow.pop %v2378
    %v2380 = vsub.f32 %v2367, %v2370
    %v2381 = vmul.f32 %v2380, 1.442695
    %v2382 = vpow.pop %v2381
    %v2383 = vadd.f32 %v2373, %v2376
    %v2384 = vadd.f32 %v2383, %v2379
    %v2385 = vadd.f32 %v2384, %v2382
    %v2386 = vmul.f32 %v2373, %v1821
    %v2387 = vmul.f32 %v2376, %v1823
    %v2388 = vadd.f32 %v2386, %v2387
    %v2389 = vmul.f32 %v2379, %v1914
    %v2390 = vadd.f32 %v2388, %v2389
    %v2391 = vmul.f32 %v2382, %v1916
    %v2392 = vadd.f32 %v2390, %v2391
    %v2393 = vrcp.pop %v2385
    %v2394 = vmul.f32 %v2392, %v2393
    %2395 = vst [vmem:[#allocation2 + $0x38] sm:$0xff] %v2394
    %v2396 = vmul.f32 %v1827, %v1837
    %v2397 = vrot.slane %v2396, 4
    %v2398 = vadd.f32 %v2396, %v2397
    %v2399 = vrot.slane %v2398, 6
    %v2400 = vadd.f32 %v2398, %v2399
    %v2401 = vrot.slane %v2400, 7
    %v2402 = vadd.f32 %v2400, %v2401
    %v2403 = vmul.f32 %v1827, %v1839
    %v2404 = vrot.slane %v2403, 4
    %v2405 = vadd.f32 %v2403, %v2404
    %v2406 = vrot.slane %v2405, 6
    %v2407 = vadd.f32 %v2405, %v2406
    %v2408 = vrot.slane %v2407, 7
    %v2409 = vadd.f32 %v2407, %v2408
    %v2410 = vmul.f32 %v1827, %v1930
    %v2411 = vrot.slane %v2410, 4
    %v2412 = vadd.f32 %v2410, %v2411
    %v2413 = vrot.slane %v2412, 6
    %v2414 = vadd.f32 %v2412, %v2413
    %v2415 = vrot.slane %v2414, 7
    %v2416 = vadd.f32 %v2414, %v2415
    %v2417 = vmul.f32 %v1827, %v1932
    %v2418 = vrot.slane %v2417, 4
    %v2419 = vadd.f32 %v2417, %v2418
    %v2420 = vrot.slane %v2419, 6
    %v2421 = vadd.f32 %v2419, %v2420
    %v2422 = vrot.slane %v2421, 7
    %v2423 = vadd.f32 %v2421, %v2422
    %v2424 = vmax.f32 %v2402, %v2409
    %v2425 = vmax.f32 %v2424, %v2416
    %v2426 = vmax.f32 %v2425, %v2423
    %v2427 = vsub.f32 %v2402, %v2426
    %v2428 = vmul.f32 %v2427, 1.442695
    %v2429 = vpow.pop %v2428
    %v2430 = vsub.f32 %v2409, %v2426
    %v2431 = vmul.f32 %v2430, 1.442695
    %v2432 = vpow.pop %v2431
    %v2433 = vsub.f32 %v2416, %v2426
    %v2434 = vmul.f32 %v2433, 1.442695
    %v2435 = vpow.pop %v2434
    %v2436 = vsub.f32 %v2423, %v2426
    %v2437 = vmul.f32 %v2436, 1.442695
    %v2438 = vpow.pop %v2437
    %v2439 = vadd.f32 %v2429, %v2432
    %v2440 = vadd.f32 %v2439, %v2435
    %v2441 = vadd.f32 %v2440, %v2438
    %v2442 = vmul.f32 %v2429, %v1847
    %v2443 = vmul.f32 %v2432, %v1849
    %v2444 = vadd.f32 %v2442, %v2443
    %v2445 = vmul.f32 %v2435, %v1940
    %v2446 = vadd.f32 %v2444, %v2445
    %v2447 = vmul.f32 %v2438, %v1942
    %v2448 = vadd.f32 %v2446, %v2447
    %v2449 = vrcp.pop %v2441
    %v2450 = vmul.f32 %v2448, %v2449
    %2451 = vst [vmem:[#allocation2 + $0x40] sm:$0xff] %v2450
    %v2452 = vmul.f32 %v1829, %v1837
    %v2453 = vrot.slane %v2452, 4
    %v2454 = vadd.f32 %v2452, %v2453
    %v2455 = vrot.slane %v2454, 6
    %v2456 = vadd.f32 %v2454, %v2455
    %v2457 = vrot.slane %v2456, 7
    %v2458 = vadd.f32 %v2456, %v2457
    %v2459 = vmul.f32 %v1829, %v1839
    %v2460 = vrot.slane %v2459, 4
    %v2461 = vadd.f32 %v2459, %v2460
    %v2462 = vrot.slane %v2461, 6
    %v2463 = vadd.f32 %v2461, %v2462
    %v2464 = vrot.slane %v2463, 7
    %v2465 = vadd.f32 %v2463, %v2464
    %v2466 = vmul.f32 %v1829, %v1930
    %v2467 = vrot.slane %v2466, 4
    %v2468 = vadd.f32 %v2466, %v2467
    %v2469 = vrot.slane %v2468, 6
    %v2470 = vadd.f32 %v2468, %v2469
    %v2471 = vrot.slane %v2470, 7
    %v2472 = vadd.f32 %v2470, %v2471
    %v2473 = vmul.f32 %v1829, %v1932
    %v2474 = vrot.slane %v2473, 4
    %v2475 = vadd.f32 %v2473, %v2474
    %v2476 = vrot.slane %v2475, 6
    %v2477 = vadd.f32 %v2475, %v2476
    %v2478 = vrot.slane %v2477, 7
    %v2479 = vadd.f32 %v2477, %v2478
    %v2480 = vmax.f32 %v2458, %v2465
    %v2481 = vmax.f32 %v2480, %v2472
    %v2482 = vmax.f32 %v2481, %v2479
    %v2483 = vsub.f32 %v2458, %v2482
    %v2484 = vmul.f32 %v2483, 1.442695
    %v2485 = vpow.pop %v2484
    %v2486 = vsub.f32 %v2465, %v2482
    %v2487 = vmul.f32 %v2486, 1.442695
    %v2488 = vpow.pop %v2487
    %v2489 = vsub.f32 %v2472, %v2482
    %v2490 = vmul.f32 %v2489, 1.442695
    %v2491 = vpow.pop %v2490
    %v2492 = vsub.f32 %v2479, %v2482
    %v2493 = vmul.f32 %v2492, 1.442695
    %v2494 = vpow.pop %v2493
    %v2495 = vadd.f32 %v2485, %v2488
    %v2496 = vadd.f32 %v2495, %v2491
    %v2497 = vadd.f32 %v2496, %v2494
    %v2498 = vmul.f32 %v2485, %v1847
    %v2499 = vmul.f32 %v2488, %v1849
    %v2500 = vadd.f32 %v2498, %v2499
    %v2501 = vmul.f32 %v2491, %v1940
    %v2502 = vadd.f32 %v2500, %v2501
    %v2503 = vmul.f32 %v2494, %v1942
    %v2504 = vadd.f32 %v2502, %v2503
    %v2505 = vrcp.pop %v2497
    %v2506 = vmul.f32 %v2504, %v2505
    %2507 = vst [vmem:[#allocation2 + $0x48] sm:$0xff] %v2506
    %v2508 = vmul.f32 %v1920, %v1837
    %v2509 = vrot.slane %v2508, 4
    %v2510 = vadd.f32 %v2508, %v2509
    %v2511 = vrot.slane %v2510, 6
    %v2512 = vadd.f32 %v2510, %v2511
    %v2513 = vrot.slane %v2512, 7
    %v2514 = vadd.f32 %v2512, %v2513
    %v2515 = vmul.f32 %v1920, %v1839
    %v2516 = vrot.slane %v2515, 4
    %v2517 = vadd.f32 %v2515, %v2516
    %v2518 = vrot.slane %v2517, 6
    %v2519 = vadd.f32 %v2517, %v2518
    %v2520 = vrot.slane %v2519, 7
    %v2521 = vadd.f32 %v2519, %v2520
    %v2522 = vmul.f32 %v1920, %v1930
    %v2523 = vrot.slane %v2522, 4
    %v2524 = vadd.f32 %v2522, %v2523
    %v2525 = vrot.slane %v2524, 6
    %v2526 = vadd.f32 %v2524, %v2525
    %v2527 = vrot.slane %v2526, 7
    %v2528 = vadd.f32 %v2526, %v2527
    %v2529 = vmul.f32 %v1920, %v1932
    %v2530 = vrot.slane %v2529, 4
    %v2531 = vadd.f32 %v2529, %v2530
    %v2532 = vrot.slane %v2531, 6
    %v2533 = vadd.f32 %v2531, %v2532
    %v2534 = vrot.slane %v2533, 7
    %v2535 = vadd.f32 %v2533, %v2534
    %v2536 = vmax.f32 %v2514, %v2521
    %v2537 = vmax.f32 %v2536, %v2528
    %v2538 = vmax.f32 %v2537, %v2535
    %v2539 = vsub.f32 %v2514, %v2538
    %v2540 = vmul.f32 %v2539, 1.442695
    %v2541 = vpow.pop %v2540
    %v2542 = vsub.f32 %v2521, %v2538
    %v2543 = vmul.f32 %v2542, 1.442695
    %v2544 = vpow.pop %v2543
    %v2545 = vsub.f32 %v2528, %v2538
    %v2546 = vmul.f32 %v2545, 1.442695
    %v2547 = vpow.pop %v2546
    %v2548 = vsub.f32 %v2535, %v2538
    %v2549 = vmul.f32 %v2548, 1.442695
    %v2550 = vpow.pop %v2549
    %v2551 = vadd.f32 %v2541, %v2544
    %v2552 = vadd.f32 %v2551, %v2547
    %v2553 = vadd.f32 %v2552, %v2550
    %v2554 = vmul.f32 %v2541, %v1847
    %v2555 = vmul.f32 %v2544, %v1849
    %v2556 = vadd.f32 %v2554, %v2555
    %v2557 = vmul.f32 %v2547, %v1940
    %v2558 = vadd.f32 %v2556, %v2557
    %v2559 = vmul.f32 %v2550, %v1942
    %v2560 = vadd.f32 %v2558, %v2559
    %v2561 = vrcp.pop %v2553
    %v2562 = vmul.f32 %v2560, %v2561
    %2563 = vst [vmem:[#allocation2 + $0x50] sm:$0xff] %v2562
    %v2564 = vmul.f32 %v1922, %v1837
    %v2565 = vrot.slane %v2564, 4
    %v2566 = vadd.f32 %v2564, %v2565
    %v2567 = vrot.slane %v2566, 6
    %v2568 = vadd.f32 %v2566, %v2567
    %v2569 = vrot.slane %v2568, 7
    %v2570 = vadd.f32 %v2568, %v2569
    %v2571 = vmul.f32 %v1922, %v1839
    %v2572 = vrot.slane %v2571, 4
    %v2573 = vadd.f32 %v2571, %v2572
    %v2574 = vrot.slane %v2573, 6
    %v2575 = vadd.f32 %v2573, %v2574
    %v2576 = vrot.slane %v2575, 7
    %v2577 = vadd.f32 %v2575, %v2576
    %v2578 = vmul.f32 %v1922, %v1930
    %v2579 = vrot.slane %v2578, 4
    %v2580 = vadd.f32 %v2578, %v2579
    %v2581 = vrot.slane %v2580, 6
    %v2582 = vadd.f32 %v2580, %v2581
    %v2583 = vrot.slane %v2582, 7
    %v2584 = vadd.f32 %v2582, %v2583
    %v2585 = vmul.f32 %v1922, %v1932
    %v2586 = vrot.slane %v2585, 4
    %v2587 = vadd.f32 %v2585, %v2586
    %v2588 = vrot.slane %v2587, 6
    %v2589 = vadd.f32 %v2587, %v2588
    %v2590 = vrot.slane %v2589, 7
    %v2591 = vadd.f32 %v2589, %v2590
    %v2592 = vmax.f32 %v2570, %v2577
    %v2593 = vmax.f32 %v2592, %v2584
    %v2594 = vmax.f32 %v2593, %v2591
    %v2595 = vsub.f32 %v2570, %v2594
    %v2596 = vmul.f32 %v2595, 1.442695
    %v2597 = vpow.pop %v2596
    %v2598 = vsub.f32 %v2577, %v2594
    %v2599 = vmul.f32 %v2598, 1.442695
    %v2600 = vpow.pop %v2599
    %v2601 = vsub.f32 %v2584, %v2594
    %v2602 = vmul.f32 %v2601, 1.442695
    %v2603 = vpow.pop %v2602
    %v2604 = vsub.f32 %v2591, %v2594
    %v2605 = vmul.f32 %v2604, 1.442695
    %v2606 = vpow.pop %v2605
    %v2607 = vadd.f32 %v2597, %v2600
    %v2608 = vadd.f32 %v2607, %v2603
    %v2609 = vadd.f32 %v2608, %v2606
    %v2610 = vmul.f32 %v2597, %v1847
    %v2611 = vmul.f32 %v2600, %v1849
    %v2612 = vadd.f32 %v2610, %v2611
    %v2613 = vmul.f32 %v2603, %v1940
    %v2614 = vadd.f32 %v2612, %v2613
    %v2615 = vmul.f32 %v2606, %v1942
    %v2616 = vadd.f32 %v2614, %v2615
    %v2617 = vrcp.pop %v2609
    %v2618 = vmul.f32 %v2616, %v2617
    %2619 = vst [vmem:[#allocation2 + $0x58] sm:$0xff] %v2618
    %v2620 = vmul.f32 %v1831, %v1841
    %v2621 = vrot.slane %v2620, 4
    %v2622 = vadd.f32 %v2620, %v2621
    %v2623 = vrot.slane %v2622, 6
    %v2624 = vadd.f32 %v2622, %v2623
    %v2625 = vrot.slane %v2624, 7
    %v2626 = vadd.f32 %v2624, %v2625
    %v2627 = vmul.f32 %v1831, %v1843
    %v2628 = vrot.slane %v2627, 4
    %v2629 = vadd.f32 %v2627, %v2628
    %v2630 = vrot.slane %v2629, 6
    %v2631 = vadd.f32 %v2629, %v2630
    %v2632 = vrot.slane %v2631, 7
    %v2633 = vadd.f32 %v2631, %v2632
    %v2634 = vmul.f32 %v1831, %v1934
    %v2635 = vrot.slane %v2634, 4
    %v2636 = vadd.f32 %v2634, %v2635
    %v2637 = vrot.slane %v2636, 6
    %v2638 = vadd.f32 %v2636, %v2637
    %v2639 = vrot.slane %v2638, 7
    %v2640 = vadd.f32 %v2638, %v2639
    %v2641 = vmul.f32 %v1831, %v1936
    %v2642 = vrot.slane %v2641, 4
    %v2643 = vadd.f32 %v2641, %v2642
    %v2644 = vrot.slane %v2643, 6
    %v2645 = vadd.f32 %v2643, %v2644
    %v2646 = vrot.slane %v2645, 7
    %v2647 = vadd.f32 %v2645, %v2646
    %v2648 = vmax.f32 %v2626, %v2633
    %v2649 = vmax.f32 %v2648, %v2640
    %v2650 = vmax.f32 %v2649, %v2647
    %v2651 = vsub.f32 %v2626, %v2650
    %v2652 = vmul.f32 %v2651, 1.442695
    %v2653 = vpow.pop %v2652
    %v2654 = vsub.f32 %v2633, %v2650
    %v2655 = vmul.f32 %v2654, 1.442695
    %v2656 = vpow.pop %v2655
    %v2657 = vsub.f32 %v2640, %v2650
    %v2658 = vmul.f32 %v2657, 1.442695
    %v2659 = vpow.pop %v2658
    %v2660 = vsub.f32 %v2647, %v2650
    %v2661 = vmul.f32 %v2660, 1.442695
    %v2662 = vpow.pop %v2661
    %v2663 = vadd.f32 %v2653, %v2656
    %v2664 = vadd.f32 %v2663, %v2659
    %v2665 = vadd.f32 %v2664, %v2662
    %v2666 = vmul.f32 %v2653, %v1851
    %v2667 = vmul.f32 %v2656, %v1853
    %v2668 = vadd.f32 %v2666, %v2667
    %v2669 = vmul.f32 %v2659, %v1944
    %v2670 = vadd.f32 %v2668, %v2669
    %v2671 = vmul.f32 %v2662, %v1946
    %v2672 = vadd.f32 %v2670, %v2671
    %v2673 = vrcp.pop %v2665
    %v2674 = vmul.f32 %v2672, %v2673
    %2675 = vst [vmem:[#allocation2 + $0x60] sm:$0xff] %v2674
    %v2676 = vmul.f32 %v1833, %v1841
    %v2677 = vrot.slane %v2676, 4
    %v2678 = vadd.f32 %v2676, %v2677
    %v2679 = vrot.slane %v2678, 6
    %v2680 = vadd.f32 %v2678, %v2679
    %v2681 = vrot.slane %v2680, 7
    %v2682 = vadd.f32 %v2680, %v2681
    %v2683 = vmul.f32 %v1833, %v1843
    %v2684 = vrot.slane %v2683, 4
    %v2685 = vadd.f32 %v2683, %v2684
    %v2686 = vrot.slane %v2685, 6
    %v2687 = vadd.f32 %v2685, %v2686
    %v2688 = vrot.slane %v2687, 7
    %v2689 = vadd.f32 %v2687, %v2688
    %v2690 = vmul.f32 %v1833, %v1934
    %v2691 = vrot.slane %v2690, 4
    %v2692 = vadd.f32 %v2690, %v2691
    %v2693 = vrot.slane %v2692, 6
    %v2694 = vadd.f32 %v2692, %v2693
    %v2695 = vrot.slane %v2694, 7
    %v2696 = vadd.f32 %v2694, %v2695
    %v2697 = vmul.f32 %v1833, %v1936
    %v2698 = vrot.slane %v2697, 4
    %v2699 = vadd.f32 %v2697, %v2698
    %v2700 = vrot.slane %v2699, 6
    %v2701 = vadd.f32 %v2699, %v2700
    %v2702 = vrot.slane %v2701, 7
    %v2703 = vadd.f32 %v2701, %v2702
    %v2704 = vmax.f32 %v2682, %v2689
    %v2705 = vmax.f32 %v2704, %v2696
    %v2706 = vmax.f32 %v2705, %v2703
    %v2707 = vsub.f32 %v2682, %v2706
    %v2708 = vmul.f32 %v2707, 1.442695
    %v2709 = vpow.pop %v2708
    %v2710 = vsub.f32 %v2689, %v2706
    %v2711 = vmul.f32 %v2710, 1.442695
    %v2712 = vpow.pop %v2711
    %v2713 = vsub.f32 %v2696, %v2706
    %v2714 = vmul.f32 %v2713, 1.442695
    %v2715 = vpow.pop %v2714
    %v2716 = vsub.f32 %v2703, %v2706
    %v2717 = vmul.f32 %v2716, 1.442695
    %v2718 = vpow.pop %v2717
    %v2719 = vadd.f32 %v2709, %v2712
    %v2720 = vadd.f32 %v2719, %v2715
    %v2721 = vadd.f32 %v2720, %v2718
    %v2722 = vmul.f32 %v2709, %v1851
    %v2723 = vmul.f32 %v2712, %v1853
    %v2724 = vadd.f32 %v2722, %v2723
    %v2725 = vmul.f32 %v2715, %v1944
    %v2726 = vadd.f32 %v2724, %v2725
    %v2727 = vmul.f32 %v2718, %v1946
    %v2728 = vadd.f32 %v2726, %v2727
    %v2729 = vrcp.pop %v2721
    %v2730 = vmul.f32 %v2728, %v2729
    %2731 = vst [vmem:[#allocation2 + $0x68] sm:$0xff] %v2730
    %v2732 = vmul.f32 %v1924, %v1841
    %v2733 = vrot.slane %v2732, 4
    %v2734 = vadd.f32 %v2732, %v2733
    %v2735 = vrot.slane %v2734, 6
    %v2736 = vadd.f32 %v2734, %v2735
    %v2737 = vrot.slane %v2736, 7
    %v2738 = vadd.f32 %v2736, %v2737
    %v2739 = vmul.f32 %v1924, %v1843
    %v2740 = vrot.slane %v2739, 4
    %v2741 = vadd.f32 %v2739, %v2740
    %v2742 = vrot.slane %v2741, 6
    %v2743 = vadd.f32 %v2741, %v2742
    %v2744 = vrot.slane %v2743, 7
    %v2745 = vadd.f32 %v2743, %v2744
    %v2746 = vmul.f32 %v1924, %v1934
    %v2747 = vrot.slane %v2746, 4
    %v2748 = vadd.f32 %v2746, %v2747
    %v2749 = vrot.slane %v2748, 6
    %v2750 = vadd.f32 %v2748, %v2749
    %v2751 = vrot.slane %v2750, 7
    %v2752 = vadd.f32 %v2750, %v2751
    %v2753 = vmul.f32 %v1924, %v1936
    %v2754 = vrot.slane %v2753, 4
    %v2755 = vadd.f32 %v2753, %v2754
    %v2756 = vrot.slane %v2755, 6
    %v2757 = vadd.f32 %v2755, %v2756
    %v2758 = vrot.slane %v2757, 7
    %v2759 = vadd.f32 %v2757, %v2758
    %v2760 = vmax.f32 %v2738, %v2745
    %v2761 = vmax.f32 %v2760, %v2752
    %v2762 = vmax.f32 %v2761, %v2759
    %v2763 = vsub.f32 %v2738, %v2762
    %v2764 = vmul.f32 %v2763, 1.442695
    %v2765 = vpow.pop %v2764
    %v2766 = vsub.f32 %v2745, %v2762
    %v2767 = vmul.f32 %v2766, 1.442695
    %v2768 = vpow.pop %v2767
    %v2769 = vsub.f32 %v2752, %v2762
    %v2770 = vmul.f32 %v2769, 1.442695
    %v2771 = vpow.pop %v2770
    %v2772 = vsub.f32 %v2759, %v2762
    %v2773 = vmul.f32 %v2772, 1.442695
    %v2774 = vpow.pop %v2773
    %v2775 = vadd.f32 %v2765, %v2768
    %v2776 = vadd.f32 %v2775, %v2771
    %v2777 = vadd.f32 %v2776, %v2774
    %v2778 = vmul.f32 %v2765, %v1851
    %v2779 = vmul.f32 %v2768, %v1853
    %v2780 = vadd.f32 %v2778, %v2779
    %v2781 = vmul.f32 %v2771, %v1944
    %v2782 = vadd.f32 %v2780, %v2781
    %v2783 = vmul.f32 %v2774, %v1946
    %v2784 = vadd.f32 %v2782, %v2783
    %v2785 = vrcp.pop %v2777
    %v2786 = vmul.f32 %v2784, %v2785
    %2787 = vst [vmem:[#allocation2 + $0x70] sm:$0xff] %v2786
    %v2788 = vmul.f32 %v1926, %v1841
    %v2789 = vrot.slane %v2788, 4
    %v2790 = vadd.f32 %v2788, %v2789
    %v2791 = vrot.slane %v2790, 6
    %v2792 = vadd.f32 %v2790, %v2791
    %v2793 = vrot.slane %v2792, 7
    %v2794 = vadd.f32 %v2792, %v2793
    %v2795 = vmul.f32 %v1926, %v1843
    %v2796 = vrot.slane %v2795, 4
    %v2797 = vadd.f32 %v2795, %v2796
    %v2798 = vrot.slane %v2797, 6
    %v2799 = vadd.f32 %v2797, %v2798
    %v2800 = vrot.slane %v2799, 7
    %v2801 = vadd.f32 %v2799, %v2800
    %v2802 = vmul.f32 %v1926, %v1934
    %v2803 = vrot.slane %v2802, 4
    %v2804 = vadd.f32 %v2802, %v2803
    %v2805 = vrot.slane %v2804, 6
    %v2806 = vadd.f32 %v2804, %v2805
    %v2807 = vrot.slane %v2806, 7
    %v2808 = vadd.f32 %v2806, %v2807
    %v2809 = vmul.f32 %v1926, %v1936
    %v2810 = vrot.slane %v2809, 4
    %v2811 = vadd.f32 %v2809, %v2810
    %v2812 = vrot.slane %v2811, 6
    %v2813 = vadd.f32 %v2811, %v2812
    %v2814 = vrot.slane %v2813, 7
    %v2815 = vadd.f32 %v2813, %v2814
    %v2816 = vmax.f32 %v2794, %v2801
    %v2817 = vmax.f32 %v2816, %v2808
    %v2818 = vmax.f32 %v2817, %v2815
    %v2819 = vsub.f32 %v2794, %v2818
    %v2820 = vmul.f32 %v2819, 1.442695
    %v2821 = vpow.pop %v2820
    %v2822 = vsub.f32 %v2801, %v2818
    %v2823 = vmul.f32 %v2822, 1.442695
    %v2824 = vpow.pop %v2823
    %v2825 = vsub.f32 %v2808, %v2818
    %v2826 = vmul.f32 %v2825, 1.442695
    %v2827 = vpow.pop %v2826
    %v2828 = vsub.f32 %v2815, %v2818
    %v2829 = vmul.f32 %v2828, 1.442695
    %v2830 = vpow.pop %v2829
    %v2831 = vadd.f32 %v2821, %v2824
    %v2832 = vadd.f32 %v2831, %v2827
    %v2833 = vadd.f32 %v2832, %v2830
    %v2834 = vmul.f32 %v2821, %v1851
    %v2835 = vmul.f32 %v2824, %v1853
    %v2836 = vadd.f32 %v2834, %v2835
    %v2837 = vmul.f32 %v2827, %v1944
    %v2838 = vadd.f32 %v2836, %v2837
    %v2839 = vmul.f32 %v2830, %v1946
    %v2840 = vadd.f32 %v2838, %v2839
    %v2841 = vrcp.pop %v2833
    %v2842 = vmul.f32 %v2840, %v2841
    %2843 = vst [vmem:[#allocation2 + $0x78] sm:$0xff] %v2842
    %v2844 = vld [vmem:[#allocation2] sm:$0xff]
    %v2845 = vld [vmem:[#allocation2 + $0x8] sm:$0xff]
    %v2846 = vld [vmem:[#allocation2 + $0x10] sm:$0xff]
    %v2847 = vld [vmem:[#allocation2 + $0x18] sm:$0xff]
    %v2848 = vld [vmem:[#allocation2 + $0x20] sm:$0xff]
    %v2849 = vld [vmem:[#allocation2 + $0x28] sm:$0xff]
    %v2850 = vld [vmem:[#allocation2 + $0x30] sm:$0xff]
    %v2851 = vld [vmem:[#allocation2 + $0x38] sm:$0xff]
    %v2852 = vld [vmem:[#allocation2 + $0x40] sm:$0xff]
    %v2853 = vld [vmem:[#allocation2 + $0x48] sm:$0xff]
    %v2854 = vld [vmem:[#allocation2 + $0x50] sm:$0xff]
    %v2855 = vld [vmem:[#allocation2 + $0x58] sm:$0xff]
    %v2856 = vld [vmem:[#allocation2 + $0x60] sm:$0xff]
    %v2857 = vld [vmem:[#allocation2 + $0x68] sm:$0xff]
    %v2858 = vld [vmem:[#allocation2 + $0x70] sm:$0xff]
    %v2859 = vld [vmem:[#allocation2 + $0x78] sm:$0xff]
    %v2860 = vpack.c.bf16 %v2848, %v2844
    %v2861 = vpack.c.bf16 %v2849, %v2845
    %v2862 = vpack.c.bf16 %v2850, %v2846
    %v2863 = vpack.c.bf16 %v2851, %v2847
    %v2864 = vpack.c.bf16 %v2856, %v2852
    %v2865 = vpack.c.bf16 %v2857, %v2853
    %v2866 = vpack.c.bf16 %v2858, %v2854
    %v2867 = vpack.c.bf16 %v2859, %v2855
    %2868 = vmatprep.subr.bf16.mxu0 0
    %2869 = vmatpush1.bf16.msra.mxu0 0
    %2870 = vmatprep.subr.bf16.mxu0 0
    %2871 = vmatpush1.bf16.msra.mxu0 0
    %2872 = vmatprep.subr.bf16.mxu0 0
    %2873 = vmatpush1.bf16.msra.mxu0 0
    %2874 = vmatprep.subr.bf16.mxu0 0
    %2875 = vmatpush1.bf16.msra.mxu0 0
    %2876 = vmatprep.subr.bf16.mxu0 0
    %2877 = vmatpush1.bf16.msra.mxu0 0
    %2878 = vmatprep.subr.bf16.mxu0 0
    %2879 = vmatpush1.bf16.msra.mxu0 0
    %2880 = vmatprep.subr.bf16.mxu0 %v2865
    %2881 = vmatpush1.bf16.msra.mxu0 %v2864
    %2882 = vmatprep.subr.bf16.mxu0 %v2861
    %2883 = vmatpush1.bf16.msra.mxu0 %v2860
    %2884 = vmatprep.subr.bf16.mxu0 0
    %2885 = vmatpush2.bf16.msra.mxu0 0
    %2886 = vmatprep.subr.bf16.mxu0 0
    %2887 = vmatpush2.bf16.msra.mxu0 0
    %2888 = vmatprep.subr.bf16.mxu0 0
    %2889 = vmatpush2.bf16.msra.mxu0 0
    %2890 = vmatprep.subr.bf16.mxu0 0
    %2891 = vmatpush2.bf16.msra.mxu0 0
    %2892 = vmatprep.subr.bf16.mxu0 0
    %2893 = vmatpush2.bf16.msra.mxu0 0
    %2894 = vmatprep.subr.bf16.mxu0 0
    %2895 = vmatpush2.bf16.msra.mxu0 0
    %2896 = vmatprep.subr.bf16.mxu0 0
    %2897 = vmatpush2.bf16.msra.mxu0 0
    %2898 = vmatprep.subr.bf16.mxu0 0
    %2899 = vmatpush2.bf16.msra.mxu0 0
    %2900 = vmatprep.mubr.bf16.mxu0 0
    %2901 = vmatmul.mubr.bf16.gmra.mxu0 %v1548
    %v2902 = vpop.f32.mrf.mxu0
    %v2903 = vadd.f32 %v1534, %v2902
    %v2904 = vpop.f32.mrf.mxu0
    %v2905 = vadd.f32 %v1534, %v2904
    %v2906 = vpop.f32.mrf.mxu0
    %v2907 = vadd.f32 %v1539, %v2906
    %v2908 = vpop.f32.mrf.mxu0
    %v2909 = vadd.f32 %v1539, %v2908
    %2910 = vdwg.mxu0
    %2911 = vmatprep.subr.bf16.mxu0 0
    %2912 = vmatpush1.bf16.msra.mxu0 0
    %2913 = vmatprep.subr.bf16.mxu0 0
    %2914 = vmatpush1.bf16.msra.mxu0 0
    %2915 = vmatprep.subr.bf16.mxu0 0
    %2916 = vmatpush1.bf16.msra.mxu0 0
    %2917 = vmatprep.subr.bf16.mxu0 0
    %2918 = vmatpush1.bf16.msra.mxu0 0
    %2919 = vmatprep.subr.bf16.mxu0 0
    %2920 = vmatpush1.bf16.msra.mxu0 0
    %2921 = vmatprep.subr.bf16.mxu0 0
    %2922 = vmatpush1.bf16.msra.mxu0 0
    %2923 = vmatprep.subr.bf16.mxu0 %v2867
    %2924 = vmatpush1.bf16.msra.mxu0 %v2866
    %2925 = vmatprep.subr.bf16.mxu0 %v2863
    %2926 = vmatpush1.bf16.msra.mxu0 %v2862
    %2927 = vmatprep.subr.bf16.mxu0 0
    %2928 = vmatpush2.bf16.msra.mxu0 0
    %2929 = vmatprep.subr.bf16.mxu0 0
    %2930 = vmatpush2.bf16.msra.mxu0 0
    %2931 = vmatprep.subr.bf16.mxu0 0
    %2932 = vmatpush2.bf16.msra.mxu0 0
    %2933 = vmatprep.subr.bf16.mxu0 0
    %2934 = vmatpush2.bf16.msra.mxu0 0
    %2935 = vmatprep.subr.bf16.mxu0 0
    %2936 = vmatpush2.bf16.msra.mxu0 0
    %2937 = vmatprep.subr.bf16.mxu0 0
    %2938 = vmatpush2.bf16.msra.mxu0 0
    %2939 = vmatprep.subr.bf16.mxu0 0
    %2940 = vmatpush2.bf16.msra.mxu0 0
    %2941 = vmatprep.subr.bf16.mxu0 0
    %2942 = vmatpush2.bf16.msra.mxu0 0
    %2943 = vmatprep.mubr.bf16.mxu0 0
    %2944 = vmatmul.mubr.bf16.gmra.mxu0 %v1548
    %v2945 = vpop.f32.mrf.mxu0
    %v2946 = vadd.f32 %v1534, %v2945
    %v2947 = vpop.f32.mrf.mxu0
    %v2948 = vadd.f32 %v1534, %v2947
    %v2949 = vpop.f32.mrf.mxu0
    %v2950 = vadd.f32 %v1539, %v2949
    %v2951 = vpop.f32.mrf.mxu0
    %v2952 = vadd.f32 %v1539, %v2951
    %2953 = vdwg.mxu0
    %v2954 = vadd.f32 %v1750, %v2903
    %v2955 = vadd.f32 %v1751, %v2905
    %v2956 = vadd.f32 %v1752, %v2946
    %v2957 = vadd.f32 %v1753, %v2948
    %v2958 = vadd.f32 %v1754, %v2907
    %v2959 = vadd.f32 %v1755, %v2909
    %v2960 = vadd.f32 %v1756, %v2950
    %v2961 = vadd.f32 %v1757, %v2952
    %v2962 = vadd.f32 %v2954, %v2958
    %v2963 = vrot.slane %v2962, 4
    %v2964 = vadd.f32 %v2962, %v2963
    %v2965 = vrot.slane %v2964, 2
    %v2966 = vadd.f32 %v2964, %v2965
    %v2967 = vrot.slane %v2966, 1
    %v2968 = vadd.f32 %v2966, %v2967
    %v2969 = vadd.f32 %v2955, %v2959
    %v2970 = vrot.slane %v2969, 4
    %v2971 = vadd.f32 %v2969, %v2970
    %v2972 = vrot.slane %v2971, 2
    %v2973 = vadd.f32 %v2971, %v2972
    %v2974 = vrot.slane %v2973, 1
    %v2975 = vadd.f32 %v2973, %v2974
    %v2976 = vadd.f32 %v2956, %v2960
    %v2977 = vrot.slane %v2976, 4
    %v2978 = vadd.f32 %v2976, %v2977
    %v2979 = vrot.slane %v2978, 2
    %v2980 = vadd.f32 %v2978, %v2979
    %v2981 = vrot.slane %v2980, 1
    %v2982 = vadd.f32 %v2980, %v2981
    %v2983 = vadd.f32 %v2957, %v2961
    %v2984 = vrot.slane %v2983, 4
    %v2985 = vadd.f32 %v2983, %v2984
    %v2986 = vrot.slane %v2985, 2
    %v2987 = vadd.f32 %v2985, %v2986
    %v2988 = vrot.slane %v2987, 1
    %v2989 = vadd.f32 %v2987, %v2988
    %v2990 = vadd.f32 %v2968, %v2975
    %v2991 = vadd.f32 %v2990, %v2982
    %v2992 = vadd.f32 %v2991, %v2989
    %v2993 = vmul.f32 %v2992, 0.015625
    %v2994 = vlaneseq
    %v2995 = vshrl.u32 %v2994, 7
    %v2996 = vsub.s32 0, %v2995
    %v2997 = vrot.slane %v2993, %v2996
    %v2998 = vsub.f32 %v2954, %v2997
    %v2999 = vsub.f32 %v2955, %v2997
    %v3000 = vsub.f32 %v2956, %v2997
    %v3001 = vsub.f32 %v2957, %v2997
    %v3002 = vsub.f32 %v2958, %v2997
    %v3003 = vsub.f32 %v2959, %v2997
    %v3004 = vsub.f32 %v2960, %v2997
    %v3005 = vsub.f32 %v2961, %v2997
    %v3006 = vmul.f32 %v2998, %v2998
    %v3007 = vmul.f32 %v2999, %v2999
    %v3008 = vmul.f32 %v3000, %v3000
    %v3009 = vmul.f32 %v3001, %v3001
    %v3010 = vmul.f32 %v3002, %v3002
    %v3011 = vmul.f32 %v3003, %v3003
    %v3012 = vmul.f32 %v3004, %v3004
    %v3013 = vmul.f32 %v3005, %v3005
    %v3014 = vadd.f32 %v3006, %v3010
    %v3015 = vrot.slane %v3014, 4
    %v3016 = vadd.f32 %v3014, %v3015
    %v3017 = vrot.slane %v3016, 2
    %v3018 = vadd.f32 %v3016, %v3017
    %v3019 = vrot.slane %v3018, 1
    %v3020 = vadd.f32 %v3018, %v3019
    %v3021 = vadd.f32 %v3007, %v3011
    %v3022 = vrot.slane %v3021, 4
    %v3023 = vadd.f32 %v3021, %v3022
    %v3024 = vrot.slane %v3023, 2
    %v3025 = vadd.f32 %v3023, %v3024
    %v3026 = vrot.slane %v3025, 1
    %v3027 = vadd.f32 %v3025, %v3026
    %v3028 = vadd.f32 %v3008, %v3012
    %v3029 = vrot.slane %v3028, 4
    %v3030 = vadd.f32 %v3028, %v3029
    %v3031 = vrot.slane %v3030, 2
    %v3032 = vadd.f32 %v3030, %v3031
    %v3033 = vrot.slane %v3032, 1
    %v3034 = vadd.f32 %v3032, %v3033
    %v3035 = vadd.f32 %v3009, %v3013
    %v3036 = vrot.slane %v3035, 4
    %v3037 = vadd.f32 %v3035, %v3036
    %v3038 = vrot.slane %v3037, 2
    %v3039 = vadd.f32 %v3037, %v3038
    %v3040 = vrot.slane %v3039, 1
    %v3041 = vadd.f32 %v3039, %v3040
    %v3042 = vadd.f32 %v3020, %v3027
    %v3043 = vadd.f32 %v3042, %v3034
    %v3044 = vadd.f32 %v3043, %v3041
    %v3045 = vmul.f32 %v3044, 0.015625
    %v3046 = vadd.f32 %v3045, 1e-05
    %v3047 = vrsqrt.pop %v3046
    %v3048 = vlaneseq
    %v3049 = vshrl.u32 %v3048, 7
    %v3050 = vsub.s32 0, %v3049
    %v3051 = vrot.slane %v3047, %v3050
    %v3052 = vmul.f32 %v2998, %v3051
    %v3053 = vmul.f32 %v2999, %v3051
    %v3054 = vmul.f32 %v3000, %v3051
    %v3055 = vmul.f32 %v3001, %v3051
    %v3056 = vmul.f32 %v3002, %v3051
    %v3057 = vmul.f32 %v3003, %v3051
    %v3058 = vmul.f32 %v3004, %v3051
    %v3059 = vmul.f32 %v3005, %v3051
    %v3060 = vmul.f32 %v3052, %v131
    %v3061 = vmul.f32 %v3053, %v132
    %v3062 = vmul.f32 %v3054, %v133
    %v3063 = vmul.f32 %v3055, %v134
    %v3064 = vmul.f32 %v3056, %v135
    %v3065 = vmul.f32 %v3057, %v136
    %v3066 = vmul.f32 %v3058, %v137
    %v3067 = vmul.f32 %v3059, %v138
    %v3068 = vadd.f32 %v3060, %v139
    %v3069 = vadd.f32 %v3061, %v140
    %v3070 = vadd.f32 %v3062, %v141
    %v3071 = vadd.f32 %v3063, %v142
    %v3072 = vadd.f32 %v3064, %v143
    %v3073 = vadd.f32 %v3065, %v144
    %v3074 = vadd.f32 %v3066, %v145
    %v3075 = vadd.f32 %v3067, %v146
    %3077 = vset.pattern.permute.xlu0 0
    %3078 = vperm.xlu0 %3077, %v130
    %v3079 = vpop.permute.xlu0 %3078
    %v3082 = vsel %vm406, %v129, 0
    %3084 = vmatprep.subr.mxu0 0.0
    %3085 = vmatpush1.msra.mxu0 0.0
    %3086 = vmatprep.subr.mxu0 0.0
    %3087 = vmatpush1.msra.mxu0 0.0
    %3088 = vmatprep.subr.mxu0 0.0
    %3089 = vmatpush1.msra.mxu0 0.0
    %3090 = vmatprep.subr.mxu0 0.0
    %3091 = vmatpush1.msra.mxu0 0.0
    %3092 = vmatprep.subr.mxu0 0.0
    %3093 = vmatpush1.msra.mxu0 0.0
    %3094 = vmatprep.subr.mxu0 0.0
    %3095 = vmatpush1.msra.mxu0 0.0
    %3096 = vmatprep.subr.mxu0 0.0
    %3097 = vmatpush1.msra.mxu0 0.0
    %3098 = vmatprep.subr.mxu0 0.0
    %3099 = vmatpush1.msra.mxu0 0.0
    %3100 = vmatprep.subr.mxu0 0.0
    %3101 = vmatpush1.msra.mxu0 0.0
    %3102 = vmatprep.subr.mxu0 0.0
    %3103 = vmatpush1.msra.mxu0 0.0
    %3104 = vmatprep.subr.mxu0 0.0
    %3105 = vmatpush1.msra.mxu0 0.0
    %3106 = vmatprep.subr.mxu0 0.0
    %3107 = vmatpush1.msra.mxu0 0.0
    %3108 = vmatprep.subr.mxu0 0.0
    %3109 = vmatpush1.msra.mxu0 0.0
    %3110 = vmatprep.subr.mxu0 0.0
    %3111 = vmatpush1.msra.mxu0 0.0
    %3112 = vmatprep.subr.mxu0 %v3073
    %3113 = vmatpush1.msra.mxu0 %v3072
    %3114 = vmatprep.subr.mxu0 %v3069
    %3115 = vmatpush1.msra.mxu0 %v3068
    %3116 = vmatprep.subr.mxu0 0.0
    %3117 = vmatpush2.msra.mxu0 0.0
    %3118 = vmatprep.subr.mxu0 0.0
    %3119 = vmatpush2.msra.mxu0 0.0
    %3120 = vmatprep.subr.mxu0 0.0
    %3121 = vmatpush2.msra.mxu0 0.0
    %3122 = vmatprep.subr.mxu0 0.0
    %3123 = vmatpush2.msra.mxu0 0.0
    %3124 = vmatprep.subr.mxu0 0.0
    %3125 = vmatpush2.msra.mxu0 0.0
    %3126 = vmatprep.subr.mxu0 0.0
    %3127 = vmatpush2.msra.mxu0 0.0
    %3128 = vmatprep.subr.mxu0 0.0
    %3129 = vmatpush2.msra.mxu0 0.0
    %3130 = vmatprep.subr.mxu0 0.0
    %3131 = vmatpush2.msra.mxu0 0.0
    %3132 = vmatprep.subr.mxu0 0.0
    %3133 = vmatpush2.msra.mxu0 0.0
    %3134 = vmatprep.subr.mxu0 0.0
    %3135 = vmatpush2.msra.mxu0 0.0
    %3136 = vmatprep.subr.mxu0 0.0
    %3137 = vmatpush2.msra.mxu0 0.0
    %3138 = vmatprep.subr.mxu0 0.0
    %3139 = vmatpush2.msra.mxu0 0.0
    %3140 = vmatprep.subr.mxu0 0.0
    %3141 = vmatpush2.msra.mxu0 0.0
    %3142 = vmatprep.subr.mxu0 0.0
    %3143 = vmatpush2.msra.mxu0 0.0
    %3144 = vmatprep.subr.mxu0 0.0
    %3145 = vmatpush2.msra.mxu0 0.0
    %3146 = vmatprep.subr.mxu0 0.0
    %3147 = vmatpush2.msra.mxu0 0.0
    %3148 = vmatprep.mubr.f32.mxu0 0.0
    %3149 = vmatmul.mubr.f32.gmra.mxu0 %v3082
    %v3150 = vpop.f32.mrf.mxu0
    %v3151 = vadd.f32 %v3079, %v3150
    %v3152 = vpop.f32.mrf.mxu0
    %v3153 = vadd.f32 %v3079, %v3152
    %3154 = vdwg.mxu0
    %3155 = vmatprep.subr.mxu0 0.0
    %3156 = vmatpush1.msra.mxu0 0.0
    %3157 = vmatprep.subr.mxu0 0.0
    %3158 = vmatpush1.msra.mxu0 0.0
    %3159 = vmatprep.subr.mxu0 0.0
    %3160 = vmatpush1.msra.mxu0 0.0
    %3161 = vmatprep.subr.mxu0 0.0
    %3162 = vmatpush1.msra.mxu0 0.0
    %3163 = vmatprep.subr.mxu0 0.0
    %3164 = vmatpush1.msra.mxu0 0.0
    %3165 = vmatprep.subr.mxu0 0.0
    %3166 = vmatpush1.msra.mxu0 0.0
    %3167 = vmatprep.subr.mxu0 0.0
    %3168 = vmatpush1.msra.mxu0 0.0
    %3169 = vmatprep.subr.mxu0 0.0
    %3170 = vmatpush1.msra.mxu0 0.0
    %3171 = vmatprep.subr.mxu0 0.0
    %3172 = vmatpush1.msra.mxu0 0.0
    %3173 = vmatprep.subr.mxu0 0.0
    %3174 = vmatpush1.msra.mxu0 0.0
    %3175 = vmatprep.subr.mxu0 0.0
    %3176 = vmatpush1.msra.mxu0 0.0
    %3177 = vmatprep.subr.mxu0 0.0
    %3178 = vmatpush1.msra.mxu0 0.0
    %3179 = vmatprep.subr.mxu0 0.0
    %3180 = vmatpush1.msra.mxu0 0.0
    %3181 = vmatprep.subr.mxu0 0.0
    %3182 = vmatpush1.msra.mxu0 0.0
    %3183 = vmatprep.subr.mxu0 %v3075
    %3184 = vmatpush1.msra.mxu0 %v3074
    %3185 = vmatprep.subr.mxu0 %v3071
    %3186 = vmatpush1.msra.mxu0 %v3070
    %3187 = vmatprep.subr.mxu0 0.0
    %3188 = vmatpush2.msra.mxu0 0.0
    %3189 = vmatprep.subr.mxu0 0.0
    %3190 = vmatpush2.msra.mxu0 0.0
    %3191 = vmatprep.subr.mxu0 0.0
    %3192 = vmatpush2.msra.mxu0 0.0
    %3193 = vmatprep.subr.mxu0 0.0
    %3194 = vmatpush2.msra.mxu0 0.0
    %3195 = vmatprep.subr.mxu0 0.0
    %3196 = vmatpush2.msra.mxu0 0.0
    %3197 = vmatprep.subr.mxu0 0.0
    %3198 = vmatpush2.msra.mxu0 0.0
    %3199 = vmatprep.subr.mxu0 0.0
    %3200 = vmatpush2.msra.mxu0 0.0
    %3201 = vmatprep.subr.mxu0 0.0
    %3202 = vmatpush2.msra.mxu0 0.0
    %3203 = vmatprep.subr.mxu0 0.0
    %3204 = vmatpush2.msra.mxu0 0.0
    %3205 = vmatprep.subr.mxu0 0.0
    %3206 = vmatpush2.msra.mxu0 0.0
    %3207 = vmatprep.subr.mxu0 0.0
    %3208 = vmatpush2.msra.mxu0 0.0
    %3209 = vmatprep.subr.mxu0 0.0
    %3210 = vmatpush2.msra.mxu0 0.0
    %3211 = vmatprep.subr.mxu0 0.0
    %3212 = vmatpush2.msra.mxu0 0.0
    %3213 = vmatprep.subr.mxu0 0.0
    %3214 = vmatpush2.msra.mxu0 0.0
    %3215 = vmatprep.subr.mxu0 0.0
    %3216 = vmatpush2.msra.mxu0 0.0
    %3217 = vmatprep.subr.mxu0 0.0
    %3218 = vmatpush2.msra.mxu0 0.0
    %3219 = vmatprep.mubr.f32.mxu0 0.0
    %3220 = vmatmul.mubr.f32.gmra.mxu0 %v3082
    %v3221 = vpop.f32.mrf.mxu0
    %v3222 = vadd.f32 %v3079, %v3221
    %v3223 = vpop.f32.mrf.mxu0
    %v3224 = vadd.f32 %v3079, %v3223
    %3225 = vdwg.mxu0
    %v3226 = vsub.f32 %v3151, %v156
    %v3227 = vsub.f32 %v3153, %v158
    %v3228 = vsub.f32 %v3222, %v160
    %v3229 = vsub.f32 %v3224, %v162
    %v3230 = vlaneseq
    %v3231 = vshrl.u32 %v3230, 7
    %v3232 = vsub.s32 0, %v3231
    %v3233 = vlaneseq
    %v3234 = vshrl.u32 %v3233, 7
    %v3235 = vsub.s32 0, %v3234
    %v3236 = vlaneseq
    %v3237 = vshrl.u32 %v3236, 7
    %v3238 = vsub.s32 0, %v3237
    %v3239 = vlaneseq
    %v3240 = vshrl.u32 %v3239, 7
    %v3241 = vsub.s32 0, %v3240
    %v3242 = vmul.f32 %v3226, %v164
    %v3243 = vmul.f32 %v3227, %v166
    %v3244 = vmul.f32 %v3228, %v168
    %v3245 = vmul.f32 %v3229, %v170
    %v3246 = vmul.f32 %v3242, %v260
    %v3247 = vmul.f32 %v3243, %v261
    %v3248 = vmul.f32 %v3244, %v262
    %v3249 = vmul.f32 %v3245, %v263
    %v3250 = vadd.f32 %v3246, %v200
    %v3251 = vadd.f32 %v3247, %v201
    %v3252 = vadd.f32 %v3248, %v202
    %v3253 = vadd.f32 %v3249, %v203
    %3254 = vst [vmem:[#allocation11] sm:$0xff] %v3250
    %3255 = vst [vmem:[#allocation11 + $0x8] sm:$0xff] %v3251
    %3256 = vst [vmem:[#allocation11 + $0x10] sm:$0xff] %v3252
    %3257 = vst [vmem:[#allocation11 + $0x18] sm:$0xff] %v3253
    // Predicated region
    $region66: #{tpu_custom_call.1} parent=1 // pred_check
      _
    $region67: #{tpu_custom_call.1} parent=1 // pred_check_branch
      %3259 = sbr.rel (0) target = $region69
    $region68: #{tpu_custom_call.1} parent=1 // pred_region
      %s3261 = ssub.s32 512, 512
      %3262 = vsyncadd [#allocation5], %s3261
      %s3264 = sshll.u32 [#allocation11], 4
      %s3265 = int_to_ptr.vmem [resolvable:$true] %s3264
      %3267 = dma.vmem_to_hbm [thread:$0]  %s3265, 512, %s12, [#allocation5]
    $region69: #{tpu_custom_call.1} parent=1 // pred_fallthru
      _
    // Predicated region
    $region70: #{tpu_custom_call.1} parent=1 // pred_check
      _
    $region71: #{tpu_custom_call.1} parent=1 // pred_check_branch
      %3269 = sbr.rel (0) target = $region73
    $region72: #{tpu_custom_call.1} parent=1 // pred_region
      %3270 = dma.done [#allocation5], 512
    $region73: #{tpu_custom_call.1} parent=1 // pred_fallthru
      _
    %3271 = vsyncpa [#allocation4], 1
    %3272 = vsyncpa [#allocation5], 1
    %3273 = vsyncpa [#allocation6], 1
    %3274 = vsyncpa [#allocation9], 1

</llo_original>
